<compile_context>
chip_gen: v6e
topology: v6e:2x2x1
jax: 0.10.0
libtpu: 0.0.40
codegen_flags: <defaults>
</compile_context>

<pallas_src>
import functools

import jax
import jax.numpy as jnp
from jax.experimental import pallas as pl
from jax.experimental.pallas import tpu as pltpu

NEG_SLOPE = 0.2
LAYER_SIZES = [(24576, 4096), (4096, 2048), (2048, 1024), (1024, 1)]


def _round_up(x, m):
    return (x + m - 1) // m * m


# ----------------------------- Pallas kernel ------------------------------ #
def _linear_kernel(x_ref, w_ref, b_ref, o_ref, acc_ref, *, apply_lrelu):
    """One (Mp, tk) @ (tk, tn) partial product per grid step.

    Grid = (N_tiles, K_tiles); K is the last ("arbitrary") axis, so acc_ref
    and the o_ref block stay resident across it.  Bias + LeakyReLU are fused
    into the final K step, computed in f32 on the accumulator.
    """
    k = pl.program_id(1)

    @pl.when(k == 0)
    def _():
        acc_ref[...] = jnp.zeros_like(acc_ref)

    acc_ref[...] += jnp.dot(x_ref[...], w_ref[...],
                            preferred_element_type=jnp.float32)

    @pl.when(k == pl.num_programs(1) - 1)
    def _():
        y = acc_ref[...] + b_ref[...]
        if apply_lrelu:
            y = jnp.where(y >= 0.0, y, NEG_SLOPE * y)
        o_ref[...] = y.astype(o_ref.dtype)


def linear_fused(x, w, b, *, apply_lrelu, out_dtype, tn=512, tk=1024):
    """x: (Mp, K) bf16, w: (K, Np) bf16 (pre-packed), b: (1, Np) f32."""
    Mp, K = x.shape
    Kw, Np = w.shape
    assert K == Kw and b.shape == (1, Np)
    tn = min(tn, Np)
    tk = min(tk, K)
    assert K % tk == 0 and Np % tn == 0
    grid = (Np // tn, K // tk)

    return pl.pallas_call(
        functools.partial(_linear_kernel, apply_lrelu=apply_lrelu),
        out_shape=jax.ShapeDtypeStruct((Mp, Np), out_dtype),
        grid_spec=pltpu.PrefetchScalarGridSpec(
            num_scalar_prefetch=0,
            grid=grid,
            in_specs=[
                pl.BlockSpec((Mp, tk), lambda j, k: (0, k)),   # activations
                pl.BlockSpec((tk, tn), lambda j, k: (k, j)),   # weights
                pl.BlockSpec((1, tn), lambda j, k: (0, j)),    # bias
            ],
            out_specs=pl.BlockSpec((Mp, tn), lambda j, k: (0, j)),
            scratch_shapes=[pltpu.VMEM((Mp, tn), jnp.float32)],
        ),
        compiler_params=pltpu.CompilerParams(
            dimension_semantics=("parallel", "arbitrary"),
            vmem_limit_bytes=32 * 1024 * 1024,
        ),
    )(x, w, b)


# ---------------------------- Parameters ----------------------------------- #
def init_params(key):
    """normal(0, 0.02) weights / zero biases, matching _initialize_weights()."""
    raw = []
    for fan_in, fan_out in LAYER_SIZES:
        key, sub = jax.random.split(key)
        w = 0.02 * jax.random.normal(sub, (fan_out, fan_in), dtype=jnp.float32)
        b = jnp.zeros((fan_out,), dtype=jnp.float32)
        raw.append((w, b))
    return raw


def pack_params(raw):
    """One-time packing outside the forward pass: transpose to (K, N), pad N
    to a lane multiple (only fc4's N=1 -> 128), cast weights to bf16."""
    packed = []
    for w, b in raw:
        wk = jnp.asarray(w.T, dtype=jnp.bfloat16)             # (K, N)
        bk = jnp.asarray(b, dtype=jnp.float32).reshape(1, -1)  # (1, N)
        n = wk.shape[1]
        n_pad = _round_up(n, 128) - n
        if n_pad:
            wk = jnp.pad(wk, ((0, 0), (0, n_pad)))
            bk = jnp.pad(bk, ((0, 0), (0, n_pad)))
        packed.append((wk, bk))
    return packed


# ------------------------------ Forward ------------------------------------ #
def discriminator_forward(x, packed):
    """x: (B, 24576) f32 -> (B, 1) f32; same math as the PyTorch module."""
    B = x.shape[0]
    Mp = _round_up(max(B, 8), 8)          # pad batch ONCE to a sublane multiple
    h = jnp.pad(x.astype(jnp.bfloat16), ((0, Mp - B), (0, 0)))

    (w1, b1), (w2, b2), (w3, b3), (w4, b4) = packed
    h = linear_fused(h, w1, b1, apply_lrelu=True, out_dtype=jnp.bfloat16)
    h = linear_fused(h, w2, b2, apply_lrelu=True, out_dtype=jnp.bfloat16)
    h = linear_fused(h, w3, b3, apply_lrelu=True, out_dtype=jnp.bfloat16)
    h = linear_fused(h, w4, b4, apply_lrelu=False, out_dtype=jnp.float32)
    return h[:B, :1]                      # drop batch padding + lane padding


# ------------------------------- References -------------------------------- #
def _reference_bf16(x, raw):
    """Matched precision: bf16 operands, f32 accumulation (tight check)."""
    h = x.astype(jnp.bfloat16)
    for i, (w, b) in enumerate(raw):
        y = jnp.dot(h, jnp.asarray(w.T, jnp.bfloat16),
                    preferred_element_type=jnp.float32) + b
        if i < len(raw) - 1:
            y = jnp.where(y >= 0.0, y, NEG_SLOPE * y)
            h = y.astype(jnp.bfloat16)
        else:
            h = y
    return h


def _reference_f32(x, raw):
    """Full-f32 PyTorch-semantics reference (loose check, bf16 rounding)."""
    h = x
    for i, (w, b) in enumerate(raw):
        h = h @ w.T + b
        if i < len(raw) - 1:
            h = jnp.where(h >= 0.0, h, NEG_SLOPE * h)
    return h


if __name__ == "__main__":
    key = jax.random.PRNGKey(0)
    k_x, k_p = jax.random.split(key)

    B = 2
    x = jax.random.normal(k_x, (B, LAYER_SIZES[0][0]), dtype=jnp.float32)

    raw = init_params(k_p)
    packed = pack_params(raw)

    fwd = jax.jit(discriminator_forward)
    out = jax.block_until_ready(fwd(x, packed))
    assert out.shape == (B, 1), out.shape

    # Tight check against the matched-precision reference.
    ref_bf16 = jax.block_until_ready(_reference_bf16(x, raw))
    assert jnp.allclose(out, ref_bf16, atol=1e-2, rtol=1e-2), (
        float(jnp.max(jnp.abs(out - ref_bf16))))

    # Loose check against the full-f32 module semantics.
    ref_f32 = jax.block_until_ready(_reference_f32(x, raw))
    assert jnp.allclose(out, ref_f32, atol=1e-1, rtol=5e-2), (
        float(jnp.max(jnp.abs(out - ref_f32))))

    print("KERNEL_OK")
</pallas_src>

<mosaic_0001>
module attributes {stable_mosaic.version = 11 : i64} {
  func.func @_linear_kernel(%arg0: i32, %arg1: i32, %arg2: memref<8x1024xbf16, #tpu.memory_space<vmem>>, %arg3: memref<1024x512xbf16, #tpu.memory_space<vmem>>, %arg4: memref<1x512xf32, #tpu.memory_space<vmem>>, %arg5: memref<8x512xbf16, #tpu.memory_space<vmem>>, %arg6: memref<8x512xf32, #tpu.memory_space<vmem>>) attributes {dimension_semantics = [#tpu.dimension_semantics<parallel>, #tpu.dimension_semantics<arbitrary>], iteration_bounds = array<i64: 4, 4>, scalar_prefetch = 0 : i64, scratch_operands = 1 : i64, tpu.core_type = #tpu.core_type<tc>, window_params = [{transform_indices = @transform_0, window_bounds = array<i64: 8, 1024>}, {transform_indices = @transform_1, window_bounds = array<i64: 1024, 512>}, {transform_indices = @transform_2, window_bounds = array<i64: 1, 512>}, {transform_indices = @transform_3, window_bounds = array<i64: 8, 512>}]} {
    %c0_i32 = arith.constant 0 : i32
    %0 = arith.cmpi eq, %arg1, %c0_i32 : i32
    %1 = arith.extui %0 : i1 to i32
    %c0_i32_0 = arith.constant 0 : i32
    %2 = arith.cmpi ne, %1, %c0_i32_0 : i32
    scf.if %2 {
      %cst_9 = arith.constant 0.000000e+00 : f32
      %12 = vector.broadcast %cst_9 : f32 to vector<8x512xf32>
      %c0_10 = arith.constant 0 : index
      %c0_11 = arith.constant 0 : index
      %13 = vector.load %arg6[%c0_10, %c0_11] : memref<8x512xf32, #tpu.memory_space<vmem>>, vector<8x512xf32>
      tpu.vector_store %arg6[%c0_10, %c0_11], %12 {strides = array<i32>} : memref<8x512xf32, #tpu.memory_space<vmem>>, vector<8x512xf32>,
    } else {
    }
    %c0 = arith.constant 0 : index
    %c0_1 = arith.constant 0 : index
    %3 = vector.load %arg6[%c0, %c0_1] : memref<8x512xf32, #tpu.memory_space<vmem>>, vector<8x512xf32>
    %c0_2 = arith.constant 0 : index
    %c0_3 = arith.constant 0 : index
    %4 = vector.load %arg2[%c0_2, %c0_3] : memref<8x1024xbf16, #tpu.memory_space<vmem>>, vector<8x1024xbf16>
    %c0_4 = arith.constant 0 : index
    %c0_5 = arith.constant 0 : index
    %5 = vector.load %arg3[%c0_4, %c0_5] : memref<1024x512xbf16, #tpu.memory_space<vmem>>, vector<1024x512xbf16>
    %cst = arith.constant dense<0.000000e+00> : vector<8x512xf32>
    %6 = tpu.matmul %4, %5, %cst {dimension_numbers = #tpu.dot_dimension_numbers<[1], [0], [0], [1], [0, 0, 1, 1], [], []>} : vector<8x1024xbf16>, vector<1024x512xbf16>, vector<8x512xf32> -> vector<8x512xf32>
    %7 = arith.addf %3, %6 : vector<8x512xf32>
    %c0_6 = arith.constant 0 : index
    %c0_7 = arith.constant 0 : index
    %8 = vector.load %arg6[%c0_6, %c0_7] : memref<8x512xf32, #tpu.memory_space<vmem>>, vector<8x512xf32>
    tpu.vector_store %arg6[%c0_6, %c0_7], %7 {strides = array<i32>} : memref<8x512xf32, #tpu.memory_space<vmem>>, vector<8x512xf32>,
    %c3_i32 = arith.constant 3 : i32
    %9 = arith.cmpi eq, %arg1, %c3_i32 : i32
    %10 = arith.extui %9 : i1 to i32
    %c0_i32_8 = arith.constant 0 : i32
    %11 = arith.cmpi ne, %10, %c0_i32_8 : i32
    scf.if %11 {
      %c0_9 = arith.constant 0 : index
      %c0_10 = arith.constant 0 : index
      %12 = vector.load %arg6[%c0_9, %c0_10] : memref<8x512xf32, #tpu.memory_space<vmem>>, vector<8x512xf32>
      %c0_11 = arith.constant 0 : index
      %c0_12 = arith.constant 0 : index
      %13 = vector.load %arg4[%c0_11, %c0_12] : memref<1x512xf32, #tpu.memory_space<vmem>>, vector<1x512xf32>
      %14 = vector.broadcast %13 : vector<1x512xf32> to vector<8x512xf32>
      %15 = arith.addf %12, %14 : vector<8x512xf32>
      %cst_13 = arith.constant 0.000000e+00 : f32
      %16 = vector.broadcast %cst_13 : f32 to vector<8x512xf32>
      %17 = arith.cmpf oge, %15, %16 : vector<8x512xf32>
      %cst_14 = arith.constant 2.000000e-01 : f32
      %18 = vector.broadcast %cst_14 : f32 to vector<8x512xf32>
      %19 = arith.mulf %18, %15 : vector<8x512xf32>
      %20 = arith.select %17, %15, %19 : vector<8x512xi1>, vector<8x512xf32>
      %21 = arith.truncf %20 : vector<8x512xf32> to vector<8x512xbf16>
      %c0_15 = arith.constant 0 : index
      %c0_16 = arith.constant 0 : index
      %22 = vector.load %arg5[%c0_15, %c0_16] : memref<8x512xbf16, #tpu.memory_space<vmem>>, vector<8x512xbf16>
      tpu.vector_store %arg5[%c0_15, %c0_16], %21 {strides = array<i32>} : memref<8x512xbf16, #tpu.memory_space<vmem>>, vector<8x512xbf16>,
    } else {
    }
    return
  }
  func.func @transform_0(%arg0: i32, %arg1: i32) -> (i32, i32) {
    %c0_i32 = arith.constant 0 : i32
    %c0_i32_0 = arith.constant 0 : i32
    return %c0_i32, %arg1 : i32, i32
  }
  func.func @transform_1(%arg0: i32, %arg1: i32) -> (i32, i32) {
    %c0_i32 = arith.constant 0 : i32
    return %arg1, %arg0 : i32, i32
  }
  func.func @transform_2(%arg0: i32, %arg1: i32) -> (i32, i32) {
    %c0_i32 = arith.constant 0 : i32
    %c0_i32_0 = arith.constant 0 : i32
    return %c0_i32, %arg0 : i32, i32
  }
  func.func @transform_3(%arg0: i32, %arg1: i32) -> (i32, i32) {
    %c0_i32 = arith.constant 0 : i32
    %c0_i32_0 = arith.constant 0 : i32
    return %c0_i32, %arg0 : i32, i32
  }
}

module attributes {stable_mosaic.version = 11 : i64} {
  func.func @_linear_kernel(%arg0: i32, %arg1: i32, %arg2: memref<8x1024xbf16, #tpu.memory_space<vmem>>, %arg3: memref<1024x512xbf16, #tpu.memory_space<vmem>>, %arg4: memref<1x512xf32, #tpu.memory_space<vmem>>, %arg5: memref<8x512xbf16, #tpu.memory_space<vmem>>, %arg6: memref<8x512xf32, #tpu.memory_space<vmem>>) attributes {dimension_semantics = [#tpu.dimension_semantics<parallel>, #tpu.dimension_semantics<arbitrary>], iteration_bounds = array<i64: 8, 24>, scalar_prefetch = 0 : i64, scratch_operands = 1 : i64, tpu.core_type = #tpu.core_type<tc>, window_params = [{transform_indices = @transform_0, window_bounds = array<i64: 8, 1024>}, {transform_indices = @transform_1, window_bounds = array<i64: 1024, 512>}, {transform_indices = @transform_2, window_bounds = array<i64: 1, 512>}, {transform_indices = @transform_3, window_bounds = array<i64: 8, 512>}]} {
    %c0_i32 = arith.constant 0 : i32
    %0 = arith.cmpi eq, %arg1, %c0_i32 : i32
    %1 = arith.extui %0 : i1 to i32
    %c0_i32_0 = arith.constant 0 : i32
    %2 = arith.cmpi ne, %1, %c0_i32_0 : i32
    scf.if %2 {
      %cst_9 = arith.constant 0.000000e+00 : f32
      %12 = vector.broadcast %cst_9 : f32 to vector<8x512xf32>
      %c0_10 = arith.constant 0 : index
      %c0_11 = arith.constant 0 : index
      %13 = vector.load %arg6[%c0_10, %c0_11] : memref<8x512xf32, #tpu.memory_space<vmem>>, vector<8x512xf32>
      tpu.vector_store %arg6[%c0_10, %c0_11], %12 {strides = array<i32>} : memref<8x512xf32, #tpu.memory_space<vmem>>, vector<8x512xf32>,
    } else {
    }
    %c0 = arith.constant 0 : index
    %c0_1 = arith.constant 0 : index
    %3 = vector.load %arg6[%c0, %c0_1] : memref<8x512xf32, #tpu.memory_space<vmem>>, vector<8x512xf32>
    %c0_2 = arith.constant 0 : index
    %c0_3 = arith.constant 0 : index
    %4 = vector.load %arg2[%c0_2, %c0_3] : memref<8x1024xbf16, #tpu.memory_space<vmem>>, vector<8x1024xbf16>
    %c0_4 = arith.constant 0 : index
    %c0_5 = arith.constant 0 : index
    %5 = vector.load %arg3[%c0_4, %c0_5] : memref<1024x512xbf16, #tpu.memory_space<vmem>>, vector<1024x512xbf16>
    %cst = arith.constant dense<0.000000e+00> : vector<8x512xf32>
    %6 = tpu.matmul %4, %5, %cst {dimension_numbers = #tpu.dot_dimension_numbers<[1], [0], [0], [1], [0, 0, 1, 1], [], []>} : vector<8x1024xbf16>, vector<1024x512xbf16>, vector<8x512xf32> -> vector<8x512xf32>
    %7 = arith.addf %3, %6 : vector<8x512xf32>
    %c0_6 = arith.constant 0 : index
    %c0_7 = arith.constant 0 : index
    %8 = vector.load %arg6[%c0_6, %c0_7] : memref<8x512xf32, #tpu.memory_space<vmem>>, vector<8x512xf32>
    tpu.vector_store %arg6[%c0_6, %c0_7], %7 {strides = array<i32>} : memref<8x512xf32, #tpu.memory_space<vmem>>, vector<8x512xf32>,
    %c23_i32 = arith.constant 23 : i32
    %9 = arith.cmpi eq, %arg1, %c23_i32 : i32
    %10 = arith.extui %9 : i1 to i32
    %c0_i32_8 = arith.constant 0 : i32
    %11 = arith.cmpi ne, %10, %c0_i32_8 : i32
    scf.if %11 {
      %c0_9 = arith.constant 0 : index
      %c0_10 = arith.constant 0 : index
      %12 = vector.load %arg6[%c0_9, %c0_10] : memref<8x512xf32, #tpu.memory_space<vmem>>, vector<8x512xf32>
      %c0_11 = arith.constant 0 : index
      %c0_12 = arith.constant 0 : index
      %13 = vector.load %arg4[%c0_11, %c0_12] : memref<1x512xf32, #tpu.memory_space<vmem>>, vector<1x512xf32>
      %14 = vector.broadcast %13 : vector<1x512xf32> to vector<8x512xf32>
      %15 = arith.addf %12, %14 : vector<8x512xf32>
      %cst_13 = arith.constant 0.000000e+00 : f32
      %16 = vector.broadcast %cst_13 : f32 to vector<8x512xf32>
      %17 = arith.cmpf oge, %15, %16 : vector<8x512xf32>
      %cst_14 = arith.constant 2.000000e-01 : f32
      %18 = vector.broadcast %cst_14 : f32 to vector<8x512xf32>
      %19 = arith.mulf %18, %15 : vector<8x512xf32>
      %20 = arith.select %17, %15, %19 : vector<8x512xi1>, vector<8x512xf32>
      %21 = arith.truncf %20 : vector<8x512xf32> to vector<8x512xbf16>
      %c0_15 = arith.constant 0 : index
      %c0_16 = arith.constant 0 : index
      %22 = vector.load %arg5[%c0_15, %c0_16] : memref<8x512xbf16, #tpu.memory_space<vmem>>, vector<8x512xbf16>
      tpu.vector_store %arg5[%c0_15, %c0_16], %21 {strides = array<i32>} : memref<8x512xbf16, #tpu.memory_space<vmem>>, vector<8x512xbf16>,
    } else {
    }
    return
  }
  func.func @transform_0(%arg0: i32, %arg1: i32) -> (i32, i32) {
    %c0_i32 = arith.constant 0 : i32
    %c0_i32_0 = arith.constant 0 : i32
    return %c0_i32, %arg1 : i32, i32
  }
  func.func @transform_1(%arg0: i32, %arg1: i32) -> (i32, i32) {
    %c0_i32 = arith.constant 0 : i32
    return %arg1, %arg0 : i32, i32
  }
  func.func @transform_2(%arg0: i32, %arg1: i32) -> (i32, i32) {
    %c0_i32 = arith.constant 0 : i32
    %c0_i32_0 = arith.constant 0 : i32
    return %c0_i32, %arg0 : i32, i32
  }
  func.func @transform_3(%arg0: i32, %arg1: i32) -> (i32, i32) {
    %c0_i32 = arith.constant 0 : i32
    %c0_i32_0 = arith.constant 0 : i32
    return %c0_i32, %arg0 : i32, i32
  }
}

module attributes {stable_mosaic.version = 11 : i64} {
  func.func @_linear_kernel(%arg0: i32, %arg1: i32, %arg2: memref<8x1024xbf16, #tpu.memory_space<vmem>>, %arg3: memref<1024x512xbf16, #tpu.memory_space<vmem>>, %arg4: memref<1x512xf32, #tpu.memory_space<vmem>>, %arg5: memref<8x512xbf16, #tpu.memory_space<vmem>>, %arg6: memref<8x512xf32, #tpu.memory_space<vmem>>) attributes {dimension_semantics = [#tpu.dimension_semantics<parallel>, #tpu.dimension_semantics<arbitrary>], iteration_bounds = array<i64: 2, 2>, scalar_prefetch = 0 : i64, scratch_operands = 1 : i64, tpu.core_type = #tpu.core_type<tc>, window_params = [{transform_indices = @transform_0, window_bounds = array<i64: 8, 1024>}, {transform_indices = @transform_1, window_bounds = array<i64: 1024, 512>}, {transform_indices = @transform_2, window_bounds = array<i64: 1, 512>}, {transform_indices = @transform_3, window_bounds = array<i64: 8, 512>}]} {
    %c0_i32 = arith.constant 0 : i32
    %0 = arith.cmpi eq, %arg1, %c0_i32 : i32
    %1 = arith.extui %0 : i1 to i32
    %c0_i32_0 = arith.constant 0 : i32
    %2 = arith.cmpi ne, %1, %c0_i32_0 : i32
    scf.if %2 {
      %cst_9 = arith.constant 0.000000e+00 : f32
      %12 = vector.broadcast %cst_9 : f32 to vector<8x512xf32>
      %c0_10 = arith.constant 0 : index
      %c0_11 = arith.constant 0 : index
      %13 = vector.load %arg6[%c0_10, %c0_11] : memref<8x512xf32, #tpu.memory_space<vmem>>, vector<8x512xf32>
      tpu.vector_store %arg6[%c0_10, %c0_11], %12 {strides = array<i32>} : memref<8x512xf32, #tpu.memory_space<vmem>>, vector<8x512xf32>,
    } else {
    }
    %c0 = arith.constant 0 : index
    %c0_1 = arith.constant 0 : index
    %3 = vector.load %arg6[%c0, %c0_1] : memref<8x512xf32, #tpu.memory_space<vmem>>, vector<8x512xf32>
    %c0_2 = arith.constant 0 : index
    %c0_3 = arith.constant 0 : index
    %4 = vector.load %arg2[%c0_2, %c0_3] : memref<8x1024xbf16, #tpu.memory_space<vmem>>, vector<8x1024xbf16>
    %c0_4 = arith.constant 0 : index
    %c0_5 = arith.constant 0 : index
    %5 = vector.load %arg3[%c0_4, %c0_5] : memref<1024x512xbf16, #tpu.memory_space<vmem>>, vector<1024x512xbf16>
    %cst = arith.constant dense<0.000000e+00> : vector<8x512xf32>
    %6 = tpu.matmul %4, %5, %cst {dimension_numbers = #tpu.dot_dimension_numbers<[1], [0], [0], [1], [0, 0, 1, 1], [], []>} : vector<8x1024xbf16>, vector<1024x512xbf16>, vector<8x512xf32> -> vector<8x512xf32>
    %7 = arith.addf %3, %6 : vector<8x512xf32>
    %c0_6 = arith.constant 0 : index
    %c0_7 = arith.constant 0 : index
    %8 = vector.load %arg6[%c0_6, %c0_7] : memref<8x512xf32, #tpu.memory_space<vmem>>, vector<8x512xf32>
    tpu.vector_store %arg6[%c0_6, %c0_7], %7 {strides = array<i32>} : memref<8x512xf32, #tpu.memory_space<vmem>>, vector<8x512xf32>,
    %c1_i32 = arith.constant 1 : i32
    %9 = arith.cmpi eq, %arg1, %c1_i32 : i32
    %10 = arith.extui %9 : i1 to i32
    %c0_i32_8 = arith.constant 0 : i32
    %11 = arith.cmpi ne, %10, %c0_i32_8 : i32
    scf.if %11 {
      %c0_9 = arith.constant 0 : index
      %c0_10 = arith.constant 0 : index
      %12 = vector.load %arg6[%c0_9, %c0_10] : memref<8x512xf32, #tpu.memory_space<vmem>>, vector<8x512xf32>
      %c0_11 = arith.constant 0 : index
      %c0_12 = arith.constant 0 : index
      %13 = vector.load %arg4[%c0_11, %c0_12] : memref<1x512xf32, #tpu.memory_space<vmem>>, vector<1x512xf32>
      %14 = vector.broadcast %13 : vector<1x512xf32> to vector<8x512xf32>
      %15 = arith.addf %12, %14 : vector<8x512xf32>
      %cst_13 = arith.constant 0.000000e+00 : f32
      %16 = vector.broadcast %cst_13 : f32 to vector<8x512xf32>
      %17 = arith.cmpf oge, %15, %16 : vector<8x512xf32>
      %cst_14 = arith.constant 2.000000e-01 : f32
      %18 = vector.broadcast %cst_14 : f32 to vector<8x512xf32>
      %19 = arith.mulf %18, %15 : vector<8x512xf32>
      %20 = arith.select %17, %15, %19 : vector<8x512xi1>, vector<8x512xf32>
      %21 = arith.truncf %20 : vector<8x512xf32> to vector<8x512xbf16>
      %c0_15 = arith.constant 0 : index
      %c0_16 = arith.constant 0 : index
      %22 = vector.load %arg5[%c0_15, %c0_16] : memref<8x512xbf16, #tpu.memory_space<vmem>>, vector<8x512xbf16>
      tpu.vector_store %arg5[%c0_15, %c0_16], %21 {strides = array<i32>} : memref<8x512xbf16, #tpu.memory_space<vmem>>, vector<8x512xbf16>,
    } else {
    }
    return
  }
  func.func @transform_0(%arg0: i32, %arg1: i32) -> (i32, i32) {
    %c0_i32 = arith.constant 0 : i32
    %c0_i32_0 = arith.constant 0 : i32
    return %c0_i32, %arg1 : i32, i32
  }
  func.func @transform_1(%arg0: i32, %arg1: i32) -> (i32, i32) {
    %c0_i32 = arith.constant 0 : i32
    return %arg1, %arg0 : i32, i32
  }
  func.func @transform_2(%arg0: i32, %arg1: i32) -> (i32, i32) {
    %c0_i32 = arith.constant 0 : i32
    %c0_i32_0 = arith.constant 0 : i32
    return %c0_i32, %arg0 : i32, i32
  }
  func.func @transform_3(%arg0: i32, %arg1: i32) -> (i32, i32) {
    %c0_i32 = arith.constant 0 : i32
    %c0_i32_0 = arith.constant 0 : i32
    return %c0_i32, %arg0 : i32, i32
  }
}

module attributes {stable_mosaic.version = 11 : i64} {
  func.func @_linear_kernel(%arg0: i32, %arg1: i32, %arg2: memref<8x1024xbf16, #tpu.memory_space<vmem>>, %arg3: memref<1024x128xbf16, #tpu.memory_space<vmem>>, %arg4: memref<1x128xf32, #tpu.memory_space<vmem>>, %arg5: memref<8x128xf32, #tpu.memory_space<vmem>>, %arg6: memref<8x128xf32, #tpu.memory_space<vmem>>) attributes {dimension_semantics = [#tpu.dimension_semantics<parallel>, #tpu.dimension_semantics<arbitrary>], iteration_bounds = array<i64: 1, 1>, scalar_prefetch = 0 : i64, scratch_operands = 1 : i64, tpu.core_type = #tpu.core_type<tc>, window_params = [{transform_indices = @transform_0, window_bounds = array<i64: 8, 1024>}, {transform_indices = @transform_1, window_bounds = array<i64: 1024, 128>}, {transform_indices = @transform_2, window_bounds = array<i64: 1, 128>}, {transform_indices = @transform_3, window_bounds = array<i64: 8, 128>}]} {
    %c0_i32 = arith.constant 0 : i32
    %0 = arith.cmpi eq, %arg1, %c0_i32 : i32
    %1 = arith.extui %0 : i1 to i32
    %c0_i32_0 = arith.constant 0 : i32
    %2 = arith.cmpi ne, %1, %c0_i32_0 : i32
    scf.if %2 {
      %cst_10 = arith.constant 0.000000e+00 : f32
      %12 = vector.broadcast %cst_10 : f32 to vector<8x128xf32>
      %c0_11 = arith.constant 0 : index
      %c0_12 = arith.constant 0 : index
      %13 = vector.load %arg6[%c0_11, %c0_12] : memref<8x128xf32, #tpu.memory_space<vmem>>, vector<8x128xf32>
      tpu.vector_store %arg6[%c0_11, %c0_12], %12 {strides = array<i32>} : memref<8x128xf32, #tpu.memory_space<vmem>>, vector<8x128xf32>,
    } else {
    }
    %c0 = arith.constant 0 : index
    %c0_1 = arith.constant 0 : index
    %3 = vector.load %arg6[%c0, %c0_1] : memref<8x128xf32, #tpu.memory_space<vmem>>, vector<8x128xf32>
    %c0_2 = arith.constant 0 : index
    %c0_3 = arith.constant 0 : index
    %4 = vector.load %arg2[%c0_2, %c0_3] : memref<8x1024xbf16, #tpu.memory_space<vmem>>, vector<8x1024xbf16>
    %c0_4 = arith.constant 0 : index
    %c0_5 = arith.constant 0 : index
    %5 = vector.load %arg3[%c0_4, %c0_5] : memref<1024x128xbf16, #tpu.memory_space<vmem>>, vector<1024x128xbf16>
    %cst = arith.constant dense<0.000000e+00> : vector<8x128xf32>
    %6 = tpu.matmul %4, %5, %cst {dimension_numbers = #tpu.dot_dimension_numbers<[1], [0], [0], [1], [0, 0, 1, 1], [], []>} : vector<8x1024xbf16>, vector<1024x128xbf16>, vector<8x128xf32> -> vector<8x128xf32>
    %7 = arith.addf %3, %6 : vector<8x128xf32>
    %c0_6 = arith.constant 0 : index
    %c0_7 = arith.constant 0 : index
    %8 = vector.load %arg6[%c0_6, %c0_7] : memref<8x128xf32, #tpu.memory_space<vmem>>, vector<8x128xf32>
    tpu.vector_store %arg6[%c0_6, %c0_7], %7 {strides = array<i32>} : memref<8x128xf32, #tpu.memory_space<vmem>>, vector<8x128xf32>,
    %c0_i32_8 = arith.constant 0 : i32
    %9 = arith.cmpi eq, %arg1, %c0_i32_8 : i32
    %10 = arith.extui %9 : i1 to i32
    %c0_i32_9 = arith.constant 0 : i32
    %11 = arith.cmpi ne, %10, %c0_i32_9 : i32
    scf.if %11 {
      %c0_10 = arith.constant 0 : index
      %c0_11 = arith.constant 0 : index
      %12 = vector.load %arg6[%c0_10, %c0_11] : memref<8x128xf32, #tpu.memory_space<vmem>>, vector<8x128xf32>
      %c0_12 = arith.constant 0 : index
      %c0_13 = arith.constant 0 : index
      %13 = vector.load %arg4[%c0_12, %c0_13] : memref<1x128xf32, #tpu.memory_space<vmem>>, vector<1x128xf32>
      %14 = vector.broadcast %13 : vector<1x128xf32> to vector<8x128xf32>
      %15 = arith.addf %12, %14 : vector<8x128xf32>
      %c0_14 = arith.constant 0 : index
      %c0_15 = arith.constant 0 : index
      %16 = vector.load %arg5[%c0_14, %c0_15] : memref<8x128xf32, #tpu.memory_space<vmem>>, vector<8x128xf32>
      tpu.vector_store %arg5[%c0_14, %c0_15], %15 {strides = array<i32>} : memref<8x128xf32, #tpu.memory_space<vmem>>, vector<8x128xf32>,
    } else {
    }
    return
  }
  func.func @transform_0(%arg0: i32, %arg1: i32) -> (i32, i32) {
    %c0_i32 = arith.constant 0 : i32
    %c0_i32_0 = arith.constant 0 : i32
    return %c0_i32, %arg1 : i32, i32
  }
  func.func @transform_1(%arg0: i32, %arg1: i32) -> (i32, i32) {
    %c0_i32 = arith.constant 0 : i32
    return %arg1, %arg0 : i32, i32
  }
  func.func @transform_2(%arg0: i32, %arg1: i32) -> (i32, i32) {
    %c0_i32 = arith.constant 0 : i32
    %c0_i32_0 = arith.constant 0 : i32
    return %c0_i32, %arg0 : i32, i32
  }
  func.func @transform_3(%arg0: i32, %arg1: i32) -> (i32, i32) {
    %c0_i32 = arith.constant 0 : i32
    %c0_i32_0 = arith.constant 0 : i32
    return %c0_i32, %arg0 : i32, i32
  }
}

</mosaic_0001>

<llo_original>
// kernel: discriminator_forward.7
$region0: #{discriminator_forward.7}
  #allocation0 [shape = 'u32[]', space=smem, size = 0x4, offset = 0x4, fixed_abs, tag = 'smem constant byte address 0x4 - core index']
  #allocation1 [shape = 'u32[144,128]{1,0:T(1,128)}', space=vmem, size = 0x12000, scoped, tag = 'internal scratch']
  #allocation2 [shape = 'f32[8,128]{1,0:T(8,128)}', space=vmem, size = 0x1000, scoped, tag = 'scratch operand']
  %s0 = inlined_call_operand.vmem [shape: bf16[8,1024], index: 0, kind: input, shape index: {}]
  %s1 = inlined_call_operand.vmem [shape: bf16[1024,128], index: 1, kind: input, shape index: {}]
  %s2 = inlined_call_operand.vmem [shape: f32[1,128], index: 2, kind: input, shape index: {}]
  %s3 = inlined_call_operand.vmem [shape: f32[8,128], index: 3, kind: output, shape index: {}]
  %s4 = sld [smem:[#allocation0]]
  $region30: #{discriminator_forward.7} parent=0
    _
  %s6 = ssub.s32 1, %s4
  %s7 = scalar_select 0, %s6, %s4
  // Predicated region
  $region2: #{discriminator_forward.7} parent=0 // pred_check
    _
  $region3: #{discriminator_forward.7} parent=0 // pred_check_branch
    %9 = sbr.rel (0) target = $region5
  $region4: #{discriminator_forward.7} parent=0 // pred_region
    _
  $region5: #{discriminator_forward.7} parent=0 // pred_fallthru
    _
  // Predicated region
  $region6: #{discriminator_forward.7} parent=0 // pred_check
    _
  $region7: #{discriminator_forward.7} parent=0 // pred_check_branch
    %11 = sbr.rel (0) target = $region9
  $region8: #{discriminator_forward.7} parent=0 // pred_region
    _
  $region9: #{discriminator_forward.7} parent=0 // pred_fallthru
    _
  // Predicated region
  $region10: #{discriminator_forward.7} parent=0 // pred_check
    _
  $region11: #{discriminator_forward.7} parent=0 // pred_check_branch
    %13 = sbr.rel (0) target = $region13
  $region12: #{discriminator_forward.7} parent=0 // pred_region
    _
  $region13: #{discriminator_forward.7} parent=0 // pred_fallthru
    _
  %p15 = scmp.eq.s32.totalorder 0, 0
  // Predicated region
  $region14: #{discriminator_forward.7} parent=0 // pred_check
    %p16 = pneg %p15
  $region15: #{discriminator_forward.7} parent=0 // pred_check_branch
    %18 = sbr.rel (%p16) target = $region17
  $region16: #{discriminator_forward.7} parent=0 // pred_region
    %19 = vst [vmem:[#allocation2] sm:$0xff] 0.0
  $region17: #{discriminator_forward.7} parent=0 // pred_fallthru
    _
  %v20 = vld [vmem:[#allocation2] sm:$0xff]
  %v21 = vld [vmem:[%s0] sm:$0xff]
  %v22 = vld [vmem:[%s0 + $0x8] sm:$0xff]
  %v23 = vld [vmem:[%s0 + $0x10] sm:$0xff]
  %v24 = vld [vmem:[%s0 + $0x18] sm:$0xff]
  %v25 = vld [vmem:[%s1] sm:$0xf]
  %v26 = vld [vmem:[%s1 + $0x4] sm:$0xf]
  %v27 = vld [vmem:[%s1 + $0x8] sm:$0xf]
  %v28 = vld [vmem:[%s1 + $0xc] sm:$0xf]
  %v29 = vld [vmem:[%s1 + $0x10] sm:$0xf]
  %v30 = vld [vmem:[%s1 + $0x14] sm:$0xf]
  %v31 = vld [vmem:[%s1 + $0x18] sm:$0xf]
  %v32 = vld [vmem:[%s1 + $0x1c] sm:$0xf]
  %v33 = vld [vmem:[%s1 + $0x20] sm:$0xf]
  %v34 = vld [vmem:[%s1 + $0x24] sm:$0xf]
  %v35 = vld [vmem:[%s1 + $0x28] sm:$0xf]
  %v36 = vld [vmem:[%s1 + $0x2c] sm:$0xf]
  %v37 = vld [vmem:[%s1 + $0x30] sm:$0xf]
  %v38 = vld [vmem:[%s1 + $0x34] sm:$0xf]
  %v39 = vld [vmem:[%s1 + $0x38] sm:$0xf]
  %v40 = vld [vmem:[%s1 + $0x3c] sm:$0xf]
  %v41 = vld [vmem:[%s1 + $0x40] sm:$0xf]
  %v42 = vld [vmem:[%s1 + $0x44] sm:$0xf]
  %v43 = vld [vmem:[%s1 + $0x48] sm:$0xf]
  %v44 = vld [vmem:[%s1 + $0x4c] sm:$0xf]
  %v45 = vld [vmem:[%s1 + $0x50] sm:$0xf]
  %v46 = vld [vmem:[%s1 + $0x54] sm:$0xf]
  %v47 = vld [vmem:[%s1 + $0x58] sm:$0xf]
  %v48 = vld [vmem:[%s1 + $0x5c] sm:$0xf]
  %v49 = vld [vmem:[%s1 + $0x60] sm:$0xf]
  %v50 = vld [vmem:[%s1 + $0x64] sm:$0xf]
  %v51 = vld [vmem:[%s1 + $0x68] sm:$0xf]
  %v52 = vld [vmem:[%s1 + $0x6c] sm:$0xf]
  %v53 = vld [vmem:[%s1 + $0x70] sm:$0xf]
  %v54 = vld [vmem:[%s1 + $0x74] sm:$0xf]
  %v55 = vld [vmem:[%s1 + $0x78] sm:$0xf]
  %v56 = vld [vmem:[%s1 + $0x7c] sm:$0xf]
  %v57 = vld [vmem:[%s1 + $0x80] sm:$0xf]
  %v58 = vld [vmem:[%s1 + $0x84] sm:$0xf]
  %v59 = vld [vmem:[%s1 + $0x88] sm:$0xf]
  %v60 = vld [vmem:[%s1 + $0x8c] sm:$0xf]
  %v61 = vld [vmem:[%s1 + $0x90] sm:$0xf]
  %v62 = vld [vmem:[%s1 + $0x94] sm:$0xf]
  %v63 = vld [vmem:[%s1 + $0x98] sm:$0xf]
  %v64 = vld [vmem:[%s1 + $0x9c] sm:$0xf]
  %v65 = vld [vmem:[%s1 + $0xa0] sm:$0xf]
  %v66 = vld [vmem:[%s1 + $0xa4] sm:$0xf]
  %v67 = vld [vmem:[%s1 + $0xa8] sm:$0xf]
  %v68 = vld [vmem:[%s1 + $0xac] sm:$0xf]
  %v69 = vld [vmem:[%s1 + $0xb0] sm:$0xf]
  %v70 = vld [vmem:[%s1 + $0xb4] sm:$0xf]
  %v71 = vld [vmem:[%s1 + $0xb8] sm:$0xf]
  %v72 = vld [vmem:[%s1 + $0xbc] sm:$0xf]
  %v73 = vld [vmem:[%s1 + $0xc0] sm:$0xf]
  %v74 = vld [vmem:[%s1 + $0xc4] sm:$0xf]
  %v75 = vld [vmem:[%s1 + $0xc8] sm:$0xf]
  %v76 = vld [vmem:[%s1 + $0xcc] sm:$0xf]
  %v77 = vld [vmem:[%s1 + $0xd0] sm:$0xf]
  %v78 = vld [vmem:[%s1 + $0xd4] sm:$0xf]
  %v79 = vld [vmem:[%s1 + $0xd8] sm:$0xf]
  %v80 = vld [vmem:[%s1 + $0xdc] sm:$0xf]
  %v81 = vld [vmem:[%s1 + $0xe0] sm:$0xf]
  %v82 = vld [vmem:[%s1 + $0xe4] sm:$0xf]
  %v83 = vld [vmem:[%s1 + $0xe8] sm:$0xf]
  %v84 = vld [vmem:[%s1 + $0xec] sm:$0xf]
  %v85 = vld [vmem:[%s1 + $0xf0] sm:$0xf]
  %v86 = vld [vmem:[%s1 + $0xf4] sm:$0xf]
  %v87 = vld [vmem:[%s1 + $0xf8] sm:$0xf]
  %v88 = vld [vmem:[%s1 + $0xfc] sm:$0xf]
  %v89 = vld [vmem:[%s1 + $0x100] sm:$0xf]
  %v90 = vld [vmem:[%s1 + $0x104] sm:$0xf]
  %v91 = vld [vmem:[%s1 + $0x108] sm:$0xf]
  %v92 = vld [vmem:[%s1 + $0x10c] sm:$0xf]
  %v93 = vld [vmem:[%s1 + $0x110] sm:$0xf]
  %v94 = vld [vmem:[%s1 + $0x114] sm:$0xf]
  %v95 = vld [vmem:[%s1 + $0x118] sm:$0xf]
  %v96 = vld [vmem:[%s1 + $0x11c] sm:$0xf]
  %v97 = vld [vmem:[%s1 + $0x120] sm:$0xf]
  %v98 = vld [vmem:[%s1 + $0x124] sm:$0xf]
  %v99 = vld [vmem:[%s1 + $0x128] sm:$0xf]
  %v100 = vld [vmem:[%s1 + $0x12c] sm:$0xf]
  %v101 = vld [vmem:[%s1 + $0x130] sm:$0xf]
  %v102 = vld [vmem:[%s1 + $0x134] sm:$0xf]
  %v103 = vld [vmem:[%s1 + $0x138] sm:$0xf]
  %v104 = vld [vmem:[%s1 + $0x13c] sm:$0xf]
  %v105 = vld [vmem:[%s1 + $0x140] sm:$0xf]
  %v106 = vld [vmem:[%s1 + $0x144] sm:$0xf]
  %v107 = vld [vmem:[%s1 + $0x148] sm:$0xf]
  %v108 = vld [vmem:[%s1 + $0x14c] sm:$0xf]
  %v109 = vld [vmem:[%s1 + $0x150] sm:$0xf]
  %v110 = vld [vmem:[%s1 + $0x154] sm:$0xf]
  %v111 = vld [vmem:[%s1 + $0x158] sm:$0xf]
  %v112 = vld [vmem:[%s1 + $0x15c] sm:$0xf]
  %v113 = vld [vmem:[%s1 + $0x160] sm:$0xf]
  %v114 = vld [vmem:[%s1 + $0x164] sm:$0xf]
  %v115 = vld [vmem:[%s1 + $0x168] sm:$0xf]
  %v116 = vld [vmem:[%s1 + $0x16c] sm:$0xf]
  %v117 = vld [vmem:[%s1 + $0x170] sm:$0xf]
  %v118 = vld [vmem:[%s1 + $0x174] sm:$0xf]
  %v119 = vld [vmem:[%s1 + $0x178] sm:$0xf]
  %v120 = vld [vmem:[%s1 + $0x17c] sm:$0xf]
  %v121 = vld [vmem:[%s1 + $0x180] sm:$0xf]
  %v122 = vld [vmem:[%s1 + $0x184] sm:$0xf]
  %v123 = vld [vmem:[%s1 + $0x188] sm:$0xf]
  %v124 = vld [vmem:[%s1 + $0x18c] sm:$0xf]
  %v125 = vld [vmem:[%s1 + $0x190] sm:$0xf]
  %v126 = vld [vmem:[%s1 + $0x194] sm:$0xf]
  %v127 = vld [vmem:[%s1 + $0x198] sm:$0xf]
  %v128 = vld [vmem:[%s1 + $0x19c] sm:$0xf]
  %v129 = vld [vmem:[%s1 + $0x1a0] sm:$0xf]
  %v130 = vld [vmem:[%s1 + $0x1a4] sm:$0xf]
  %v131 = vld [vmem:[%s1 + $0x1a8] sm:$0xf]
  %v132 = vld [vmem:[%s1 + $0x1ac] sm:$0xf]
  %v133 = vld [vmem:[%s1 + $0x1b0] sm:$0xf]
  %v134 = vld [vmem:[%s1 + $0x1b4] sm:$0xf]
  %v135 = vld [vmem:[%s1 + $0x1b8] sm:$0xf]
  %v136 = vld [vmem:[%s1 + $0x1bc] sm:$0xf]
  %v137 = vld [vmem:[%s1 + $0x1c0] sm:$0xf]
  %v138 = vld [vmem:[%s1 + $0x1c4] sm:$0xf]
  %v139 = vld [vmem:[%s1 + $0x1c8] sm:$0xf]
  %v140 = vld [vmem:[%s1 + $0x1cc] sm:$0xf]
  %v141 = vld [vmem:[%s1 + $0x1d0] sm:$0xf]
  %v142 = vld [vmem:[%s1 + $0x1d4] sm:$0xf]
  %v143 = vld [vmem:[%s1 + $0x1d8] sm:$0xf]
  %v144 = vld [vmem:[%s1 + $0x1dc] sm:$0xf]
  %v145 = vld [vmem:[%s1 + $0x1e0] sm:$0xf]
  %v146 = vld [vmem:[%s1 + $0x1e4] sm:$0xf]
  %v147 = vld [vmem:[%s1 + $0x1e8] sm:$0xf]
  %v148 = vld [vmem:[%s1 + $0x1ec] sm:$0xf]
  %v149 = vld [vmem:[%s1 + $0x1f0] sm:$0xf]
  %v150 = vld [vmem:[%s1 + $0x1f4] sm:$0xf]
  %v151 = vld [vmem:[%s1 + $0x1f8] sm:$0xf]
  %v152 = vld [vmem:[%s1 + $0x1fc] sm:$0xf]
  %v157 = vunpack.c.l.b16 %v21
  %v158 = vunpack.c.h.b16 %v21
  %v159 = vunpack.c.l.b16 %v22
  %v160 = vunpack.c.h.b16 %v22
  %v161 = vunpack.c.l.b16 %v23
  %v162 = vunpack.c.h.b16 %v23
  %v163 = vunpack.c.l.b16 %v24
  %v164 = vunpack.c.h.b16 %v24
  %v165 = vpack.c.b16 %v157, %v157
  %v166 = vpack.c.b16 %v158, %v158
  %v167 = vpack.c.b16 %v159, %v159
  %v168 = vpack.c.b16 %v160, %v160
  %v169 = vpack.c.b16 %v161, %v161
  %v170 = vpack.c.b16 %v162, %v162
  %v171 = vpack.c.b16 %v163, %v163
  %v172 = vpack.c.b16 %v164, %v164
  %v309 = vunpack.c.l.b16 %v25
  %v310 = vunpack.c.l.b16 %v26
  %v311 = vunpack.c.l.b16 %v27
  %v312 = vunpack.c.l.b16 %v28
  %v313 = vunpack.c.l.b16 %v29
  %v314 = vunpack.c.l.b16 %v30
  %v315 = vunpack.c.l.b16 %v31
  %v316 = vunpack.c.l.b16 %v32
  %v317 = vunpack.c.l.b16 %v33
  %v318 = vunpack.c.l.b16 %v34
  %v319 = vunpack.c.l.b16 %v35
  %v320 = vunpack.c.l.b16 %v36
  %v321 = vunpack.c.l.b16 %v37
  %v322 = vunpack.c.l.b16 %v38
  %v323 = vunpack.c.l.b16 %v39
  %v324 = vunpack.c.l.b16 %v40
  %v325 = vunpack.c.l.b16 %v41
  %v326 = vunpack.c.l.b16 %v42
  %v327 = vunpack.c.l.b16 %v43
  %v328 = vunpack.c.l.b16 %v44
  %v329 = vunpack.c.l.b16 %v45
  %v330 = vunpack.c.l.b16 %v46
  %v331 = vunpack.c.l.b16 %v47
  %v332 = vunpack.c.l.b16 %v48
  %v333 = vunpack.c.l.b16 %v49
  %v334 = vunpack.c.l.b16 %v50
  %v335 = vunpack.c.l.b16 %v51
  %v336 = vunpack.c.l.b16 %v52
  %v337 = vunpack.c.l.b16 %v53
  %v338 = vunpack.c.l.b16 %v54
  %v339 = vunpack.c.l.b16 %v55
  %v340 = vunpack.c.l.b16 %v56
  %v341 = vunpack.c.l.b16 %v57
  %v342 = vunpack.c.l.b16 %v58
  %v343 = vunpack.c.l.b16 %v59
  %v344 = vunpack.c.l.b16 %v60
  %v345 = vunpack.c.l.b16 %v61
  %v346 = vunpack.c.l.b16 %v62
  %v347 = vunpack.c.l.b16 %v63
  %v348 = vunpack.c.l.b16 %v64
  %v349 = vunpack.c.l.b16 %v65
  %v350 = vunpack.c.l.b16 %v66
  %v351 = vunpack.c.l.b16 %v67
  %v352 = vunpack.c.l.b16 %v68
  %v353 = vunpack.c.l.b16 %v69
  %v354 = vunpack.c.l.b16 %v70
  %v355 = vunpack.c.l.b16 %v71
  %v356 = vunpack.c.l.b16 %v72
  %v357 = vunpack.c.l.b16 %v73
  %v358 = vunpack.c.l.b16 %v74
  %v359 = vunpack.c.l.b16 %v75
  %v360 = vunpack.c.l.b16 %v76
  %v361 = vunpack.c.l.b16 %v77
  %v362 = vunpack.c.l.b16 %v78
  %v363 = vunpack.c.l.b16 %v79
  %v364 = vunpack.c.l.b16 %v80
  %v365 = vunpack.c.l.b16 %v81
  %v366 = vunpack.c.l.b16 %v82
  %v367 = vunpack.c.l.b16 %v83
  %v368 = vunpack.c.l.b16 %v84
  %v369 = vunpack.c.l.b16 %v85
  %v370 = vunpack.c.l.b16 %v86
  %v371 = vunpack.c.l.b16 %v87
  %v372 = vunpack.c.l.b16 %v88
  %v373 = vunpack.c.l.b16 %v89
  %v374 = vunpack.c.l.b16 %v90
  %v375 = vunpack.c.l.b16 %v91
  %v376 = vunpack.c.l.b16 %v92
  %v377 = vunpack.c.l.b16 %v93
  %v378 = vunpack.c.l.b16 %v94
  %v379 = vunpack.c.l.b16 %v95
  %v380 = vunpack.c.l.b16 %v96
  %v381 = vunpack.c.l.b16 %v97
  %v382 = vunpack.c.l.b16 %v98
  %v383 = vunpack.c.l.b16 %v99
  %v384 = vunpack.c.l.b16 %v100
  %v385 = vunpack.c.l.b16 %v101
  %v386 = vunpack.c.l.b16 %v102
  %v387 = vunpack.c.l.b16 %v103
  %v388 = vunpack.c.l.b16 %v104
  %v389 = vunpack.c.l.b16 %v105
  %v390 = vunpack.c.l.b16 %v106
  %v391 = vunpack.c.l.b16 %v107
  %v392 = vunpack.c.l.b16 %v108
  %v393 = vunpack.c.l.b16 %v109
  %v394 = vunpack.c.l.b16 %v110
  %v395 = vunpack.c.l.b16 %v111
  %v396 = vunpack.c.l.b16 %v112
  %v397 = vunpack.c.l.b16 %v113
  %v398 = vunpack.c.l.b16 %v114
  %v399 = vunpack.c.l.b16 %v115
  %v400 = vunpack.c.l.b16 %v116
  %v401 = vunpack.c.l.b16 %v117
  %v402 = vunpack.c.l.b16 %v118
  %v403 = vunpack.c.l.b16 %v119
  %v404 = vunpack.c.l.b16 %v120
  %v405 = vunpack.c.l.b16 %v121
  %v406 = vunpack.c.l.b16 %v122
  %v407 = vunpack.c.l.b16 %v123
  %v408 = vunpack.c.l.b16 %v124
  %v409 = vunpack.c.l.b16 %v125
  %v410 = vunpack.c.l.b16 %v126
  %v411 = vunpack.c.l.b16 %v127
  %v412 = vunpack.c.l.b16 %v128
  %v413 = vunpack.c.l.b16 %v129
  %v414 = vunpack.c.l.b16 %v130
  %v415 = vunpack.c.l.b16 %v131
  %v416 = vunpack.c.l.b16 %v132
  %v417 = vunpack.c.l.b16 %v133
  %v418 = vunpack.c.l.b16 %v134
  %v419 = vunpack.c.l.b16 %v135
  %v420 = vunpack.c.l.b16 %v136
  %v421 = vunpack.c.l.b16 %v137
  %v422 = vunpack.c.l.b16 %v138
  %v423 = vunpack.c.l.b16 %v139
  %v424 = vunpack.c.l.b16 %v140
  %v425 = vunpack.c.l.b16 %v141
  %v426 = vunpack.c.l.b16 %v142
  %v427 = vunpack.c.l.b16 %v143
  %v428 = vunpack.c.l.b16 %v144
  %v429 = vunpack.c.l.b16 %v145
  %v430 = vunpack.c.l.b16 %v146
  %v431 = vunpack.c.l.b16 %v147
  %v432 = vunpack.c.l.b16 %v148
  %v433 = vunpack.c.l.b16 %v149
  %v434 = vunpack.c.l.b16 %v150
  %v435 = vunpack.c.l.b16 %v151
  %v436 = vunpack.c.l.b16 %v152
  %v437 = vpack.c.b16 %v310, %v309
  %v438 = vpack.c.b16 %v312, %v311
  %v439 = vpack.c.b16 %v314, %v313
  %v440 = vpack.c.b16 %v316, %v315
  %v441 = vpack.c.b16 %v318, %v317
  %v442 = vpack.c.b16 %v320, %v319
  %v443 = vpack.c.b16 %v322, %v321
  %v444 = vpack.c.b16 %v324, %v323
  %v445 = vpack.c.b16 %v326, %v325
  %v446 = vpack.c.b16 %v328, %v327
  %v447 = vpack.c.b16 %v330, %v329
  %v448 = vpack.c.b16 %v332, %v331
  %v449 = vpack.c.b16 %v334, %v333
  %v450 = vpack.c.b16 %v336, %v335
  %v451 = vpack.c.b16 %v338, %v337
  %v452 = vpack.c.b16 %v340, %v339
  %v453 = vpack.c.b16 %v342, %v341
  %v454 = vpack.c.b16 %v344, %v343
  %v455 = vpack.c.b16 %v346, %v345
  %v456 = vpack.c.b16 %v348, %v347
  %v457 = vpack.c.b16 %v350, %v349
  %v458 = vpack.c.b16 %v352, %v351
  %v459 = vpack.c.b16 %v354, %v353
  %v460 = vpack.c.b16 %v356, %v355
  %v461 = vpack.c.b16 %v358, %v357
  %v462 = vpack.c.b16 %v360, %v359
  %v463 = vpack.c.b16 %v362, %v361
  %v464 = vpack.c.b16 %v364, %v363
  %v465 = vpack.c.b16 %v366, %v365
  %v466 = vpack.c.b16 %v368, %v367
  %v467 = vpack.c.b16 %v370, %v369
  %v468 = vpack.c.b16 %v372, %v371
  %v469 = vpack.c.b16 %v374, %v373
  %v470 = vpack.c.b16 %v376, %v375
  %v471 = vpack.c.b16 %v378, %v377
  %v472 = vpack.c.b16 %v380, %v379
  %v473 = vpack.c.b16 %v382, %v381
  %v474 = vpack.c.b16 %v384, %v383
  %v475 = vpack.c.b16 %v386, %v385
  %v476 = vpack.c.b16 %v388, %v387
  %v477 = vpack.c.b16 %v390, %v389
  %v478 = vpack.c.b16 %v392, %v391
  %v479 = vpack.c.b16 %v394, %v393
  %v480 = vpack.c.b16 %v396, %v395
  %v481 = vpack.c.b16 %v398, %v397
  %v482 = vpack.c.b16 %v400, %v399
  %v483 = vpack.c.b16 %v402, %v401
  %v484 = vpack.c.b16 %v404, %v403
  %v485 = vpack.c.b16 %v406, %v405
  %v486 = vpack.c.b16 %v408, %v407
  %v487 = vpack.c.b16 %v410, %v409
  %v488 = vpack.c.b16 %v412, %v411
  %v489 = vpack.c.b16 %v414, %v413
  %v490 = vpack.c.b16 %v416, %v415
  %v491 = vpack.c.b16 %v418, %v417
  %v492 = vpack.c.b16 %v420, %v419
  %v493 = vpack.c.b16 %v422, %v421
  %v494 = vpack.c.b16 %v424, %v423
  %v495 = vpack.c.b16 %v426, %v425
  %v496 = vpack.c.b16 %v428, %v427
  %v497 = vpack.c.b16 %v430, %v429
  %v498 = vpack.c.b16 %v432, %v431
  %v499 = vpack.c.b16 %v434, %v433
  %v500 = vpack.c.b16 %v436, %v435
  %565 = vmatprep.subr.bf16.mxu0 0
  %566 = vmatpush1.bf16.msra.mxu0 %v444
  %567 = vmatprep.subr.bf16.mxu0 0
  %568 = vmatpush1.bf16.msra.mxu0 %v443
  %569 = vmatprep.subr.bf16.mxu0 0
  %570 = vmatpush1.bf16.msra.mxu0 %v442
  %571 = vmatprep.subr.bf16.mxu0 0
  %572 = vmatpush1.bf16.msra.mxu0 %v441
  %573 = vmatprep.subr.bf16.mxu0 0
  %574 = vmatpush1.bf16.msra.mxu0 %v440
  %575 = vmatprep.subr.bf16.mxu0 0
  %576 = vmatpush1.bf16.msra.mxu0 %v439
  %577 = vmatprep.subr.bf16.mxu0 0
  %578 = vmatpush1.bf16.msra.mxu0 %v438
  %579 = vmatprep.subr.bf16.mxu0 0
  %580 = vmatpush1.bf16.msra.mxu0 %v437
  %581 = vmatprep.subr.bf16.mxu0 0
  %582 = vmatpush2.bf16.msra.mxu0 %v452
  %583 = vmatprep.subr.bf16.mxu0 0
  %584 = vmatpush2.bf16.msra.mxu0 %v451
  %585 = vmatprep.subr.bf16.mxu0 0
  %586 = vmatpush2.bf16.msra.mxu0 %v450
  %587 = vmatprep.subr.bf16.mxu0 0
  %588 = vmatpush2.bf16.msra.mxu0 %v449
  %589 = vmatprep.subr.bf16.mxu0 0
  %590 = vmatpush2.bf16.msra.mxu0 %v448
  %591 = vmatprep.subr.bf16.mxu0 0
  %592 = vmatpush2.bf16.msra.mxu0 %v447
  %593 = vmatprep.subr.bf16.mxu0 0
  %594 = vmatpush2.bf16.msra.mxu0 %v446
  %595 = vmatprep.subr.bf16.mxu0 0
  %596 = vmatpush2.bf16.msra.mxu0 %v445
  %597 = vmatprep.mubr.bf16.mxu0 %v166
  %598 = vmatmul.mubr.bf16.gmra.mxu0 %v165
  %v599 = vpop.f32.mrf.mxu0
  %v600 = vadd.f32 0.0, %v599
  %v601 = vpop.f32.mrf.mxu0
  %v602 = vpop.f32.mrf.mxu0
  %v603 = vpop.f32.mrf.mxu0
  %604 = vdwg.mxu0
  %605 = vmatprep.subr.bf16.mxu0 0
  %606 = vmatpush1.bf16.msra.mxu0 %v460
  %607 = vmatprep.subr.bf16.mxu0 0
  %608 = vmatpush1.bf16.msra.mxu0 %v459
  %609 = vmatprep.subr.bf16.mxu0 0
  %610 = vmatpush1.bf16.msra.mxu0 %v458
  %611 = vmatprep.subr.bf16.mxu0 0
  %612 = vmatpush1.bf16.msra.mxu0 %v457
  %613 = vmatprep.subr.bf16.mxu0 0
  %614 = vmatpush1.bf16.msra.mxu0 %v456
  %615 = vmatprep.subr.bf16.mxu0 0
  %616 = vmatpush1.bf16.msra.mxu0 %v455
  %617 = vmatprep.subr.bf16.mxu0 0
  %618 = vmatpush1.bf16.msra.mxu0 %v454
  %619 = vmatprep.subr.bf16.mxu0 0
  %620 = vmatpush1.bf16.msra.mxu0 %v453
  %621 = vmatprep.subr.bf16.mxu0 0
  %622 = vmatpush2.bf16.msra.mxu0 %v468
  %623 = vmatprep.subr.bf16.mxu0 0
  %624 = vmatpush2.bf16.msra.mxu0 %v467
  %625 = vmatprep.subr.bf16.mxu0 0
  %626 = vmatpush2.bf16.msra.mxu0 %v466
  %627 = vmatprep.subr.bf16.mxu0 0
  %628 = vmatpush2.bf16.msra.mxu0 %v465
  %629 = vmatprep.subr.bf16.mxu0 0
  %630 = vmatpush2.bf16.msra.mxu0 %v464
  %631 = vmatprep.subr.bf16.mxu0 0
  %632 = vmatpush2.bf16.msra.mxu0 %v463
  %633 = vmatprep.subr.bf16.mxu0 0
  %634 = vmatpush2.bf16.msra.mxu0 %v462
  %635 = vmatprep.subr.bf16.mxu0 0
  %636 = vmatpush2.bf16.msra.mxu0 %v461
  %637 = vmatprep.mubr.bf16.mxu0 %v168
  %638 = vmatmul.mubr.bf16.gmra.mxu0 %v167
  %v639 = vpop.f32.mrf.mxu0
  %v640 = vadd.f32 %v600, %v639
  %v641 = vpop.f32.mrf.mxu0
  %v642 = vpop.f32.mrf.mxu0
  %v643 = vpop.f32.mrf.mxu0
  %644 = vdwg.mxu0
  %645 = vmatprep.subr.bf16.mxu0 0
  %646 = vmatpush1.bf16.msra.mxu0 %v476
  %647 = vmatprep.subr.bf16.mxu0 0
  %648 = vmatpush1.bf16.msra.mxu0 %v475
  %649 = vmatprep.subr.bf16.mxu0 0
  %650 = vmatpush1.bf16.msra.mxu0 %v474
  %651 = vmatprep.subr.bf16.mxu0 0
  %652 = vmatpush1.bf16.msra.mxu0 %v473
  %653 = vmatprep.subr.bf16.mxu0 0
  %654 = vmatpush1.bf16.msra.mxu0 %v472
  %655 = vmatprep.subr.bf16.mxu0 0
  %656 = vmatpush1.bf16.msra.mxu0 %v471
  %657 = vmatprep.subr.bf16.mxu0 0
  %658 = vmatpush1.bf16.msra.mxu0 %v470
  %659 = vmatprep.subr.bf16.mxu0 0
  %660 = vmatpush1.bf16.msra.mxu0 %v469
  %661 = vmatprep.subr.bf16.mxu0 0
  %662 = vmatpush2.bf16.msra.mxu0 %v484
  %663 = vmatprep.subr.bf16.mxu0 0
  %664 = vmatpush2.bf16.msra.mxu0 %v483
  %665 = vmatprep.subr.bf16.mxu0 0
  %666 = vmatpush2.bf16.msra.mxu0 %v482
  %667 = vmatprep.subr.bf16.mxu0 0
  %668 = vmatpush2.bf16.msra.mxu0 %v481
  %669 = vmatprep.subr.bf16.mxu0 0
  %670 = vmatpush2.bf16.msra.mxu0 %v480
  %671 = vmatprep.subr.bf16.mxu0 0
  %672 = vmatpush2.bf16.msra.mxu0 %v479
  %673 = vmatprep.subr.bf16.mxu0 0
  %674 = vmatpush2.bf16.msra.mxu0 %v478
  %675 = vmatprep.subr.bf16.mxu0 0
  %676 = vmatpush2.bf16.msra.mxu0 %v477
  %677 = vmatprep.mubr.bf16.mxu0 %v170
  %678 = vmatmul.mubr.bf16.gmra.mxu0 %v169
  %v679 = vpop.f32.mrf.mxu0
  %v680 = vadd.f32 %v640, %v679
  %v681 = vpop.f32.mrf.mxu0
  %v682 = vpop.f32.mrf.mxu0
  %v683 = vpop.f32.mrf.mxu0
  %684 = vdwg.mxu0
  %685 = vmatprep.subr.bf16.mxu0 0
  %686 = vmatpush1.bf16.msra.mxu0 %v492
  %687 = vmatprep.subr.bf16.mxu0 0
  %688 = vmatpush1.bf16.msra.mxu0 %v491
  %689 = vmatprep.subr.bf16.mxu0 0
  %690 = vmatpush1.bf16.msra.mxu0 %v490
  %691 = vmatprep.subr.bf16.mxu0 0
  %692 = vmatpush1.bf16.msra.mxu0 %v489
  %693 = vmatprep.subr.bf16.mxu0 0
  %694 = vmatpush1.bf16.msra.mxu0 %v488
  %695 = vmatprep.subr.bf16.mxu0 0
  %696 = vmatpush1.bf16.msra.mxu0 %v487
  %697 = vmatprep.subr.bf16.mxu0 0
  %698 = vmatpush1.bf16.msra.mxu0 %v486
  %699 = vmatprep.subr.bf16.mxu0 0
  %700 = vmatpush1.bf16.msra.mxu0 %v485
  %701 = vmatprep.subr.bf16.mxu0 0
  %702 = vmatpush2.bf16.msra.mxu0 %v500
  %703 = vmatprep.subr.bf16.mxu0 0
  %704 = vmatpush2.bf16.msra.mxu0 %v499
  %705 = vmatprep.subr.bf16.mxu0 0
  %706 = vmatpush2.bf16.msra.mxu0 %v498
  %707 = vmatprep.subr.bf16.mxu0 0
  %708 = vmatpush2.bf16.msra.mxu0 %v497
  %709 = vmatprep.subr.bf16.mxu0 0
  %710 = vmatpush2.bf16.msra.mxu0 %v496
  %711 = vmatprep.subr.bf16.mxu0 0
  %712 = vmatpush2.bf16.msra.mxu0 %v495
  %713 = vmatprep.subr.bf16.mxu0 0
  %714 = vmatpush2.bf16.msra.mxu0 %v494
  %715 = vmatprep.subr.bf16.mxu0 0
  %716 = vmatpush2.bf16.msra.mxu0 %v493
  %717 = vmatprep.mubr.bf16.mxu0 %v172
  %718 = vmatmul.mubr.bf16.gmra.mxu0 %v171
  %v719 = vpop.f32.mrf.mxu0
  %v720 = vadd.f32 %v680, %v719
  %v721 = vpop.f32.mrf.mxu0
  %v722 = vpop.f32.mrf.mxu0
  %v723 = vpop.f32.mrf.mxu0
  %724 = vdwg.mxu0
  %v725 = vadd.f32 %v20, %v720
  %726 = vst [vmem:[#allocation2] sm:$0xff] %v725
  // Predicated region
  $region18: #{discriminator_forward.7} parent=0 // pred_check
    %p727 = pneg %p15
  $region19: #{discriminator_forward.7} parent=0 // pred_check_branch
    %729 = sbr.rel (%p727) target = $region21
  $region20: #{discriminator_forward.7} parent=0 // pred_region
    %v730 = vld [vmem:[#allocation2] sm:$0xff]
    %v731 = vld [vmem:[%s2] sm:$0x1]
    %v733 = vlaneseq
    %v734 = vshrl.u32 %v733, 7
    %v735 = vsub.s32 0, %v734
    %v736 = vrot.slane %v731, %v735
    %v738 = vadd.f32 %v730, %v736
    %739 = vst [vmem:[%s3] sm:$0xff] %v738
  $region21: #{discriminator_forward.7} parent=0 // pred_fallthru
    _
  // Predicated region
  $region22: #{discriminator_forward.7} parent=0 // pred_check
    _
  $region23: #{discriminator_forward.7} parent=0 // pred_check_branch
    %741 = sbr.rel (0) target = $region25
  $region24: #{discriminator_forward.7} parent=0 // pred_region
    _
  $region25: #{discriminator_forward.7} parent=0 // pred_fallthru
    _
  // Predicated region
  $region26: #{discriminator_forward.7} parent=0 // pred_check
    _
  $region27: #{discriminator_forward.7} parent=0 // pred_check_branch
    %743 = sbr.rel (0) target = $region29
  $region28: #{discriminator_forward.7} parent=0 // pred_region
    _
  $region29: #{discriminator_forward.7} parent=0 // pred_fallthru
    _

// kernel: discriminator_forward.4
$region0: #{discriminator_forward.4}
  #allocation0 [shape = 'u32[]', space=smem, size = 0x4, offset = 0x4, fixed_abs, tag = 'smem constant byte address 0x4 - core index']
  #allocation1 [shape = 'u32[144,128]{1,0:T(1,128)}', space=vmem, size = 0x12000, scoped, tag = 'internal scratch']
  #allocation2 [shape = 'f32[8,512]{1,0:T(8,128)}', space=vmem, size = 0x4000, scoped, tag = 'scratch operand']
  %s0 = inlined_call_operand.vmem [shape: bf16[8,24576], index: 0, kind: input, shape index: {}]
  %s1 = inlined_call_operand.hbm [shape: bf16[24576,4096], index: 1, kind: input, shape index: {}]
  %s2 = inlined_call_operand.hbm [shape: f32[1,4096], index: 2, kind: input, shape index: {}]
  %s3 = inlined_call_operand.vmem [shape: bf16[8,4096], index: 3, kind: output, shape index: {}]
  %s4 = sld [smem:[#allocation0]]
  $region61: #{discriminator_forward.4} parent=0
    _
  %s6 = ssub.s32 1, %s4
  %s7 = scalar_select 0, %s6, %s4
  $region1: #{discriminator_forward.4} parent=0
    #allocation3 [shape = 'u8[2097152]{0}', space=vmem, size = 0x200000, scoped, tag = 'input window, operand 1']
    #allocation4 [shape = 's32[2]{0}', space=sflag, size = 0x8, scoped, tag = 'scoped memory for discriminator_forward.4']
    #allocation5 [shape = 'u8[4096]{0}', space=vmem, size = 0x1000, scoped, tag = 'input window, operand 2']
    #allocation6 [shape = 's32[2]{0}', space=sflag, size = 0x8, scoped, tag = 'scoped memory for discriminator_forward.4']
    %8 = vsyncpa [#allocation4], 0
    %s9 = scalar_lea.sflag [#allocation4], 1
    %10 = vsyncpa %s9, 0
    %11 = vsyncpa [#allocation6], 0
    %s12 = scalar_lea.sflag [#allocation6], 1
    %13 = vsyncpa %s12, 0
    loop: start=0, step=1, limit=194
    $region2: #{discriminator_forward.4} parent=1 // loop_pre_header
      _
    $region3: #{discriminator_forward.4} parent=1 // loop_header
      %s15 = sphi 0, %s19
      %p16 = scmp.ge.s32.totalorder %s15, 194
      %s22 = sphi 0, %s34
      %s23 = sphi 0, %s30
      %s24 = sphi 0, %s22
      %s25 = sphi 0, %s23
      %s26 = sphi 0, %s24
      %s27 = sphi 0, %s25
      %s37 = sphi 0, %s39
      %s40 = sphi 0, %s37
      %s41 = sphi 0, %s40
      %s57 = sphi 0, %s41
      %s65 = sphi 0, %s67
      %s68 = sphi 0, %s65
      %s69 = sphi 0, %s68
      %s85 = sphi 0, %s69
      %s91 = sphi 0, %s93
      %s94 = sphi 0, %s91
      %s95 = sphi 0, %s94
      %s111 = sphi 0, %s95
      %s117 = sphi 0, %s119
      %s120 = sphi 0, %s117
      %s121 = sphi 0, %s120
      %s137 = sphi 0, %s121
    $region4: #{discriminator_forward.4} parent=1 // loop_header_branch
      %18 = sbr.rel (%p16) target = $region8
    $region5: #{discriminator_forward.4} parent=1 // loop_body
      %s20 = ssub.s32 %s15, 1
      %s21 = ssub.s32 %s15, 2
      %s28 = sadd.s32 1, %s23
      %p29 = scmp.ge.s32.totalorder %s28, 24
      %s30 = scalar_select %p29, 0, %s28
      %s31 = sadd.s32 1, %s22
      %s32 = scalar_select %p29, %s31, %s22
      %p33 = scmp.ge.s32.totalorder %s32, 8
      %s34 = scalar_select %p33, 0, %s32
      %s35 = ssub.s32 %s23, %s30
      %p36 = scmp.eq.s32.totalorder %s35, 0
      %s38 = sadd.s32 %s37, 1
      %s39 = scalar_select %p36, %s37, %s38
      %p42 = pneg %p36
      %p43 = scmp.eq.s32.totalorder %s15, 191
      %p44 = por %p42, %p43
      %p45 = scmp.ne.s32.totalorder %s37, %s40
      %p46 = scmp.eq.s32.totalorder %s15, 0
      %p47 = por %p45, %p46
      %p48 = scmp.ne.s32.totalorder %s37, %s40
      %p49 = scmp.eq.s32.totalorder %s20, 191
      %p50 = por %p48, %p49
      %p51 = scmp.ne.s32.totalorder %s40, %s41
      %p52 = scmp.eq.s32.totalorder %s20, 0
      %p53 = por %p51, %p52
      %p54 = scmp.ne.s32.totalorder %s40, %s41
      %p55 = scmp.eq.s32.totalorder %s21, 191
      %p56 = por %p54, %p55
      %p58 = scmp.ne.s32.totalorder %s41, %s57
      %p59 = scmp.eq.s32.totalorder %s21, 0
      %p60 = por %p58, %p59
      %s61 = ssub.s32 %s23, %s30
      %s62 = ssub.s32 %s22, %s34
      %s63 = sor.u32 %s61, %s62
      %p64 = scmp.eq.s32.totalorder %s63, 0
      %s66 = sadd.s32 %s65, 1
      %s67 = scalar_select %p64, %s65, %s66
      %p70 = pneg %p64
      %p71 = scmp.eq.s32.totalorder %s15, 191
      %p72 = por %p70, %p71
      %p73 = scmp.ne.s32.totalorder %s65, %s68
      %p74 = scmp.eq.s32.totalorder %s15, 0
      %p75 = por %p73, %p74
      %p76 = scmp.ne.s32.totalorder %s65, %s68
      %p77 = scmp.eq.s32.totalorder %s20, 191
      %p78 = por %p76, %p77
      %p79 = scmp.ne.s32.totalorder %s68, %s69
      %p80 = scmp.eq.s32.totalorder %s20, 0
      %p81 = por %p79, %p80
      %p82 = scmp.ne.s32.totalorder %s68, %s69
      %p83 = scmp.eq.s32.totalorder %s21, 191
      %p84 = por %p82, %p83
      %p86 = scmp.ne.s32.totalorder %s69, %s85
      %p87 = scmp.eq.s32.totalorder %s21, 0
      %p88 = por %p86, %p87
      %s89 = ssub.s32 %s22, %s34
      %p90 = scmp.eq.s32.totalorder %s89, 0
      %s92 = sadd.s32 %s91, 1
      %s93 = scalar_select %p90, %s91, %s92
      %p96 = pneg %p90
      %p97 = scmp.eq.s32.totalorder %s15, 191
      %p98 = por %p96, %p97
      %p99 = scmp.ne.s32.totalorder %s91, %s94
      %p100 = scmp.eq.s32.totalorder %s15, 0
      %p101 = por %p99, %p100
      %p102 = scmp.ne.s32.totalorder %s91, %s94
      %p103 = scmp.eq.s32.totalorder %s20, 191
      %p104 = por %p102, %p103
      %p105 = scmp.ne.s32.totalorder %s94, %s95
      %p106 = scmp.eq.s32.totalorder %s20, 0
      %p107 = por %p105, %p106
      %p108 = scmp.ne.s32.totalorder %s94, %s95
      %p109 = scmp.eq.s32.totalorder %s21, 191
      %p110 = por %p108, %p109
      %p112 = scmp.ne.s32.totalorder %s95, %s111
      %p113 = scmp.eq.s32.totalorder %s21, 0
      %p114 = por %p112, %p113
      %s115 = ssub.s32 %s22, %s34
      %p116 = scmp.eq.s32.totalorder %s115, 0
      %s118 = sadd.s32 %s117, 1
      %s119 = scalar_select %p116, %s117, %s118
      %p122 = pneg %p116
      %p123 = scmp.eq.s32.totalorder %s15, 191
      %p124 = por %p122, %p123
      %p125 = scmp.ne.s32.totalorder %s117, %s120
      %p126 = scmp.eq.s32.totalorder %s15, 0
      %p127 = por %p125, %p126
      %p128 = scmp.ne.s32.totalorder %s117, %s120
      %p129 = scmp.eq.s32.totalorder %s20, 191
      %p130 = por %p128, %p129
      %p131 = scmp.ne.s32.totalorder %s120, %s121
      %p132 = scmp.eq.s32.totalorder %s20, 0
      %p133 = por %p131, %p132
      %p134 = scmp.ne.s32.totalorder %s120, %s121
      %p135 = scmp.eq.s32.totalorder %s21, 191
      %p136 = por %p134, %p135
      %p138 = scmp.ne.s32.totalorder %s121, %s137
      %p139 = scmp.eq.s32.totalorder %s21, 0
      %p140 = por %p138, %p139
      %p141 = scmp.le.s32.totalorder 1, %s15
      %p142 = scmp.lt.s32.totalorder %s15, 193
      %p143 = pnand %p141, %p142
      %p144 = pneg %p143
      // Predicated region
      $region9: #{discriminator_forward.4} parent=5 // pred_check
        _
      $region10: #{discriminator_forward.4} parent=5 // pred_check_branch
        %146 = sbr.rel (%p143) target = $region12
      $region11: #{discriminator_forward.4} parent=5 // pred_region
        %s147 = ssub.s32 %s15, 1
      $region12: #{discriminator_forward.4} parent=5 // pred_fallthru
        _
      %p148 = scmp.lt.s32.totalorder %s15, 192
      // Predicated region
      $region13: #{discriminator_forward.4} parent=5 // pred_check
        %p149 = pneg %p148
      $region14: #{discriminator_forward.4} parent=5 // pred_check_branch
        %151 = sbr.rel (%p149) target = $region16
      $region15: #{discriminator_forward.4} parent=5 // pred_region
        // Predicated region
        $region17: #{discriminator_forward.4} parent=15 // pred_check
          %p152 = pneg %p47
        $region18: #{discriminator_forward.4} parent=15 // pred_check_branch
          %154 = sbr.rel (%p152) target = $region20
        $region19: #{discriminator_forward.4} parent=15 // pred_region
          %s155 = smul.u32 8, %s23
          %p156 = scmp.lt.s32.totalorder %s155, 191
          %s157 = scalar_select %p156, %s155, 191
          %s158 = smul.addr %s157, 4
          %s159 = scalar_lea.vmem %s0, %s158
          %s160 = smul.u32 8, %s23
        $region20: #{discriminator_forward.4} parent=15 // pred_fallthru
          _
        // Predicated region
        $region21: #{discriminator_forward.4} parent=15 // pred_check
          %p161 = pneg %p75
        $region22: #{discriminator_forward.4} parent=15 // pred_check_branch
          %163 = sbr.rel (%p161) target = $region24
        $region23: #{discriminator_forward.4} parent=15 // pred_region
          %s164 = sand.u32 %s65, 1
          %s165 = scalar_lea.sflag [#allocation4], %s164
          %s166 = sand.u32 %s65, 1
          %s167 = smul.addr %s166, 2048
          %s168 = scalar_lea.vmem [#allocation3], %s167
          %s169 = smul.u32 128, %s23
          %s170 = smul.u32 4, %s22
          %s172 = ssub.s32 32768, 32768
          %173 = vsyncadd %s165, %s172
          %s174 = smul.addr %s169, 32
          %s175 = sadd.s32 %s170, %s174
          %s176 = smul.addr %s175, 64
          %s177 = scalar_lea.hbm %s1, %s176
          %s178 = sshll.u32 %s168, 4
          %s179 = int_to_ptr.vmem [resolvable:$true] %s178
          %184 = dma.hbm_to_vmem [thread:$0]  %s177, 32768, %s179, %s165, 2048, 256, 16
        $region24: #{discriminator_forward.4} parent=15 // pred_fallthru
          _
        // Predicated region
        $region25: #{discriminator_forward.4} parent=15 // pred_check
          %p185 = pneg %p101
        $region26: #{discriminator_forward.4} parent=15 // pred_check_branch
          %187 = sbr.rel (%p185) target = $region28
        $region27: #{discriminator_forward.4} parent=15 // pred_region
          %s188 = sand.u32 %s91, 1
          %s189 = scalar_lea.sflag [#allocation6], %s188
          %s190 = sand.u32 %s91, 1
          %s191 = smul.addr %s190, 4
          %s192 = scalar_lea.vmem [#allocation5], %s191
          %s193 = smul.u32 4, %s22
          %s195 = ssub.s32 64, 64
          %196 = vsyncadd %s189, %s195
          %s197 = smul.addr %s193, 16
          %s198 = scalar_lea.hbm %s2, %s197
          %s200 = sshll.u32 %s192, 4
          %s201 = int_to_ptr.vmem [resolvable:$true] %s200
          %203 = dma.hbm_to_vmem [thread:$0]  %s198, 64, %s201, %s189
        $region28: #{discriminator_forward.4} parent=15 // pred_fallthru
          _
      $region16: #{discriminator_forward.4} parent=5 // pred_fallthru
        _
      %p204 = scmp.le.s32.totalorder 1, %s15
      %p205 = scmp.lt.s32.totalorder %s15, 193
      %p206 = pnand %p204, %p205
      %p207 = pneg %p206
      // Predicated region
      $region29: #{discriminator_forward.4} parent=5 // pred_check
        _
      $region30: #{discriminator_forward.4} parent=5 // pred_check_branch
        %209 = sbr.rel (%p206) target = $region32
      $region31: #{discriminator_forward.4} parent=5 // pred_region
        %s210 = ssub.s32 %s15, 1
        %s211 = sand.u32 %s68, 1
        %s212 = scalar_lea.sflag [#allocation4], %s211
        %s213 = sand.u32 %s68, 1
        %s214 = smul.addr %s213, 2048
        %s215 = scalar_lea.vmem [#allocation3], %s214
        // Predicated region
        $region33: #{discriminator_forward.4} parent=31 // pred_check
          %p216 = pneg %p81
        $region34: #{discriminator_forward.4} parent=31 // pred_check_branch
          %218 = sbr.rel (%p216) target = $region36
        $region35: #{discriminator_forward.4} parent=31 // pred_region
          %219 = dma.done %s212, 32768
        $region36: #{discriminator_forward.4} parent=31 // pred_fallthru
          _
        %s220 = sand.u32 %s94, 1
        %s221 = scalar_lea.sflag [#allocation6], %s220
        %s222 = sand.u32 %s94, 1
        %s223 = smul.addr %s222, 4
        %s224 = scalar_lea.vmem [#allocation5], %s223
        // Predicated region
        $region37: #{discriminator_forward.4} parent=31 // pred_check
          %p225 = pneg %p107
        $region38: #{discriminator_forward.4} parent=31 // pred_check_branch
          %227 = sbr.rel (%p225) target = $region40
        $region39: #{discriminator_forward.4} parent=31 // pred_region
          %228 = dma.done %s221, 64
        $region40: #{discriminator_forward.4} parent=31 // pred_fallthru
          _
        %s229 = smul.u32 8, %s25
        %p230 = scmp.lt.s32.totalorder %s229, 191
        %s231 = scalar_select %p230, %s229, 191
        %s232 = smul.addr %s231, 4
        %s233 = scalar_lea.vmem %s0, %s232
        %p234 = pneg %p53
        %p235 = pneg %p50
        %s236 = sand.u32 %s68, 1
        %s237 = scalar_lea.sflag [#allocation4], %s236
        %s238 = sand.u32 %s68, 1
        %s239 = smul.addr %s238, 2048
        %s240 = scalar_lea.vmem [#allocation3], %s239
        %p241 = pneg %p81
        %p242 = pneg %p78
        %s243 = sand.u32 %s94, 1
        %s244 = scalar_lea.sflag [#allocation6], %s243
        %s245 = sand.u32 %s94, 1
        %s246 = smul.addr %s245, 4
        %s247 = scalar_lea.vmem [#allocation5], %s246
        %p248 = pneg %p107
        %p249 = pneg %p104
        %p250 = pneg %p133
        %p251 = pneg %p130
        %s252 = smul.u32 4, %s24
        %p253 = scmp.lt.s32.totalorder %s252, 31
        %s254 = scalar_select %p253, %s252, 31
        %s255 = smul.addr %s254, 4
        %s256 = scalar_lea.vmem %s3, %s255
        %s257 = smul.u32 8, %s25
        %p258 = scmp.lt.s32.totalorder %s257, 191
        %s259 = scalar_select %p258, %s257, 191
        %s260 = smul.addr %s259, 4
        %s261 = scalar_lea.vmem %s0, %s260
        %s262 = smul.u32 8, %s25
        %s263 = smul.u32 128, %s25
        %s264 = smul.u32 4, %s24
        %s265 = smul.u32 4, %s24
        %s266 = smul.u32 4, %s24
        %p267 = scmp.lt.s32.totalorder %s266, 31
        %s268 = scalar_select %p267, %s266, 31
        %s269 = smul.addr %s268, 4
        %s270 = scalar_lea.vmem %s3, %s269
        %s271 = smul.u32 4, %s24
        %p272 = scmp.eq.s32.totalorder %s25, 0
        // Predicated region
        $region41: #{discriminator_forward.4} parent=31 // pred_check
          %p273 = pneg %p272
        $region42: #{discriminator_forward.4} parent=31 // pred_check_branch
          %275 = sbr.rel (%p273) target = $region44
        $region43: #{discriminator_forward.4} parent=31 // pred_region
          %276 = vst [vmem:[#allocation2] sm:$0xff] 0.0
          %277 = vst [vmem:[#allocation2 + $0x8] sm:$0xff] 0.0
          %278 = vst [vmem:[#allocation2 + $0x10] sm:$0xff] 0.0
          %279 = vst [vmem:[#allocation2 + $0x18] sm:$0xff] 0.0
        $region44: #{discriminator_forward.4} parent=31 // pred_fallthru
          _
        %v280 = vld [vmem:[#allocation2] sm:$0xff]
        %v281 = vld [vmem:[#allocation2 + $0x8] sm:$0xff]
        %v282 = vld [vmem:[#allocation2 + $0x10] sm:$0xff]
        %v283 = vld [vmem:[#allocation2 + $0x18] sm:$0xff]
        %v284 = vld [vmem:[%s261] sm:$0xff]
        %v285 = vld [vmem:[%s261 + $0x8] sm:$0xff]
        %v286 = vld [vmem:[%s261 + $0x10] sm:$0xff]
        %v287 = vld [vmem:[%s261 + $0x18] sm:$0xff]
        %v288 = vld [vmem:[%s215] sm:$0xff]
        %v289 = vld [vmem:[%s215 + $0x8] sm:$0xff]
        %v290 = vld [vmem:[%s215 + $0x10] sm:$0xff]
        %v291 = vld [vmem:[%s215 + $0x18] sm:$0xff]
        %v292 = vld [vmem:[%s215 + $0x20] sm:$0xff]
        %v293 = vld [vmem:[%s215 + $0x28] sm:$0xff]
        %v294 = vld [vmem:[%s215 + $0x30] sm:$0xff]
        %v295 = vld [vmem:[%s215 + $0x38] sm:$0xff]
        %v296 = vld [vmem:[%s215 + $0x40] sm:$0xff]
        %v297 = vld [vmem:[%s215 + $0x48] sm:$0xff]
        %v298 = vld [vmem:[%s215 + $0x50] sm:$0xff]
        %v299 = vld [vmem:[%s215 + $0x58] sm:$0xff]
        %v300 = vld [vmem:[%s215 + $0x60] sm:$0xff]
        %v301 = vld [vmem:[%s215 + $0x68] sm:$0xff]
        %v302 = vld [vmem:[%s215 + $0x70] sm:$0xff]
        %v303 = vld [vmem:[%s215 + $0x78] sm:$0xff]
        %v304 = vld [vmem:[%s215 + $0x80] sm:$0xff]
        %v305 = vld [vmem:[%s215 + $0x88] sm:$0xff]
        %v306 = vld [vmem:[%s215 + $0x90] sm:$0xff]
        %v307 = vld [vmem:[%s215 + $0x98] sm:$0xff]
        %v308 = vld [vmem:[%s215 + $0xa0] sm:$0xff]
        %v309 = vld [vmem:[%s215 + $0xa8] sm:$0xff]
        %v310 = vld [vmem:[%s215 + $0xb0] sm:$0xff]
        %v311 = vld [vmem:[%s215 + $0xb8] sm:$0xff]
        %v312 = vld [vmem:[%s215 + $0xc0] sm:$0xff]
        %v313 = vld [vmem:[%s215 + $0xc8] sm:$0xff]
        %v314 = vld [vmem:[%s215 + $0xd0] sm:$0xff]
        %v315 = vld [vmem:[%s215 + $0xd8] sm:$0xff]
        %v316 = vld [vmem:[%s215 + $0xe0] sm:$0xff]
        %v317 = vld [vmem:[%s215 + $0xe8] sm:$0xff]
        %v318 = vld [vmem:[%s215 + $0xf0] sm:$0xff]
        %v319 = vld [vmem:[%s215 + $0xf8] sm:$0xff]
        %v320 = vld [vmem:[%s215 + $0x100] sm:$0xff]
        %v321 = vld [vmem:[%s215 + $0x108] sm:$0xff]
        %v322 = vld [vmem:[%s215 + $0x110] sm:$0xff]
        %v323 = vld [vmem:[%s215 + $0x118] sm:$0xff]
        %v324 = vld [vmem:[%s215 + $0x120] sm:$0xff]
        %v325 = vld [vmem:[%s215 + $0x128] sm:$0xff]
        %v326 = vld [vmem:[%s215 + $0x130] sm:$0xff]
        %v327 = vld [vmem:[%s215 + $0x138] sm:$0xff]
        %v328 = vld [vmem:[%s215 + $0x140] sm:$0xff]
        %v329 = vld [vmem:[%s215 + $0x148] sm:$0xff]
        %v330 = vld [vmem:[%s215 + $0x150] sm:$0xff]
        %v331 = vld [vmem:[%s215 + $0x158] sm:$0xff]
        %v332 = vld [vmem:[%s215 + $0x160] sm:$0xff]
        %v333 = vld [vmem:[%s215 + $0x168] sm:$0xff]
        %v334 = vld [vmem:[%s215 + $0x170] sm:$0xff]
        %v335 = vld [vmem:[%s215 + $0x178] sm:$0xff]
        %v336 = vld [vmem:[%s215 + $0x180] sm:$0xff]
        %v337 = vld [vmem:[%s215 + $0x188] sm:$0xff]
        %v338 = vld [vmem:[%s215 + $0x190] sm:$0xff]
        %v339 = vld [vmem:[%s215 + $0x198] sm:$0xff]
        %v340 = vld [vmem:[%s215 + $0x1a0] sm:$0xff]
        %v341 = vld [vmem:[%s215 + $0x1a8] sm:$0xff]
        %v342 = vld [vmem:[%s215 + $0x1b0] sm:$0xff]
        %v343 = vld [vmem:[%s215 + $0x1b8] sm:$0xff]
        %v344 = vld [vmem:[%s215 + $0x1c0] sm:$0xff]
        %v345 = vld [vmem:[%s215 + $0x1c8] sm:$0xff]
        %v346 = vld [vmem:[%s215 + $0x1d0] sm:$0xff]
        %v347 = vld [vmem:[%s215 + $0x1d8] sm:$0xff]
        %v348 = vld [vmem:[%s215 + $0x1e0] sm:$0xff]
        %v349 = vld [vmem:[%s215 + $0x1e8] sm:$0xff]
        %v350 = vld [vmem:[%s215 + $0x1f0] sm:$0xff]
        %v351 = vld [vmem:[%s215 + $0x1f8] sm:$0xff]
        %v352 = vld [vmem:[%s215 + $0x200] sm:$0xff]
        %v353 = vld [vmem:[%s215 + $0x208] sm:$0xff]
        %v354 = vld [vmem:[%s215 + $0x210] sm:$0xff]
        %v355 = vld [vmem:[%s215 + $0x218] sm:$0xff]
        %v356 = vld [vmem:[%s215 + $0x220] sm:$0xff]
        %v357 = vld [vmem:[%s215 + $0x228] sm:$0xff]
        %v358 = vld [vmem:[%s215 + $0x230] sm:$0xff]
        %v359 = vld [vmem:[%s215 + $0x238] sm:$0xff]
        %v360 = vld [vmem:[%s215 + $0x240] sm:$0xff]
        %v361 = vld [vmem:[%s215 + $0x248] sm:$0xff]
        %v362 = vld [vmem:[%s215 + $0x250] sm:$0xff]
        %v363 = vld [vmem:[%s215 + $0x258] sm:$0xff]
        %v364 = vld [vmem:[%s215 + $0x260] sm:$0xff]
        %v365 = vld [vmem:[%s215 + $0x268] sm:$0xff]
        %v366 = vld [vmem:[%s215 + $0x270] sm:$0xff]
        %v367 = vld [vmem:[%s215 + $0x278] sm:$0xff]
        %v368 = vld [vmem:[%s215 + $0x280] sm:$0xff]
        %v369 = vld [vmem:[%s215 + $0x288] sm:$0xff]
        %v370 = vld [vmem:[%s215 + $0x290] sm:$0xff]
        %v371 = vld [vmem:[%s215 + $0x298] sm:$0xff]
        %v372 = vld [vmem:[%s215 + $0x2a0] sm:$0xff]
        %v373 = vld [vmem:[%s215 + $0x2a8] sm:$0xff]
        %v374 = vld [vmem:[%s215 + $0x2b0] sm:$0xff]
        %v375 = vld [vmem:[%s215 + $0x2b8] sm:$0xff]
        %v376 = vld [vmem:[%s215 + $0x2c0] sm:$0xff]
        %v377 = vld [vmem:[%s215 + $0x2c8] sm:$0xff]
        %v378 = vld [vmem:[%s215 + $0x2d0] sm:$0xff]
        %v379 = vld [vmem:[%s215 + $0x2d8] sm:$0xff]
        %v380 = vld [vmem:[%s215 + $0x2e0] sm:$0xff]
        %v381 = vld [vmem:[%s215 + $0x2e8] sm:$0xff]
        %v382 = vld [vmem:[%s215 + $0x2f0] sm:$0xff]
        %v383 = vld [vmem:[%s215 + $0x2f8] sm:$0xff]
        %v384 = vld [vmem:[%s215 + $0x300] sm:$0xff]
        %v385 = vld [vmem:[%s215 + $0x308] sm:$0xff]
        %v386 = vld [vmem:[%s215 + $0x310] sm:$0xff]
        %v387 = vld [vmem:[%s215 + $0x318] sm:$0xff]
        %v388 = vld [vmem:[%s215 + $0x320] sm:$0xff]
        %v389 = vld [vmem:[%s215 + $0x328] sm:$0xff]
        %v390 = vld [vmem:[%s215 + $0x330] sm:$0xff]
        %v391 = vld [vmem:[%s215 + $0x338] sm:$0xff]
        %v392 = vld [vmem:[%s215 + $0x340] sm:$0xff]
        %v393 = vld [vmem:[%s215 + $0x348] sm:$0xff]
        %v394 = vld [vmem:[%s215 + $0x350] sm:$0xff]
        %v395 = vld [vmem:[%s215 + $0x358] sm:$0xff]
        %v396 = vld [vmem:[%s215 + $0x360] sm:$0xff]
        %v397 = vld [vmem:[%s215 + $0x368] sm:$0xff]
        %v398 = vld [vmem:[%s215 + $0x370] sm:$0xff]
        %v399 = vld [vmem:[%s215 + $0x378] sm:$0xff]
        %v400 = vld [vmem:[%s215 + $0x380] sm:$0xff]
        %v401 = vld [vmem:[%s215 + $0x388] sm:$0xff]
        %v402 = vld [vmem:[%s215 + $0x390] sm:$0xff]
        %v403 = vld [vmem:[%s215 + $0x398] sm:$0xff]
        %v404 = vld [vmem:[%s215 + $0x3a0] sm:$0xff]
        %v405 = vld [vmem:[%s215 + $0x3a8] sm:$0xff]
        %v406 = vld [vmem:[%s215 + $0x3b0] sm:$0xff]
        %v407 = vld [vmem:[%s215 + $0x3b8] sm:$0xff]
        %v408 = vld [vmem:[%s215 + $0x3c0] sm:$0xff]
        %v409 = vld [vmem:[%s215 + $0x3c8] sm:$0xff]
        %v410 = vld [vmem:[%s215 + $0x3d0] sm:$0xff]
        %v411 = vld [vmem:[%s215 + $0x3d8] sm:$0xff]
        %v412 = vld [vmem:[%s215 + $0x3e0] sm:$0xff]
        %v413 = vld [vmem:[%s215 + $0x3e8] sm:$0xff]
        %v414 = vld [vmem:[%s215 + $0x3f0] sm:$0xff]
        %v415 = vld [vmem:[%s215 + $0x3f8] sm:$0xff]
        %v416 = vld [vmem:[%s215 + $0x400] sm:$0xff]
        %v417 = vld [vmem:[%s215 + $0x408] sm:$0xff]
        %v418 = vld [vmem:[%s215 + $0x410] sm:$0xff]
        %v419 = vld [vmem:[%s215 + $0x418] sm:$0xff]
        %v420 = vld [vmem:[%s215 + $0x420] sm:$0xff]
        %v421 = vld [vmem:[%s215 + $0x428] sm:$0xff]
        %v422 = vld [vmem:[%s215 + $0x430] sm:$0xff]
        %v423 = vld [vmem:[%s215 + $0x438] sm:$0xff]
        %v424 = vld [vmem:[%s215 + $0x440] sm:$0xff]
        %v425 = vld [vmem:[%s215 + $0x448] sm:$0xff]
        %v426 = vld [vmem:[%s215 + $0x450] sm:$0xff]
        %v427 = vld [vmem:[%s215 + $0x458] sm:$0xff]
        %v428 = vld [vmem:[%s215 + $0x460] sm:$0xff]
        %v429 = vld [vmem:[%s215 + $0x468] sm:$0xff]
        %v430 = vld [vmem:[%s215 + $0x470] sm:$0xff]
        %v431 = vld [vmem:[%s215 + $0x478] sm:$0xff]
        %v432 = vld [vmem:[%s215 + $0x480] sm:$0xff]
        %v433 = vld [vmem:[%s215 + $0x488] sm:$0xff]
        %v434 = vld [vmem:[%s215 + $0x490] sm:$0xff]
        %v435 = vld [vmem:[%s215 + $0x498] sm:$0xff]
        %v436 = vld [vmem:[%s215 + $0x4a0] sm:$0xff]
        %v437 = vld [vmem:[%s215 + $0x4a8] sm:$0xff]
        %v438 = vld [vmem:[%s215 + $0x4b0] sm:$0xff]
        %v439 = vld [vmem:[%s215 + $0x4b8] sm:$0xff]
        %v440 = vld [vmem:[%s215 + $0x4c0] sm:$0xff]
        %v441 = vld [vmem:[%s215 + $0x4c8] sm:$0xff]
        %v442 = vld [vmem:[%s215 + $0x4d0] sm:$0xff]
        %v443 = vld [vmem:[%s215 + $0x4d8] sm:$0xff]
        %v444 = vld [vmem:[%s215 + $0x4e0] sm:$0xff]
        %v445 = vld [vmem:[%s215 + $0x4e8] sm:$0xff]
        %v446 = vld [vmem:[%s215 + $0x4f0] sm:$0xff]
        %v447 = vld [vmem:[%s215 + $0x4f8] sm:$0xff]
        %v448 = vld [vmem:[%s215 + $0x500] sm:$0xff]
        %v449 = vld [vmem:[%s215 + $0x508] sm:$0xff]
        %v450 = vld [vmem:[%s215 + $0x510] sm:$0xff]
        %v451 = vld [vmem:[%s215 + $0x518] sm:$0xff]
        %v452 = vld [vmem:[%s215 + $0x520] sm:$0xff]
        %v453 = vld [vmem:[%s215 + $0x528] sm:$0xff]
        %v454 = vld [vmem:[%s215 + $0x530] sm:$0xff]
        %v455 = vld [vmem:[%s215 + $0x538] sm:$0xff]
        %v456 = vld [vmem:[%s215 + $0x540] sm:$0xff]
        %v457 = vld [vmem:[%s215 + $0x548] sm:$0xff]
        %v458 = vld [vmem:[%s215 + $0x550] sm:$0xff]
        %v459 = vld [vmem:[%s215 + $0x558] sm:$0xff]
        %v460 = vld [vmem:[%s215 + $0x560] sm:$0xff]
        %v461 = vld [vmem:[%s215 + $0x568] sm:$0xff]
        %v462 = vld [vmem:[%s215 + $0x570] sm:$0xff]
        %v463 = vld [vmem:[%s215 + $0x578] sm:$0xff]
        %v464 = vld [vmem:[%s215 + $0x580] sm:$0xff]
        %v465 = vld [vmem:[%s215 + $0x588] sm:$0xff]
        %v466 = vld [vmem:[%s215 + $0x590] sm:$0xff]
        %v467 = vld [vmem:[%s215 + $0x598] sm:$0xff]
        %v468 = vld [vmem:[%s215 + $0x5a0] sm:$0xff]
        %v469 = vld [vmem:[%s215 + $0x5a8] sm:$0xff]
        %v470 = vld [vmem:[%s215 + $0x5b0] sm:$0xff]
        %v471 = vld [vmem:[%s215 + $0x5b8] sm:$0xff]
        %v472 = vld [vmem:[%s215 + $0x5c0] sm:$0xff]
        %v473 = vld [vmem:[%s215 + $0x5c8] sm:$0xff]
        %v474 = vld [vmem:[%s215 + $0x5d0] sm:$0xff]
        %v475 = vld [vmem:[%s215 + $0x5d8] sm:$0xff]
        %v476 = vld [vmem:[%s215 + $0x5e0] sm:$0xff]
        %v477 = vld [vmem:[%s215 + $0x5e8] sm:$0xff]
        %v478 = vld [vmem:[%s215 + $0x5f0] sm:$0xff]
        %v479 = vld [vmem:[%s215 + $0x5f8] sm:$0xff]
        %v480 = vld [vmem:[%s215 + $0x600] sm:$0xff]
        %v481 = vld [vmem:[%s215 + $0x608] sm:$0xff]
        %v482 = vld [vmem:[%s215 + $0x610] sm:$0xff]
        %v483 = vld [vmem:[%s215 + $0x618] sm:$0xff]
        %v484 = vld [vmem:[%s215 + $0x620] sm:$0xff]
        %v485 = vld [vmem:[%s215 + $0x628] sm:$0xff]
        %v486 = vld [vmem:[%s215 + $0x630] sm:$0xff]
        %v487 = vld [vmem:[%s215 + $0x638] sm:$0xff]
        %v488 = vld [vmem:[%s215 + $0x640] sm:$0xff]
        %v489 = vld [vmem:[%s215 + $0x648] sm:$0xff]
        %v490 = vld [vmem:[%s215 + $0x650] sm:$0xff]
        %v491 = vld [vmem:[%s215 + $0x658] sm:$0xff]
        %v492 = vld [vmem:[%s215 + $0x660] sm:$0xff]
        %v493 = vld [vmem:[%s215 + $0x668] sm:$0xff]
        %v494 = vld [vmem:[%s215 + $0x670] sm:$0xff]
        %v495 = vld [vmem:[%s215 + $0x678] sm:$0xff]
        %v496 = vld [vmem:[%s215 + $0x680] sm:$0xff]
        %v497 = vld [vmem:[%s215 + $0x688] sm:$0xff]
        %v498 = vld [vmem:[%s215 + $0x690] sm:$0xff]
        %v499 = vld [vmem:[%s215 + $0x698] sm:$0xff]
        %v500 = vld [vmem:[%s215 + $0x6a0] sm:$0xff]
        %v501 = vld [vmem:[%s215 + $0x6a8] sm:$0xff]
        %v502 = vld [vmem:[%s215 + $0x6b0] sm:$0xff]
        %v503 = vld [vmem:[%s215 + $0x6b8] sm:$0xff]
        %v504 = vld [vmem:[%s215 + $0x6c0] sm:$0xff]
        %v505 = vld [vmem:[%s215 + $0x6c8] sm:$0xff]
        %v506 = vld [vmem:[%s215 + $0x6d0] sm:$0xff]
        %v507 = vld [vmem:[%s215 + $0x6d8] sm:$0xff]
        %v508 = vld [vmem:[%s215 + $0x6e0] sm:$0xff]
        %v509 = vld [vmem:[%s215 + $0x6e8] sm:$0xff]
        %v510 = vld [vmem:[%s215 + $0x6f0] sm:$0xff]
        %v511 = vld [vmem:[%s215 + $0x6f8] sm:$0xff]
        %v512 = vld [vmem:[%s215 + $0x700] sm:$0xff]
        %v513 = vld [vmem:[%s215 + $0x708] sm:$0xff]
        %v514 = vld [vmem:[%s215 + $0x710] sm:$0xff]
        %v515 = vld [vmem:[%s215 + $0x718] sm:$0xff]
        %v516 = vld [vmem:[%s215 + $0x720] sm:$0xff]
        %v517 = vld [vmem:[%s215 + $0x728] sm:$0xff]
        %v518 = vld [vmem:[%s215 + $0x730] sm:$0xff]
        %v519 = vld [vmem:[%s215 + $0x738] sm:$0xff]
        %v520 = vld [vmem:[%s215 + $0x740] sm:$0xff]
        %v521 = vld [vmem:[%s215 + $0x748] sm:$0xff]
        %v522 = vld [vmem:[%s215 + $0x750] sm:$0xff]
        %v523 = vld [vmem:[%s215 + $0x758] sm:$0xff]
        %v524 = vld [vmem:[%s215 + $0x760] sm:$0xff]
        %v525 = vld [vmem:[%s215 + $0x768] sm:$0xff]
        %v526 = vld [vmem:[%s215 + $0x770] sm:$0xff]
        %v527 = vld [vmem:[%s215 + $0x778] sm:$0xff]
        %v528 = vld [vmem:[%s215 + $0x780] sm:$0xff]
        %v529 = vld [vmem:[%s215 + $0x788] sm:$0xff]
        %v530 = vld [vmem:[%s215 + $0x790] sm:$0xff]
        %v531 = vld [vmem:[%s215 + $0x798] sm:$0xff]
        %v532 = vld [vmem:[%s215 + $0x7a0] sm:$0xff]
        %v533 = vld [vmem:[%s215 + $0x7a8] sm:$0xff]
        %v534 = vld [vmem:[%s215 + $0x7b0] sm:$0xff]
        %v535 = vld [vmem:[%s215 + $0x7b8] sm:$0xff]
        %v536 = vld [vmem:[%s215 + $0x7c0] sm:$0xff]
        %v537 = vld [vmem:[%s215 + $0x7c8] sm:$0xff]
        %v538 = vld [vmem:[%s215 + $0x7d0] sm:$0xff]
        %v539 = vld [vmem:[%s215 + $0x7d8] sm:$0xff]
        %v540 = vld [vmem:[%s215 + $0x7e0] sm:$0xff]
        %v541 = vld [vmem:[%s215 + $0x7e8] sm:$0xff]
        %v542 = vld [vmem:[%s215 + $0x7f0] sm:$0xff]
        %v543 = vld [vmem:[%s215 + $0x7f8] sm:$0xff]
        %v548 = vunpack.c.l.b16 %v284
        %v549 = vunpack.c.h.b16 %v284
        %v550 = vunpack.c.l.b16 %v285
        %v551 = vunpack.c.h.b16 %v285
        %v552 = vunpack.c.l.b16 %v286
        %v553 = vunpack.c.h.b16 %v286
        %v554 = vunpack.c.l.b16 %v287
        %v555 = vunpack.c.h.b16 %v287
        %v556 = vpack.c.b16 %v548, %v548
        %v557 = vpack.c.b16 %v549, %v549
        %v558 = vpack.c.b16 %v550, %v550
        %v559 = vpack.c.b16 %v551, %v551
        %v560 = vpack.c.b16 %v552, %v552
        %v561 = vpack.c.b16 %v553, %v553
        %v562 = vpack.c.b16 %v554, %v554
        %v563 = vpack.c.b16 %v555, %v555
        %v828 = vunpack.c.l.b16 %v288
        %v829 = vunpack.c.h.b16 %v288
        %v830 = vunpack.c.l.b16 %v289
        %v831 = vunpack.c.h.b16 %v289
        %v832 = vunpack.c.l.b16 %v290
        %v833 = vunpack.c.h.b16 %v290
        %v834 = vunpack.c.l.b16 %v291
        %v835 = vunpack.c.h.b16 %v291
        %v836 = vunpack.c.l.b16 %v292
        %v837 = vunpack.c.h.b16 %v292
        %v838 = vunpack.c.l.b16 %v293
        %v839 = vunpack.c.h.b16 %v293
        %v840 = vunpack.c.l.b16 %v294
        %v841 = vunpack.c.h.b16 %v294
        %v842 = vunpack.c.l.b16 %v295
        %v843 = vunpack.c.h.b16 %v295
        %v844 = vunpack.c.l.b16 %v296
        %v845 = vunpack.c.h.b16 %v296
        %v846 = vunpack.c.l.b16 %v297
        %v847 = vunpack.c.h.b16 %v297
        %v848 = vunpack.c.l.b16 %v298
        %v849 = vunpack.c.h.b16 %v298
        %v850 = vunpack.c.l.b16 %v299
        %v851 = vunpack.c.h.b16 %v299
        %v852 = vunpack.c.l.b16 %v300
        %v853 = vunpack.c.h.b16 %v300
        %v854 = vunpack.c.l.b16 %v301
        %v855 = vunpack.c.h.b16 %v301
        %v856 = vunpack.c.l.b16 %v302
        %v857 = vunpack.c.h.b16 %v302
        %v858 = vunpack.c.l.b16 %v303
        %v859 = vunpack.c.h.b16 %v303
        %v860 = vunpack.c.l.b16 %v304
        %v861 = vunpack.c.h.b16 %v304
        %v862 = vunpack.c.l.b16 %v305
        %v863 = vunpack.c.h.b16 %v305
        %v864 = vunpack.c.l.b16 %v306
        %v865 = vunpack.c.h.b16 %v306
        %v866 = vunpack.c.l.b16 %v307
        %v867 = vunpack.c.h.b16 %v307
        %v868 = vunpack.c.l.b16 %v308
        %v869 = vunpack.c.h.b16 %v308
        %v870 = vunpack.c.l.b16 %v309
        %v871 = vunpack.c.h.b16 %v309
        %v872 = vunpack.c.l.b16 %v310
        %v873 = vunpack.c.h.b16 %v310
        %v874 = vunpack.c.l.b16 %v311
        %v875 = vunpack.c.h.b16 %v311
        %v876 = vunpack.c.l.b16 %v312
        %v877 = vunpack.c.h.b16 %v312
        %v878 = vunpack.c.l.b16 %v313
        %v879 = vunpack.c.h.b16 %v313
        %v880 = vunpack.c.l.b16 %v314
        %v881 = vunpack.c.h.b16 %v314
        %v882 = vunpack.c.l.b16 %v315
        %v883 = vunpack.c.h.b16 %v315
        %v884 = vunpack.c.l.b16 %v316
        %v885 = vunpack.c.h.b16 %v316
        %v886 = vunpack.c.l.b16 %v317
        %v887 = vunpack.c.h.b16 %v317
        %v888 = vunpack.c.l.b16 %v318
        %v889 = vunpack.c.h.b16 %v318
        %v890 = vunpack.c.l.b16 %v319
        %v891 = vunpack.c.h.b16 %v319
        %v892 = vunpack.c.l.b16 %v320
        %v893 = vunpack.c.h.b16 %v320
        %v894 = vunpack.c.l.b16 %v321
        %v895 = vunpack.c.h.b16 %v321
        %v896 = vunpack.c.l.b16 %v322
        %v897 = vunpack.c.h.b16 %v322
        %v898 = vunpack.c.l.b16 %v323
        %v899 = vunpack.c.h.b16 %v323
        %v900 = vunpack.c.l.b16 %v324
        %v901 = vunpack.c.h.b16 %v324
        %v902 = vunpack.c.l.b16 %v325
        %v903 = vunpack.c.h.b16 %v325
        %v904 = vunpack.c.l.b16 %v326
        %v905 = vunpack.c.h.b16 %v326
        %v906 = vunpack.c.l.b16 %v327
        %v907 = vunpack.c.h.b16 %v327
        %v908 = vunpack.c.l.b16 %v328
        %v909 = vunpack.c.h.b16 %v328
        %v910 = vunpack.c.l.b16 %v329
        %v911 = vunpack.c.h.b16 %v329
        %v912 = vunpack.c.l.b16 %v330
        %v913 = vunpack.c.h.b16 %v330
        %v914 = vunpack.c.l.b16 %v331
        %v915 = vunpack.c.h.b16 %v331
        %v916 = vunpack.c.l.b16 %v332
        %v917 = vunpack.c.h.b16 %v332
        %v918 = vunpack.c.l.b16 %v333
        %v919 = vunpack.c.h.b16 %v333
        %v920 = vunpack.c.l.b16 %v334
        %v921 = vunpack.c.h.b16 %v334
        %v922 = vunpack.c.l.b16 %v335
        %v923 = vunpack.c.h.b16 %v335
        %v924 = vunpack.c.l.b16 %v336
        %v925 = vunpack.c.h.b16 %v336
        %v926 = vunpack.c.l.b16 %v337
        %v927 = vunpack.c.h.b16 %v337
        %v928 = vunpack.c.l.b16 %v338
        %v929 = vunpack.c.h.b16 %v338
        %v930 = vunpack.c.l.b16 %v339
        %v931 = vunpack.c.h.b16 %v339
        %v932 = vunpack.c.l.b16 %v340
        %v933 = vunpack.c.h.b16 %v340
        %v934 = vunpack.c.l.b16 %v341
        %v935 = vunpack.c.h.b16 %v341
        %v936 = vunpack.c.l.b16 %v342
        %v937 = vunpack.c.h.b16 %v342
        %v938 = vunpack.c.l.b16 %v343
        %v939 = vunpack.c.h.b16 %v343
        %v940 = vunpack.c.l.b16 %v344
        %v941 = vunpack.c.h.b16 %v344
        %v942 = vunpack.c.l.b16 %v345
        %v943 = vunpack.c.h.b16 %v345
        %v944 = vunpack.c.l.b16 %v346
        %v945 = vunpack.c.h.b16 %v346
        %v946 = vunpack.c.l.b16 %v347
        %v947 = vunpack.c.h.b16 %v347
        %v948 = vunpack.c.l.b16 %v348
        %v949 = vunpack.c.h.b16 %v348
        %v950 = vunpack.c.l.b16 %v349
        %v951 = vunpack.c.h.b16 %v349
        %v952 = vunpack.c.l.b16 %v350
        %v953 = vunpack.c.h.b16 %v350
        %v954 = vunpack.c.l.b16 %v351
        %v955 = vunpack.c.h.b16 %v351
        %v956 = vunpack.c.l.b16 %v352
        %v957 = vunpack.c.h.b16 %v352
        %v958 = vunpack.c.l.b16 %v353
        %v959 = vunpack.c.h.b16 %v353
        %v960 = vunpack.c.l.b16 %v354
        %v961 = vunpack.c.h.b16 %v354
        %v962 = vunpack.c.l.b16 %v355
        %v963 = vunpack.c.h.b16 %v355
        %v964 = vunpack.c.l.b16 %v356
        %v965 = vunpack.c.h.b16 %v356
        %v966 = vunpack.c.l.b16 %v357
        %v967 = vunpack.c.h.b16 %v357
        %v968 = vunpack.c.l.b16 %v358
        %v969 = vunpack.c.h.b16 %v358
        %v970 = vunpack.c.l.b16 %v359
        %v971 = vunpack.c.h.b16 %v359
        %v972 = vunpack.c.l.b16 %v360
        %v973 = vunpack.c.h.b16 %v360
        %v974 = vunpack.c.l.b16 %v361
        %v975 = vunpack.c.h.b16 %v361
        %v976 = vunpack.c.l.b16 %v362
        %v977 = vunpack.c.h.b16 %v362
        %v978 = vunpack.c.l.b16 %v363
        %v979 = vunpack.c.h.b16 %v363
        %v980 = vunpack.c.l.b16 %v364
        %v981 = vunpack.c.h.b16 %v364
        %v982 = vunpack.c.l.b16 %v365
        %v983 = vunpack.c.h.b16 %v365
        %v984 = vunpack.c.l.b16 %v366
        %v985 = vunpack.c.h.b16 %v366
        %v986 = vunpack.c.l.b16 %v367
        %v987 = vunpack.c.h.b16 %v367
        %v988 = vunpack.c.l.b16 %v368
        %v989 = vunpack.c.h.b16 %v368
        %v990 = vunpack.c.l.b16 %v369
        %v991 = vunpack.c.h.b16 %v369
        %v992 = vunpack.c.l.b16 %v370
        %v993 = vunpack.c.h.b16 %v370
        %v994 = vunpack.c.l.b16 %v371
        %v995 = vunpack.c.h.b16 %v371
        %v996 = vunpack.c.l.b16 %v372
        %v997 = vunpack.c.h.b16 %v372
        %v998 = vunpack.c.l.b16 %v373
        %v999 = vunpack.c.h.b16 %v373
        %v1000 = vunpack.c.l.b16 %v374
        %v1001 = vunpack.c.h.b16 %v374
        %v1002 = vunpack.c.l.b16 %v375
        %v1003 = vunpack.c.h.b16 %v375
        %v1004 = vunpack.c.l.b16 %v376
        %v1005 = vunpack.c.h.b16 %v376
        %v1006 = vunpack.c.l.b16 %v377
        %v1007 = vunpack.c.h.b16 %v377
        %v1008 = vunpack.c.l.b16 %v378
        %v1009 = vunpack.c.h.b16 %v378
        %v1010 = vunpack.c.l.b16 %v379
        %v1011 = vunpack.c.h.b16 %v379
        %v1012 = vunpack.c.l.b16 %v380
        %v1013 = vunpack.c.h.b16 %v380
        %v1014 = vunpack.c.l.b16 %v381
        %v1015 = vunpack.c.h.b16 %v381
        %v1016 = vunpack.c.l.b16 %v382
        %v1017 = vunpack.c.h.b16 %v382
        %v1018 = vunpack.c.l.b16 %v383
        %v1019 = vunpack.c.h.b16 %v383
        %v1020 = vunpack.c.l.b16 %v384
        %v1021 = vunpack.c.h.b16 %v384
        %v1022 = vunpack.c.l.b16 %v385
        %v1023 = vunpack.c.h.b16 %v385
        %v1024 = vunpack.c.l.b16 %v386
        %v1025 = vunpack.c.h.b16 %v386
        %v1026 = vunpack.c.l.b16 %v387
        %v1027 = vunpack.c.h.b16 %v387
        %v1028 = vunpack.c.l.b16 %v388
        %v1029 = vunpack.c.h.b16 %v388
        %v1030 = vunpack.c.l.b16 %v389
        %v1031 = vunpack.c.h.b16 %v389
        %v1032 = vunpack.c.l.b16 %v390
        %v1033 = vunpack.c.h.b16 %v390
        %v1034 = vunpack.c.l.b16 %v391
        %v1035 = vunpack.c.h.b16 %v391
        %v1036 = vunpack.c.l.b16 %v392
        %v1037 = vunpack.c.h.b16 %v392
        %v1038 = vunpack.c.l.b16 %v393
        %v1039 = vunpack.c.h.b16 %v393
        %v1040 = vunpack.c.l.b16 %v394
        %v1041 = vunpack.c.h.b16 %v394
        %v1042 = vunpack.c.l.b16 %v395
        %v1043 = vunpack.c.h.b16 %v395
        %v1044 = vunpack.c.l.b16 %v396
        %v1045 = vunpack.c.h.b16 %v396
        %v1046 = vunpack.c.l.b16 %v397
        %v1047 = vunpack.c.h.b16 %v397
        %v1048 = vunpack.c.l.b16 %v398
        %v1049 = vunpack.c.h.b16 %v398
        %v1050 = vunpack.c.l.b16 %v399
        %v1051 = vunpack.c.h.b16 %v399
        %v1052 = vunpack.c.l.b16 %v400
        %v1053 = vunpack.c.h.b16 %v400
        %v1054 = vunpack.c.l.b16 %v401
        %v1055 = vunpack.c.h.b16 %v401
        %v1056 = vunpack.c.l.b16 %v402
        %v1057 = vunpack.c.h.b16 %v402
        %v1058 = vunpack.c.l.b16 %v403
        %v1059 = vunpack.c.h.b16 %v403
        %v1060 = vunpack.c.l.b16 %v404
        %v1061 = vunpack.c.h.b16 %v404
        %v1062 = vunpack.c.l.b16 %v405
        %v1063 = vunpack.c.h.b16 %v405
        %v1064 = vunpack.c.l.b16 %v406
        %v1065 = vunpack.c.h.b16 %v406
        %v1066 = vunpack.c.l.b16 %v407
        %v1067 = vunpack.c.h.b16 %v407
        %v1068 = vunpack.c.l.b16 %v408
        %v1069 = vunpack.c.h.b16 %v408
        %v1070 = vunpack.c.l.b16 %v409
        %v1071 = vunpack.c.h.b16 %v409
        %v1072 = vunpack.c.l.b16 %v410
        %v1073 = vunpack.c.h.b16 %v410
        %v1074 = vunpack.c.l.b16 %v411
        %v1075 = vunpack.c.h.b16 %v411
        %v1076 = vunpack.c.l.b16 %v412
        %v1077 = vunpack.c.h.b16 %v412
        %v1078 = vunpack.c.l.b16 %v413
        %v1079 = vunpack.c.h.b16 %v413
        %v1080 = vunpack.c.l.b16 %v414
        %v1081 = vunpack.c.h.b16 %v414
        %v1082 = vunpack.c.l.b16 %v415
        %v1083 = vunpack.c.h.b16 %v415
        %v1084 = vunpack.c.l.b16 %v416
        %v1085 = vunpack.c.h.b16 %v416
        %v1086 = vunpack.c.l.b16 %v417
        %v1087 = vunpack.c.h.b16 %v417
        %v1088 = vunpack.c.l.b16 %v418
        %v1089 = vunpack.c.h.b16 %v418
        %v1090 = vunpack.c.l.b16 %v419
        %v1091 = vunpack.c.h.b16 %v419
        %v1092 = vunpack.c.l.b16 %v420
        %v1093 = vunpack.c.h.b16 %v420
        %v1094 = vunpack.c.l.b16 %v421
        %v1095 = vunpack.c.h.b16 %v421
        %v1096 = vunpack.c.l.b16 %v422
        %v1097 = vunpack.c.h.b16 %v422
        %v1098 = vunpack.c.l.b16 %v423
        %v1099 = vunpack.c.h.b16 %v423
        %v1100 = vunpack.c.l.b16 %v424
        %v1101 = vunpack.c.h.b16 %v424
        %v1102 = vunpack.c.l.b16 %v425
        %v1103 = vunpack.c.h.b16 %v425
        %v1104 = vunpack.c.l.b16 %v426
        %v1105 = vunpack.c.h.b16 %v426
        %v1106 = vunpack.c.l.b16 %v427
        %v1107 = vunpack.c.h.b16 %v427
        %v1108 = vunpack.c.l.b16 %v428
        %v1109 = vunpack.c.h.b16 %v428
        %v1110 = vunpack.c.l.b16 %v429
        %v1111 = vunpack.c.h.b16 %v429
        %v1112 = vunpack.c.l.b16 %v430
        %v1113 = vunpack.c.h.b16 %v430
        %v1114 = vunpack.c.l.b16 %v431
        %v1115 = vunpack.c.h.b16 %v431
        %v1116 = vunpack.c.l.b16 %v432
        %v1117 = vunpack.c.h.b16 %v432
        %v1118 = vunpack.c.l.b16 %v433
        %v1119 = vunpack.c.h.b16 %v433
        %v1120 = vunpack.c.l.b16 %v434
        %v1121 = vunpack.c.h.b16 %v434
        %v1122 = vunpack.c.l.b16 %v435
        %v1123 = vunpack.c.h.b16 %v435
        %v1124 = vunpack.c.l.b16 %v436
        %v1125 = vunpack.c.h.b16 %v436
        %v1126 = vunpack.c.l.b16 %v437
        %v1127 = vunpack.c.h.b16 %v437
        %v1128 = vunpack.c.l.b16 %v438
        %v1129 = vunpack.c.h.b16 %v438
        %v1130 = vunpack.c.l.b16 %v439
        %v1131 = vunpack.c.h.b16 %v439
        %v1132 = vunpack.c.l.b16 %v440
        %v1133 = vunpack.c.h.b16 %v440
        %v1134 = vunpack.c.l.b16 %v441
        %v1135 = vunpack.c.h.b16 %v441
        %v1136 = vunpack.c.l.b16 %v442
        %v1137 = vunpack.c.h.b16 %v442
        %v1138 = vunpack.c.l.b16 %v443
        %v1139 = vunpack.c.h.b16 %v443
        %v1140 = vunpack.c.l.b16 %v444
        %v1141 = vunpack.c.h.b16 %v444
        %v1142 = vunpack.c.l.b16 %v445
        %v1143 = vunpack.c.h.b16 %v445
        %v1144 = vunpack.c.l.b16 %v446
        %v1145 = vunpack.c.h.b16 %v446
        %v1146 = vunpack.c.l.b16 %v447
        %v1147 = vunpack.c.h.b16 %v447
        %v1148 = vunpack.c.l.b16 %v448
        %v1149 = vunpack.c.h.b16 %v448
        %v1150 = vunpack.c.l.b16 %v449
        %v1151 = vunpack.c.h.b16 %v449
        %v1152 = vunpack.c.l.b16 %v450
        %v1153 = vunpack.c.h.b16 %v450
        %v1154 = vunpack.c.l.b16 %v451
        %v1155 = vunpack.c.h.b16 %v451
        %v1156 = vunpack.c.l.b16 %v452
        %v1157 = vunpack.c.h.b16 %v452
        %v1158 = vunpack.c.l.b16 %v453
        %v1159 = vunpack.c.h.b16 %v453
        %v1160 = vunpack.c.l.b16 %v454
        %v1161 = vunpack.c.h.b16 %v454
        %v1162 = vunpack.c.l.b16 %v455
        %v1163 = vunpack.c.h.b16 %v455
        %v1164 = vunpack.c.l.b16 %v456
        %v1165 = vunpack.c.h.b16 %v456
        %v1166 = vunpack.c.l.b16 %v457
        %v1167 = vunpack.c.h.b16 %v457
        %v1168 = vunpack.c.l.b16 %v458
        %v1169 = vunpack.c.h.b16 %v458
        %v1170 = vunpack.c.l.b16 %v459
        %v1171 = vunpack.c.h.b16 %v459
        %v1172 = vunpack.c.l.b16 %v460
        %v1173 = vunpack.c.h.b16 %v460
        %v1174 = vunpack.c.l.b16 %v461
        %v1175 = vunpack.c.h.b16 %v461
        %v1176 = vunpack.c.l.b16 %v462
        %v1177 = vunpack.c.h.b16 %v462
        %v1178 = vunpack.c.l.b16 %v463
        %v1179 = vunpack.c.h.b16 %v463
        %v1180 = vunpack.c.l.b16 %v464
        %v1181 = vunpack.c.h.b16 %v464
        %v1182 = vunpack.c.l.b16 %v465
        %v1183 = vunpack.c.h.b16 %v465
        %v1184 = vunpack.c.l.b16 %v466
        %v1185 = vunpack.c.h.b16 %v466
        %v1186 = vunpack.c.l.b16 %v467
        %v1187 = vunpack.c.h.b16 %v467
        %v1188 = vunpack.c.l.b16 %v468
        %v1189 = vunpack.c.h.b16 %v468
        %v1190 = vunpack.c.l.b16 %v469
        %v1191 = vunpack.c.h.b16 %v469
        %v1192 = vunpack.c.l.b16 %v470
        %v1193 = vunpack.c.h.b16 %v470
        %v1194 = vunpack.c.l.b16 %v471
        %v1195 = vunpack.c.h.b16 %v471
        %v1196 = vunpack.c.l.b16 %v472
        %v1197 = vunpack.c.h.b16 %v472
        %v1198 = vunpack.c.l.b16 %v473
        %v1199 = vunpack.c.h.b16 %v473
        %v1200 = vunpack.c.l.b16 %v474
        %v1201 = vunpack.c.h.b16 %v474
        %v1202 = vunpack.c.l.b16 %v475
        %v1203 = vunpack.c.h.b16 %v475
        %v1204 = vunpack.c.l.b16 %v476
        %v1205 = vunpack.c.h.b16 %v476
        %v1206 = vunpack.c.l.b16 %v477
        %v1207 = vunpack.c.h.b16 %v477
        %v1208 = vunpack.c.l.b16 %v478
        %v1209 = vunpack.c.h.b16 %v478
        %v1210 = vunpack.c.l.b16 %v479
        %v1211 = vunpack.c.h.b16 %v479
        %v1212 = vunpack.c.l.b16 %v480
        %v1213 = vunpack.c.h.b16 %v480
        %v1214 = vunpack.c.l.b16 %v481
        %v1215 = vunpack.c.h.b16 %v481
        %v1216 = vunpack.c.l.b16 %v482
        %v1217 = vunpack.c.h.b16 %v482
        %v1218 = vunpack.c.l.b16 %v483
        %v1219 = vunpack.c.h.b16 %v483
        %v1220 = vunpack.c.l.b16 %v484
        %v1221 = vunpack.c.h.b16 %v484
        %v1222 = vunpack.c.l.b16 %v485
        %v1223 = vunpack.c.h.b16 %v485
        %v1224 = vunpack.c.l.b16 %v486
        %v1225 = vunpack.c.h.b16 %v486
        %v1226 = vunpack.c.l.b16 %v487
        %v1227 = vunpack.c.h.b16 %v487
        %v1228 = vunpack.c.l.b16 %v488
        %v1229 = vunpack.c.h.b16 %v488
        %v1230 = vunpack.c.l.b16 %v489
        %v1231 = vunpack.c.h.b16 %v489
        %v1232 = vunpack.c.l.b16 %v490
        %v1233 = vunpack.c.h.b16 %v490
        %v1234 = vunpack.c.l.b16 %v491
        %v1235 = vunpack.c.h.b16 %v491
        %v1236 = vunpack.c.l.b16 %v492
        %v1237 = vunpack.c.h.b16 %v492
        %v1238 = vunpack.c.l.b16 %v493
        %v1239 = vunpack.c.h.b16 %v493
        %v1240 = vunpack.c.l.b16 %v494
        %v1241 = vunpack.c.h.b16 %v494
        %v1242 = vunpack.c.l.b16 %v495
        %v1243 = vunpack.c.h.b16 %v495
        %v1244 = vunpack.c.l.b16 %v496
        %v1245 = vunpack.c.h.b16 %v496
        %v1246 = vunpack.c.l.b16 %v497
        %v1247 = vunpack.c.h.b16 %v497
        %v1248 = vunpack.c.l.b16 %v498
        %v1249 = vunpack.c.h.b16 %v498
        %v1250 = vunpack.c.l.b16 %v499
        %v1251 = vunpack.c.h.b16 %v499
        %v1252 = vunpack.c.l.b16 %v500
        %v1253 = vunpack.c.h.b16 %v500
        %v1254 = vunpack.c.l.b16 %v501
        %v1255 = vunpack.c.h.b16 %v501
        %v1256 = vunpack.c.l.b16 %v502
        %v1257 = vunpack.c.h.b16 %v502
        %v1258 = vunpack.c.l.b16 %v503
        %v1259 = vunpack.c.h.b16 %v503
        %v1260 = vunpack.c.l.b16 %v504
        %v1261 = vunpack.c.h.b16 %v504
        %v1262 = vunpack.c.l.b16 %v505
        %v1263 = vunpack.c.h.b16 %v505
        %v1264 = vunpack.c.l.b16 %v506
        %v1265 = vunpack.c.h.b16 %v506
        %v1266 = vunpack.c.l.b16 %v507
        %v1267 = vunpack.c.h.b16 %v507
        %v1268 = vunpack.c.l.b16 %v508
        %v1269 = vunpack.c.h.b16 %v508
        %v1270 = vunpack.c.l.b16 %v509
        %v1271 = vunpack.c.h.b16 %v509
        %v1272 = vunpack.c.l.b16 %v510
        %v1273 = vunpack.c.h.b16 %v510
        %v1274 = vunpack.c.l.b16 %v511
        %v1275 = vunpack.c.h.b16 %v511
        %v1276 = vunpack.c.l.b16 %v512
        %v1277 = vunpack.c.h.b16 %v512
        %v1278 = vunpack.c.l.b16 %v513
        %v1279 = vunpack.c.h.b16 %v513
        %v1280 = vunpack.c.l.b16 %v514
        %v1281 = vunpack.c.h.b16 %v514
        %v1282 = vunpack.c.l.b16 %v515
        %v1283 = vunpack.c.h.b16 %v515
        %v1284 = vunpack.c.l.b16 %v516
        %v1285 = vunpack.c.h.b16 %v516
        %v1286 = vunpack.c.l.b16 %v517
        %v1287 = vunpack.c.h.b16 %v517
        %v1288 = vunpack.c.l.b16 %v518
        %v1289 = vunpack.c.h.b16 %v518
        %v1290 = vunpack.c.l.b16 %v519
        %v1291 = vunpack.c.h.b16 %v519
        %v1292 = vunpack.c.l.b16 %v520
        %v1293 = vunpack.c.h.b16 %v520
        %v1294 = vunpack.c.l.b16 %v521
        %v1295 = vunpack.c.h.b16 %v521
        %v1296 = vunpack.c.l.b16 %v522
        %v1297 = vunpack.c.h.b16 %v522
        %v1298 = vunpack.c.l.b16 %v523
        %v1299 = vunpack.c.h.b16 %v523
        %v1300 = vunpack.c.l.b16 %v524
        %v1301 = vunpack.c.h.b16 %v524
        %v1302 = vunpack.c.l.b16 %v525
        %v1303 = vunpack.c.h.b16 %v525
        %v1304 = vunpack.c.l.b16 %v526
        %v1305 = vunpack.c.h.b16 %v526
        %v1306 = vunpack.c.l.b16 %v527
        %v1307 = vunpack.c.h.b16 %v527
        %v1308 = vunpack.c.l.b16 %v528
        %v1309 = vunpack.c.h.b16 %v528
        %v1310 = vunpack.c.l.b16 %v529
        %v1311 = vunpack.c.h.b16 %v529
        %v1312 = vunpack.c.l.b16 %v530
        %v1313 = vunpack.c.h.b16 %v530
        %v1314 = vunpack.c.l.b16 %v531
        %v1315 = vunpack.c.h.b16 %v531
        %v1316 = vunpack.c.l.b16 %v532
        %v1317 = vunpack.c.h.b16 %v532
        %v1318 = vunpack.c.l.b16 %v533
        %v1319 = vunpack.c.h.b16 %v533
        %v1320 = vunpack.c.l.b16 %v534
        %v1321 = vunpack.c.h.b16 %v534
        %v1322 = vunpack.c.l.b16 %v535
        %v1323 = vunpack.c.h.b16 %v535
        %v1324 = vunpack.c.l.b16 %v536
        %v1325 = vunpack.c.h.b16 %v536
        %v1326 = vunpack.c.l.b16 %v537
        %v1327 = vunpack.c.h.b16 %v537
        %v1328 = vunpack.c.l.b16 %v538
        %v1329 = vunpack.c.h.b16 %v538
        %v1330 = vunpack.c.l.b16 %v539
        %v1331 = vunpack.c.h.b16 %v539
        %v1332 = vunpack.c.l.b16 %v540
        %v1333 = vunpack.c.h.b16 %v540
        %v1334 = vunpack.c.l.b16 %v541
        %v1335 = vunpack.c.h.b16 %v541
        %v1336 = vunpack.c.l.b16 %v542
        %v1337 = vunpack.c.h.b16 %v542
        %v1338 = vunpack.c.l.b16 %v543
        %v1339 = vunpack.c.h.b16 %v543
        %v1340 = vpack.c.b16 %v832, %v828
        %v1341 = vpack.c.b16 %v833, %v829
        %v1342 = vpack.c.b16 %v834, %v830
        %v1343 = vpack.c.b16 %v835, %v831
        %v1344 = vpack.c.b16 %v840, %v836
        %v1345 = vpack.c.b16 %v841, %v837
        %v1346 = vpack.c.b16 %v842, %v838
        %v1347 = vpack.c.b16 %v843, %v839
        %v1348 = vpack.c.b16 %v848, %v844
        %v1349 = vpack.c.b16 %v849, %v845
        %v1350 = vpack.c.b16 %v850, %v846
        %v1351 = vpack.c.b16 %v851, %v847
        %v1352 = vpack.c.b16 %v856, %v852
        %v1353 = vpack.c.b16 %v857, %v853
        %v1354 = vpack.c.b16 %v858, %v854
        %v1355 = vpack.c.b16 %v859, %v855
        %v1356 = vpack.c.b16 %v864, %v860
        %v1357 = vpack.c.b16 %v865, %v861
        %v1358 = vpack.c.b16 %v866, %v862
        %v1359 = vpack.c.b16 %v867, %v863
        %v1360 = vpack.c.b16 %v872, %v868
        %v1361 = vpack.c.b16 %v873, %v869
        %v1362 = vpack.c.b16 %v874, %v870
        %v1363 = vpack.c.b16 %v875, %v871
        %v1364 = vpack.c.b16 %v880, %v876
        %v1365 = vpack.c.b16 %v881, %v877
        %v1366 = vpack.c.b16 %v882, %v878
        %v1367 = vpack.c.b16 %v883, %v879
        %v1368 = vpack.c.b16 %v888, %v884
        %v1369 = vpack.c.b16 %v889, %v885
        %v1370 = vpack.c.b16 %v890, %v886
        %v1371 = vpack.c.b16 %v891, %v887
        %v1372 = vpack.c.b16 %v896, %v892
        %v1373 = vpack.c.b16 %v897, %v893
        %v1374 = vpack.c.b16 %v898, %v894
        %v1375 = vpack.c.b16 %v899, %v895
        %v1376 = vpack.c.b16 %v904, %v900
        %v1377 = vpack.c.b16 %v905, %v901
        %v1378 = vpack.c.b16 %v906, %v902
        %v1379 = vpack.c.b16 %v907, %v903
        %v1380 = vpack.c.b16 %v912, %v908
        %v1381 = vpack.c.b16 %v913, %v909
        %v1382 = vpack.c.b16 %v914, %v910
        %v1383 = vpack.c.b16 %v915, %v911
        %v1384 = vpack.c.b16 %v920, %v916
        %v1385 = vpack.c.b16 %v921, %v917
        %v1386 = vpack.c.b16 %v922, %v918
        %v1387 = vpack.c.b16 %v923, %v919
        %v1388 = vpack.c.b16 %v928, %v924
        %v1389 = vpack.c.b16 %v929, %v925
        %v1390 = vpack.c.b16 %v930, %v926
        %v1391 = vpack.c.b16 %v931, %v927
        %v1392 = vpack.c.b16 %v936, %v932
        %v1393 = vpack.c.b16 %v937, %v933
        %v1394 = vpack.c.b16 %v938, %v934
        %v1395 = vpack.c.b16 %v939, %v935
        %v1396 = vpack.c.b16 %v944, %v940
        %v1397 = vpack.c.b16 %v945, %v941
        %v1398 = vpack.c.b16 %v946, %v942
        %v1399 = vpack.c.b16 %v947, %v943
        %v1400 = vpack.c.b16 %v952, %v948
        %v1401 = vpack.c.b16 %v953, %v949
        %v1402 = vpack.c.b16 %v954, %v950
        %v1403 = vpack.c.b16 %v955, %v951
        %v1404 = vpack.c.b16 %v960, %v956
        %v1405 = vpack.c.b16 %v961, %v957
        %v1406 = vpack.c.b16 %v962, %v958
        %v1407 = vpack.c.b16 %v963, %v959
        %v1408 = vpack.c.b16 %v968, %v964
        %v1409 = vpack.c.b16 %v969, %v965
        %v1410 = vpack.c.b16 %v970, %v966
        %v1411 = vpack.c.b16 %v971, %v967
        %v1412 = vpack.c.b16 %v976, %v972
        %v1413 = vpack.c.b16 %v977, %v973
        %v1414 = vpack.c.b16 %v978, %v974
        %v1415 = vpack.c.b16 %v979, %v975
        %v1416 = vpack.c.b16 %v984, %v980
        %v1417 = vpack.c.b16 %v985, %v981
        %v1418 = vpack.c.b16 %v986, %v982
        %v1419 = vpack.c.b16 %v987, %v983
        %v1420 = vpack.c.b16 %v992, %v988
        %v1421 = vpack.c.b16 %v993, %v989
        %v1422 = vpack.c.b16 %v994, %v990
        %v1423 = vpack.c.b16 %v995, %v991
        %v1424 = vpack.c.b16 %v1000, %v996
        %v1425 = vpack.c.b16 %v1001, %v997
        %v1426 = vpack.c.b16 %v1002, %v998
        %v1427 = vpack.c.b16 %v1003, %v999
        %v1428 = vpack.c.b16 %v1008, %v1004
        %v1429 = vpack.c.b16 %v1009, %v1005
        %v1430 = vpack.c.b16 %v1010, %v1006
        %v1431 = vpack.c.b16 %v1011, %v1007
        %v1432 = vpack.c.b16 %v1016, %v1012
        %v1433 = vpack.c.b16 %v1017, %v1013
        %v1434 = vpack.c.b16 %v1018, %v1014
        %v1435 = vpack.c.b16 %v1019, %v1015
        %v1436 = vpack.c.b16 %v1024, %v1020
        %v1437 = vpack.c.b16 %v1025, %v1021
        %v1438 = vpack.c.b16 %v1026, %v1022
        %v1439 = vpack.c.b16 %v1027, %v1023
        %v1440 = vpack.c.b16 %v1032, %v1028
        %v1441 = vpack.c.b16 %v1033, %v1029
        %v1442 = vpack.c.b16 %v1034, %v1030
        %v1443 = vpack.c.b16 %v1035, %v1031
        %v1444 = vpack.c.b16 %v1040, %v1036
        %v1445 = vpack.c.b16 %v1041, %v1037
        %v1446 = vpack.c.b16 %v1042, %v1038
        %v1447 = vpack.c.b16 %v1043, %v1039
        %v1448 = vpack.c.b16 %v1048, %v1044
        %v1449 = vpack.c.b16 %v1049, %v1045
        %v1450 = vpack.c.b16 %v1050, %v1046
        %v1451 = vpack.c.b16 %v1051, %v1047
        %v1452 = vpack.c.b16 %v1056, %v1052
        %v1453 = vpack.c.b16 %v1057, %v1053
        %v1454 = vpack.c.b16 %v1058, %v1054
        %v1455 = vpack.c.b16 %v1059, %v1055
        %v1456 = vpack.c.b16 %v1064, %v1060
        %v1457 = vpack.c.b16 %v1065, %v1061
        %v1458 = vpack.c.b16 %v1066, %v1062
        %v1459 = vpack.c.b16 %v1067, %v1063
        %v1460 = vpack.c.b16 %v1072, %v1068
        %v1461 = vpack.c.b16 %v1073, %v1069
        %v1462 = vpack.c.b16 %v1074, %v1070
        %v1463 = vpack.c.b16 %v1075, %v1071
        %v1464 = vpack.c.b16 %v1080, %v1076
        %v1465 = vpack.c.b16 %v1081, %v1077
        %v1466 = vpack.c.b16 %v1082, %v1078
        %v1467 = vpack.c.b16 %v1083, %v1079
        %v1468 = vpack.c.b16 %v1088, %v1084
        %v1469 = vpack.c.b16 %v1089, %v1085
        %v1470 = vpack.c.b16 %v1090, %v1086
        %v1471 = vpack.c.b16 %v1091, %v1087
        %v1472 = vpack.c.b16 %v1096, %v1092
        %v1473 = vpack.c.b16 %v1097, %v1093
        %v1474 = vpack.c.b16 %v1098, %v1094
        %v1475 = vpack.c.b16 %v1099, %v1095
        %v1476 = vpack.c.b16 %v1104, %v1100
        %v1477 = vpack.c.b16 %v1105, %v1101
        %v1478 = vpack.c.b16 %v1106, %v1102
        %v1479 = vpack.c.b16 %v1107, %v1103
        %v1480 = vpack.c.b16 %v1112, %v1108
        %v1481 = vpack.c.b16 %v1113, %v1109
        %v1482 = vpack.c.b16 %v1114, %v1110
        %v1483 = vpack.c.b16 %v1115, %v1111
        %v1484 = vpack.c.b16 %v1120, %v1116
        %v1485 = vpack.c.b16 %v1121, %v1117
        %v1486 = vpack.c.b16 %v1122, %v1118
        %v1487 = vpack.c.b16 %v1123, %v1119
        %v1488 = vpack.c.b16 %v1128, %v1124
        %v1489 = vpack.c.b16 %v1129, %v1125
        %v1490 = vpack.c.b16 %v1130, %v1126
        %v1491 = vpack.c.b16 %v1131, %v1127
        %v1492 = vpack.c.b16 %v1136, %v1132
        %v1493 = vpack.c.b16 %v1137, %v1133
        %v1494 = vpack.c.b16 %v1138, %v1134
        %v1495 = vpack.c.b16 %v1139, %v1135
        %v1496 = vpack.c.b16 %v1144, %v1140
        %v1497 = vpack.c.b16 %v1145, %v1141
        %v1498 = vpack.c.b16 %v1146, %v1142
        %v1499 = vpack.c.b16 %v1147, %v1143
        %v1500 = vpack.c.b16 %v1152, %v1148
        %v1501 = vpack.c.b16 %v1153, %v1149
        %v1502 = vpack.c.b16 %v1154, %v1150
        %v1503 = vpack.c.b16 %v1155, %v1151
        %v1504 = vpack.c.b16 %v1160, %v1156
        %v1505 = vpack.c.b16 %v1161, %v1157
        %v1506 = vpack.c.b16 %v1162, %v1158
        %v1507 = vpack.c.b16 %v1163, %v1159
        %v1508 = vpack.c.b16 %v1168, %v1164
        %v1509 = vpack.c.b16 %v1169, %v1165
        %v1510 = vpack.c.b16 %v1170, %v1166
        %v1511 = vpack.c.b16 %v1171, %v1167
        %v1512 = vpack.c.b16 %v1176, %v1172
        %v1513 = vpack.c.b16 %v1177, %v1173
        %v1514 = vpack.c.b16 %v1178, %v1174
        %v1515 = vpack.c.b16 %v1179, %v1175
        %v1516 = vpack.c.b16 %v1184, %v1180
        %v1517 = vpack.c.b16 %v1185, %v1181
        %v1518 = vpack.c.b16 %v1186, %v1182
        %v1519 = vpack.c.b16 %v1187, %v1183
        %v1520 = vpack.c.b16 %v1192, %v1188
        %v1521 = vpack.c.b16 %v1193, %v1189
        %v1522 = vpack.c.b16 %v1194, %v1190
        %v1523 = vpack.c.b16 %v1195, %v1191
        %v1524 = vpack.c.b16 %v1200, %v1196
        %v1525 = vpack.c.b16 %v1201, %v1197
        %v1526 = vpack.c.b16 %v1202, %v1198
        %v1527 = vpack.c.b16 %v1203, %v1199
        %v1528 = vpack.c.b16 %v1208, %v1204
        %v1529 = vpack.c.b16 %v1209, %v1205
        %v1530 = vpack.c.b16 %v1210, %v1206
        %v1531 = vpack.c.b16 %v1211, %v1207
        %v1532 = vpack.c.b16 %v1216, %v1212
        %v1533 = vpack.c.b16 %v1217, %v1213
        %v1534 = vpack.c.b16 %v1218, %v1214
        %v1535 = vpack.c.b16 %v1219, %v1215
        %v1536 = vpack.c.b16 %v1224, %v1220
        %v1537 = vpack.c.b16 %v1225, %v1221
        %v1538 = vpack.c.b16 %v1226, %v1222
        %v1539 = vpack.c.b16 %v1227, %v1223
        %v1540 = vpack.c.b16 %v1232, %v1228
        %v1541 = vpack.c.b16 %v1233, %v1229
        %v1542 = vpack.c.b16 %v1234, %v1230
        %v1543 = vpack.c.b16 %v1235, %v1231
        %v1544 = vpack.c.b16 %v1240, %v1236
        %v1545 = vpack.c.b16 %v1241, %v1237
        %v1546 = vpack.c.b16 %v1242, %v1238
        %v1547 = vpack.c.b16 %v1243, %v1239
        %v1548 = vpack.c.b16 %v1248, %v1244
        %v1549 = vpack.c.b16 %v1249, %v1245
        %v1550 = vpack.c.b16 %v1250, %v1246
        %v1551 = vpack.c.b16 %v1251, %v1247
        %v1552 = vpack.c.b16 %v1256, %v1252
        %v1553 = vpack.c.b16 %v1257, %v1253
        %v1554 = vpack.c.b16 %v1258, %v1254
        %v1555 = vpack.c.b16 %v1259, %v1255
        %v1556 = vpack.c.b16 %v1264, %v1260
        %v1557 = vpack.c.b16 %v1265, %v1261
        %v1558 = vpack.c.b16 %v1266, %v1262
        %v1559 = vpack.c.b16 %v1267, %v1263
        %v1560 = vpack.c.b16 %v1272, %v1268
        %v1561 = vpack.c.b16 %v1273, %v1269
        %v1562 = vpack.c.b16 %v1274, %v1270
        %v1563 = vpack.c.b16 %v1275, %v1271
        %v1564 = vpack.c.b16 %v1280, %v1276
        %v1565 = vpack.c.b16 %v1281, %v1277
        %v1566 = vpack.c.b16 %v1282, %v1278
        %v1567 = vpack.c.b16 %v1283, %v1279
        %v1568 = vpack.c.b16 %v1288, %v1284
        %v1569 = vpack.c.b16 %v1289, %v1285
        %v1570 = vpack.c.b16 %v1290, %v1286
        %v1571 = vpack.c.b16 %v1291, %v1287
        %v1572 = vpack.c.b16 %v1296, %v1292
        %v1573 = vpack.c.b16 %v1297, %v1293
        %v1574 = vpack.c.b16 %v1298, %v1294
        %v1575 = vpack.c.b16 %v1299, %v1295
        %v1576 = vpack.c.b16 %v1304, %v1300
        %v1577 = vpack.c.b16 %v1305, %v1301
        %v1578 = vpack.c.b16 %v1306, %v1302
        %v1579 = vpack.c.b16 %v1307, %v1303
        %v1580 = vpack.c.b16 %v1312, %v1308
        %v1581 = vpack.c.b16 %v1313, %v1309
        %v1582 = vpack.c.b16 %v1314, %v1310
        %v1583 = vpack.c.b16 %v1315, %v1311
        %v1584 = vpack.c.b16 %v1320, %v1316
        %v1585 = vpack.c.b16 %v1321, %v1317
        %v1586 = vpack.c.b16 %v1322, %v1318
        %v1587 = vpack.c.b16 %v1323, %v1319
        %v1588 = vpack.c.b16 %v1328, %v1324
        %v1589 = vpack.c.b16 %v1329, %v1325
        %v1590 = vpack.c.b16 %v1330, %v1326
        %v1591 = vpack.c.b16 %v1331, %v1327
        %v1592 = vpack.c.b16 %v1336, %v1332
        %v1593 = vpack.c.b16 %v1337, %v1333
        %v1594 = vpack.c.b16 %v1338, %v1334
        %v1595 = vpack.c.b16 %v1339, %v1335
        %1852 = vmatprep.subr.bf16.mxu0 %v1369
        %1853 = vmatpush1.bf16.msra.mxu0 %v1368
        %1854 = vmatprep.subr.bf16.mxu0 %v1365
        %1855 = vmatpush1.bf16.msra.mxu0 %v1364
        %1856 = vmatprep.subr.bf16.mxu0 %v1361
        %1857 = vmatpush1.bf16.msra.mxu0 %v1360
        %1858 = vmatprep.subr.bf16.mxu0 %v1357
        %1859 = vmatpush1.bf16.msra.mxu0 %v1356
        %1860 = vmatprep.subr.bf16.mxu0 %v1353
        %1861 = vmatpush1.bf16.msra.mxu0 %v1352
        %1862 = vmatprep.subr.bf16.mxu0 %v1349
        %1863 = vmatpush1.bf16.msra.mxu0 %v1348
        %1864 = vmatprep.subr.bf16.mxu0 %v1345
        %1865 = vmatpush1.bf16.msra.mxu0 %v1344
        %1866 = vmatprep.subr.bf16.mxu0 %v1341
        %1867 = vmatpush1.bf16.msra.mxu0 %v1340
        %1868 = vmatprep.subr.bf16.mxu0 %v1401
        %1869 = vmatpush2.bf16.msra.mxu0 %v1400
        %1870 = vmatprep.subr.bf16.mxu0 %v1397
        %1871 = vmatpush2.bf16.msra.mxu0 %v1396
        %1872 = vmatprep.subr.bf16.mxu0 %v1393
        %1873 = vmatpush2.bf16.msra.mxu0 %v1392
        %1874 = vmatprep.subr.bf16.mxu0 %v1389
        %1875 = vmatpush2.bf16.msra.mxu0 %v1388
        %1876 = vmatprep.subr.bf16.mxu0 %v1385
        %1877 = vmatpush2.bf16.msra.mxu0 %v1384
        %1878 = vmatprep.subr.bf16.mxu0 %v1381
        %1879 = vmatpush2.bf16.msra.mxu0 %v1380
        %1880 = vmatprep.subr.bf16.mxu0 %v1377
        %1881 = vmatpush2.bf16.msra.mxu0 %v1376
        %1882 = vmatprep.subr.bf16.mxu0 %v1373
        %1883 = vmatpush2.bf16.msra.mxu0 %v1372
        %1884 = vmatprep.mubr.bf16.mxu0 %v557
        %1885 = vmatmul.mubr.bf16.gmra.mxu0 %v556
        %v1886 = vpop.f32.mrf.mxu0
        %v1887 = vadd.f32 0.0, %v1886
        %v1888 = vpop.f32.mrf.mxu0
        %v1889 = vadd.f32 0.0, %v1888
        %v1890 = vpop.f32.mrf.mxu0
        %v1891 = vpop.f32.mrf.mxu0
        %1892 = vdwg.mxu0
        %1893 = vmatprep.subr.bf16.mxu0 %v1433
        %1894 = vmatpush1.bf16.msra.mxu0 %v1432
        %1895 = vmatprep.subr.bf16.mxu0 %v1429
        %1896 = vmatpush1.bf16.msra.mxu0 %v1428
        %1897 = vmatprep.subr.bf16.mxu0 %v1425
        %1898 = vmatpush1.bf16.msra.mxu0 %v1424
        %1899 = vmatprep.subr.bf16.mxu0 %v1421
        %1900 = vmatpush1.bf16.msra.mxu0 %v1420
        %1901 = vmatprep.subr.bf16.mxu0 %v1417
        %1902 = vmatpush1.bf16.msra.mxu0 %v1416
        %1903 = vmatprep.subr.bf16.mxu0 %v1413
        %1904 = vmatpush1.bf16.msra.mxu0 %v1412
        %1905 = vmatprep.subr.bf16.mxu0 %v1409
        %1906 = vmatpush1.bf16.msra.mxu0 %v1408
        %1907 = vmatprep.subr.bf16.mxu0 %v1405
        %1908 = vmatpush1.bf16.msra.mxu0 %v1404
        %1909 = vmatprep.subr.bf16.mxu0 %v1465
        %1910 = vmatpush2.bf16.msra.mxu0 %v1464
        %1911 = vmatprep.subr.bf16.mxu0 %v1461
        %1912 = vmatpush2.bf16.msra.mxu0 %v1460
        %1913 = vmatprep.subr.bf16.mxu0 %v1457
        %1914 = vmatpush2.bf16.msra.mxu0 %v1456
        %1915 = vmatprep.subr.bf16.mxu0 %v1453
        %1916 = vmatpush2.bf16.msra.mxu0 %v1452
        %1917 = vmatprep.subr.bf16.mxu0 %v1449
        %1918 = vmatpush2.bf16.msra.mxu0 %v1448
        %1919 = vmatprep.subr.bf16.mxu0 %v1445
        %1920 = vmatpush2.bf16.msra.mxu0 %v1444
        %1921 = vmatprep.subr.bf16.mxu0 %v1441
        %1922 = vmatpush2.bf16.msra.mxu0 %v1440
        %1923 = vmatprep.subr.bf16.mxu0 %v1437
        %1924 = vmatpush2.bf16.msra.mxu0 %v1436
        %1925 = vmatprep.mubr.bf16.mxu0 %v559
        %1926 = vmatmul.mubr.bf16.gmra.mxu0 %v558
        %v1927 = vpop.f32.mrf.mxu0
        %v1928 = vadd.f32 %v1887, %v1927
        %v1929 = vpop.f32.mrf.mxu0
        %v1930 = vadd.f32 %v1889, %v1929
        %v1931 = vpop.f32.mrf.mxu0
        %v1932 = vpop.f32.mrf.mxu0
        %1933 = vdwg.mxu0
        %1934 = vmatprep.subr.bf16.mxu0 %v1497
        %1935 = vmatpush1.bf16.msra.mxu0 %v1496
        %1936 = vmatprep.subr.bf16.mxu0 %v1493
        %1937 = vmatpush1.bf16.msra.mxu0 %v1492
        %1938 = vmatprep.subr.bf16.mxu0 %v1489
        %1939 = vmatpush1.bf16.msra.mxu0 %v1488
        %1940 = vmatprep.subr.bf16.mxu0 %v1485
        %1941 = vmatpush1.bf16.msra.mxu0 %v1484
        %1942 = vmatprep.subr.bf16.mxu0 %v1481
        %1943 = vmatpush1.bf16.msra.mxu0 %v1480
        %1944 = vmatprep.subr.bf16.mxu0 %v1477
        %1945 = vmatpush1.bf16.msra.mxu0 %v1476
        %1946 = vmatprep.subr.bf16.mxu0 %v1473
        %1947 = vmatpush1.bf16.msra.mxu0 %v1472
        %1948 = vmatprep.subr.bf16.mxu0 %v1469
        %1949 = vmatpush1.bf16.msra.mxu0 %v1468
        %1950 = vmatprep.subr.bf16.mxu0 %v1529
        %1951 = vmatpush2.bf16.msra.mxu0 %v1528
        %1952 = vmatprep.subr.bf16.mxu0 %v1525
        %1953 = vmatpush2.bf16.msra.mxu0 %v1524
        %1954 = vmatprep.subr.bf16.mxu0 %v1521
        %1955 = vmatpush2.bf16.msra.mxu0 %v1520
        %1956 = vmatprep.subr.bf16.mxu0 %v1517
        %1957 = vmatpush2.bf16.msra.mxu0 %v1516
        %1958 = vmatprep.subr.bf16.mxu0 %v1513
        %1959 = vmatpush2.bf16.msra.mxu0 %v1512
        %1960 = vmatprep.subr.bf16.mxu0 %v1509
        %1961 = vmatpush2.bf16.msra.mxu0 %v1508
        %1962 = vmatprep.subr.bf16.mxu0 %v1505
        %1963 = vmatpush2.bf16.msra.mxu0 %v1504
        %1964 = vmatprep.subr.bf16.mxu0 %v1501
        %1965 = vmatpush2.bf16.msra.mxu0 %v1500
        %1966 = vmatprep.mubr.bf16.mxu0 %v561
        %1967 = vmatmul.mubr.bf16.gmra.mxu0 %v560
        %v1968 = vpop.f32.mrf.mxu0
        %v1969 = vadd.f32 %v1928, %v1968
        %v1970 = vpop.f32.mrf.mxu0
        %v1971 = vadd.f32 %v1930, %v1970
        %v1972 = vpop.f32.mrf.mxu0
        %v1973 = vpop.f32.mrf.mxu0
        %1974 = vdwg.mxu0
        %1975 = vmatprep.subr.bf16.mxu0 %v1561
        %1976 = vmatpush1.bf16.msra.mxu0 %v1560
        %1977 = vmatprep.subr.bf16.mxu0 %v1557
        %1978 = vmatpush1.bf16.msra.mxu0 %v1556
        %1979 = vmatprep.subr.bf16.mxu0 %v1553
        %1980 = vmatpush1.bf16.msra.mxu0 %v1552
        %1981 = vmatprep.subr.bf16.mxu0 %v1549
        %1982 = vmatpush1.bf16.msra.mxu0 %v1548
        %1983 = vmatprep.subr.bf16.mxu0 %v1545
        %1984 = vmatpush1.bf16.msra.mxu0 %v1544
        %1985 = vmatprep.subr.bf16.mxu0 %v1541
        %1986 = vmatpush1.bf16.msra.mxu0 %v1540
        %1987 = vmatprep.subr.bf16.mxu0 %v1537
        %1988 = vmatpush1.bf16.msra.mxu0 %v1536
        %1989 = vmatprep.subr.bf16.mxu0 %v1533
        %1990 = vmatpush1.bf16.msra.mxu0 %v1532
        %1991 = vmatprep.subr.bf16.mxu0 %v1593
        %1992 = vmatpush2.bf16.msra.mxu0 %v1592
        %1993 = vmatprep.subr.bf16.mxu0 %v1589
        %1994 = vmatpush2.bf16.msra.mxu0 %v1588
        %1995 = vmatprep.subr.bf16.mxu0 %v1585
        %1996 = vmatpush2.bf16.msra.mxu0 %v1584
        %1997 = vmatprep.subr.bf16.mxu0 %v1581
        %1998 = vmatpush2.bf16.msra.mxu0 %v1580
        %1999 = vmatprep.subr.bf16.mxu0 %v1577
        %2000 = vmatpush2.bf16.msra.mxu0 %v1576
        %2001 = vmatprep.subr.bf16.mxu0 %v1573
        %2002 = vmatpush2.bf16.msra.mxu0 %v1572
        %2003 = vmatprep.subr.bf16.mxu0 %v1569
        %2004 = vmatpush2.bf16.msra.mxu0 %v1568
        %2005 = vmatprep.subr.bf16.mxu0 %v1565
        %2006 = vmatpush2.bf16.msra.mxu0 %v1564
        %2007 = vmatprep.mubr.bf16.mxu0 %v563
        %2008 = vmatmul.mubr.bf16.gmra.mxu0 %v562
        %v2009 = vpop.f32.mrf.mxu0
        %v2010 = vadd.f32 %v1969, %v2009
        %v2011 = vpop.f32.mrf.mxu0
        %v2012 = vadd.f32 %v1971, %v2011
        %v2013 = vpop.f32.mrf.mxu0
        %v2014 = vpop.f32.mrf.mxu0
        %2015 = vdwg.mxu0
        %2016 = vmatprep.subr.bf16.mxu0 %v1371
        %2017 = vmatpush1.bf16.msra.mxu0 %v1370
        %2018 = vmatprep.subr.bf16.mxu0 %v1367
        %2019 = vmatpush1.bf16.msra.mxu0 %v1366
        %2020 = vmatprep.subr.bf16.mxu0 %v1363
        %2021 = vmatpush1.bf16.msra.mxu0 %v1362
        %2022 = vmatprep.subr.bf16.mxu0 %v1359
        %2023 = vmatpush1.bf16.msra.mxu0 %v1358
        %2024 = vmatprep.subr.bf16.mxu0 %v1355
        %2025 = vmatpush1.bf16.msra.mxu0 %v1354
        %2026 = vmatprep.subr.bf16.mxu0 %v1351
        %2027 = vmatpush1.bf16.msra.mxu0 %v1350
        %2028 = vmatprep.subr.bf16.mxu0 %v1347
        %2029 = vmatpush1.bf16.msra.mxu0 %v1346
        %2030 = vmatprep.subr.bf16.mxu0 %v1343
        %2031 = vmatpush1.bf16.msra.mxu0 %v1342
        %2032 = vmatprep.subr.bf16.mxu0 %v1403
        %2033 = vmatpush2.bf16.msra.mxu0 %v1402
        %2034 = vmatprep.subr.bf16.mxu0 %v1399
        %2035 = vmatpush2.bf16.msra.mxu0 %v1398
        %2036 = vmatprep.subr.bf16.mxu0 %v1395
        %2037 = vmatpush2.bf16.msra.mxu0 %v1394
        %2038 = vmatprep.subr.bf16.mxu0 %v1391
        %2039 = vmatpush2.bf16.msra.mxu0 %v1390
        %2040 = vmatprep.subr.bf16.mxu0 %v1387
        %2041 = vmatpush2.bf16.msra.mxu0 %v1386
        %2042 = vmatprep.subr.bf16.mxu0 %v1383
        %2043 = vmatpush2.bf16.msra.mxu0 %v1382
        %2044 = vmatprep.subr.bf16.mxu0 %v1379
        %2045 = vmatpush2.bf16.msra.mxu0 %v1378
        %2046 = vmatprep.subr.bf16.mxu0 %v1375
        %2047 = vmatpush2.bf16.msra.mxu0 %v1374
        %2048 = vmatprep.mubr.bf16.mxu0 %v557
        %2049 = vmatmul.mubr.bf16.gmra.mxu0 %v556
        %v2050 = vpop.f32.mrf.mxu0
        %v2051 = vadd.f32 0.0, %v2050
        %v2052 = vpop.f32.mrf.mxu0
        %v2053 = vadd.f32 0.0, %v2052
        %v2054 = vpop.f32.mrf.mxu0
        %v2055 = vpop.f32.mrf.mxu0
        %2056 = vdwg.mxu0
        %2057 = vmatprep.subr.bf16.mxu0 %v1435
        %2058 = vmatpush1.bf16.msra.mxu0 %v1434
        %2059 = vmatprep.subr.bf16.mxu0 %v1431
        %2060 = vmatpush1.bf16.msra.mxu0 %v1430
        %2061 = vmatprep.subr.bf16.mxu0 %v1427
        %2062 = vmatpush1.bf16.msra.mxu0 %v1426
        %2063 = vmatprep.subr.bf16.mxu0 %v1423
        %2064 = vmatpush1.bf16.msra.mxu0 %v1422
        %2065 = vmatprep.subr.bf16.mxu0 %v1419
        %2066 = vmatpush1.bf16.msra.mxu0 %v1418
        %2067 = vmatprep.subr.bf16.mxu0 %v1415
        %2068 = vmatpush1.bf16.msra.mxu0 %v1414
        %2069 = vmatprep.subr.bf16.mxu0 %v1411
        %2070 = vmatpush1.bf16.msra.mxu0 %v1410
        %2071 = vmatprep.subr.bf16.mxu0 %v1407
        %2072 = vmatpush1.bf16.msra.mxu0 %v1406
        %2073 = vmatprep.subr.bf16.mxu0 %v1467
        %2074 = vmatpush2.bf16.msra.mxu0 %v1466
        %2075 = vmatprep.subr.bf16.mxu0 %v1463
        %2076 = vmatpush2.bf16.msra.mxu0 %v1462
        %2077 = vmatprep.subr.bf16.mxu0 %v1459
        %2078 = vmatpush2.bf16.msra.mxu0 %v1458
        %2079 = vmatprep.subr.bf16.mxu0 %v1455
        %2080 = vmatpush2.bf16.msra.mxu0 %v1454
        %2081 = vmatprep.subr.bf16.mxu0 %v1451
        %2082 = vmatpush2.bf16.msra.mxu0 %v1450
        %2083 = vmatprep.subr.bf16.mxu0 %v1447
        %2084 = vmatpush2.bf16.msra.mxu0 %v1446
        %2085 = vmatprep.subr.bf16.mxu0 %v1443
        %2086 = vmatpush2.bf16.msra.mxu0 %v1442
        %2087 = vmatprep.subr.bf16.mxu0 %v1439
        %2088 = vmatpush2.bf16.msra.mxu0 %v1438
        %2089 = vmatprep.mubr.bf16.mxu0 %v559
        %2090 = vmatmul.mubr.bf16.gmra.mxu0 %v558
        %v2091 = vpop.f32.mrf.mxu0
        %v2092 = vadd.f32 %v2051, %v2091
        %v2093 = vpop.f32.mrf.mxu0
        %v2094 = vadd.f32 %v2053, %v2093
        %v2095 = vpop.f32.mrf.mxu0
        %v2096 = vpop.f32.mrf.mxu0
        %2097 = vdwg.mxu0
        %2098 = vmatprep.subr.bf16.mxu0 %v1499
        %2099 = vmatpush1.bf16.msra.mxu0 %v1498
        %2100 = vmatprep.subr.bf16.mxu0 %v1495
        %2101 = vmatpush1.bf16.msra.mxu0 %v1494
        %2102 = vmatprep.subr.bf16.mxu0 %v1491
        %2103 = vmatpush1.bf16.msra.mxu0 %v1490
        %2104 = vmatprep.subr.bf16.mxu0 %v1487
        %2105 = vmatpush1.bf16.msra.mxu0 %v1486
        %2106 = vmatprep.subr.bf16.mxu0 %v1483
        %2107 = vmatpush1.bf16.msra.mxu0 %v1482
        %2108 = vmatprep.subr.bf16.mxu0 %v1479
        %2109 = vmatpush1.bf16.msra.mxu0 %v1478
        %2110 = vmatprep.subr.bf16.mxu0 %v1475
        %2111 = vmatpush1.bf16.msra.mxu0 %v1474
        %2112 = vmatprep.subr.bf16.mxu0 %v1471
        %2113 = vmatpush1.bf16.msra.mxu0 %v1470
        %2114 = vmatprep.subr.bf16.mxu0 %v1531
        %2115 = vmatpush2.bf16.msra.mxu0 %v1530
        %2116 = vmatprep.subr.bf16.mxu0 %v1527
        %2117 = vmatpush2.bf16.msra.mxu0 %v1526
        %2118 = vmatprep.subr.bf16.mxu0 %v1523
        %2119 = vmatpush2.bf16.msra.mxu0 %v1522
        %2120 = vmatprep.subr.bf16.mxu0 %v1519
        %2121 = vmatpush2.bf16.msra.mxu0 %v1518
        %2122 = vmatprep.subr.bf16.mxu0 %v1515
        %2123 = vmatpush2.bf16.msra.mxu0 %v1514
        %2124 = vmatprep.subr.bf16.mxu0 %v1511
        %2125 = vmatpush2.bf16.msra.mxu0 %v1510
        %2126 = vmatprep.subr.bf16.mxu0 %v1507
        %2127 = vmatpush2.bf16.msra.mxu0 %v1506
        %2128 = vmatprep.subr.bf16.mxu0 %v1503
        %2129 = vmatpush2.bf16.msra.mxu0 %v1502
        %2130 = vmatprep.mubr.bf16.mxu0 %v561
        %2131 = vmatmul.mubr.bf16.gmra.mxu0 %v560
        %v2132 = vpop.f32.mrf.mxu0
        %v2133 = vadd.f32 %v2092, %v2132
        %v2134 = vpop.f32.mrf.mxu0
        %v2135 = vadd.f32 %v2094, %v2134
        %v2136 = vpop.f32.mrf.mxu0
        %v2137 = vpop.f32.mrf.mxu0
        %2138 = vdwg.mxu0
        %2139 = vmatprep.subr.bf16.mxu0 %v1563
        %2140 = vmatpush1.bf16.msra.mxu0 %v1562
        %2141 = vmatprep.subr.bf16.mxu0 %v1559
        %2142 = vmatpush1.bf16.msra.mxu0 %v1558
        %2143 = vmatprep.subr.bf16.mxu0 %v1555
        %2144 = vmatpush1.bf16.msra.mxu0 %v1554
        %2145 = vmatprep.subr.bf16.mxu0 %v1551
        %2146 = vmatpush1.bf16.msra.mxu0 %v1550
        %2147 = vmatprep.subr.bf16.mxu0 %v1547
        %2148 = vmatpush1.bf16.msra.mxu0 %v1546
        %2149 = vmatprep.subr.bf16.mxu0 %v1543
        %2150 = vmatpush1.bf16.msra.mxu0 %v1542
        %2151 = vmatprep.subr.bf16.mxu0 %v1539
        %2152 = vmatpush1.bf16.msra.mxu0 %v1538
        %2153 = vmatprep.subr.bf16.mxu0 %v1535
        %2154 = vmatpush1.bf16.msra.mxu0 %v1534
        %2155 = vmatprep.subr.bf16.mxu0 %v1595
        %2156 = vmatpush2.bf16.msra.mxu0 %v1594
        %2157 = vmatprep.subr.bf16.mxu0 %v1591
        %2158 = vmatpush2.bf16.msra.mxu0 %v1590
        %2159 = vmatprep.subr.bf16.mxu0 %v1587
        %2160 = vmatpush2.bf16.msra.mxu0 %v1586
        %2161 = vmatprep.subr.bf16.mxu0 %v1583
        %2162 = vmatpush2.bf16.msra.mxu0 %v1582
        %2163 = vmatprep.subr.bf16.mxu0 %v1579
        %2164 = vmatpush2.bf16.msra.mxu0 %v1578
        %2165 = vmatprep.subr.bf16.mxu0 %v1575
        %2166 = vmatpush2.bf16.msra.mxu0 %v1574
        %2167 = vmatprep.subr.bf16.mxu0 %v1571
        %2168 = vmatpush2.bf16.msra.mxu0 %v1570
        %2169 = vmatprep.subr.bf16.mxu0 %v1567
        %2170 = vmatpush2.bf16.msra.mxu0 %v1566
        %2171 = vmatprep.mubr.bf16.mxu0 %v563
        %2172 = vmatmul.mubr.bf16.gmra.mxu0 %v562
        %v2173 = vpop.f32.mrf.mxu0
        %v2174 = vadd.f32 %v2133, %v2173
        %v2175 = vpop.f32.mrf.mxu0
        %v2176 = vadd.f32 %v2135, %v2175
        %v2177 = vpop.f32.mrf.mxu0
        %v2178 = vpop.f32.mrf.mxu0
        %2179 = vdwg.mxu0
        %v2180 = vadd.f32 %v280, %v2010
        %v2181 = vadd.f32 %v281, %v2012
        %v2182 = vadd.f32 %v282, %v2174
        %v2183 = vadd.f32 %v283, %v2176
        %2184 = vst [vmem:[#allocation2] sm:$0xff] %v2180
        %2185 = vst [vmem:[#allocation2 + $0x8] sm:$0xff] %v2181
        %2186 = vst [vmem:[#allocation2 + $0x10] sm:$0xff] %v2182
        %2187 = vst [vmem:[#allocation2 + $0x18] sm:$0xff] %v2183
        %p2188 = scmp.eq.s32.totalorder %s25, 23
        // Predicated region
        $region45: #{discriminator_forward.4} parent=31 // pred_check
          %p2189 = pneg %p2188
        $region46: #{discriminator_forward.4} parent=31 // pred_check_branch
          %2191 = sbr.rel (%p2189) target = $region48
        $region47: #{discriminator_forward.4} parent=31 // pred_region
          %v2192 = vld [vmem:[#allocation2] sm:$0xff]
          %v2193 = vld [vmem:[#allocation2 + $0x8] sm:$0xff]
          %v2194 = vld [vmem:[#allocation2 + $0x10] sm:$0xff]
          %v2195 = vld [vmem:[#allocation2 + $0x18] sm:$0xff]
          %v2196 = vld [vmem:[%s224] sm:$0xf]
          %v2198 = vlaneseq
          %v2199 = vshrl.u32 %v2198, 7
          %v2200 = vsub.s32 0, %v2199
          %v2201 = vrot.slane %v2196, %v2200
          %v2202 = vlaneseq
          %v2203 = vshrl.u32 %v2202, 7
          %v2204 = vsub.s32 1, %v2203
          %v2205 = vrot.slane %v2196, %v2204
          %v2206 = vlaneseq
          %v2207 = vshrl.u32 %v2206, 7
          %v2208 = vsub.s32 2, %v2207
          %v2209 = vrot.slane %v2196, %v2208
          %v2210 = vlaneseq
          %v2211 = vshrl.u32 %v2210, 7
          %v2212 = vsub.s32 3, %v2211
          %v2213 = vrot.slane %v2196, %v2212
          %v2218 = vadd.f32 %v2192, %v2201
          %v2219 = vadd.f32 %v2193, %v2205
          %v2220 = vadd.f32 %v2194, %v2209
          %v2221 = vadd.f32 %v2195, %v2213
          %vm2222 = vcmp.ge.f32.partialorder %v2218, 0.0
          %vm2223 = vcmp.ge.f32.partialorder %v2219, 0.0
          %vm2224 = vcmp.ge.f32.partialorder %v2220, 0.0
          %vm2225 = vcmp.ge.f32.partialorder %v2221, 0.0
          %v2226 = vmul.f32 %v2218, 0.2
          %v2227 = vmul.f32 %v2219, 0.2
          %v2228 = vmul.f32 %v2220, 0.2
          %v2229 = vmul.f32 %v2221, 0.2
          %v2230 = vsel %vm2222, %v2218, %v2226
          %v2231 = vsel %vm2223, %v2219, %v2227
          %v2232 = vsel %vm2224, %v2220, %v2228
          %v2233 = vsel %vm2225, %v2221, %v2229
          %v2234 = vpack.c.bf16 %v2230, %v2230
          %v2235 = vpack.c.bf16 %v2231, %v2231
          %v2236 = vpack.c.bf16 %v2232, %v2232
          %v2237 = vpack.c.bf16 %v2233, %v2233
          %v2242 = vunpack.c.l.b16 %v2234
          %v2243 = vunpack.c.l.b16 %v2235
          %v2244 = vunpack.c.l.b16 %v2236
          %v2245 = vunpack.c.l.b16 %v2237
          %v2246 = vpack.c.b16 %v2243, %v2242
          %v2247 = vpack.c.b16 %v2245, %v2244
          %2250 = vst [vmem:[%s270] sm:$0xff] %v2246
          %2251 = vst [vmem:[%s270 + $0x8] sm:$0xff] %v2247
        $region48: #{discriminator_forward.4} parent=31 // pred_fallthru
          _
        %s2252 = smul.u32 4, %s24
        %p2253 = scmp.lt.s32.totalorder %s2252, 31
        %s2254 = scalar_select %p2253, %s2252, 31
        %s2255 = smul.addr %s2254, 4
        %s2256 = scalar_lea.vmem %s3, %s2255
        // Predicated region
        $region49: #{discriminator_forward.4} parent=31 // pred_check
          %p2257 = pneg %p130
        $region50: #{discriminator_forward.4} parent=31 // pred_check_branch
          %2259 = sbr.rel (%p2257) target = $region52
        $region51: #{discriminator_forward.4} parent=31 // pred_region
          %s2260 = smul.u32 4, %s24
        $region52: #{discriminator_forward.4} parent=31 // pred_fallthru
          _
      $region32: #{discriminator_forward.4} parent=5 // pred_fallthru
        _
      %p2261 = scmp.le.s32.totalorder 2, %s15
      // Predicated region
      $region53: #{discriminator_forward.4} parent=5 // pred_check
        %p2262 = pneg %p2261
      $region54: #{discriminator_forward.4} parent=5 // pred_check_branch
        %2264 = sbr.rel (%p2262) target = $region56
      $region55: #{discriminator_forward.4} parent=5 // pred_region
        %s2265 = ssub.s32 %s15, 2
        // Predicated region
        $region57: #{discriminator_forward.4} parent=55 // pred_check
          %p2266 = pneg %p136
        $region58: #{discriminator_forward.4} parent=55 // pred_check_branch
          %2268 = sbr.rel (%p2266) target = $region60
        $region59: #{discriminator_forward.4} parent=55 // pred_region
          %s2269 = smul.u32 4, %s26
          %p2270 = scmp.lt.s32.totalorder %s2269, 31
          %s2271 = scalar_select %p2270, %s2269, 31
          %s2272 = smul.addr %s2271, 4
          %s2273 = scalar_lea.vmem %s3, %s2272
        $region60: #{discriminator_forward.4} parent=55 // pred_fallthru
          _
      $region56: #{discriminator_forward.4} parent=5 // pred_fallthru
        _
    $region6: #{discriminator_forward.4} parent=1 // loop_footer
      %s19 = sadd.s32 1, %s15
    $region7: #{discriminator_forward.4} parent=1 // loop_footer_branch
      %14 = sbr.rel target = $region3
    $region8: #{discriminator_forward.4} parent=1 // loop_exit
      _
    %2274 = vsyncpa [#allocation4], 1
    %s2275 = scalar_lea.sflag [#allocation4], 1
    %2276 = vsyncpa %s2275, 1
    %2277 = vsyncpa [#allocation6], 1
    %s2278 = scalar_lea.sflag [#allocation6], 1
    %2279 = vsyncpa %s2278, 1

// kernel: discriminator_forward.5
$region0: #{discriminator_forward.5}
  #allocation0 [shape = 'u32[]', space=smem, size = 0x4, offset = 0x4, fixed_abs, tag = 'smem constant byte address 0x4 - core index']
  #allocation1 [shape = 'u32[144,128]{1,0:T(1,128)}', space=vmem, size = 0x12000, scoped, tag = 'internal scratch']
  #allocation2 [shape = 'f32[8,512]{1,0:T(8,128)}', space=vmem, size = 0x4000, scoped, tag = 'scratch operand']
  %s0 = inlined_call_operand.vmem [shape: bf16[8,4096], index: 0, kind: input, shape index: {}]
  %s1 = inlined_call_operand.vmem [shape: bf16[4096,2048], index: 1, kind: input, shape index: {}]
  %s2 = inlined_call_operand.vmem [shape: f32[1,2048], index: 2, kind: input, shape index: {}]
  %s3 = inlined_call_operand.vmem [shape: bf16[8,2048], index: 3, kind: output, shape index: {}]
  %s4 = sld [smem:[#allocation0]]
  $region76: #{discriminator_forward.5} parent=0
    _
  %s6 = ssub.s32 1, %s4
  %s7 = scalar_select 0, %s6, %s4
  $region1: #{discriminator_forward.5} parent=0
    #allocation3 [shape = 'u8[2097152]{0}', space=vmem, size = 0x200000, scoped, tag = 'input window, operand 1']
    loop: start=0, step=1, limit=18
    $region2: #{discriminator_forward.5} parent=1 // loop_pre_header
      _
    $region3: #{discriminator_forward.5} parent=1 // loop_header
      %s9 = sphi 0, %s13
      %p10 = scmp.ge.s32.totalorder %s9, 18
      %s16 = sphi 0, %s28
      %s17 = sphi 0, %s24
      %s18 = sphi 0, %s16
      %s19 = sphi 0, %s17
      %s20 = sphi 0, %s18
      %s21 = sphi 0, %s19
      %s31 = sphi 0, %s33
      %s34 = sphi 0, %s31
      %s35 = sphi 0, %s34
      %s51 = sphi 0, %s35
      %s59 = sphi 0, %s61
      %s62 = sphi 0, %s59
      %s63 = sphi 0, %s62
      %s79 = sphi 0, %s63
      %s85 = sphi 0, %s87
      %s88 = sphi 0, %s85
      %s89 = sphi 0, %s88
      %s105 = sphi 0, %s89
      %s111 = sphi 0, %s113
      %s114 = sphi 0, %s111
      %s115 = sphi 0, %s114
      %s131 = sphi 0, %s115
    $region4: #{discriminator_forward.5} parent=1 // loop_header_branch
      %12 = sbr.rel (%p10) target = $region8
    $region5: #{discriminator_forward.5} parent=1 // loop_body
      %s14 = ssub.s32 %s9, 1
      %s15 = ssub.s32 %s9, 2
      %s22 = sadd.s32 1, %s17
      %p23 = scmp.ge.s32.totalorder %s22, 4
      %s24 = scalar_select %p23, 0, %s22
      %s25 = sadd.s32 1, %s16
      %s26 = scalar_select %p23, %s25, %s16
      %p27 = scmp.ge.s32.totalorder %s26, 4
      %s28 = scalar_select %p27, 0, %s26
      %s29 = ssub.s32 %s17, %s24
      %p30 = scmp.eq.s32.totalorder %s29, 0
      %s32 = sadd.s32 %s31, 1
      %s33 = scalar_select %p30, %s31, %s32
      %p36 = pneg %p30
      %p37 = scmp.eq.s32.totalorder %s9, 15
      %p38 = por %p36, %p37
      %p39 = scmp.ne.s32.totalorder %s31, %s34
      %p40 = scmp.eq.s32.totalorder %s9, 0
      %p41 = por %p39, %p40
      %p42 = scmp.ne.s32.totalorder %s31, %s34
      %p43 = scmp.eq.s32.totalorder %s14, 15
      %p44 = por %p42, %p43
      %p45 = scmp.ne.s32.totalorder %s34, %s35
      %p46 = scmp.eq.s32.totalorder %s14, 0
      %p47 = por %p45, %p46
      %p48 = scmp.ne.s32.totalorder %s34, %s35
      %p49 = scmp.eq.s32.totalorder %s15, 15
      %p50 = por %p48, %p49
      %p52 = scmp.ne.s32.totalorder %s35, %s51
      %p53 = scmp.eq.s32.totalorder %s15, 0
      %p54 = por %p52, %p53
      %s55 = ssub.s32 %s17, %s24
      %s56 = ssub.s32 %s16, %s28
      %s57 = sor.u32 %s55, %s56
      %p58 = scmp.eq.s32.totalorder %s57, 0
      %s60 = sadd.s32 %s59, 1
      %s61 = scalar_select %p58, %s59, %s60
      %p64 = pneg %p58
      %p65 = scmp.eq.s32.totalorder %s9, 15
      %p66 = por %p64, %p65
      %p67 = scmp.ne.s32.totalorder %s59, %s62
      %p68 = scmp.eq.s32.totalorder %s9, 0
      %p69 = por %p67, %p68
      %p70 = scmp.ne.s32.totalorder %s59, %s62
      %p71 = scmp.eq.s32.totalorder %s14, 15
      %p72 = por %p70, %p71
      %p73 = scmp.ne.s32.totalorder %s62, %s63
      %p74 = scmp.eq.s32.totalorder %s14, 0
      %p75 = por %p73, %p74
      %p76 = scmp.ne.s32.totalorder %s62, %s63
      %p77 = scmp.eq.s32.totalorder %s15, 15
      %p78 = por %p76, %p77
      %p80 = scmp.ne.s32.totalorder %s63, %s79
      %p81 = scmp.eq.s32.totalorder %s15, 0
      %p82 = por %p80, %p81
      %s83 = ssub.s32 %s16, %s28
      %p84 = scmp.eq.s32.totalorder %s83, 0
      %s86 = sadd.s32 %s85, 1
      %s87 = scalar_select %p84, %s85, %s86
      %p90 = pneg %p84
      %p91 = scmp.eq.s32.totalorder %s9, 15
      %p92 = por %p90, %p91
      %p93 = scmp.ne.s32.totalorder %s85, %s88
      %p94 = scmp.eq.s32.totalorder %s9, 0
      %p95 = por %p93, %p94
      %p96 = scmp.ne.s32.totalorder %s85, %s88
      %p97 = scmp.eq.s32.totalorder %s14, 15
      %p98 = por %p96, %p97
      %p99 = scmp.ne.s32.totalorder %s88, %s89
      %p100 = scmp.eq.s32.totalorder %s14, 0
      %p101 = por %p99, %p100
      %p102 = scmp.ne.s32.totalorder %s88, %s89
      %p103 = scmp.eq.s32.totalorder %s15, 15
      %p104 = por %p102, %p103
      %p106 = scmp.ne.s32.totalorder %s89, %s105
      %p107 = scmp.eq.s32.totalorder %s15, 0
      %p108 = por %p106, %p107
      %s109 = ssub.s32 %s16, %s28
      %p110 = scmp.eq.s32.totalorder %s109, 0
      %s112 = sadd.s32 %s111, 1
      %s113 = scalar_select %p110, %s111, %s112
      %p116 = pneg %p110
      %p117 = scmp.eq.s32.totalorder %s9, 15
      %p118 = por %p116, %p117
      %p119 = scmp.ne.s32.totalorder %s111, %s114
      %p120 = scmp.eq.s32.totalorder %s9, 0
      %p121 = por %p119, %p120
      %p122 = scmp.ne.s32.totalorder %s111, %s114
      %p123 = scmp.eq.s32.totalorder %s14, 15
      %p124 = por %p122, %p123
      %p125 = scmp.ne.s32.totalorder %s114, %s115
      %p126 = scmp.eq.s32.totalorder %s14, 0
      %p127 = por %p125, %p126
      %p128 = scmp.ne.s32.totalorder %s114, %s115
      %p129 = scmp.eq.s32.totalorder %s15, 15
      %p130 = por %p128, %p129
      %p132 = scmp.ne.s32.totalorder %s115, %s131
      %p133 = scmp.eq.s32.totalorder %s15, 0
      %p134 = por %p132, %p133
      %p135 = scmp.le.s32.totalorder 1, %s9
      %p136 = scmp.lt.s32.totalorder %s9, 17
      %p137 = pnand %p135, %p136
      %p138 = pneg %p137
      // Predicated region
      $region9: #{discriminator_forward.5} parent=5 // pred_check
        _
      $region10: #{discriminator_forward.5} parent=5 // pred_check_branch
        %140 = sbr.rel (%p137) target = $region12
      $region11: #{discriminator_forward.5} parent=5 // pred_region
        %s141 = ssub.s32 %s9, 1
      $region12: #{discriminator_forward.5} parent=5 // pred_fallthru
        _
      %p142 = scmp.lt.s32.totalorder %s9, 16
      // Predicated region
      $region13: #{discriminator_forward.5} parent=5 // pred_check
        %p143 = pneg %p142
      $region14: #{discriminator_forward.5} parent=5 // pred_check_branch
        %145 = sbr.rel (%p143) target = $region16
      $region15: #{discriminator_forward.5} parent=5 // pred_region
        // Predicated region
        $region17: #{discriminator_forward.5} parent=15 // pred_check
          %p146 = pneg %p41
        $region18: #{discriminator_forward.5} parent=15 // pred_check_branch
          %148 = sbr.rel (%p146) target = $region20
        $region19: #{discriminator_forward.5} parent=15 // pred_region
          %s149 = smul.u32 8, %s17
          %p150 = scmp.lt.s32.totalorder %s149, 31
          %s151 = scalar_select %p150, %s149, 31
          %s152 = smul.addr %s151, 4
          %s153 = scalar_lea.vmem %s0, %s152
          %s154 = smul.u32 8, %s17
        $region20: #{discriminator_forward.5} parent=15 // pred_fallthru
          _
        // Predicated region
        $region21: #{discriminator_forward.5} parent=15 // pred_check
          %p155 = pneg %p69
        $region22: #{discriminator_forward.5} parent=15 // pred_check_branch
          %157 = sbr.rel (%p155) target = $region24
        $region23: #{discriminator_forward.5} parent=15 // pred_region
          %s158 = sand.u32 %s59, 1
          %s159 = sand.u32 %s59, 1
          %s160 = smul.addr %s159, 2048
          %s161 = scalar_lea.vmem [#allocation3], %s160
          %s162 = smul.u32 128, %s17
          %s163 = smul.u32 4, %s16
          %s164 = smul.addr %s162, 16
          %s165 = sadd.s32 %s163, %s164
          %s166 = smul.addr %s165, 4
          %s167 = scalar_lea.vmem %s1, %s166
          // Predicated region
          $region25: #{discriminator_forward.5} parent=23 // pred_check
            _
          $region26: #{discriminator_forward.5} parent=23 // pred_check_branch
            %169 = sbr.rel (0) target = $region28
          $region27: #{discriminator_forward.5} parent=23 // pred_region
            // Predicated region
            $region29: #{discriminator_forward.5} parent=27 // pred_check
              _
            $region30: #{discriminator_forward.5} parent=27 // pred_check_branch
              %171 = sbr.rel (0) target = $region32
            $region31: #{discriminator_forward.5} parent=27 // pred_region
              loop: start=0, step=1, limit=1
              $region33: #{discriminator_forward.5} parent=31 // loop_pre_header
                _
              $region34: #{discriminator_forward.5} parent=31 // loop_header
                %s173 = sphi 0, %s177
                %p174 = scmp.ge.s32.totalorder %s173, 1
                %s178 = sphi %s167, %s167
                %s179 = sphi %s161, %s161
              $region35: #{discriminator_forward.5} parent=31 // loop_header_branch
                %176 = sbr.rel (%p174) target = $region39
              $region36: #{discriminator_forward.5} parent=31 // loop_body
                %v180 = vld [vmem:[%s178] sm:$0xff]
                %181 = vst [vmem:[%s179] sm:$0xff] %v180
                %v182 = vld [vmem:[%s178 + $0x8] sm:$0xff]
                %183 = vst [vmem:[%s179 + $0x8] sm:$0xff] %v182
                %v184 = vld [vmem:[%s178 + $0x40] sm:$0xff]
                %185 = vst [vmem:[%s179 + $0x10] sm:$0xff] %v184
                %v186 = vld [vmem:[%s178 + $0x48] sm:$0xff]
                %187 = vst [vmem:[%s179 + $0x18] sm:$0xff] %v186
                %v188 = vld [vmem:[%s178 + $0x80] sm:$0xff]
                %189 = vst [vmem:[%s179 + $0x20] sm:$0xff] %v188
                %v190 = vld [vmem:[%s178 + $0x88] sm:$0xff]
                %191 = vst [vmem:[%s179 + $0x28] sm:$0xff] %v190
                %v192 = vld [vmem:[%s178 + $0xc0] sm:$0xff]
                %193 = vst [vmem:[%s179 + $0x30] sm:$0xff] %v192
                %v194 = vld [vmem:[%s178 + $0xc8] sm:$0xff]
                %195 = vst [vmem:[%s179 + $0x38] sm:$0xff] %v194
                %v196 = vld [vmem:[%s178 + $0x100] sm:$0xff]
                %197 = vst [vmem:[%s179 + $0x40] sm:$0xff] %v196
                %v198 = vld [vmem:[%s178 + $0x108] sm:$0xff]
                %199 = vst [vmem:[%s179 + $0x48] sm:$0xff] %v198
                %v200 = vld [vmem:[%s178 + $0x140] sm:$0xff]
                %201 = vst [vmem:[%s179 + $0x50] sm:$0xff] %v200
                %v202 = vld [vmem:[%s178 + $0x148] sm:$0xff]
                %203 = vst [vmem:[%s179 + $0x58] sm:$0xff] %v202
                %v204 = vld [vmem:[%s178 + $0x180] sm:$0xff]
                %205 = vst [vmem:[%s179 + $0x60] sm:$0xff] %v204
                %v206 = vld [vmem:[%s178 + $0x188] sm:$0xff]
                %207 = vst [vmem:[%s179 + $0x68] sm:$0xff] %v206
                %v208 = vld [vmem:[%s178 + $0x1c0] sm:$0xff]
                %209 = vst [vmem:[%s179 + $0x70] sm:$0xff] %v208
                %v210 = vld [vmem:[%s178 + $0x1c8] sm:$0xff]
                %211 = vst [vmem:[%s179 + $0x78] sm:$0xff] %v210
                %v212 = vld [vmem:[%s178 + $0x200] sm:$0xff]
                %213 = vst [vmem:[%s179 + $0x80] sm:$0xff] %v212
                %v214 = vld [vmem:[%s178 + $0x208] sm:$0xff]
                %215 = vst [vmem:[%s179 + $0x88] sm:$0xff] %v214
                %v216 = vld [vmem:[%s178 + $0x240] sm:$0xff]
                %217 = vst [vmem:[%s179 + $0x90] sm:$0xff] %v216
                %v218 = vld [vmem:[%s178 + $0x248] sm:$0xff]
                %219 = vst [vmem:[%s179 + $0x98] sm:$0xff] %v218
                %v220 = vld [vmem:[%s178 + $0x280] sm:$0xff]
                %221 = vst [vmem:[%s179 + $0xa0] sm:$0xff] %v220
                %v222 = vld [vmem:[%s178 + $0x288] sm:$0xff]
                %223 = vst [vmem:[%s179 + $0xa8] sm:$0xff] %v222
                %v224 = vld [vmem:[%s178 + $0x2c0] sm:$0xff]
                %225 = vst [vmem:[%s179 + $0xb0] sm:$0xff] %v224
                %v226 = vld [vmem:[%s178 + $0x2c8] sm:$0xff]
                %227 = vst [vmem:[%s179 + $0xb8] sm:$0xff] %v226
                %v228 = vld [vmem:[%s178 + $0x300] sm:$0xff]
                %229 = vst [vmem:[%s179 + $0xc0] sm:$0xff] %v228
                %v230 = vld [vmem:[%s178 + $0x308] sm:$0xff]
                %231 = vst [vmem:[%s179 + $0xc8] sm:$0xff] %v230
                %v232 = vld [vmem:[%s178 + $0x340] sm:$0xff]
                %233 = vst [vmem:[%s179 + $0xd0] sm:$0xff] %v232
                %v234 = vld [vmem:[%s178 + $0x348] sm:$0xff]
                %235 = vst [vmem:[%s179 + $0xd8] sm:$0xff] %v234
                %v236 = vld [vmem:[%s178 + $0x380] sm:$0xff]
                %237 = vst [vmem:[%s179 + $0xe0] sm:$0xff] %v236
                %v238 = vld [vmem:[%s178 + $0x388] sm:$0xff]
                %239 = vst [vmem:[%s179 + $0xe8] sm:$0xff] %v238
                %v240 = vld [vmem:[%s178 + $0x3c0] sm:$0xff]
                %241 = vst [vmem:[%s179 + $0xf0] sm:$0xff] %v240
                %v242 = vld [vmem:[%s178 + $0x3c8] sm:$0xff]
                %243 = vst [vmem:[%s179 + $0xf8] sm:$0xff] %v242
                %v244 = vld [vmem:[%s178 + $0x400] sm:$0xff]
                %245 = vst [vmem:[%s179 + $0x100] sm:$0xff] %v244
                %v246 = vld [vmem:[%s178 + $0x408] sm:$0xff]
                %247 = vst [vmem:[%s179 + $0x108] sm:$0xff] %v246
                %v248 = vld [vmem:[%s178 + $0x440] sm:$0xff]
                %249 = vst [vmem:[%s179 + $0x110] sm:$0xff] %v248
                %v250 = vld [vmem:[%s178 + $0x448] sm:$0xff]
                %251 = vst [vmem:[%s179 + $0x118] sm:$0xff] %v250
                %v252 = vld [vmem:[%s178 + $0x480] sm:$0xff]
                %253 = vst [vmem:[%s179 + $0x120] sm:$0xff] %v252
                %v254 = vld [vmem:[%s178 + $0x488] sm:$0xff]
                %255 = vst [vmem:[%s179 + $0x128] sm:$0xff] %v254
                %v256 = vld [vmem:[%s178 + $0x4c0] sm:$0xff]
                %257 = vst [vmem:[%s179 + $0x130] sm:$0xff] %v256
                %v258 = vld [vmem:[%s178 + $0x4c8] sm:$0xff]
                %259 = vst [vmem:[%s179 + $0x138] sm:$0xff] %v258
                %v260 = vld [vmem:[%s178 + $0x500] sm:$0xff]
                %261 = vst [vmem:[%s179 + $0x140] sm:$0xff] %v260
                %v262 = vld [vmem:[%s178 + $0x508] sm:$0xff]
                %263 = vst [vmem:[%s179 + $0x148] sm:$0xff] %v262
                %v264 = vld [vmem:[%s178 + $0x540] sm:$0xff]
                %265 = vst [vmem:[%s179 + $0x150] sm:$0xff] %v264
                %v266 = vld [vmem:[%s178 + $0x548] sm:$0xff]
                %267 = vst [vmem:[%s179 + $0x158] sm:$0xff] %v266
                %v268 = vld [vmem:[%s178 + $0x580] sm:$0xff]
                %269 = vst [vmem:[%s179 + $0x160] sm:$0xff] %v268
                %v270 = vld [vmem:[%s178 + $0x588] sm:$0xff]
                %271 = vst [vmem:[%s179 + $0x168] sm:$0xff] %v270
                %v272 = vld [vmem:[%s178 + $0x5c0] sm:$0xff]
                %273 = vst [vmem:[%s179 + $0x170] sm:$0xff] %v272
                %v274 = vld [vmem:[%s178 + $0x5c8] sm:$0xff]
                %275 = vst [vmem:[%s179 + $0x178] sm:$0xff] %v274
                %v276 = vld [vmem:[%s178 + $0x600] sm:$0xff]
                %277 = vst [vmem:[%s179 + $0x180] sm:$0xff] %v276
                %v278 = vld [vmem:[%s178 + $0x608] sm:$0xff]
                %279 = vst [vmem:[%s179 + $0x188] sm:$0xff] %v278
                %v280 = vld [vmem:[%s178 + $0x640] sm:$0xff]
                %281 = vst [vmem:[%s179 + $0x190] sm:$0xff] %v280
                %v282 = vld [vmem:[%s178 + $0x648] sm:$0xff]
                %283 = vst [vmem:[%s179 + $0x198] sm:$0xff] %v282
                %v284 = vld [vmem:[%s178 + $0x680] sm:$0xff]
                %285 = vst [vmem:[%s179 + $0x1a0] sm:$0xff] %v284
                %v286 = vld [vmem:[%s178 + $0x688] sm:$0xff]
                %287 = vst [vmem:[%s179 + $0x1a8] sm:$0xff] %v286
                %v288 = vld [vmem:[%s178 + $0x6c0] sm:$0xff]
                %289 = vst [vmem:[%s179 + $0x1b0] sm:$0xff] %v288
                %v290 = vld [vmem:[%s178 + $0x6c8] sm:$0xff]
                %291 = vst [vmem:[%s179 + $0x1b8] sm:$0xff] %v290
                %v292 = vld [vmem:[%s178 + $0x700] sm:$0xff]
                %293 = vst [vmem:[%s179 + $0x1c0] sm:$0xff] %v292
                %v294 = vld [vmem:[%s178 + $0x708] sm:$0xff]
                %295 = vst [vmem:[%s179 + $0x1c8] sm:$0xff] %v294
                %v296 = vld [vmem:[%s178 + $0x740] sm:$0xff]
                %297 = vst [vmem:[%s179 + $0x1d0] sm:$0xff] %v296
                %v298 = vld [vmem:[%s178 + $0x748] sm:$0xff]
                %299 = vst [vmem:[%s179 + $0x1d8] sm:$0xff] %v298
                %v300 = vld [vmem:[%s178 + $0x780] sm:$0xff]
                %301 = vst [vmem:[%s179 + $0x1e0] sm:$0xff] %v300
                %v302 = vld [vmem:[%s178 + $0x788] sm:$0xff]
                %303 = vst [vmem:[%s179 + $0x1e8] sm:$0xff] %v302
                %v304 = vld [vmem:[%s178 + $0x7c0] sm:$0xff]
                %305 = vst [vmem:[%s179 + $0x1f0] sm:$0xff] %v304
                %v306 = vld [vmem:[%s178 + $0x7c8] sm:$0xff]
                %307 = vst [vmem:[%s179 + $0x1f8] sm:$0xff] %v306
                %v308 = vld [vmem:[%s178 + $0x800] sm:$0xff]
                %309 = vst [vmem:[%s179 + $0x200] sm:$0xff] %v308
                %v310 = vld [vmem:[%s178 + $0x808] sm:$0xff]
                %311 = vst [vmem:[%s179 + $0x208] sm:$0xff] %v310
                %v312 = vld [vmem:[%s178 + $0x840] sm:$0xff]
                %313 = vst [vmem:[%s179 + $0x210] sm:$0xff] %v312
                %v314 = vld [vmem:[%s178 + $0x848] sm:$0xff]
                %315 = vst [vmem:[%s179 + $0x218] sm:$0xff] %v314
                %v316 = vld [vmem:[%s178 + $0x880] sm:$0xff]
                %317 = vst [vmem:[%s179 + $0x220] sm:$0xff] %v316
                %v318 = vld [vmem:[%s178 + $0x888] sm:$0xff]
                %319 = vst [vmem:[%s179 + $0x228] sm:$0xff] %v318
                %v320 = vld [vmem:[%s178 + $0x8c0] sm:$0xff]
                %321 = vst [vmem:[%s179 + $0x230] sm:$0xff] %v320
                %v322 = vld [vmem:[%s178 + $0x8c8] sm:$0xff]
                %323 = vst [vmem:[%s179 + $0x238] sm:$0xff] %v322
                %v324 = vld [vmem:[%s178 + $0x900] sm:$0xff]
                %325 = vst [vmem:[%s179 + $0x240] sm:$0xff] %v324
                %v326 = vld [vmem:[%s178 + $0x908] sm:$0xff]
                %327 = vst [vmem:[%s179 + $0x248] sm:$0xff] %v326
                %v328 = vld [vmem:[%s178 + $0x940] sm:$0xff]
                %329 = vst [vmem:[%s179 + $0x250] sm:$0xff] %v328
                %v330 = vld [vmem:[%s178 + $0x948] sm:$0xff]
                %331 = vst [vmem:[%s179 + $0x258] sm:$0xff] %v330
                %v332 = vld [vmem:[%s178 + $0x980] sm:$0xff]
                %333 = vst [vmem:[%s179 + $0x260] sm:$0xff] %v332
                %v334 = vld [vmem:[%s178 + $0x988] sm:$0xff]
                %335 = vst [vmem:[%s179 + $0x268] sm:$0xff] %v334
                %v336 = vld [vmem:[%s178 + $0x9c0] sm:$0xff]
                %337 = vst [vmem:[%s179 + $0x270] sm:$0xff] %v336
                %v338 = vld [vmem:[%s178 + $0x9c8] sm:$0xff]
                %339 = vst [vmem:[%s179 + $0x278] sm:$0xff] %v338
                %v340 = vld [vmem:[%s178 + $0xa00] sm:$0xff]
                %341 = vst [vmem:[%s179 + $0x280] sm:$0xff] %v340
                %v342 = vld [vmem:[%s178 + $0xa08] sm:$0xff]
                %343 = vst [vmem:[%s179 + $0x288] sm:$0xff] %v342
                %v344 = vld [vmem:[%s178 + $0xa40] sm:$0xff]
                %345 = vst [vmem:[%s179 + $0x290] sm:$0xff] %v344
                %v346 = vld [vmem:[%s178 + $0xa48] sm:$0xff]
                %347 = vst [vmem:[%s179 + $0x298] sm:$0xff] %v346
                %v348 = vld [vmem:[%s178 + $0xa80] sm:$0xff]
                %349 = vst [vmem:[%s179 + $0x2a0] sm:$0xff] %v348
                %v350 = vld [vmem:[%s178 + $0xa88] sm:$0xff]
                %351 = vst [vmem:[%s179 + $0x2a8] sm:$0xff] %v350
                %v352 = vld [vmem:[%s178 + $0xac0] sm:$0xff]
                %353 = vst [vmem:[%s179 + $0x2b0] sm:$0xff] %v352
                %v354 = vld [vmem:[%s178 + $0xac8] sm:$0xff]
                %355 = vst [vmem:[%s179 + $0x2b8] sm:$0xff] %v354
                %v356 = vld [vmem:[%s178 + $0xb00] sm:$0xff]
                %357 = vst [vmem:[%s179 + $0x2c0] sm:$0xff] %v356
                %v358 = vld [vmem:[%s178 + $0xb08] sm:$0xff]
                %359 = vst [vmem:[%s179 + $0x2c8] sm:$0xff] %v358
                %v360 = vld [vmem:[%s178 + $0xb40] sm:$0xff]
                %361 = vst [vmem:[%s179 + $0x2d0] sm:$0xff] %v360
                %v362 = vld [vmem:[%s178 + $0xb48] sm:$0xff]
                %363 = vst [vmem:[%s179 + $0x2d8] sm:$0xff] %v362
                %v364 = vld [vmem:[%s178 + $0xb80] sm:$0xff]
                %365 = vst [vmem:[%s179 + $0x2e0] sm:$0xff] %v364
                %v366 = vld [vmem:[%s178 + $0xb88] sm:$0xff]
                %367 = vst [vmem:[%s179 + $0x2e8] sm:$0xff] %v366
                %v368 = vld [vmem:[%s178 + $0xbc0] sm:$0xff]
                %369 = vst [vmem:[%s179 + $0x2f0] sm:$0xff] %v368
                %v370 = vld [vmem:[%s178 + $0xbc8] sm:$0xff]
                %371 = vst [vmem:[%s179 + $0x2f8] sm:$0xff] %v370
                %v372 = vld [vmem:[%s178 + $0xc00] sm:$0xff]
                %373 = vst [vmem:[%s179 + $0x300] sm:$0xff] %v372
                %v374 = vld [vmem:[%s178 + $0xc08] sm:$0xff]
                %375 = vst [vmem:[%s179 + $0x308] sm:$0xff] %v374
                %v376 = vld [vmem:[%s178 + $0xc40] sm:$0xff]
                %377 = vst [vmem:[%s179 + $0x310] sm:$0xff] %v376
                %v378 = vld [vmem:[%s178 + $0xc48] sm:$0xff]
                %379 = vst [vmem:[%s179 + $0x318] sm:$0xff] %v378
                %v380 = vld [vmem:[%s178 + $0xc80] sm:$0xff]
                %381 = vst [vmem:[%s179 + $0x320] sm:$0xff] %v380
                %v382 = vld [vmem:[%s178 + $0xc88] sm:$0xff]
                %383 = vst [vmem:[%s179 + $0x328] sm:$0xff] %v382
                %v384 = vld [vmem:[%s178 + $0xcc0] sm:$0xff]
                %385 = vst [vmem:[%s179 + $0x330] sm:$0xff] %v384
                %v386 = vld [vmem:[%s178 + $0xcc8] sm:$0xff]
                %387 = vst [vmem:[%s179 + $0x338] sm:$0xff] %v386
                %v388 = vld [vmem:[%s178 + $0xd00] sm:$0xff]
                %389 = vst [vmem:[%s179 + $0x340] sm:$0xff] %v388
                %v390 = vld [vmem:[%s178 + $0xd08] sm:$0xff]
                %391 = vst [vmem:[%s179 + $0x348] sm:$0xff] %v390
                %v392 = vld [vmem:[%s178 + $0xd40] sm:$0xff]
                %393 = vst [vmem:[%s179 + $0x350] sm:$0xff] %v392
                %v394 = vld [vmem:[%s178 + $0xd48] sm:$0xff]
                %395 = vst [vmem:[%s179 + $0x358] sm:$0xff] %v394
                %v396 = vld [vmem:[%s178 + $0xd80] sm:$0xff]
                %397 = vst [vmem:[%s179 + $0x360] sm:$0xff] %v396
                %v398 = vld [vmem:[%s178 + $0xd88] sm:$0xff]
                %399 = vst [vmem:[%s179 + $0x368] sm:$0xff] %v398
                %v400 = vld [vmem:[%s178 + $0xdc0] sm:$0xff]
                %401 = vst [vmem:[%s179 + $0x370] sm:$0xff] %v400
                %v402 = vld [vmem:[%s178 + $0xdc8] sm:$0xff]
                %403 = vst [vmem:[%s179 + $0x378] sm:$0xff] %v402
                %v404 = vld [vmem:[%s178 + $0xe00] sm:$0xff]
                %405 = vst [vmem:[%s179 + $0x380] sm:$0xff] %v404
                %v406 = vld [vmem:[%s178 + $0xe08] sm:$0xff]
                %407 = vst [vmem:[%s179 + $0x388] sm:$0xff] %v406
                %v408 = vld [vmem:[%s178 + $0xe40] sm:$0xff]
                %409 = vst [vmem:[%s179 + $0x390] sm:$0xff] %v408
                %v410 = vld [vmem:[%s178 + $0xe48] sm:$0xff]
                %411 = vst [vmem:[%s179 + $0x398] sm:$0xff] %v410
                %v412 = vld [vmem:[%s178 + $0xe80] sm:$0xff]
                %413 = vst [vmem:[%s179 + $0x3a0] sm:$0xff] %v412
                %v414 = vld [vmem:[%s178 + $0xe88] sm:$0xff]
                %415 = vst [vmem:[%s179 + $0x3a8] sm:$0xff] %v414
                %v416 = vld [vmem:[%s178 + $0xec0] sm:$0xff]
                %417 = vst [vmem:[%s179 + $0x3b0] sm:$0xff] %v416
                %v418 = vld [vmem:[%s178 + $0xec8] sm:$0xff]
                %419 = vst [vmem:[%s179 + $0x3b8] sm:$0xff] %v418
                %v420 = vld [vmem:[%s178 + $0xf00] sm:$0xff]
                %421 = vst [vmem:[%s179 + $0x3c0] sm:$0xff] %v420
                %v422 = vld [vmem:[%s178 + $0xf08] sm:$0xff]
                %423 = vst [vmem:[%s179 + $0x3c8] sm:$0xff] %v422
                %v424 = vld [vmem:[%s178 + $0xf40] sm:$0xff]
                %425 = vst [vmem:[%s179 + $0x3d0] sm:$0xff] %v424
                %v426 = vld [vmem:[%s178 + $0xf48] sm:$0xff]
                %427 = vst [vmem:[%s179 + $0x3d8] sm:$0xff] %v426
                %v428 = vld [vmem:[%s178 + $0xf80] sm:$0xff]
                %429 = vst [vmem:[%s179 + $0x3e0] sm:$0xff] %v428
                %v430 = vld [vmem:[%s178 + $0xf88] sm:$0xff]
                %431 = vst [vmem:[%s179 + $0x3e8] sm:$0xff] %v430
                %v432 = vld [vmem:[%s178 + $0xfc0] sm:$0xff]
                %433 = vst [vmem:[%s179 + $0x3f0] sm:$0xff] %v432
                %v434 = vld [vmem:[%s178 + $0xfc8] sm:$0xff]
                %435 = vst [vmem:[%s179 + $0x3f8] sm:$0xff] %v434
                %v436 = vld [vmem:[%s178 + $0x1000] sm:$0xff]
                %437 = vst [vmem:[%s179 + $0x400] sm:$0xff] %v436
                %v438 = vld [vmem:[%s178 + $0x1008] sm:$0xff]
                %439 = vst [vmem:[%s179 + $0x408] sm:$0xff] %v438
                %v440 = vld [vmem:[%s178 + $0x1040] sm:$0xff]
                %441 = vst [vmem:[%s179 + $0x410] sm:$0xff] %v440
                %v442 = vld [vmem:[%s178 + $0x1048] sm:$0xff]
                %443 = vst [vmem:[%s179 + $0x418] sm:$0xff] %v442
                %v444 = vld [vmem:[%s178 + $0x1080] sm:$0xff]
                %445 = vst [vmem:[%s179 + $0x420] sm:$0xff] %v444
                %v446 = vld [vmem:[%s178 + $0x1088] sm:$0xff]
                %447 = vst [vmem:[%s179 + $0x428] sm:$0xff] %v446
                %v448 = vld [vmem:[%s178 + $0x10c0] sm:$0xff]
                %449 = vst [vmem:[%s179 + $0x430] sm:$0xff] %v448
                %v450 = vld [vmem:[%s178 + $0x10c8] sm:$0xff]
                %451 = vst [vmem:[%s179 + $0x438] sm:$0xff] %v450
                %v452 = vld [vmem:[%s178 + $0x1100] sm:$0xff]
                %453 = vst [vmem:[%s179 + $0x440] sm:$0xff] %v452
                %v454 = vld [vmem:[%s178 + $0x1108] sm:$0xff]
                %455 = vst [vmem:[%s179 + $0x448] sm:$0xff] %v454
                %v456 = vld [vmem:[%s178 + $0x1140] sm:$0xff]
                %457 = vst [vmem:[%s179 + $0x450] sm:$0xff] %v456
                %v458 = vld [vmem:[%s178 + $0x1148] sm:$0xff]
                %459 = vst [vmem:[%s179 + $0x458] sm:$0xff] %v458
                %v460 = vld [vmem:[%s178 + $0x1180] sm:$0xff]
                %461 = vst [vmem:[%s179 + $0x460] sm:$0xff] %v460
                %v462 = vld [vmem:[%s178 + $0x1188] sm:$0xff]
                %463 = vst [vmem:[%s179 + $0x468] sm:$0xff] %v462
                %v464 = vld [vmem:[%s178 + $0x11c0] sm:$0xff]
                %465 = vst [vmem:[%s179 + $0x470] sm:$0xff] %v464
                %v466 = vld [vmem:[%s178 + $0x11c8] sm:$0xff]
                %467 = vst [vmem:[%s179 + $0x478] sm:$0xff] %v466
                %v468 = vld [vmem:[%s178 + $0x1200] sm:$0xff]
                %469 = vst [vmem:[%s179 + $0x480] sm:$0xff] %v468
                %v470 = vld [vmem:[%s178 + $0x1208] sm:$0xff]
                %471 = vst [vmem:[%s179 + $0x488] sm:$0xff] %v470
                %v472 = vld [vmem:[%s178 + $0x1240] sm:$0xff]
                %473 = vst [vmem:[%s179 + $0x490] sm:$0xff] %v472
                %v474 = vld [vmem:[%s178 + $0x1248] sm:$0xff]
                %475 = vst [vmem:[%s179 + $0x498] sm:$0xff] %v474
                %v476 = vld [vmem:[%s178 + $0x1280] sm:$0xff]
                %477 = vst [vmem:[%s179 + $0x4a0] sm:$0xff] %v476
                %v478 = vld [vmem:[%s178 + $0x1288] sm:$0xff]
                %479 = vst [vmem:[%s179 + $0x4a8] sm:$0xff] %v478
                %v480 = vld [vmem:[%s178 + $0x12c0] sm:$0xff]
                %481 = vst [vmem:[%s179 + $0x4b0] sm:$0xff] %v480
                %v482 = vld [vmem:[%s178 + $0x12c8] sm:$0xff]
                %483 = vst [vmem:[%s179 + $0x4b8] sm:$0xff] %v482
                %v484 = vld [vmem:[%s178 + $0x1300] sm:$0xff]
                %485 = vst [vmem:[%s179 + $0x4c0] sm:$0xff] %v484
                %v486 = vld [vmem:[%s178 + $0x1308] sm:$0xff]
                %487 = vst [vmem:[%s179 + $0x4c8] sm:$0xff] %v486
                %v488 = vld [vmem:[%s178 + $0x1340] sm:$0xff]
                %489 = vst [vmem:[%s179 + $0x4d0] sm:$0xff] %v488
                %v490 = vld [vmem:[%s178 + $0x1348] sm:$0xff]
                %491 = vst [vmem:[%s179 + $0x4d8] sm:$0xff] %v490
                %v492 = vld [vmem:[%s178 + $0x1380] sm:$0xff]
                %493 = vst [vmem:[%s179 + $0x4e0] sm:$0xff] %v492
                %v494 = vld [vmem:[%s178 + $0x1388] sm:$0xff]
                %495 = vst [vmem:[%s179 + $0x4e8] sm:$0xff] %v494
                %v496 = vld [vmem:[%s178 + $0x13c0] sm:$0xff]
                %497 = vst [vmem:[%s179 + $0x4f0] sm:$0xff] %v496
                %v498 = vld [vmem:[%s178 + $0x13c8] sm:$0xff]
                %499 = vst [vmem:[%s179 + $0x4f8] sm:$0xff] %v498
                %v500 = vld [vmem:[%s178 + $0x1400] sm:$0xff]
                %501 = vst [vmem:[%s179 + $0x500] sm:$0xff] %v500
                %v502 = vld [vmem:[%s178 + $0x1408] sm:$0xff]
                %503 = vst [vmem:[%s179 + $0x508] sm:$0xff] %v502
                %v504 = vld [vmem:[%s178 + $0x1440] sm:$0xff]
                %505 = vst [vmem:[%s179 + $0x510] sm:$0xff] %v504
                %v506 = vld [vmem:[%s178 + $0x1448] sm:$0xff]
                %507 = vst [vmem:[%s179 + $0x518] sm:$0xff] %v506
                %v508 = vld [vmem:[%s178 + $0x1480] sm:$0xff]
                %509 = vst [vmem:[%s179 + $0x520] sm:$0xff] %v508
                %v510 = vld [vmem:[%s178 + $0x1488] sm:$0xff]
                %511 = vst [vmem:[%s179 + $0x528] sm:$0xff] %v510
                %v512 = vld [vmem:[%s178 + $0x14c0] sm:$0xff]
                %513 = vst [vmem:[%s179 + $0x530] sm:$0xff] %v512
                %v514 = vld [vmem:[%s178 + $0x14c8] sm:$0xff]
                %515 = vst [vmem:[%s179 + $0x538] sm:$0xff] %v514
                %v516 = vld [vmem:[%s178 + $0x1500] sm:$0xff]
                %517 = vst [vmem:[%s179 + $0x540] sm:$0xff] %v516
                %v518 = vld [vmem:[%s178 + $0x1508] sm:$0xff]
                %519 = vst [vmem:[%s179 + $0x548] sm:$0xff] %v518
                %v520 = vld [vmem:[%s178 + $0x1540] sm:$0xff]
                %521 = vst [vmem:[%s179 + $0x550] sm:$0xff] %v520
                %v522 = vld [vmem:[%s178 + $0x1548] sm:$0xff]
                %523 = vst [vmem:[%s179 + $0x558] sm:$0xff] %v522
                %v524 = vld [vmem:[%s178 + $0x1580] sm:$0xff]
                %525 = vst [vmem:[%s179 + $0x560] sm:$0xff] %v524
                %v526 = vld [vmem:[%s178 + $0x1588] sm:$0xff]
                %527 = vst [vmem:[%s179 + $0x568] sm:$0xff] %v526
                %v528 = vld [vmem:[%s178 + $0x15c0] sm:$0xff]
                %529 = vst [vmem:[%s179 + $0x570] sm:$0xff] %v528
                %v530 = vld [vmem:[%s178 + $0x15c8] sm:$0xff]
                %531 = vst [vmem:[%s179 + $0x578] sm:$0xff] %v530
                %v532 = vld [vmem:[%s178 + $0x1600] sm:$0xff]
                %533 = vst [vmem:[%s179 + $0x580] sm:$0xff] %v532
                %v534 = vld [vmem:[%s178 + $0x1608] sm:$0xff]
                %535 = vst [vmem:[%s179 + $0x588] sm:$0xff] %v534
                %v536 = vld [vmem:[%s178 + $0x1640] sm:$0xff]
                %537 = vst [vmem:[%s179 + $0x590] sm:$0xff] %v536
                %v538 = vld [vmem:[%s178 + $0x1648] sm:$0xff]
                %539 = vst [vmem:[%s179 + $0x598] sm:$0xff] %v538
                %v540 = vld [vmem:[%s178 + $0x1680] sm:$0xff]
                %541 = vst [vmem:[%s179 + $0x5a0] sm:$0xff] %v540
                %v542 = vld [vmem:[%s178 + $0x1688] sm:$0xff]
                %543 = vst [vmem:[%s179 + $0x5a8] sm:$0xff] %v542
                %v544 = vld [vmem:[%s178 + $0x16c0] sm:$0xff]
                %545 = vst [vmem:[%s179 + $0x5b0] sm:$0xff] %v544
                %v546 = vld [vmem:[%s178 + $0x16c8] sm:$0xff]
                %547 = vst [vmem:[%s179 + $0x5b8] sm:$0xff] %v546
                %v548 = vld [vmem:[%s178 + $0x1700] sm:$0xff]
                %549 = vst [vmem:[%s179 + $0x5c0] sm:$0xff] %v548
                %v550 = vld [vmem:[%s178 + $0x1708] sm:$0xff]
                %551 = vst [vmem:[%s179 + $0x5c8] sm:$0xff] %v550
                %v552 = vld [vmem:[%s178 + $0x1740] sm:$0xff]
                %553 = vst [vmem:[%s179 + $0x5d0] sm:$0xff] %v552
                %v554 = vld [vmem:[%s178 + $0x1748] sm:$0xff]
                %555 = vst [vmem:[%s179 + $0x5d8] sm:$0xff] %v554
                %v556 = vld [vmem:[%s178 + $0x1780] sm:$0xff]
                %557 = vst [vmem:[%s179 + $0x5e0] sm:$0xff] %v556
                %v558 = vld [vmem:[%s178 + $0x1788] sm:$0xff]
                %559 = vst [vmem:[%s179 + $0x5e8] sm:$0xff] %v558
                %v560 = vld [vmem:[%s178 + $0x17c0] sm:$0xff]
                %561 = vst [vmem:[%s179 + $0x5f0] sm:$0xff] %v560
                %v562 = vld [vmem:[%s178 + $0x17c8] sm:$0xff]
                %563 = vst [vmem:[%s179 + $0x5f8] sm:$0xff] %v562
                %v564 = vld [vmem:[%s178 + $0x1800] sm:$0xff]
                %565 = vst [vmem:[%s179 + $0x600] sm:$0xff] %v564
                %v566 = vld [vmem:[%s178 + $0x1808] sm:$0xff]
                %567 = vst [vmem:[%s179 + $0x608] sm:$0xff] %v566
                %v568 = vld [vmem:[%s178 + $0x1840] sm:$0xff]
                %569 = vst [vmem:[%s179 + $0x610] sm:$0xff] %v568
                %v570 = vld [vmem:[%s178 + $0x1848] sm:$0xff]
                %571 = vst [vmem:[%s179 + $0x618] sm:$0xff] %v570
                %v572 = vld [vmem:[%s178 + $0x1880] sm:$0xff]
                %573 = vst [vmem:[%s179 + $0x620] sm:$0xff] %v572
                %v574 = vld [vmem:[%s178 + $0x1888] sm:$0xff]
                %575 = vst [vmem:[%s179 + $0x628] sm:$0xff] %v574
                %v576 = vld [vmem:[%s178 + $0x18c0] sm:$0xff]
                %577 = vst [vmem:[%s179 + $0x630] sm:$0xff] %v576
                %v578 = vld [vmem:[%s178 + $0x18c8] sm:$0xff]
                %579 = vst [vmem:[%s179 + $0x638] sm:$0xff] %v578
                %v580 = vld [vmem:[%s178 + $0x1900] sm:$0xff]
                %581 = vst [vmem:[%s179 + $0x640] sm:$0xff] %v580
                %v582 = vld [vmem:[%s178 + $0x1908] sm:$0xff]
                %583 = vst [vmem:[%s179 + $0x648] sm:$0xff] %v582
                %v584 = vld [vmem:[%s178 + $0x1940] sm:$0xff]
                %585 = vst [vmem:[%s179 + $0x650] sm:$0xff] %v584
                %v586 = vld [vmem:[%s178 + $0x1948] sm:$0xff]
                %587 = vst [vmem:[%s179 + $0x658] sm:$0xff] %v586
                %v588 = vld [vmem:[%s178 + $0x1980] sm:$0xff]
                %589 = vst [vmem:[%s179 + $0x660] sm:$0xff] %v588
                %v590 = vld [vmem:[%s178 + $0x1988] sm:$0xff]
                %591 = vst [vmem:[%s179 + $0x668] sm:$0xff] %v590
                %v592 = vld [vmem:[%s178 + $0x19c0] sm:$0xff]
                %593 = vst [vmem:[%s179 + $0x670] sm:$0xff] %v592
                %v594 = vld [vmem:[%s178 + $0x19c8] sm:$0xff]
                %595 = vst [vmem:[%s179 + $0x678] sm:$0xff] %v594
                %v596 = vld [vmem:[%s178 + $0x1a00] sm:$0xff]
                %597 = vst [vmem:[%s179 + $0x680] sm:$0xff] %v596
                %v598 = vld [vmem:[%s178 + $0x1a08] sm:$0xff]
                %599 = vst [vmem:[%s179 + $0x688] sm:$0xff] %v598
                %v600 = vld [vmem:[%s178 + $0x1a40] sm:$0xff]
                %601 = vst [vmem:[%s179 + $0x690] sm:$0xff] %v600
                %v602 = vld [vmem:[%s178 + $0x1a48] sm:$0xff]
                %603 = vst [vmem:[%s179 + $0x698] sm:$0xff] %v602
                %v604 = vld [vmem:[%s178 + $0x1a80] sm:$0xff]
                %605 = vst [vmem:[%s179 + $0x6a0] sm:$0xff] %v604
                %v606 = vld [vmem:[%s178 + $0x1a88] sm:$0xff]
                %607 = vst [vmem:[%s179 + $0x6a8] sm:$0xff] %v606
                %v608 = vld [vmem:[%s178 + $0x1ac0] sm:$0xff]
                %609 = vst [vmem:[%s179 + $0x6b0] sm:$0xff] %v608
                %v610 = vld [vmem:[%s178 + $0x1ac8] sm:$0xff]
                %611 = vst [vmem:[%s179 + $0x6b8] sm:$0xff] %v610
                %v612 = vld [vmem:[%s178 + $0x1b00] sm:$0xff]
                %613 = vst [vmem:[%s179 + $0x6c0] sm:$0xff] %v612
                %v614 = vld [vmem:[%s178 + $0x1b08] sm:$0xff]
                %615 = vst [vmem:[%s179 + $0x6c8] sm:$0xff] %v614
                %v616 = vld [vmem:[%s178 + $0x1b40] sm:$0xff]
                %617 = vst [vmem:[%s179 + $0x6d0] sm:$0xff] %v616
                %v618 = vld [vmem:[%s178 + $0x1b48] sm:$0xff]
                %619 = vst [vmem:[%s179 + $0x6d8] sm:$0xff] %v618
                %v620 = vld [vmem:[%s178 + $0x1b80] sm:$0xff]
                %621 = vst [vmem:[%s179 + $0x6e0] sm:$0xff] %v620
                %v622 = vld [vmem:[%s178 + $0x1b88] sm:$0xff]
                %623 = vst [vmem:[%s179 + $0x6e8] sm:$0xff] %v622
                %v624 = vld [vmem:[%s178 + $0x1bc0] sm:$0xff]
                %625 = vst [vmem:[%s179 + $0x6f0] sm:$0xff] %v624
                %v626 = vld [vmem:[%s178 + $0x1bc8] sm:$0xff]
                %627 = vst [vmem:[%s179 + $0x6f8] sm:$0xff] %v626
                %v628 = vld [vmem:[%s178 + $0x1c00] sm:$0xff]
                %629 = vst [vmem:[%s179 + $0x700] sm:$0xff] %v628
                %v630 = vld [vmem:[%s178 + $0x1c08] sm:$0xff]
                %631 = vst [vmem:[%s179 + $0x708] sm:$0xff] %v630
                %v632 = vld [vmem:[%s178 + $0x1c40] sm:$0xff]
                %633 = vst [vmem:[%s179 + $0x710] sm:$0xff] %v632
                %v634 = vld [vmem:[%s178 + $0x1c48] sm:$0xff]
                %635 = vst [vmem:[%s179 + $0x718] sm:$0xff] %v634
                %v636 = vld [vmem:[%s178 + $0x1c80] sm:$0xff]
                %637 = vst [vmem:[%s179 + $0x720] sm:$0xff] %v636
                %v638 = vld [vmem:[%s178 + $0x1c88] sm:$0xff]
                %639 = vst [vmem:[%s179 + $0x728] sm:$0xff] %v638
                %v640 = vld [vmem:[%s178 + $0x1cc0] sm:$0xff]
                %641 = vst [vmem:[%s179 + $0x730] sm:$0xff] %v640
                %v642 = vld [vmem:[%s178 + $0x1cc8] sm:$0xff]
                %643 = vst [vmem:[%s179 + $0x738] sm:$0xff] %v642
                %v644 = vld [vmem:[%s178 + $0x1d00] sm:$0xff]
                %645 = vst [vmem:[%s179 + $0x740] sm:$0xff] %v644
                %v646 = vld [vmem:[%s178 + $0x1d08] sm:$0xff]
                %647 = vst [vmem:[%s179 + $0x748] sm:$0xff] %v646
                %v648 = vld [vmem:[%s178 + $0x1d40] sm:$0xff]
                %649 = vst [vmem:[%s179 + $0x750] sm:$0xff] %v648
                %v650 = vld [vmem:[%s178 + $0x1d48] sm:$0xff]
                %651 = vst [vmem:[%s179 + $0x758] sm:$0xff] %v650
                %v652 = vld [vmem:[%s178 + $0x1d80] sm:$0xff]
                %653 = vst [vmem:[%s179 + $0x760] sm:$0xff] %v652
                %v654 = vld [vmem:[%s178 + $0x1d88] sm:$0xff]
                %655 = vst [vmem:[%s179 + $0x768] sm:$0xff] %v654
                %v656 = vld [vmem:[%s178 + $0x1dc0] sm:$0xff]
                %657 = vst [vmem:[%s179 + $0x770] sm:$0xff] %v656
                %v658 = vld [vmem:[%s178 + $0x1dc8] sm:$0xff]
                %659 = vst [vmem:[%s179 + $0x778] sm:$0xff] %v658
                %v660 = vld [vmem:[%s178 + $0x1e00] sm:$0xff]
                %661 = vst [vmem:[%s179 + $0x780] sm:$0xff] %v660
                %v662 = vld [vmem:[%s178 + $0x1e08] sm:$0xff]
                %663 = vst [vmem:[%s179 + $0x788] sm:$0xff] %v662
                %v664 = vld [vmem:[%s178 + $0x1e40] sm:$0xff]
                %665 = vst [vmem:[%s179 + $0x790] sm:$0xff] %v664
                %v666 = vld [vmem:[%s178 + $0x1e48] sm:$0xff]
                %667 = vst [vmem:[%s179 + $0x798] sm:$0xff] %v666
                %v668 = vld [vmem:[%s178 + $0x1e80] sm:$0xff]
                %669 = vst [vmem:[%s179 + $0x7a0] sm:$0xff] %v668
                %v670 = vld [vmem:[%s178 + $0x1e88] sm:$0xff]
                %671 = vst [vmem:[%s179 + $0x7a8] sm:$0xff] %v670
                %v672 = vld [vmem:[%s178 + $0x1ec0] sm:$0xff]
                %673 = vst [vmem:[%s179 + $0x7b0] sm:$0xff] %v672
                %v674 = vld [vmem:[%s178 + $0x1ec8] sm:$0xff]
                %675 = vst [vmem:[%s179 + $0x7b8] sm:$0xff] %v674
                %v676 = vld [vmem:[%s178 + $0x1f00] sm:$0xff]
                %677 = vst [vmem:[%s179 + $0x7c0] sm:$0xff] %v676
                %v678 = vld [vmem:[%s178 + $0x1f08] sm:$0xff]
                %679 = vst [vmem:[%s179 + $0x7c8] sm:$0xff] %v678
                %v680 = vld [vmem:[%s178 + $0x1f40] sm:$0xff]
                %681 = vst [vmem:[%s179 + $0x7d0] sm:$0xff] %v680
                %v682 = vld [vmem:[%s178 + $0x1f48] sm:$0xff]
                %683 = vst [vmem:[%s179 + $0x7d8] sm:$0xff] %v682
                %v684 = vld [vmem:[%s178 + $0x1f80] sm:$0xff]
                %685 = vst [vmem:[%s179 + $0x7e0] sm:$0xff] %v684
                %v686 = vld [vmem:[%s178 + $0x1f88] sm:$0xff]
                %687 = vst [vmem:[%s179 + $0x7e8] sm:$0xff] %v686
                %v688 = vld [vmem:[%s178 + $0x1fc0] sm:$0xff]
                %689 = vst [vmem:[%s179 + $0x7f0] sm:$0xff] %v688
                %v690 = vld [vmem:[%s178 + $0x1fc8] sm:$0xff]
                %691 = vst [vmem:[%s179 + $0x7f8] sm:$0xff] %v690
              $region37: #{discriminator_forward.5} parent=31 // loop_footer
                %s177 = sadd.s32 1, %s173
              $region38: #{discriminator_forward.5} parent=31 // loop_footer_branch
                %172 = sbr.rel target = $region34
              $region39: #{discriminator_forward.5} parent=31 // loop_exit
                _
            $region32: #{discriminator_forward.5} parent=27 // pred_fallthru
              _
            // Predicated region
            $region40: #{discriminator_forward.5} parent=27 // pred_check
              _
            $region41: #{discriminator_forward.5} parent=27 // pred_check_branch
              %693 = sbr.rel target = $region43
            $region42: #{discriminator_forward.5} parent=27 // pred_region
              _
            $region43: #{discriminator_forward.5} parent=27 // pred_fallthru
              _
          $region28: #{discriminator_forward.5} parent=23 // pred_fallthru
            _
          %694 = vnop
        $region24: #{discriminator_forward.5} parent=15 // pred_fallthru
          _
        // Predicated region
        $region44: #{discriminator_forward.5} parent=15 // pred_check
          %p695 = pneg %p95
        $region45: #{discriminator_forward.5} parent=15 // pred_check_branch
          %697 = sbr.rel (%p695) target = $region47
        $region46: #{discriminator_forward.5} parent=15 // pred_region
          %s698 = smul.u32 4, %s16
          %p699 = scmp.lt.s32.totalorder %s698, 15
          %s700 = scalar_select %p699, %s698, 15
          %s701 = scalar_lea.vmem %s2, %s700
          %s702 = smul.u32 4, %s16
        $region47: #{discriminator_forward.5} parent=15 // pred_fallthru
          _
      $region16: #{discriminator_forward.5} parent=5 // pred_fallthru
        _
      %p703 = scmp.le.s32.totalorder 1, %s9
      %p704 = scmp.lt.s32.totalorder %s9, 17
      %p705 = pnand %p703, %p704
      %p706 = pneg %p705
      // Predicated region
      $region48: #{discriminator_forward.5} parent=5 // pred_check
        _
      $region49: #{discriminator_forward.5} parent=5 // pred_check_branch
        %708 = sbr.rel (%p705) target = $region51
      $region50: #{discriminator_forward.5} parent=5 // pred_region
        %s709 = ssub.s32 %s9, 1
        %s710 = sand.u32 %s62, 1
        %s711 = sand.u32 %s62, 1
        %s712 = smul.addr %s711, 2048
        %s713 = scalar_lea.vmem [#allocation3], %s712
        // Predicated region
        $region52: #{discriminator_forward.5} parent=50 // pred_check
          %p714 = pneg %p75
        $region53: #{discriminator_forward.5} parent=50 // pred_check_branch
          %716 = sbr.rel (%p714) target = $region55
        $region54: #{discriminator_forward.5} parent=50 // pred_region
          _
        $region55: #{discriminator_forward.5} parent=50 // pred_fallthru
          _
        %s717 = smul.u32 8, %s19
        %p718 = scmp.lt.s32.totalorder %s717, 31
        %s719 = scalar_select %p718, %s717, 31
        %s720 = smul.addr %s719, 4
        %s721 = scalar_lea.vmem %s0, %s720
        %p722 = pneg %p47
        %p723 = pneg %p44
        %s724 = sand.u32 %s62, 1
        %s725 = sand.u32 %s62, 1
        %s726 = smul.addr %s725, 2048
        %s727 = scalar_lea.vmem [#allocation3], %s726
        %p728 = pneg %p75
        %p729 = pneg %p72
        %s730 = smul.u32 4, %s18
        %p731 = scmp.lt.s32.totalorder %s730, 15
        %s732 = scalar_select %p731, %s730, 15
        %s733 = scalar_lea.vmem %s2, %s732
        %p734 = pneg %p101
        %p735 = pneg %p98
        %p736 = pneg %p127
        %p737 = pneg %p124
        %s738 = smul.u32 4, %s18
        %p739 = scmp.lt.s32.totalorder %s738, 15
        %s740 = scalar_select %p739, %s738, 15
        %s741 = smul.addr %s740, 4
        %s742 = scalar_lea.vmem %s3, %s741
        %s743 = smul.u32 8, %s19
        %p744 = scmp.lt.s32.totalorder %s743, 31
        %s745 = scalar_select %p744, %s743, 31
        %s746 = smul.addr %s745, 4
        %s747 = scalar_lea.vmem %s0, %s746
        %s748 = smul.u32 8, %s19
        %s749 = smul.u32 128, %s19
        %s750 = smul.u32 4, %s18
        %s751 = smul.u32 4, %s18
        %p752 = scmp.lt.s32.totalorder %s751, 15
        %s753 = scalar_select %p752, %s751, 15
        %s754 = scalar_lea.vmem %s2, %s753
        %s755 = smul.u32 4, %s18
        %s756 = smul.u32 4, %s18
        %p757 = scmp.lt.s32.totalorder %s756, 15
        %s758 = scalar_select %p757, %s756, 15
        %s759 = smul.addr %s758, 4
        %s760 = scalar_lea.vmem %s3, %s759
        %s761 = smul.u32 4, %s18
        %p762 = scmp.eq.s32.totalorder %s19, 0
        // Predicated region
        $region56: #{discriminator_forward.5} parent=50 // pred_check
          %p763 = pneg %p762
        $region57: #{discriminator_forward.5} parent=50 // pred_check_branch
          %765 = sbr.rel (%p763) target = $region59
        $region58: #{discriminator_forward.5} parent=50 // pred_region
          %766 = vst [vmem:[#allocation2] sm:$0xff] 0.0
          %767 = vst [vmem:[#allocation2 + $0x8] sm:$0xff] 0.0
          %768 = vst [vmem:[#allocation2 + $0x10] sm:$0xff] 0.0
          %769 = vst [vmem:[#allocation2 + $0x18] sm:$0xff] 0.0
        $region59: #{discriminator_forward.5} parent=50 // pred_fallthru
          _
        %v770 = vld [vmem:[#allocation2] sm:$0xff]
        %v771 = vld [vmem:[#allocation2 + $0x8] sm:$0xff]
        %v772 = vld [vmem:[#allocation2 + $0x10] sm:$0xff]
        %v773 = vld [vmem:[#allocation2 + $0x18] sm:$0xff]
        %v774 = vld [vmem:[%s747] sm:$0xff]
        %v775 = vld [vmem:[%s747 + $0x8] sm:$0xff]
        %v776 = vld [vmem:[%s747 + $0x10] sm:$0xff]
        %v777 = vld [vmem:[%s747 + $0x18] sm:$0xff]
        %v778 = vld [vmem:[%s713] sm:$0xff]
        %v779 = vld [vmem:[%s713 + $0x8] sm:$0xff]
        %v780 = vld [vmem:[%s713 + $0x10] sm:$0xff]
        %v781 = vld [vmem:[%s713 + $0x18] sm:$0xff]
        %v782 = vld [vmem:[%s713 + $0x20] sm:$0xff]
        %v783 = vld [vmem:[%s713 + $0x28] sm:$0xff]
        %v784 = vld [vmem:[%s713 + $0x30] sm:$0xff]
        %v785 = vld [vmem:[%s713 + $0x38] sm:$0xff]
        %v786 = vld [vmem:[%s713 + $0x40] sm:$0xff]
        %v787 = vld [vmem:[%s713 + $0x48] sm:$0xff]
        %v788 = vld [vmem:[%s713 + $0x50] sm:$0xff]
        %v789 = vld [vmem:[%s713 + $0x58] sm:$0xff]
        %v790 = vld [vmem:[%s713 + $0x60] sm:$0xff]
        %v791 = vld [vmem:[%s713 + $0x68] sm:$0xff]
        %v792 = vld [vmem:[%s713 + $0x70] sm:$0xff]
        %v793 = vld [vmem:[%s713 + $0x78] sm:$0xff]
        %v794 = vld [vmem:[%s713 + $0x80] sm:$0xff]
        %v795 = vld [vmem:[%s713 + $0x88] sm:$0xff]
        %v796 = vld [vmem:[%s713 + $0x90] sm:$0xff]
        %v797 = vld [vmem:[%s713 + $0x98] sm:$0xff]
        %v798 = vld [vmem:[%s713 + $0xa0] sm:$0xff]
        %v799 = vld [vmem:[%s713 + $0xa8] sm:$0xff]
        %v800 = vld [vmem:[%s713 + $0xb0] sm:$0xff]
        %v801 = vld [vmem:[%s713 + $0xb8] sm:$0xff]
        %v802 = vld [vmem:[%s713 + $0xc0] sm:$0xff]
        %v803 = vld [vmem:[%s713 + $0xc8] sm:$0xff]
        %v804 = vld [vmem:[%s713 + $0xd0] sm:$0xff]
        %v805 = vld [vmem:[%s713 + $0xd8] sm:$0xff]
        %v806 = vld [vmem:[%s713 + $0xe0] sm:$0xff]
        %v807 = vld [vmem:[%s713 + $0xe8] sm:$0xff]
        %v808 = vld [vmem:[%s713 + $0xf0] sm:$0xff]
        %v809 = vld [vmem:[%s713 + $0xf8] sm:$0xff]
        %v810 = vld [vmem:[%s713 + $0x100] sm:$0xff]
        %v811 = vld [vmem:[%s713 + $0x108] sm:$0xff]
        %v812 = vld [vmem:[%s713 + $0x110] sm:$0xff]
        %v813 = vld [vmem:[%s713 + $0x118] sm:$0xff]
        %v814 = vld [vmem:[%s713 + $0x120] sm:$0xff]
        %v815 = vld [vmem:[%s713 + $0x128] sm:$0xff]
        %v816 = vld [vmem:[%s713 + $0x130] sm:$0xff]
        %v817 = vld [vmem:[%s713 + $0x138] sm:$0xff]
        %v818 = vld [vmem:[%s713 + $0x140] sm:$0xff]
        %v819 = vld [vmem:[%s713 + $0x148] sm:$0xff]
        %v820 = vld [vmem:[%s713 + $0x150] sm:$0xff]
        %v821 = vld [vmem:[%s713 + $0x158] sm:$0xff]
        %v822 = vld [vmem:[%s713 + $0x160] sm:$0xff]
        %v823 = vld [vmem:[%s713 + $0x168] sm:$0xff]
        %v824 = vld [vmem:[%s713 + $0x170] sm:$0xff]
        %v825 = vld [vmem:[%s713 + $0x178] sm:$0xff]
        %v826 = vld [vmem:[%s713 + $0x180] sm:$0xff]
        %v827 = vld [vmem:[%s713 + $0x188] sm:$0xff]
        %v828 = vld [vmem:[%s713 + $0x190] sm:$0xff]
        %v829 = vld [vmem:[%s713 + $0x198] sm:$0xff]
        %v830 = vld [vmem:[%s713 + $0x1a0] sm:$0xff]
        %v831 = vld [vmem:[%s713 + $0x1a8] sm:$0xff]
        %v832 = vld [vmem:[%s713 + $0x1b0] sm:$0xff]
        %v833 = vld [vmem:[%s713 + $0x1b8] sm:$0xff]
        %v834 = vld [vmem:[%s713 + $0x1c0] sm:$0xff]
        %v835 = vld [vmem:[%s713 + $0x1c8] sm:$0xff]
        %v836 = vld [vmem:[%s713 + $0x1d0] sm:$0xff]
        %v837 = vld [vmem:[%s713 + $0x1d8] sm:$0xff]
        %v838 = vld [vmem:[%s713 + $0x1e0] sm:$0xff]
        %v839 = vld [vmem:[%s713 + $0x1e8] sm:$0xff]
        %v840 = vld [vmem:[%s713 + $0x1f0] sm:$0xff]
        %v841 = vld [vmem:[%s713 + $0x1f8] sm:$0xff]
        %v842 = vld [vmem:[%s713 + $0x200] sm:$0xff]
        %v843 = vld [vmem:[%s713 + $0x208] sm:$0xff]
        %v844 = vld [vmem:[%s713 + $0x210] sm:$0xff]
        %v845 = vld [vmem:[%s713 + $0x218] sm:$0xff]
        %v846 = vld [vmem:[%s713 + $0x220] sm:$0xff]
        %v847 = vld [vmem:[%s713 + $0x228] sm:$0xff]
        %v848 = vld [vmem:[%s713 + $0x230] sm:$0xff]
        %v849 = vld [vmem:[%s713 + $0x238] sm:$0xff]
        %v850 = vld [vmem:[%s713 + $0x240] sm:$0xff]
        %v851 = vld [vmem:[%s713 + $0x248] sm:$0xff]
        %v852 = vld [vmem:[%s713 + $0x250] sm:$0xff]
        %v853 = vld [vmem:[%s713 + $0x258] sm:$0xff]
        %v854 = vld [vmem:[%s713 + $0x260] sm:$0xff]
        %v855 = vld [vmem:[%s713 + $0x268] sm:$0xff]
        %v856 = vld [vmem:[%s713 + $0x270] sm:$0xff]
        %v857 = vld [vmem:[%s713 + $0x278] sm:$0xff]
        %v858 = vld [vmem:[%s713 + $0x280] sm:$0xff]
        %v859 = vld [vmem:[%s713 + $0x288] sm:$0xff]
        %v860 = vld [vmem:[%s713 + $0x290] sm:$0xff]
        %v861 = vld [vmem:[%s713 + $0x298] sm:$0xff]
        %v862 = vld [vmem:[%s713 + $0x2a0] sm:$0xff]
        %v863 = vld [vmem:[%s713 + $0x2a8] sm:$0xff]
        %v864 = vld [vmem:[%s713 + $0x2b0] sm:$0xff]
        %v865 = vld [vmem:[%s713 + $0x2b8] sm:$0xff]
        %v866 = vld [vmem:[%s713 + $0x2c0] sm:$0xff]
        %v867 = vld [vmem:[%s713 + $0x2c8] sm:$0xff]
        %v868 = vld [vmem:[%s713 + $0x2d0] sm:$0xff]
        %v869 = vld [vmem:[%s713 + $0x2d8] sm:$0xff]
        %v870 = vld [vmem:[%s713 + $0x2e0] sm:$0xff]
        %v871 = vld [vmem:[%s713 + $0x2e8] sm:$0xff]
        %v872 = vld [vmem:[%s713 + $0x2f0] sm:$0xff]
        %v873 = vld [vmem:[%s713 + $0x2f8] sm:$0xff]
        %v874 = vld [vmem:[%s713 + $0x300] sm:$0xff]
        %v875 = vld [vmem:[%s713 + $0x308] sm:$0xff]
        %v876 = vld [vmem:[%s713 + $0x310] sm:$0xff]
        %v877 = vld [vmem:[%s713 + $0x318] sm:$0xff]
        %v878 = vld [vmem:[%s713 + $0x320] sm:$0xff]
        %v879 = vld [vmem:[%s713 + $0x328] sm:$0xff]
        %v880 = vld [vmem:[%s713 + $0x330] sm:$0xff]
        %v881 = vld [vmem:[%s713 + $0x338] sm:$0xff]
        %v882 = vld [vmem:[%s713 + $0x340] sm:$0xff]
        %v883 = vld [vmem:[%s713 + $0x348] sm:$0xff]
        %v884 = vld [vmem:[%s713 + $0x350] sm:$0xff]
        %v885 = vld [vmem:[%s713 + $0x358] sm:$0xff]
        %v886 = vld [vmem:[%s713 + $0x360] sm:$0xff]
        %v887 = vld [vmem:[%s713 + $0x368] sm:$0xff]
        %v888 = vld [vmem:[%s713 + $0x370] sm:$0xff]
        %v889 = vld [vmem:[%s713 + $0x378] sm:$0xff]
        %v890 = vld [vmem:[%s713 + $0x380] sm:$0xff]
        %v891 = vld [vmem:[%s713 + $0x388] sm:$0xff]
        %v892 = vld [vmem:[%s713 + $0x390] sm:$0xff]
        %v893 = vld [vmem:[%s713 + $0x398] sm:$0xff]
        %v894 = vld [vmem:[%s713 + $0x3a0] sm:$0xff]
        %v895 = vld [vmem:[%s713 + $0x3a8] sm:$0xff]
        %v896 = vld [vmem:[%s713 + $0x3b0] sm:$0xff]
        %v897 = vld [vmem:[%s713 + $0x3b8] sm:$0xff]
        %v898 = vld [vmem:[%s713 + $0x3c0] sm:$0xff]
        %v899 = vld [vmem:[%s713 + $0x3c8] sm:$0xff]
        %v900 = vld [vmem:[%s713 + $0x3d0] sm:$0xff]
        %v901 = vld [vmem:[%s713 + $0x3d8] sm:$0xff]
        %v902 = vld [vmem:[%s713 + $0x3e0] sm:$0xff]
        %v903 = vld [vmem:[%s713 + $0x3e8] sm:$0xff]
        %v904 = vld [vmem:[%s713 + $0x3f0] sm:$0xff]
        %v905 = vld [vmem:[%s713 + $0x3f8] sm:$0xff]
        %v906 = vld [vmem:[%s713 + $0x400] sm:$0xff]
        %v907 = vld [vmem:[%s713 + $0x408] sm:$0xff]
        %v908 = vld [vmem:[%s713 + $0x410] sm:$0xff]
        %v909 = vld [vmem:[%s713 + $0x418] sm:$0xff]
        %v910 = vld [vmem:[%s713 + $0x420] sm:$0xff]
        %v911 = vld [vmem:[%s713 + $0x428] sm:$0xff]
        %v912 = vld [vmem:[%s713 + $0x430] sm:$0xff]
        %v913 = vld [vmem:[%s713 + $0x438] sm:$0xff]
        %v914 = vld [vmem:[%s713 + $0x440] sm:$0xff]
        %v915 = vld [vmem:[%s713 + $0x448] sm:$0xff]
        %v916 = vld [vmem:[%s713 + $0x450] sm:$0xff]
        %v917 = vld [vmem:[%s713 + $0x458] sm:$0xff]
        %v918 = vld [vmem:[%s713 + $0x460] sm:$0xff]
        %v919 = vld [vmem:[%s713 + $0x468] sm:$0xff]
        %v920 = vld [vmem:[%s713 + $0x470] sm:$0xff]
        %v921 = vld [vmem:[%s713 + $0x478] sm:$0xff]
        %v922 = vld [vmem:[%s713 + $0x480] sm:$0xff]
        %v923 = vld [vmem:[%s713 + $0x488] sm:$0xff]
        %v924 = vld [vmem:[%s713 + $0x490] sm:$0xff]
        %v925 = vld [vmem:[%s713 + $0x498] sm:$0xff]
        %v926 = vld [vmem:[%s713 + $0x4a0] sm:$0xff]
        %v927 = vld [vmem:[%s713 + $0x4a8] sm:$0xff]
        %v928 = vld [vmem:[%s713 + $0x4b0] sm:$0xff]
        %v929 = vld [vmem:[%s713 + $0x4b8] sm:$0xff]
        %v930 = vld [vmem:[%s713 + $0x4c0] sm:$0xff]
        %v931 = vld [vmem:[%s713 + $0x4c8] sm:$0xff]
        %v932 = vld [vmem:[%s713 + $0x4d0] sm:$0xff]
        %v933 = vld [vmem:[%s713 + $0x4d8] sm:$0xff]
        %v934 = vld [vmem:[%s713 + $0x4e0] sm:$0xff]
        %v935 = vld [vmem:[%s713 + $0x4e8] sm:$0xff]
        %v936 = vld [vmem:[%s713 + $0x4f0] sm:$0xff]
        %v937 = vld [vmem:[%s713 + $0x4f8] sm:$0xff]
        %v938 = vld [vmem:[%s713 + $0x500] sm:$0xff]
        %v939 = vld [vmem:[%s713 + $0x508] sm:$0xff]
        %v940 = vld [vmem:[%s713 + $0x510] sm:$0xff]
        %v941 = vld [vmem:[%s713 + $0x518] sm:$0xff]
        %v942 = vld [vmem:[%s713 + $0x520] sm:$0xff]
        %v943 = vld [vmem:[%s713 + $0x528] sm:$0xff]
        %v944 = vld [vmem:[%s713 + $0x530] sm:$0xff]
        %v945 = vld [vmem:[%s713 + $0x538] sm:$0xff]
        %v946 = vld [vmem:[%s713 + $0x540] sm:$0xff]
        %v947 = vld [vmem:[%s713 + $0x548] sm:$0xff]
        %v948 = vld [vmem:[%s713 + $0x550] sm:$0xff]
        %v949 = vld [vmem:[%s713 + $0x558] sm:$0xff]
        %v950 = vld [vmem:[%s713 + $0x560] sm:$0xff]
        %v951 = vld [vmem:[%s713 + $0x568] sm:$0xff]
        %v952 = vld [vmem:[%s713 + $0x570] sm:$0xff]
        %v953 = vld [vmem:[%s713 + $0x578] sm:$0xff]
        %v954 = vld [vmem:[%s713 + $0x580] sm:$0xff]
        %v955 = vld [vmem:[%s713 + $0x588] sm:$0xff]
        %v956 = vld [vmem:[%s713 + $0x590] sm:$0xff]
        %v957 = vld [vmem:[%s713 + $0x598] sm:$0xff]
        %v958 = vld [vmem:[%s713 + $0x5a0] sm:$0xff]
        %v959 = vld [vmem:[%s713 + $0x5a8] sm:$0xff]
        %v960 = vld [vmem:[%s713 + $0x5b0] sm:$0xff]
        %v961 = vld [vmem:[%s713 + $0x5b8] sm:$0xff]
        %v962 = vld [vmem:[%s713 + $0x5c0] sm:$0xff]
        %v963 = vld [vmem:[%s713 + $0x5c8] sm:$0xff]
        %v964 = vld [vmem:[%s713 + $0x5d0] sm:$0xff]
        %v965 = vld [vmem:[%s713 + $0x5d8] sm:$0xff]
        %v966 = vld [vmem:[%s713 + $0x5e0] sm:$0xff]
        %v967 = vld [vmem:[%s713 + $0x5e8] sm:$0xff]
        %v968 = vld [vmem:[%s713 + $0x5f0] sm:$0xff]
        %v969 = vld [vmem:[%s713 + $0x5f8] sm:$0xff]
        %v970 = vld [vmem:[%s713 + $0x600] sm:$0xff]
        %v971 = vld [vmem:[%s713 + $0x608] sm:$0xff]
        %v972 = vld [vmem:[%s713 + $0x610] sm:$0xff]
        %v973 = vld [vmem:[%s713 + $0x618] sm:$0xff]
        %v974 = vld [vmem:[%s713 + $0x620] sm:$0xff]
        %v975 = vld [vmem:[%s713 + $0x628] sm:$0xff]
        %v976 = vld [vmem:[%s713 + $0x630] sm:$0xff]
        %v977 = vld [vmem:[%s713 + $0x638] sm:$0xff]
        %v978 = vld [vmem:[%s713 + $0x640] sm:$0xff]
        %v979 = vld [vmem:[%s713 + $0x648] sm:$0xff]
        %v980 = vld [vmem:[%s713 + $0x650] sm:$0xff]
        %v981 = vld [vmem:[%s713 + $0x658] sm:$0xff]
        %v982 = vld [vmem:[%s713 + $0x660] sm:$0xff]
        %v983 = vld [vmem:[%s713 + $0x668] sm:$0xff]
        %v984 = vld [vmem:[%s713 + $0x670] sm:$0xff]
        %v985 = vld [vmem:[%s713 + $0x678] sm:$0xff]
        %v986 = vld [vmem:[%s713 + $0x680] sm:$0xff]
        %v987 = vld [vmem:[%s713 + $0x688] sm:$0xff]
        %v988 = vld [vmem:[%s713 + $0x690] sm:$0xff]
        %v989 = vld [vmem:[%s713 + $0x698] sm:$0xff]
        %v990 = vld [vmem:[%s713 + $0x6a0] sm:$0xff]
        %v991 = vld [vmem:[%s713 + $0x6a8] sm:$0xff]
        %v992 = vld [vmem:[%s713 + $0x6b0] sm:$0xff]
        %v993 = vld [vmem:[%s713 + $0x6b8] sm:$0xff]
        %v994 = vld [vmem:[%s713 + $0x6c0] sm:$0xff]
        %v995 = vld [vmem:[%s713 + $0x6c8] sm:$0xff]
        %v996 = vld [vmem:[%s713 + $0x6d0] sm:$0xff]
        %v997 = vld [vmem:[%s713 + $0x6d8] sm:$0xff]
        %v998 = vld [vmem:[%s713 + $0x6e0] sm:$0xff]
        %v999 = vld [vmem:[%s713 + $0x6e8] sm:$0xff]
        %v1000 = vld [vmem:[%s713 + $0x6f0] sm:$0xff]
        %v1001 = vld [vmem:[%s713 + $0x6f8] sm:$0xff]
        %v1002 = vld [vmem:[%s713 + $0x700] sm:$0xff]
        %v1003 = vld [vmem:[%s713 + $0x708] sm:$0xff]
        %v1004 = vld [vmem:[%s713 + $0x710] sm:$0xff]
        %v1005 = vld [vmem:[%s713 + $0x718] sm:$0xff]
        %v1006 = vld [vmem:[%s713 + $0x720] sm:$0xff]
        %v1007 = vld [vmem:[%s713 + $0x728] sm:$0xff]
        %v1008 = vld [vmem:[%s713 + $0x730] sm:$0xff]
        %v1009 = vld [vmem:[%s713 + $0x738] sm:$0xff]
        %v1010 = vld [vmem:[%s713 + $0x740] sm:$0xff]
        %v1011 = vld [vmem:[%s713 + $0x748] sm:$0xff]
        %v1012 = vld [vmem:[%s713 + $0x750] sm:$0xff]
        %v1013 = vld [vmem:[%s713 + $0x758] sm:$0xff]
        %v1014 = vld [vmem:[%s713 + $0x760] sm:$0xff]
        %v1015 = vld [vmem:[%s713 + $0x768] sm:$0xff]
        %v1016 = vld [vmem:[%s713 + $0x770] sm:$0xff]
        %v1017 = vld [vmem:[%s713 + $0x778] sm:$0xff]
        %v1018 = vld [vmem:[%s713 + $0x780] sm:$0xff]
        %v1019 = vld [vmem:[%s713 + $0x788] sm:$0xff]
        %v1020 = vld [vmem:[%s713 + $0x790] sm:$0xff]
        %v1021 = vld [vmem:[%s713 + $0x798] sm:$0xff]
        %v1022 = vld [vmem:[%s713 + $0x7a0] sm:$0xff]
        %v1023 = vld [vmem:[%s713 + $0x7a8] sm:$0xff]
        %v1024 = vld [vmem:[%s713 + $0x7b0] sm:$0xff]
        %v1025 = vld [vmem:[%s713 + $0x7b8] sm:$0xff]
        %v1026 = vld [vmem:[%s713 + $0x7c0] sm:$0xff]
        %v1027 = vld [vmem:[%s713 + $0x7c8] sm:$0xff]
        %v1028 = vld [vmem:[%s713 + $0x7d0] sm:$0xff]
        %v1029 = vld [vmem:[%s713 + $0x7d8] sm:$0xff]
        %v1030 = vld [vmem:[%s713 + $0x7e0] sm:$0xff]
        %v1031 = vld [vmem:[%s713 + $0x7e8] sm:$0xff]
        %v1032 = vld [vmem:[%s713 + $0x7f0] sm:$0xff]
        %v1033 = vld [vmem:[%s713 + $0x7f8] sm:$0xff]
        %v1038 = vunpack.c.l.b16 %v774
        %v1039 = vunpack.c.h.b16 %v774
        %v1040 = vunpack.c.l.b16 %v775
        %v1041 = vunpack.c.h.b16 %v775
        %v1042 = vunpack.c.l.b16 %v776
        %v1043 = vunpack.c.h.b16 %v776
        %v1044 = vunpack.c.l.b16 %v777
        %v1045 = vunpack.c.h.b16 %v777
        %v1046 = vpack.c.b16 %v1038, %v1038
        %v1047 = vpack.c.b16 %v1039, %v1039
        %v1048 = vpack.c.b16 %v1040, %v1040
        %v1049 = vpack.c.b16 %v1041, %v1041
        %v1050 = vpack.c.b16 %v1042, %v1042
        %v1051 = vpack.c.b16 %v1043, %v1043
        %v1052 = vpack.c.b16 %v1044, %v1044
        %v1053 = vpack.c.b16 %v1045, %v1045
        %v1318 = vunpack.c.l.b16 %v778
        %v1319 = vunpack.c.h.b16 %v778
        %v1320 = vunpack.c.l.b16 %v779
        %v1321 = vunpack.c.h.b16 %v779
        %v1322 = vunpack.c.l.b16 %v780
        %v1323 = vunpack.c.h.b16 %v780
        %v1324 = vunpack.c.l.b16 %v781
        %v1325 = vunpack.c.h.b16 %v781
        %v1326 = vunpack.c.l.b16 %v782
        %v1327 = vunpack.c.h.b16 %v782
        %v1328 = vunpack.c.l.b16 %v783
        %v1329 = vunpack.c.h.b16 %v783
        %v1330 = vunpack.c.l.b16 %v784
        %v1331 = vunpack.c.h.b16 %v784
        %v1332 = vunpack.c.l.b16 %v785
        %v1333 = vunpack.c.h.b16 %v785
        %v1334 = vunpack.c.l.b16 %v786
        %v1335 = vunpack.c.h.b16 %v786
        %v1336 = vunpack.c.l.b16 %v787
        %v1337 = vunpack.c.h.b16 %v787
        %v1338 = vunpack.c.l.b16 %v788
        %v1339 = vunpack.c.h.b16 %v788
        %v1340 = vunpack.c.l.b16 %v789
        %v1341 = vunpack.c.h.b16 %v789
        %v1342 = vunpack.c.l.b16 %v790
        %v1343 = vunpack.c.h.b16 %v790
        %v1344 = vunpack.c.l.b16 %v791
        %v1345 = vunpack.c.h.b16 %v791
        %v1346 = vunpack.c.l.b16 %v792
        %v1347 = vunpack.c.h.b16 %v792
        %v1348 = vunpack.c.l.b16 %v793
        %v1349 = vunpack.c.h.b16 %v793
        %v1350 = vunpack.c.l.b16 %v794
        %v1351 = vunpack.c.h.b16 %v794
        %v1352 = vunpack.c.l.b16 %v795
        %v1353 = vunpack.c.h.b16 %v795
        %v1354 = vunpack.c.l.b16 %v796
        %v1355 = vunpack.c.h.b16 %v796
        %v1356 = vunpack.c.l.b16 %v797
        %v1357 = vunpack.c.h.b16 %v797
        %v1358 = vunpack.c.l.b16 %v798
        %v1359 = vunpack.c.h.b16 %v798
        %v1360 = vunpack.c.l.b16 %v799
        %v1361 = vunpack.c.h.b16 %v799
        %v1362 = vunpack.c.l.b16 %v800
        %v1363 = vunpack.c.h.b16 %v800
        %v1364 = vunpack.c.l.b16 %v801
        %v1365 = vunpack.c.h.b16 %v801
        %v1366 = vunpack.c.l.b16 %v802
        %v1367 = vunpack.c.h.b16 %v802
        %v1368 = vunpack.c.l.b16 %v803
        %v1369 = vunpack.c.h.b16 %v803
        %v1370 = vunpack.c.l.b16 %v804
        %v1371 = vunpack.c.h.b16 %v804
        %v1372 = vunpack.c.l.b16 %v805
        %v1373 = vunpack.c.h.b16 %v805
        %v1374 = vunpack.c.l.b16 %v806
        %v1375 = vunpack.c.h.b16 %v806
        %v1376 = vunpack.c.l.b16 %v807
        %v1377 = vunpack.c.h.b16 %v807
        %v1378 = vunpack.c.l.b16 %v808
        %v1379 = vunpack.c.h.b16 %v808
        %v1380 = vunpack.c.l.b16 %v809
        %v1381 = vunpack.c.h.b16 %v809
        %v1382 = vunpack.c.l.b16 %v810
        %v1383 = vunpack.c.h.b16 %v810
        %v1384 = vunpack.c.l.b16 %v811
        %v1385 = vunpack.c.h.b16 %v811
        %v1386 = vunpack.c.l.b16 %v812
        %v1387 = vunpack.c.h.b16 %v812
        %v1388 = vunpack.c.l.b16 %v813
        %v1389 = vunpack.c.h.b16 %v813
        %v1390 = vunpack.c.l.b16 %v814
        %v1391 = vunpack.c.h.b16 %v814
        %v1392 = vunpack.c.l.b16 %v815
        %v1393 = vunpack.c.h.b16 %v815
        %v1394 = vunpack.c.l.b16 %v816
        %v1395 = vunpack.c.h.b16 %v816
        %v1396 = vunpack.c.l.b16 %v817
        %v1397 = vunpack.c.h.b16 %v817
        %v1398 = vunpack.c.l.b16 %v818
        %v1399 = vunpack.c.h.b16 %v818
        %v1400 = vunpack.c.l.b16 %v819
        %v1401 = vunpack.c.h.b16 %v819
        %v1402 = vunpack.c.l.b16 %v820
        %v1403 = vunpack.c.h.b16 %v820
        %v1404 = vunpack.c.l.b16 %v821
        %v1405 = vunpack.c.h.b16 %v821
        %v1406 = vunpack.c.l.b16 %v822
        %v1407 = vunpack.c.h.b16 %v822
        %v1408 = vunpack.c.l.b16 %v823
        %v1409 = vunpack.c.h.b16 %v823
        %v1410 = vunpack.c.l.b16 %v824
        %v1411 = vunpack.c.h.b16 %v824
        %v1412 = vunpack.c.l.b16 %v825
        %v1413 = vunpack.c.h.b16 %v825
        %v1414 = vunpack.c.l.b16 %v826
        %v1415 = vunpack.c.h.b16 %v826
        %v1416 = vunpack.c.l.b16 %v827
        %v1417 = vunpack.c.h.b16 %v827
        %v1418 = vunpack.c.l.b16 %v828
        %v1419 = vunpack.c.h.b16 %v828
        %v1420 = vunpack.c.l.b16 %v829
        %v1421 = vunpack.c.h.b16 %v829
        %v1422 = vunpack.c.l.b16 %v830
        %v1423 = vunpack.c.h.b16 %v830
        %v1424 = vunpack.c.l.b16 %v831
        %v1425 = vunpack.c.h.b16 %v831
        %v1426 = vunpack.c.l.b16 %v832
        %v1427 = vunpack.c.h.b16 %v832
        %v1428 = vunpack.c.l.b16 %v833
        %v1429 = vunpack.c.h.b16 %v833
        %v1430 = vunpack.c.l.b16 %v834
        %v1431 = vunpack.c.h.b16 %v834
        %v1432 = vunpack.c.l.b16 %v835
        %v1433 = vunpack.c.h.b16 %v835
        %v1434 = vunpack.c.l.b16 %v836
        %v1435 = vunpack.c.h.b16 %v836
        %v1436 = vunpack.c.l.b16 %v837
        %v1437 = vunpack.c.h.b16 %v837
        %v1438 = vunpack.c.l.b16 %v838
        %v1439 = vunpack.c.h.b16 %v838
        %v1440 = vunpack.c.l.b16 %v839
        %v1441 = vunpack.c.h.b16 %v839
        %v1442 = vunpack.c.l.b16 %v840
        %v1443 = vunpack.c.h.b16 %v840
        %v1444 = vunpack.c.l.b16 %v841
        %v1445 = vunpack.c.h.b16 %v841
        %v1446 = vunpack.c.l.b16 %v842
        %v1447 = vunpack.c.h.b16 %v842
        %v1448 = vunpack.c.l.b16 %v843
        %v1449 = vunpack.c.h.b16 %v843
        %v1450 = vunpack.c.l.b16 %v844
        %v1451 = vunpack.c.h.b16 %v844
        %v1452 = vunpack.c.l.b16 %v845
        %v1453 = vunpack.c.h.b16 %v845
        %v1454 = vunpack.c.l.b16 %v846
        %v1455 = vunpack.c.h.b16 %v846
        %v1456 = vunpack.c.l.b16 %v847
        %v1457 = vunpack.c.h.b16 %v847
        %v1458 = vunpack.c.l.b16 %v848
        %v1459 = vunpack.c.h.b16 %v848
        %v1460 = vunpack.c.l.b16 %v849
        %v1461 = vunpack.c.h.b16 %v849
        %v1462 = vunpack.c.l.b16 %v850
        %v1463 = vunpack.c.h.b16 %v850
        %v1464 = vunpack.c.l.b16 %v851
        %v1465 = vunpack.c.h.b16 %v851
        %v1466 = vunpack.c.l.b16 %v852
        %v1467 = vunpack.c.h.b16 %v852
        %v1468 = vunpack.c.l.b16 %v853
        %v1469 = vunpack.c.h.b16 %v853
        %v1470 = vunpack.c.l.b16 %v854
        %v1471 = vunpack.c.h.b16 %v854
        %v1472 = vunpack.c.l.b16 %v855
        %v1473 = vunpack.c.h.b16 %v855
        %v1474 = vunpack.c.l.b16 %v856
        %v1475 = vunpack.c.h.b16 %v856
        %v1476 = vunpack.c.l.b16 %v857
        %v1477 = vunpack.c.h.b16 %v857
        %v1478 = vunpack.c.l.b16 %v858
        %v1479 = vunpack.c.h.b16 %v858
        %v1480 = vunpack.c.l.b16 %v859
        %v1481 = vunpack.c.h.b16 %v859
        %v1482 = vunpack.c.l.b16 %v860
        %v1483 = vunpack.c.h.b16 %v860
        %v1484 = vunpack.c.l.b16 %v861
        %v1485 = vunpack.c.h.b16 %v861
        %v1486 = vunpack.c.l.b16 %v862
        %v1487 = vunpack.c.h.b16 %v862
        %v1488 = vunpack.c.l.b16 %v863
        %v1489 = vunpack.c.h.b16 %v863
        %v1490 = vunpack.c.l.b16 %v864
        %v1491 = vunpack.c.h.b16 %v864
        %v1492 = vunpack.c.l.b16 %v865
        %v1493 = vunpack.c.h.b16 %v865
        %v1494 = vunpack.c.l.b16 %v866
        %v1495 = vunpack.c.h.b16 %v866
        %v1496 = vunpack.c.l.b16 %v867
        %v1497 = vunpack.c.h.b16 %v867
        %v1498 = vunpack.c.l.b16 %v868
        %v1499 = vunpack.c.h.b16 %v868
        %v1500 = vunpack.c.l.b16 %v869
        %v1501 = vunpack.c.h.b16 %v869
        %v1502 = vunpack.c.l.b16 %v870
        %v1503 = vunpack.c.h.b16 %v870
        %v1504 = vunpack.c.l.b16 %v871
        %v1505 = vunpack.c.h.b16 %v871
        %v1506 = vunpack.c.l.b16 %v872
        %v1507 = vunpack.c.h.b16 %v872
        %v1508 = vunpack.c.l.b16 %v873
        %v1509 = vunpack.c.h.b16 %v873
        %v1510 = vunpack.c.l.b16 %v874
        %v1511 = vunpack.c.h.b16 %v874
        %v1512 = vunpack.c.l.b16 %v875
        %v1513 = vunpack.c.h.b16 %v875
        %v1514 = vunpack.c.l.b16 %v876
        %v1515 = vunpack.c.h.b16 %v876
        %v1516 = vunpack.c.l.b16 %v877
        %v1517 = vunpack.c.h.b16 %v877
        %v1518 = vunpack.c.l.b16 %v878
        %v1519 = vunpack.c.h.b16 %v878
        %v1520 = vunpack.c.l.b16 %v879
        %v1521 = vunpack.c.h.b16 %v879
        %v1522 = vunpack.c.l.b16 %v880
        %v1523 = vunpack.c.h.b16 %v880
        %v1524 = vunpack.c.l.b16 %v881
        %v1525 = vunpack.c.h.b16 %v881
        %v1526 = vunpack.c.l.b16 %v882
        %v1527 = vunpack.c.h.b16 %v882
        %v1528 = vunpack.c.l.b16 %v883
        %v1529 = vunpack.c.h.b16 %v883
        %v1530 = vunpack.c.l.b16 %v884
        %v1531 = vunpack.c.h.b16 %v884
        %v1532 = vunpack.c.l.b16 %v885
        %v1533 = vunpack.c.h.b16 %v885
        %v1534 = vunpack.c.l.b16 %v886
        %v1535 = vunpack.c.h.b16 %v886
        %v1536 = vunpack.c.l.b16 %v887
        %v1537 = vunpack.c.h.b16 %v887
        %v1538 = vunpack.c.l.b16 %v888
        %v1539 = vunpack.c.h.b16 %v888
        %v1540 = vunpack.c.l.b16 %v889
        %v1541 = vunpack.c.h.b16 %v889
        %v1542 = vunpack.c.l.b16 %v890
        %v1543 = vunpack.c.h.b16 %v890
        %v1544 = vunpack.c.l.b16 %v891
        %v1545 = vunpack.c.h.b16 %v891
        %v1546 = vunpack.c.l.b16 %v892
        %v1547 = vunpack.c.h.b16 %v892
        %v1548 = vunpack.c.l.b16 %v893
        %v1549 = vunpack.c.h.b16 %v893
        %v1550 = vunpack.c.l.b16 %v894
        %v1551 = vunpack.c.h.b16 %v894
        %v1552 = vunpack.c.l.b16 %v895
        %v1553 = vunpack.c.h.b16 %v895
        %v1554 = vunpack.c.l.b16 %v896
        %v1555 = vunpack.c.h.b16 %v896
        %v1556 = vunpack.c.l.b16 %v897
        %v1557 = vunpack.c.h.b16 %v897
        %v1558 = vunpack.c.l.b16 %v898
        %v1559 = vunpack.c.h.b16 %v898
        %v1560 = vunpack.c.l.b16 %v899
        %v1561 = vunpack.c.h.b16 %v899
        %v1562 = vunpack.c.l.b16 %v900
        %v1563 = vunpack.c.h.b16 %v900
        %v1564 = vunpack.c.l.b16 %v901
        %v1565 = vunpack.c.h.b16 %v901
        %v1566 = vunpack.c.l.b16 %v902
        %v1567 = vunpack.c.h.b16 %v902
        %v1568 = vunpack.c.l.b16 %v903
        %v1569 = vunpack.c.h.b16 %v903
        %v1570 = vunpack.c.l.b16 %v904
        %v1571 = vunpack.c.h.b16 %v904
        %v1572 = vunpack.c.l.b16 %v905
        %v1573 = vunpack.c.h.b16 %v905
        %v1574 = vunpack.c.l.b16 %v906
        %v1575 = vunpack.c.h.b16 %v906
        %v1576 = vunpack.c.l.b16 %v907
        %v1577 = vunpack.c.h.b16 %v907
        %v1578 = vunpack.c.l.b16 %v908
        %v1579 = vunpack.c.h.b16 %v908
        %v1580 = vunpack.c.l.b16 %v909
        %v1581 = vunpack.c.h.b16 %v909
        %v1582 = vunpack.c.l.b16 %v910
        %v1583 = vunpack.c.h.b16 %v910
        %v1584 = vunpack.c.l.b16 %v911
        %v1585 = vunpack.c.h.b16 %v911
        %v1586 = vunpack.c.l.b16 %v912
        %v1587 = vunpack.c.h.b16 %v912
        %v1588 = vunpack.c.l.b16 %v913
        %v1589 = vunpack.c.h.b16 %v913
        %v1590 = vunpack.c.l.b16 %v914
        %v1591 = vunpack.c.h.b16 %v914
        %v1592 = vunpack.c.l.b16 %v915
        %v1593 = vunpack.c.h.b16 %v915
        %v1594 = vunpack.c.l.b16 %v916
        %v1595 = vunpack.c.h.b16 %v916
        %v1596 = vunpack.c.l.b16 %v917
        %v1597 = vunpack.c.h.b16 %v917
        %v1598 = vunpack.c.l.b16 %v918
        %v1599 = vunpack.c.h.b16 %v918
        %v1600 = vunpack.c.l.b16 %v919
        %v1601 = vunpack.c.h.b16 %v919
        %v1602 = vunpack.c.l.b16 %v920
        %v1603 = vunpack.c.h.b16 %v920
        %v1604 = vunpack.c.l.b16 %v921
        %v1605 = vunpack.c.h.b16 %v921
        %v1606 = vunpack.c.l.b16 %v922
        %v1607 = vunpack.c.h.b16 %v922
        %v1608 = vunpack.c.l.b16 %v923
        %v1609 = vunpack.c.h.b16 %v923
        %v1610 = vunpack.c.l.b16 %v924
        %v1611 = vunpack.c.h.b16 %v924
        %v1612 = vunpack.c.l.b16 %v925
        %v1613 = vunpack.c.h.b16 %v925
        %v1614 = vunpack.c.l.b16 %v926
        %v1615 = vunpack.c.h.b16 %v926
        %v1616 = vunpack.c.l.b16 %v927
        %v1617 = vunpack.c.h.b16 %v927
        %v1618 = vunpack.c.l.b16 %v928
        %v1619 = vunpack.c.h.b16 %v928
        %v1620 = vunpack.c.l.b16 %v929
        %v1621 = vunpack.c.h.b16 %v929
        %v1622 = vunpack.c.l.b16 %v930
        %v1623 = vunpack.c.h.b16 %v930
        %v1624 = vunpack.c.l.b16 %v931
        %v1625 = vunpack.c.h.b16 %v931
        %v1626 = vunpack.c.l.b16 %v932
        %v1627 = vunpack.c.h.b16 %v932
        %v1628 = vunpack.c.l.b16 %v933
        %v1629 = vunpack.c.h.b16 %v933
        %v1630 = vunpack.c.l.b16 %v934
        %v1631 = vunpack.c.h.b16 %v934
        %v1632 = vunpack.c.l.b16 %v935
        %v1633 = vunpack.c.h.b16 %v935
        %v1634 = vunpack.c.l.b16 %v936
        %v1635 = vunpack.c.h.b16 %v936
        %v1636 = vunpack.c.l.b16 %v937
        %v1637 = vunpack.c.h.b16 %v937
        %v1638 = vunpack.c.l.b16 %v938
        %v1639 = vunpack.c.h.b16 %v938
        %v1640 = vunpack.c.l.b16 %v939
        %v1641 = vunpack.c.h.b16 %v939
        %v1642 = vunpack.c.l.b16 %v940
        %v1643 = vunpack.c.h.b16 %v940
        %v1644 = vunpack.c.l.b16 %v941
        %v1645 = vunpack.c.h.b16 %v941
        %v1646 = vunpack.c.l.b16 %v942
        %v1647 = vunpack.c.h.b16 %v942
        %v1648 = vunpack.c.l.b16 %v943
        %v1649 = vunpack.c.h.b16 %v943
        %v1650 = vunpack.c.l.b16 %v944
        %v1651 = vunpack.c.h.b16 %v944
        %v1652 = vunpack.c.l.b16 %v945
        %v1653 = vunpack.c.h.b16 %v945
        %v1654 = vunpack.c.l.b16 %v946
        %v1655 = vunpack.c.h.b16 %v946
        %v1656 = vunpack.c.l.b16 %v947
        %v1657 = vunpack.c.h.b16 %v947
        %v1658 = vunpack.c.l.b16 %v948
        %v1659 = vunpack.c.h.b16 %v948
        %v1660 = vunpack.c.l.b16 %v949
        %v1661 = vunpack.c.h.b16 %v949
        %v1662 = vunpack.c.l.b16 %v950
        %v1663 = vunpack.c.h.b16 %v950
        %v1664 = vunpack.c.l.b16 %v951
        %v1665 = vunpack.c.h.b16 %v951
        %v1666 = vunpack.c.l.b16 %v952
        %v1667 = vunpack.c.h.b16 %v952
        %v1668 = vunpack.c.l.b16 %v953
        %v1669 = vunpack.c.h.b16 %v953
        %v1670 = vunpack.c.l.b16 %v954
        %v1671 = vunpack.c.h.b16 %v954
        %v1672 = vunpack.c.l.b16 %v955
        %v1673 = vunpack.c.h.b16 %v955
        %v1674 = vunpack.c.l.b16 %v956
        %v1675 = vunpack.c.h.b16 %v956
        %v1676 = vunpack.c.l.b16 %v957
        %v1677 = vunpack.c.h.b16 %v957
        %v1678 = vunpack.c.l.b16 %v958
        %v1679 = vunpack.c.h.b16 %v958
        %v1680 = vunpack.c.l.b16 %v959
        %v1681 = vunpack.c.h.b16 %v959
        %v1682 = vunpack.c.l.b16 %v960
        %v1683 = vunpack.c.h.b16 %v960
        %v1684 = vunpack.c.l.b16 %v961
        %v1685 = vunpack.c.h.b16 %v961
        %v1686 = vunpack.c.l.b16 %v962
        %v1687 = vunpack.c.h.b16 %v962
        %v1688 = vunpack.c.l.b16 %v963
        %v1689 = vunpack.c.h.b16 %v963
        %v1690 = vunpack.c.l.b16 %v964
        %v1691 = vunpack.c.h.b16 %v964
        %v1692 = vunpack.c.l.b16 %v965
        %v1693 = vunpack.c.h.b16 %v965
        %v1694 = vunpack.c.l.b16 %v966
        %v1695 = vunpack.c.h.b16 %v966
        %v1696 = vunpack.c.l.b16 %v967
        %v1697 = vunpack.c.h.b16 %v967
        %v1698 = vunpack.c.l.b16 %v968
        %v1699 = vunpack.c.h.b16 %v968
        %v1700 = vunpack.c.l.b16 %v969
        %v1701 = vunpack.c.h.b16 %v969
        %v1702 = vunpack.c.l.b16 %v970
        %v1703 = vunpack.c.h.b16 %v970
        %v1704 = vunpack.c.l.b16 %v971
        %v1705 = vunpack.c.h.b16 %v971
        %v1706 = vunpack.c.l.b16 %v972
        %v1707 = vunpack.c.h.b16 %v972
        %v1708 = vunpack.c.l.b16 %v973
        %v1709 = vunpack.c.h.b16 %v973
        %v1710 = vunpack.c.l.b16 %v974
        %v1711 = vunpack.c.h.b16 %v974
        %v1712 = vunpack.c.l.b16 %v975
        %v1713 = vunpack.c.h.b16 %v975
        %v1714 = vunpack.c.l.b16 %v976
        %v1715 = vunpack.c.h.b16 %v976
        %v1716 = vunpack.c.l.b16 %v977
        %v1717 = vunpack.c.h.b16 %v977
        %v1718 = vunpack.c.l.b16 %v978
        %v1719 = vunpack.c.h.b16 %v978
        %v1720 = vunpack.c.l.b16 %v979
        %v1721 = vunpack.c.h.b16 %v979
        %v1722 = vunpack.c.l.b16 %v980
        %v1723 = vunpack.c.h.b16 %v980
        %v1724 = vunpack.c.l.b16 %v981
        %v1725 = vunpack.c.h.b16 %v981
        %v1726 = vunpack.c.l.b16 %v982
        %v1727 = vunpack.c.h.b16 %v982
        %v1728 = vunpack.c.l.b16 %v983
        %v1729 = vunpack.c.h.b16 %v983
        %v1730 = vunpack.c.l.b16 %v984
        %v1731 = vunpack.c.h.b16 %v984
        %v1732 = vunpack.c.l.b16 %v985
        %v1733 = vunpack.c.h.b16 %v985
        %v1734 = vunpack.c.l.b16 %v986
        %v1735 = vunpack.c.h.b16 %v986
        %v1736 = vunpack.c.l.b16 %v987
        %v1737 = vunpack.c.h.b16 %v987
        %v1738 = vunpack.c.l.b16 %v988
        %v1739 = vunpack.c.h.b16 %v988
        %v1740 = vunpack.c.l.b16 %v989
        %v1741 = vunpack.c.h.b16 %v989
        %v1742 = vunpack.c.l.b16 %v990
        %v1743 = vunpack.c.h.b16 %v990
        %v1744 = vunpack.c.l.b16 %v991
        %v1745 = vunpack.c.h.b16 %v991
        %v1746 = vunpack.c.l.b16 %v992
        %v1747 = vunpack.c.h.b16 %v992
        %v1748 = vunpack.c.l.b16 %v993
        %v1749 = vunpack.c.h.b16 %v993
        %v1750 = vunpack.c.l.b16 %v994
        %v1751 = vunpack.c.h.b16 %v994
        %v1752 = vunpack.c.l.b16 %v995
        %v1753 = vunpack.c.h.b16 %v995
        %v1754 = vunpack.c.l.b16 %v996
        %v1755 = vunpack.c.h.b16 %v996
        %v1756 = vunpack.c.l.b16 %v997
        %v1757 = vunpack.c.h.b16 %v997
        %v1758 = vunpack.c.l.b16 %v998
        %v1759 = vunpack.c.h.b16 %v998
        %v1760 = vunpack.c.l.b16 %v999
        %v1761 = vunpack.c.h.b16 %v999
        %v1762 = vunpack.c.l.b16 %v1000
        %v1763 = vunpack.c.h.b16 %v1000
        %v1764 = vunpack.c.l.b16 %v1001
        %v1765 = vunpack.c.h.b16 %v1001
        %v1766 = vunpack.c.l.b16 %v1002
        %v1767 = vunpack.c.h.b16 %v1002
        %v1768 = vunpack.c.l.b16 %v1003
        %v1769 = vunpack.c.h.b16 %v1003
        %v1770 = vunpack.c.l.b16 %v1004
        %v1771 = vunpack.c.h.b16 %v1004
        %v1772 = vunpack.c.l.b16 %v1005
        %v1773 = vunpack.c.h.b16 %v1005
        %v1774 = vunpack.c.l.b16 %v1006
        %v1775 = vunpack.c.h.b16 %v1006
        %v1776 = vunpack.c.l.b16 %v1007
        %v1777 = vunpack.c.h.b16 %v1007
        %v1778 = vunpack.c.l.b16 %v1008
        %v1779 = vunpack.c.h.b16 %v1008
        %v1780 = vunpack.c.l.b16 %v1009
        %v1781 = vunpack.c.h.b16 %v1009
        %v1782 = vunpack.c.l.b16 %v1010
        %v1783 = vunpack.c.h.b16 %v1010
        %v1784 = vunpack.c.l.b16 %v1011
        %v1785 = vunpack.c.h.b16 %v1011
        %v1786 = vunpack.c.l.b16 %v1012
        %v1787 = vunpack.c.h.b16 %v1012
        %v1788 = vunpack.c.l.b16 %v1013
        %v1789 = vunpack.c.h.b16 %v1013
        %v1790 = vunpack.c.l.b16 %v1014
        %v1791 = vunpack.c.h.b16 %v1014
        %v1792 = vunpack.c.l.b16 %v1015
        %v1793 = vunpack.c.h.b16 %v1015
        %v1794 = vunpack.c.l.b16 %v1016
        %v1795 = vunpack.c.h.b16 %v1016
        %v1796 = vunpack.c.l.b16 %v1017
        %v1797 = vunpack.c.h.b16 %v1017
        %v1798 = vunpack.c.l.b16 %v1018
        %v1799 = vunpack.c.h.b16 %v1018
        %v1800 = vunpack.c.l.b16 %v1019
        %v1801 = vunpack.c.h.b16 %v1019
        %v1802 = vunpack.c.l.b16 %v1020
        %v1803 = vunpack.c.h.b16 %v1020
        %v1804 = vunpack.c.l.b16 %v1021
        %v1805 = vunpack.c.h.b16 %v1021
        %v1806 = vunpack.c.l.b16 %v1022
        %v1807 = vunpack.c.h.b16 %v1022
        %v1808 = vunpack.c.l.b16 %v1023
        %v1809 = vunpack.c.h.b16 %v1023
        %v1810 = vunpack.c.l.b16 %v1024
        %v1811 = vunpack.c.h.b16 %v1024
        %v1812 = vunpack.c.l.b16 %v1025
        %v1813 = vunpack.c.h.b16 %v1025
        %v1814 = vunpack.c.l.b16 %v1026
        %v1815 = vunpack.c.h.b16 %v1026
        %v1816 = vunpack.c.l.b16 %v1027
        %v1817 = vunpack.c.h.b16 %v1027
        %v1818 = vunpack.c.l.b16 %v1028
        %v1819 = vunpack.c.h.b16 %v1028
        %v1820 = vunpack.c.l.b16 %v1029
        %v1821 = vunpack.c.h.b16 %v1029
        %v1822 = vunpack.c.l.b16 %v1030
        %v1823 = vunpack.c.h.b16 %v1030
        %v1824 = vunpack.c.l.b16 %v1031
        %v1825 = vunpack.c.h.b16 %v1031
        %v1826 = vunpack.c.l.b16 %v1032
        %v1827 = vunpack.c.h.b16 %v1032
        %v1828 = vunpack.c.l.b16 %v1033
        %v1829 = vunpack.c.h.b16 %v1033
        %v1830 = vpack.c.b16 %v1322, %v1318
        %v1831 = vpack.c.b16 %v1323, %v1319
        %v1832 = vpack.c.b16 %v1324, %v1320
        %v1833 = vpack.c.b16 %v1325, %v1321
        %v1834 = vpack.c.b16 %v1330, %v1326
        %v1835 = vpack.c.b16 %v1331, %v1327
        %v1836 = vpack.c.b16 %v1332, %v1328
        %v1837 = vpack.c.b16 %v1333, %v1329
        %v1838 = vpack.c.b16 %v1338, %v1334
        %v1839 = vpack.c.b16 %v1339, %v1335
        %v1840 = vpack.c.b16 %v1340, %v1336
        %v1841 = vpack.c.b16 %v1341, %v1337
        %v1842 = vpack.c.b16 %v1346, %v1342
        %v1843 = vpack.c.b16 %v1347, %v1343
        %v1844 = vpack.c.b16 %v1348, %v1344
        %v1845 = vpack.c.b16 %v1349, %v1345
        %v1846 = vpack.c.b16 %v1354, %v1350
        %v1847 = vpack.c.b16 %v1355, %v1351
        %v1848 = vpack.c.b16 %v1356, %v1352
        %v1849 = vpack.c.b16 %v1357, %v1353
        %v1850 = vpack.c.b16 %v1362, %v1358
        %v1851 = vpack.c.b16 %v1363, %v1359
        %v1852 = vpack.c.b16 %v1364, %v1360
        %v1853 = vpack.c.b16 %v1365, %v1361
        %v1854 = vpack.c.b16 %v1370, %v1366
        %v1855 = vpack.c.b16 %v1371, %v1367
        %v1856 = vpack.c.b16 %v1372, %v1368
        %v1857 = vpack.c.b16 %v1373, %v1369
        %v1858 = vpack.c.b16 %v1378, %v1374
        %v1859 = vpack.c.b16 %v1379, %v1375
        %v1860 = vpack.c.b16 %v1380, %v1376
        %v1861 = vpack.c.b16 %v1381, %v1377
        %v1862 = vpack.c.b16 %v1386, %v1382
        %v1863 = vpack.c.b16 %v1387, %v1383
        %v1864 = vpack.c.b16 %v1388, %v1384
        %v1865 = vpack.c.b16 %v1389, %v1385
        %v1866 = vpack.c.b16 %v1394, %v1390
        %v1867 = vpack.c.b16 %v1395, %v1391
        %v1868 = vpack.c.b16 %v1396, %v1392
        %v1869 = vpack.c.b16 %v1397, %v1393
        %v1870 = vpack.c.b16 %v1402, %v1398
        %v1871 = vpack.c.b16 %v1403, %v1399
        %v1872 = vpack.c.b16 %v1404, %v1400
        %v1873 = vpack.c.b16 %v1405, %v1401
        %v1874 = vpack.c.b16 %v1410, %v1406
        %v1875 = vpack.c.b16 %v1411, %v1407
        %v1876 = vpack.c.b16 %v1412, %v1408
        %v1877 = vpack.c.b16 %v1413, %v1409
        %v1878 = vpack.c.b16 %v1418, %v1414
        %v1879 = vpack.c.b16 %v1419, %v1415
        %v1880 = vpack.c.b16 %v1420, %v1416
        %v1881 = vpack.c.b16 %v1421, %v1417
        %v1882 = vpack.c.b16 %v1426, %v1422
        %v1883 = vpack.c.b16 %v1427, %v1423
        %v1884 = vpack.c.b16 %v1428, %v1424
        %v1885 = vpack.c.b16 %v1429, %v1425
        %v1886 = vpack.c.b16 %v1434, %v1430
        %v1887 = vpack.c.b16 %v1435, %v1431
        %v1888 = vpack.c.b16 %v1436, %v1432
        %v1889 = vpack.c.b16 %v1437, %v1433
        %v1890 = vpack.c.b16 %v1442, %v1438
        %v1891 = vpack.c.b16 %v1443, %v1439
        %v1892 = vpack.c.b16 %v1444, %v1440
        %v1893 = vpack.c.b16 %v1445, %v1441
        %v1894 = vpack.c.b16 %v1450, %v1446
        %v1895 = vpack.c.b16 %v1451, %v1447
        %v1896 = vpack.c.b16 %v1452, %v1448
        %v1897 = vpack.c.b16 %v1453, %v1449
        %v1898 = vpack.c.b16 %v1458, %v1454
        %v1899 = vpack.c.b16 %v1459, %v1455
        %v1900 = vpack.c.b16 %v1460, %v1456
        %v1901 = vpack.c.b16 %v1461, %v1457
        %v1902 = vpack.c.b16 %v1466, %v1462
        %v1903 = vpack.c.b16 %v1467, %v1463
        %v1904 = vpack.c.b16 %v1468, %v1464
        %v1905 = vpack.c.b16 %v1469, %v1465
        %v1906 = vpack.c.b16 %v1474, %v1470
        %v1907 = vpack.c.b16 %v1475, %v1471
        %v1908 = vpack.c.b16 %v1476, %v1472
        %v1909 = vpack.c.b16 %v1477, %v1473
        %v1910 = vpack.c.b16 %v1482, %v1478
        %v1911 = vpack.c.b16 %v1483, %v1479
        %v1912 = vpack.c.b16 %v1484, %v1480
        %v1913 = vpack.c.b16 %v1485, %v1481
        %v1914 = vpack.c.b16 %v1490, %v1486
        %v1915 = vpack.c.b16 %v1491, %v1487
        %v1916 = vpack.c.b16 %v1492, %v1488
        %v1917 = vpack.c.b16 %v1493, %v1489
        %v1918 = vpack.c.b16 %v1498, %v1494
        %v1919 = vpack.c.b16 %v1499, %v1495
        %v1920 = vpack.c.b16 %v1500, %v1496
        %v1921 = vpack.c.b16 %v1501, %v1497
        %v1922 = vpack.c.b16 %v1506, %v1502
        %v1923 = vpack.c.b16 %v1507, %v1503
        %v1924 = vpack.c.b16 %v1508, %v1504
        %v1925 = vpack.c.b16 %v1509, %v1505
        %v1926 = vpack.c.b16 %v1514, %v1510
        %v1927 = vpack.c.b16 %v1515, %v1511
        %v1928 = vpack.c.b16 %v1516, %v1512
        %v1929 = vpack.c.b16 %v1517, %v1513
        %v1930 = vpack.c.b16 %v1522, %v1518
        %v1931 = vpack.c.b16 %v1523, %v1519
        %v1932 = vpack.c.b16 %v1524, %v1520
        %v1933 = vpack.c.b16 %v1525, %v1521
        %v1934 = vpack.c.b16 %v1530, %v1526
        %v1935 = vpack.c.b16 %v1531, %v1527
        %v1936 = vpack.c.b16 %v1532, %v1528
        %v1937 = vpack.c.b16 %v1533, %v1529
        %v1938 = vpack.c.b16 %v1538, %v1534
        %v1939 = vpack.c.b16 %v1539, %v1535
        %v1940 = vpack.c.b16 %v1540, %v1536
        %v1941 = vpack.c.b16 %v1541, %v1537
        %v1942 = vpack.c.b16 %v1546, %v1542
        %v1943 = vpack.c.b16 %v1547, %v1543
        %v1944 = vpack.c.b16 %v1548, %v1544
        %v1945 = vpack.c.b16 %v1549, %v1545
        %v1946 = vpack.c.b16 %v1554, %v1550
        %v1947 = vpack.c.b16 %v1555, %v1551
        %v1948 = vpack.c.b16 %v1556, %v1552
        %v1949 = vpack.c.b16 %v1557, %v1553
        %v1950 = vpack.c.b16 %v1562, %v1558
        %v1951 = vpack.c.b16 %v1563, %v1559
        %v1952 = vpack.c.b16 %v1564, %v1560
        %v1953 = vpack.c.b16 %v1565, %v1561
        %v1954 = vpack.c.b16 %v1570, %v1566
        %v1955 = vpack.c.b16 %v1571, %v1567
        %v1956 = vpack.c.b16 %v1572, %v1568
        %v1957 = vpack.c.b16 %v1573, %v1569
        %v1958 = vpack.c.b16 %v1578, %v1574
        %v1959 = vpack.c.b16 %v1579, %v1575
        %v1960 = vpack.c.b16 %v1580, %v1576
        %v1961 = vpack.c.b16 %v1581, %v1577
        %v1962 = vpack.c.b16 %v1586, %v1582
        %v1963 = vpack.c.b16 %v1587, %v1583
        %v1964 = vpack.c.b16 %v1588, %v1584
        %v1965 = vpack.c.b16 %v1589, %v1585
        %v1966 = vpack.c.b16 %v1594, %v1590
        %v1967 = vpack.c.b16 %v1595, %v1591
        %v1968 = vpack.c.b16 %v1596, %v1592
        %v1969 = vpack.c.b16 %v1597, %v1593
        %v1970 = vpack.c.b16 %v1602, %v1598
        %v1971 = vpack.c.b16 %v1603, %v1599
        %v1972 = vpack.c.b16 %v1604, %v1600
        %v1973 = vpack.c.b16 %v1605, %v1601
        %v1974 = vpack.c.b16 %v1610, %v1606
        %v1975 = vpack.c.b16 %v1611, %v1607
        %v1976 = vpack.c.b16 %v1612, %v1608
        %v1977 = vpack.c.b16 %v1613, %v1609
        %v1978 = vpack.c.b16 %v1618, %v1614
        %v1979 = vpack.c.b16 %v1619, %v1615
        %v1980 = vpack.c.b16 %v1620, %v1616
        %v1981 = vpack.c.b16 %v1621, %v1617
        %v1982 = vpack.c.b16 %v1626, %v1622
        %v1983 = vpack.c.b16 %v1627, %v1623
        %v1984 = vpack.c.b16 %v1628, %v1624
        %v1985 = vpack.c.b16 %v1629, %v1625
        %v1986 = vpack.c.b16 %v1634, %v1630
        %v1987 = vpack.c.b16 %v1635, %v1631
        %v1988 = vpack.c.b16 %v1636, %v1632
        %v1989 = vpack.c.b16 %v1637, %v1633
        %v1990 = vpack.c.b16 %v1642, %v1638
        %v1991 = vpack.c.b16 %v1643, %v1639
        %v1992 = vpack.c.b16 %v1644, %v1640
        %v1993 = vpack.c.b16 %v1645, %v1641
        %v1994 = vpack.c.b16 %v1650, %v1646
        %v1995 = vpack.c.b16 %v1651, %v1647
        %v1996 = vpack.c.b16 %v1652, %v1648
        %v1997 = vpack.c.b16 %v1653, %v1649
        %v1998 = vpack.c.b16 %v1658, %v1654
        %v1999 = vpack.c.b16 %v1659, %v1655
        %v2000 = vpack.c.b16 %v1660, %v1656
        %v2001 = vpack.c.b16 %v1661, %v1657
        %v2002 = vpack.c.b16 %v1666, %v1662
        %v2003 = vpack.c.b16 %v1667, %v1663
        %v2004 = vpack.c.b16 %v1668, %v1664
        %v2005 = vpack.c.b16 %v1669, %v1665
        %v2006 = vpack.c.b16 %v1674, %v1670
        %v2007 = vpack.c.b16 %v1675, %v1671
        %v2008 = vpack.c.b16 %v1676, %v1672
        %v2009 = vpack.c.b16 %v1677, %v1673
        %v2010 = vpack.c.b16 %v1682, %v1678
        %v2011 = vpack.c.b16 %v1683, %v1679
        %v2012 = vpack.c.b16 %v1684, %v1680
        %v2013 = vpack.c.b16 %v1685, %v1681
        %v2014 = vpack.c.b16 %v1690, %v1686
        %v2015 = vpack.c.b16 %v1691, %v1687
        %v2016 = vpack.c.b16 %v1692, %v1688
        %v2017 = vpack.c.b16 %v1693, %v1689
        %v2018 = vpack.c.b16 %v1698, %v1694
        %v2019 = vpack.c.b16 %v1699, %v1695
        %v2020 = vpack.c.b16 %v1700, %v1696
        %v2021 = vpack.c.b16 %v1701, %v1697
        %v2022 = vpack.c.b16 %v1706, %v1702
        %v2023 = vpack.c.b16 %v1707, %v1703
        %v2024 = vpack.c.b16 %v1708, %v1704
        %v2025 = vpack.c.b16 %v1709, %v1705
        %v2026 = vpack.c.b16 %v1714, %v1710
        %v2027 = vpack.c.b16 %v1715, %v1711
        %v2028 = vpack.c.b16 %v1716, %v1712
        %v2029 = vpack.c.b16 %v1717, %v1713
        %v2030 = vpack.c.b16 %v1722, %v1718
        %v2031 = vpack.c.b16 %v1723, %v1719
        %v2032 = vpack.c.b16 %v1724, %v1720
        %v2033 = vpack.c.b16 %v1725, %v1721
        %v2034 = vpack.c.b16 %v1730, %v1726
        %v2035 = vpack.c.b16 %v1731, %v1727
        %v2036 = vpack.c.b16 %v1732, %v1728
        %v2037 = vpack.c.b16 %v1733, %v1729
        %v2038 = vpack.c.b16 %v1738, %v1734
        %v2039 = vpack.c.b16 %v1739, %v1735
        %v2040 = vpack.c.b16 %v1740, %v1736
        %v2041 = vpack.c.b16 %v1741, %v1737
        %v2042 = vpack.c.b16 %v1746, %v1742
        %v2043 = vpack.c.b16 %v1747, %v1743
        %v2044 = vpack.c.b16 %v1748, %v1744
        %v2045 = vpack.c.b16 %v1749, %v1745
        %v2046 = vpack.c.b16 %v1754, %v1750
        %v2047 = vpack.c.b16 %v1755, %v1751
        %v2048 = vpack.c.b16 %v1756, %v1752
        %v2049 = vpack.c.b16 %v1757, %v1753
        %v2050 = vpack.c.b16 %v1762, %v1758
        %v2051 = vpack.c.b16 %v1763, %v1759
        %v2052 = vpack.c.b16 %v1764, %v1760
        %v2053 = vpack.c.b16 %v1765, %v1761
        %v2054 = vpack.c.b16 %v1770, %v1766
        %v2055 = vpack.c.b16 %v1771, %v1767
        %v2056 = vpack.c.b16 %v1772, %v1768
        %v2057 = vpack.c.b16 %v1773, %v1769
        %v2058 = vpack.c.b16 %v1778, %v1774
        %v2059 = vpack.c.b16 %v1779, %v1775
        %v2060 = vpack.c.b16 %v1780, %v1776
        %v2061 = vpack.c.b16 %v1781, %v1777
        %v2062 = vpack.c.b16 %v1786, %v1782
        %v2063 = vpack.c.b16 %v1787, %v1783
        %v2064 = vpack.c.b16 %v1788, %v1784
        %v2065 = vpack.c.b16 %v1789, %v1785
        %v2066 = vpack.c.b16 %v1794, %v1790
        %v2067 = vpack.c.b16 %v1795, %v1791
        %v2068 = vpack.c.b16 %v1796, %v1792
        %v2069 = vpack.c.b16 %v1797, %v1793
        %v2070 = vpack.c.b16 %v1802, %v1798
        %v2071 = vpack.c.b16 %v1803, %v1799
        %v2072 = vpack.c.b16 %v1804, %v1800
        %v2073 = vpack.c.b16 %v1805, %v1801
        %v2074 = vpack.c.b16 %v1810, %v1806
        %v2075 = vpack.c.b16 %v1811, %v1807
        %v2076 = vpack.c.b16 %v1812, %v1808
        %v2077 = vpack.c.b16 %v1813, %v1809
        %v2078 = vpack.c.b16 %v1818, %v1814
        %v2079 = vpack.c.b16 %v1819, %v1815
        %v2080 = vpack.c.b16 %v1820, %v1816
        %v2081 = vpack.c.b16 %v1821, %v1817
        %v2082 = vpack.c.b16 %v1826, %v1822
        %v2083 = vpack.c.b16 %v1827, %v1823
        %v2084 = vpack.c.b16 %v1828, %v1824
        %v2085 = vpack.c.b16 %v1829, %v1825
        %2342 = vmatprep.subr.bf16.mxu0 %v1859
        %2343 = vmatpush1.bf16.msra.mxu0 %v1858
        %2344 = vmatprep.subr.bf16.mxu0 %v1855
        %2345 = vmatpush1.bf16.msra.mxu0 %v1854
        %2346 = vmatprep.subr.bf16.mxu0 %v1851
        %2347 = vmatpush1.bf16.msra.mxu0 %v1850
        %2348 = vmatprep.subr.bf16.mxu0 %v1847
        %2349 = vmatpush1.bf16.msra.mxu0 %v1846
        %2350 = vmatprep.subr.bf16.mxu0 %v1843
        %2351 = vmatpush1.bf16.msra.mxu0 %v1842
        %2352 = vmatprep.subr.bf16.mxu0 %v1839
        %2353 = vmatpush1.bf16.msra.mxu0 %v1838
        %2354 = vmatprep.subr.bf16.mxu0 %v1835
        %2355 = vmatpush1.bf16.msra.mxu0 %v1834
        %2356 = vmatprep.subr.bf16.mxu0 %v1831
        %2357 = vmatpush1.bf16.msra.mxu0 %v1830
        %2358 = vmatprep.subr.bf16.mxu0 %v1891
        %2359 = vmatpush2.bf16.msra.mxu0 %v1890
        %2360 = vmatprep.subr.bf16.mxu0 %v1887
        %2361 = vmatpush2.bf16.msra.mxu0 %v1886
        %2362 = vmatprep.subr.bf16.mxu0 %v1883
        %2363 = vmatpush2.bf16.msra.mxu0 %v1882
        %2364 = vmatprep.subr.bf16.mxu0 %v1879
        %2365 = vmatpush2.bf16.msra.mxu0 %v1878
        %2366 = vmatprep.subr.bf16.mxu0 %v1875
        %2367 = vmatpush2.bf16.msra.mxu0 %v1874
        %2368 = vmatprep.subr.bf16.mxu0 %v1871
        %2369 = vmatpush2.bf16.msra.mxu0 %v1870
        %2370 = vmatprep.subr.bf16.mxu0 %v1867
        %2371 = vmatpush2.bf16.msra.mxu0 %v1866
        %2372 = vmatprep.subr.bf16.mxu0 %v1863
        %2373 = vmatpush2.bf16.msra.mxu0 %v1862
        %2374 = vmatprep.mubr.bf16.mxu0 %v1047
        %2375 = vmatmul.mubr.bf16.gmra.mxu0 %v1046
        %v2376 = vpop.f32.mrf.mxu0
        %v2377 = vadd.f32 0.0, %v2376
        %v2378 = vpop.f32.mrf.mxu0
        %v2379 = vadd.f32 0.0, %v2378
        %v2380 = vpop.f32.mrf.mxu0
        %v2381 = vpop.f32.mrf.mxu0
        %2382 = vdwg.mxu0
        %2383 = vmatprep.subr.bf16.mxu0 %v1923
        %2384 = vmatpush1.bf16.msra.mxu0 %v1922
        %2385 = vmatprep.subr.bf16.mxu0 %v1919
        %2386 = vmatpush1.bf16.msra.mxu0 %v1918
        %2387 = vmatprep.subr.bf16.mxu0 %v1915
        %2388 = vmatpush1.bf16.msra.mxu0 %v1914
        %2389 = vmatprep.subr.bf16.mxu0 %v1911
        %2390 = vmatpush1.bf16.msra.mxu0 %v1910
        %2391 = vmatprep.subr.bf16.mxu0 %v1907
        %2392 = vmatpush1.bf16.msra.mxu0 %v1906
        %2393 = vmatprep.subr.bf16.mxu0 %v1903
        %2394 = vmatpush1.bf16.msra.mxu0 %v1902
        %2395 = vmatprep.subr.bf16.mxu0 %v1899
        %2396 = vmatpush1.bf16.msra.mxu0 %v1898
        %2397 = vmatprep.subr.bf16.mxu0 %v1895
        %2398 = vmatpush1.bf16.msra.mxu0 %v1894
        %2399 = vmatprep.subr.bf16.mxu0 %v1955
        %2400 = vmatpush2.bf16.msra.mxu0 %v1954
        %2401 = vmatprep.subr.bf16.mxu0 %v1951
        %2402 = vmatpush2.bf16.msra.mxu0 %v1950
        %2403 = vmatprep.subr.bf16.mxu0 %v1947
        %2404 = vmatpush2.bf16.msra.mxu0 %v1946
        %2405 = vmatprep.subr.bf16.mxu0 %v1943
        %2406 = vmatpush2.bf16.msra.mxu0 %v1942
        %2407 = vmatprep.subr.bf16.mxu0 %v1939
        %2408 = vmatpush2.bf16.msra.mxu0 %v1938
        %2409 = vmatprep.subr.bf16.mxu0 %v1935
        %2410 = vmatpush2.bf16.msra.mxu0 %v1934
        %2411 = vmatprep.subr.bf16.mxu0 %v1931
        %2412 = vmatpush2.bf16.msra.mxu0 %v1930
        %2413 = vmatprep.subr.bf16.mxu0 %v1927
        %2414 = vmatpush2.bf16.msra.mxu0 %v1926
        %2415 = vmatprep.mubr.bf16.mxu0 %v1049
        %2416 = vmatmul.mubr.bf16.gmra.mxu0 %v1048
        %v2417 = vpop.f32.mrf.mxu0
        %v2418 = vadd.f32 %v2377, %v2417
        %v2419 = vpop.f32.mrf.mxu0
        %v2420 = vadd.f32 %v2379, %v2419
        %v2421 = vpop.f32.mrf.mxu0
        %v2422 = vpop.f32.mrf.mxu0
        %2423 = vdwg.mxu0
        %2424 = vmatprep.subr.bf16.mxu0 %v1987
        %2425 = vmatpush1.bf16.msra.mxu0 %v1986
        %2426 = vmatprep.subr.bf16.mxu0 %v1983
        %2427 = vmatpush1.bf16.msra.mxu0 %v1982
        %2428 = vmatprep.subr.bf16.mxu0 %v1979
        %2429 = vmatpush1.bf16.msra.mxu0 %v1978
        %2430 = vmatprep.subr.bf16.mxu0 %v1975
        %2431 = vmatpush1.bf16.msra.mxu0 %v1974
        %2432 = vmatprep.subr.bf16.mxu0 %v1971
        %2433 = vmatpush1.bf16.msra.mxu0 %v1970
        %2434 = vmatprep.subr.bf16.mxu0 %v1967
        %2435 = vmatpush1.bf16.msra.mxu0 %v1966
        %2436 = vmatprep.subr.bf16.mxu0 %v1963
        %2437 = vmatpush1.bf16.msra.mxu0 %v1962
        %2438 = vmatprep.subr.bf16.mxu0 %v1959
        %2439 = vmatpush1.bf16.msra.mxu0 %v1958
        %2440 = vmatprep.subr.bf16.mxu0 %v2019
        %2441 = vmatpush2.bf16.msra.mxu0 %v2018
        %2442 = vmatprep.subr.bf16.mxu0 %v2015
        %2443 = vmatpush2.bf16.msra.mxu0 %v2014
        %2444 = vmatprep.subr.bf16.mxu0 %v2011
        %2445 = vmatpush2.bf16.msra.mxu0 %v2010
        %2446 = vmatprep.subr.bf16.mxu0 %v2007
        %2447 = vmatpush2.bf16.msra.mxu0 %v2006
        %2448 = vmatprep.subr.bf16.mxu0 %v2003
        %2449 = vmatpush2.bf16.msra.mxu0 %v2002
        %2450 = vmatprep.subr.bf16.mxu0 %v1999
        %2451 = vmatpush2.bf16.msra.mxu0 %v1998
        %2452 = vmatprep.subr.bf16.mxu0 %v1995
        %2453 = vmatpush2.bf16.msra.mxu0 %v1994
        %2454 = vmatprep.subr.bf16.mxu0 %v1991
        %2455 = vmatpush2.bf16.msra.mxu0 %v1990
        %2456 = vmatprep.mubr.bf16.mxu0 %v1051
        %2457 = vmatmul.mubr.bf16.gmra.mxu0 %v1050
        %v2458 = vpop.f32.mrf.mxu0
        %v2459 = vadd.f32 %v2418, %v2458
        %v2460 = vpop.f32.mrf.mxu0
        %v2461 = vadd.f32 %v2420, %v2460
        %v2462 = vpop.f32.mrf.mxu0
        %v2463 = vpop.f32.mrf.mxu0
        %2464 = vdwg.mxu0
        %2465 = vmatprep.subr.bf16.mxu0 %v2051
        %2466 = vmatpush1.bf16.msra.mxu0 %v2050
        %2467 = vmatprep.subr.bf16.mxu0 %v2047
        %2468 = vmatpush1.bf16.msra.mxu0 %v2046
        %2469 = vmatprep.subr.bf16.mxu0 %v2043
        %2470 = vmatpush1.bf16.msra.mxu0 %v2042
        %2471 = vmatprep.subr.bf16.mxu0 %v2039
        %2472 = vmatpush1.bf16.msra.mxu0 %v2038
        %2473 = vmatprep.subr.bf16.mxu0 %v2035
        %2474 = vmatpush1.bf16.msra.mxu0 %v2034
        %2475 = vmatprep.subr.bf16.mxu0 %v2031
        %2476 = vmatpush1.bf16.msra.mxu0 %v2030
        %2477 = vmatprep.subr.bf16.mxu0 %v2027
        %2478 = vmatpush1.bf16.msra.mxu0 %v2026
        %2479 = vmatprep.subr.bf16.mxu0 %v2023
        %2480 = vmatpush1.bf16.msra.mxu0 %v2022
        %2481 = vmatprep.subr.bf16.mxu0 %v2083
        %2482 = vmatpush2.bf16.msra.mxu0 %v2082
        %2483 = vmatprep.subr.bf16.mxu0 %v2079
        %2484 = vmatpush2.bf16.msra.mxu0 %v2078
        %2485 = vmatprep.subr.bf16.mxu0 %v2075
        %2486 = vmatpush2.bf16.msra.mxu0 %v2074
        %2487 = vmatprep.subr.bf16.mxu0 %v2071
        %2488 = vmatpush2.bf16.msra.mxu0 %v2070
        %2489 = vmatprep.subr.bf16.mxu0 %v2067
        %2490 = vmatpush2.bf16.msra.mxu0 %v2066
        %2491 = vmatprep.subr.bf16.mxu0 %v2063
        %2492 = vmatpush2.bf16.msra.mxu0 %v2062
        %2493 = vmatprep.subr.bf16.mxu0 %v2059
        %2494 = vmatpush2.bf16.msra.mxu0 %v2058
        %2495 = vmatprep.subr.bf16.mxu0 %v2055
        %2496 = vmatpush2.bf16.msra.mxu0 %v2054
        %2497 = vmatprep.mubr.bf16.mxu0 %v1053
        %2498 = vmatmul.mubr.bf16.gmra.mxu0 %v1052
        %v2499 = vpop.f32.mrf.mxu0
        %v2500 = vadd.f32 %v2459, %v2499
        %v2501 = vpop.f32.mrf.mxu0
        %v2502 = vadd.f32 %v2461, %v2501
        %v2503 = vpop.f32.mrf.mxu0
        %v2504 = vpop.f32.mrf.mxu0
        %2505 = vdwg.mxu0
        %2506 = vmatprep.subr.bf16.mxu0 %v1861
        %2507 = vmatpush1.bf16.msra.mxu0 %v1860
        %2508 = vmatprep.subr.bf16.mxu0 %v1857
        %2509 = vmatpush1.bf16.msra.mxu0 %v1856
        %2510 = vmatprep.subr.bf16.mxu0 %v1853
        %2511 = vmatpush1.bf16.msra.mxu0 %v1852
        %2512 = vmatprep.subr.bf16.mxu0 %v1849
        %2513 = vmatpush1.bf16.msra.mxu0 %v1848
        %2514 = vmatprep.subr.bf16.mxu0 %v1845
        %2515 = vmatpush1.bf16.msra.mxu0 %v1844
        %2516 = vmatprep.subr.bf16.mxu0 %v1841
        %2517 = vmatpush1.bf16.msra.mxu0 %v1840
        %2518 = vmatprep.subr.bf16.mxu0 %v1837
        %2519 = vmatpush1.bf16.msra.mxu0 %v1836
        %2520 = vmatprep.subr.bf16.mxu0 %v1833
        %2521 = vmatpush1.bf16.msra.mxu0 %v1832
        %2522 = vmatprep.subr.bf16.mxu0 %v1893
        %2523 = vmatpush2.bf16.msra.mxu0 %v1892
        %2524 = vmatprep.subr.bf16.mxu0 %v1889
        %2525 = vmatpush2.bf16.msra.mxu0 %v1888
        %2526 = vmatprep.subr.bf16.mxu0 %v1885
        %2527 = vmatpush2.bf16.msra.mxu0 %v1884
        %2528 = vmatprep.subr.bf16.mxu0 %v1881
        %2529 = vmatpush2.bf16.msra.mxu0 %v1880
        %2530 = vmatprep.subr.bf16.mxu0 %v1877
        %2531 = vmatpush2.bf16.msra.mxu0 %v1876
        %2532 = vmatprep.subr.bf16.mxu0 %v1873
        %2533 = vmatpush2.bf16.msra.mxu0 %v1872
        %2534 = vmatprep.subr.bf16.mxu0 %v1869
        %2535 = vmatpush2.bf16.msra.mxu0 %v1868
        %2536 = vmatprep.subr.bf16.mxu0 %v1865
        %2537 = vmatpush2.bf16.msra.mxu0 %v1864
        %2538 = vmatprep.mubr.bf16.mxu0 %v1047
        %2539 = vmatmul.mubr.bf16.gmra.mxu0 %v1046
        %v2540 = vpop.f32.mrf.mxu0
        %v2541 = vadd.f32 0.0, %v2540
        %v2542 = vpop.f32.mrf.mxu0
        %v2543 = vadd.f32 0.0, %v2542
        %v2544 = vpop.f32.mrf.mxu0
        %v2545 = vpop.f32.mrf.mxu0
        %2546 = vdwg.mxu0
        %2547 = vmatprep.subr.bf16.mxu0 %v1925
        %2548 = vmatpush1.bf16.msra.mxu0 %v1924
        %2549 = vmatprep.subr.bf16.mxu0 %v1921
        %2550 = vmatpush1.bf16.msra.mxu0 %v1920
        %2551 = vmatprep.subr.bf16.mxu0 %v1917
        %2552 = vmatpush1.bf16.msra.mxu0 %v1916
        %2553 = vmatprep.subr.bf16.mxu0 %v1913
        %2554 = vmatpush1.bf16.msra.mxu0 %v1912
        %2555 = vmatprep.subr.bf16.mxu0 %v1909
        %2556 = vmatpush1.bf16.msra.mxu0 %v1908
        %2557 = vmatprep.subr.bf16.mxu0 %v1905
        %2558 = vmatpush1.bf16.msra.mxu0 %v1904
        %2559 = vmatprep.subr.bf16.mxu0 %v1901
        %2560 = vmatpush1.bf16.msra.mxu0 %v1900
        %2561 = vmatprep.subr.bf16.mxu0 %v1897
        %2562 = vmatpush1.bf16.msra.mxu0 %v1896
        %2563 = vmatprep.subr.bf16.mxu0 %v1957
        %2564 = vmatpush2.bf16.msra.mxu0 %v1956
        %2565 = vmatprep.subr.bf16.mxu0 %v1953
        %2566 = vmatpush2.bf16.msra.mxu0 %v1952
        %2567 = vmatprep.subr.bf16.mxu0 %v1949
        %2568 = vmatpush2.bf16.msra.mxu0 %v1948
        %2569 = vmatprep.subr.bf16.mxu0 %v1945
        %2570 = vmatpush2.bf16.msra.mxu0 %v1944
        %2571 = vmatprep.subr.bf16.mxu0 %v1941
        %2572 = vmatpush2.bf16.msra.mxu0 %v1940
        %2573 = vmatprep.subr.bf16.mxu0 %v1937
        %2574 = vmatpush2.bf16.msra.mxu0 %v1936
        %2575 = vmatprep.subr.bf16.mxu0 %v1933
        %2576 = vmatpush2.bf16.msra.mxu0 %v1932
        %2577 = vmatprep.subr.bf16.mxu0 %v1929
        %2578 = vmatpush2.bf16.msra.mxu0 %v1928
        %2579 = vmatprep.mubr.bf16.mxu0 %v1049
        %2580 = vmatmul.mubr.bf16.gmra.mxu0 %v1048
        %v2581 = vpop.f32.mrf.mxu0
        %v2582 = vadd.f32 %v2541, %v2581
        %v2583 = vpop.f32.mrf.mxu0
        %v2584 = vadd.f32 %v2543, %v2583
        %v2585 = vpop.f32.mrf.mxu0
        %v2586 = vpop.f32.mrf.mxu0
        %2587 = vdwg.mxu0
        %2588 = vmatprep.subr.bf16.mxu0 %v1989
        %2589 = vmatpush1.bf16.msra.mxu0 %v1988
        %2590 = vmatprep.subr.bf16.mxu0 %v1985
        %2591 = vmatpush1.bf16.msra.mxu0 %v1984
        %2592 = vmatprep.subr.bf16.mxu0 %v1981
        %2593 = vmatpush1.bf16.msra.mxu0 %v1980
        %2594 = vmatprep.subr.bf16.mxu0 %v1977
        %2595 = vmatpush1.bf16.msra.mxu0 %v1976
        %2596 = vmatprep.subr.bf16.mxu0 %v1973
        %2597 = vmatpush1.bf16.msra.mxu0 %v1972
        %2598 = vmatprep.subr.bf16.mxu0 %v1969
        %2599 = vmatpush1.bf16.msra.mxu0 %v1968
        %2600 = vmatprep.subr.bf16.mxu0 %v1965
        %2601 = vmatpush1.bf16.msra.mxu0 %v1964
        %2602 = vmatprep.subr.bf16.mxu0 %v1961
        %2603 = vmatpush1.bf16.msra.mxu0 %v1960
        %2604 = vmatprep.subr.bf16.mxu0 %v2021
        %2605 = vmatpush2.bf16.msra.mxu0 %v2020
        %2606 = vmatprep.subr.bf16.mxu0 %v2017
        %2607 = vmatpush2.bf16.msra.mxu0 %v2016
        %2608 = vmatprep.subr.bf16.mxu0 %v2013
        %2609 = vmatpush2.bf16.msra.mxu0 %v2012
        %2610 = vmatprep.subr.bf16.mxu0 %v2009
        %2611 = vmatpush2.bf16.msra.mxu0 %v2008
        %2612 = vmatprep.subr.bf16.mxu0 %v2005
        %2613 = vmatpush2.bf16.msra.mxu0 %v2004
        %2614 = vmatprep.subr.bf16.mxu0 %v2001
        %2615 = vmatpush2.bf16.msra.mxu0 %v2000
        %2616 = vmatprep.subr.bf16.mxu0 %v1997
        %2617 = vmatpush2.bf16.msra.mxu0 %v1996
        %2618 = vmatprep.subr.bf16.mxu0 %v1993
        %2619 = vmatpush2.bf16.msra.mxu0 %v1992
        %2620 = vmatprep.mubr.bf16.mxu0 %v1051
        %2621 = vmatmul.mubr.bf16.gmra.mxu0 %v1050
        %v2622 = vpop.f32.mrf.mxu0
        %v2623 = vadd.f32 %v2582, %v2622
        %v2624 = vpop.f32.mrf.mxu0
        %v2625 = vadd.f32 %v2584, %v2624
        %v2626 = vpop.f32.mrf.mxu0
        %v2627 = vpop.f32.mrf.mxu0
        %2628 = vdwg.mxu0
        %2629 = vmatprep.subr.bf16.mxu0 %v2053
        %2630 = vmatpush1.bf16.msra.mxu0 %v2052
        %2631 = vmatprep.subr.bf16.mxu0 %v2049
        %2632 = vmatpush1.bf16.msra.mxu0 %v2048
        %2633 = vmatprep.subr.bf16.mxu0 %v2045
        %2634 = vmatpush1.bf16.msra.mxu0 %v2044
        %2635 = vmatprep.subr.bf16.mxu0 %v2041
        %2636 = vmatpush1.bf16.msra.mxu0 %v2040
        %2637 = vmatprep.subr.bf16.mxu0 %v2037
        %2638 = vmatpush1.bf16.msra.mxu0 %v2036
        %2639 = vmatprep.subr.bf16.mxu0 %v2033
        %2640 = vmatpush1.bf16.msra.mxu0 %v2032
        %2641 = vmatprep.subr.bf16.mxu0 %v2029
        %2642 = vmatpush1.bf16.msra.mxu0 %v2028
        %2643 = vmatprep.subr.bf16.mxu0 %v2025
        %2644 = vmatpush1.bf16.msra.mxu0 %v2024
        %2645 = vmatprep.subr.bf16.mxu0 %v2085
        %2646 = vmatpush2.bf16.msra.mxu0 %v2084
        %2647 = vmatprep.subr.bf16.mxu0 %v2081
        %2648 = vmatpush2.bf16.msra.mxu0 %v2080
        %2649 = vmatprep.subr.bf16.mxu0 %v2077
        %2650 = vmatpush2.bf16.msra.mxu0 %v2076
        %2651 = vmatprep.subr.bf16.mxu0 %v2073
        %2652 = vmatpush2.bf16.msra.mxu0 %v2072
        %2653 = vmatprep.subr.bf16.mxu0 %v2069
        %2654 = vmatpush2.bf16.msra.mxu0 %v2068
        %2655 = vmatprep.subr.bf16.mxu0 %v2065
        %2656 = vmatpush2.bf16.msra.mxu0 %v2064
        %2657 = vmatprep.subr.bf16.mxu0 %v2061
        %2658 = vmatpush2.bf16.msra.mxu0 %v2060
        %2659 = vmatprep.subr.bf16.mxu0 %v2057
        %2660 = vmatpush2.bf16.msra.mxu0 %v2056
        %2661 = vmatprep.mubr.bf16.mxu0 %v1053
        %2662 = vmatmul.mubr.bf16.gmra.mxu0 %v1052
        %v2663 = vpop.f32.mrf.mxu0
        %v2664 = vadd.f32 %v2623, %v2663
        %v2665 = vpop.f32.mrf.mxu0
        %v2666 = vadd.f32 %v2625, %v2665
        %v2667 = vpop.f32.mrf.mxu0
        %v2668 = vpop.f32.mrf.mxu0
        %2669 = vdwg.mxu0
        %v2670 = vadd.f32 %v770, %v2500
        %v2671 = vadd.f32 %v771, %v2502
        %v2672 = vadd.f32 %v772, %v2664
        %v2673 = vadd.f32 %v773, %v2666
        %2674 = vst [vmem:[#allocation2] sm:$0xff] %v2670
        %2675 = vst [vmem:[#allocation2 + $0x8] sm:$0xff] %v2671
        %2676 = vst [vmem:[#allocation2 + $0x10] sm:$0xff] %v2672
        %2677 = vst [vmem:[#allocation2 + $0x18] sm:$0xff] %v2673
        %p2678 = scmp.eq.s32.totalorder %s19, 3
        // Predicated region
        $region60: #{discriminator_forward.5} parent=50 // pred_check
          %p2679 = pneg %p2678
        $region61: #{discriminator_forward.5} parent=50 // pred_check_branch
          %2681 = sbr.rel (%p2679) target = $region63
        $region62: #{discriminator_forward.5} parent=50 // pred_region
          %v2682 = vld [vmem:[#allocation2] sm:$0xff]
          %v2683 = vld [vmem:[#allocation2 + $0x8] sm:$0xff]
          %v2684 = vld [vmem:[#allocation2 + $0x10] sm:$0xff]
          %v2685 = vld [vmem:[#allocation2 + $0x18] sm:$0xff]
          %v2686 = vld [vmem:[%s754] sm:$0xf]
          %v2688 = vlaneseq
          %v2689 = vshrl.u32 %v2688, 7
          %v2690 = vsub.s32 0, %v2689
          %v2691 = vrot.slane %v2686, %v2690
          %v2692 = vlaneseq
          %v2693 = vshrl.u32 %v2692, 7
          %v2694 = vsub.s32 1, %v2693
          %v2695 = vrot.slane %v2686, %v2694
          %v2696 = vlaneseq
          %v2697 = vshrl.u32 %v2696, 7
          %v2698 = vsub.s32 2, %v2697
          %v2699 = vrot.slane %v2686, %v2698
          %v2700 = vlaneseq
          %v2701 = vshrl.u32 %v2700, 7
          %v2702 = vsub.s32 3, %v2701
          %v2703 = vrot.slane %v2686, %v2702
          %v2708 = vadd.f32 %v2682, %v2691
          %v2709 = vadd.f32 %v2683, %v2695
          %v2710 = vadd.f32 %v2684, %v2699
          %v2711 = vadd.f32 %v2685, %v2703
          %vm2712 = vcmp.ge.f32.partialorder %v2708, 0.0
          %vm2713 = vcmp.ge.f32.partialorder %v2709, 0.0
          %vm2714 = vcmp.ge.f32.partialorder %v2710, 0.0
          %vm2715 = vcmp.ge.f32.partialorder %v2711, 0.0
          %v2716 = vmul.f32 %v2708, 0.2
          %v2717 = vmul.f32 %v2709, 0.2
          %v2718 = vmul.f32 %v2710, 0.2
          %v2719 = vmul.f32 %v2711, 0.2
          %v2720 = vsel %vm2712, %v2708, %v2716
          %v2721 = vsel %vm2713, %v2709, %v2717
          %v2722 = vsel %vm2714, %v2710, %v2718
          %v2723 = vsel %vm2715, %v2711, %v2719
          %v2724 = vpack.c.bf16 %v2720, %v2720
          %v2725 = vpack.c.bf16 %v2721, %v2721
          %v2726 = vpack.c.bf16 %v2722, %v2722
          %v2727 = vpack.c.bf16 %v2723, %v2723
          %v2732 = vunpack.c.l.b16 %v2724
          %v2733 = vunpack.c.l.b16 %v2725
          %v2734 = vunpack.c.l.b16 %v2726
          %v2735 = vunpack.c.l.b16 %v2727
          %v2736 = vpack.c.b16 %v2733, %v2732
          %v2737 = vpack.c.b16 %v2735, %v2734
          %2740 = vst [vmem:[%s760] sm:$0xff] %v2736
          %2741 = vst [vmem:[%s760 + $0x8] sm:$0xff] %v2737
        $region63: #{discriminator_forward.5} parent=50 // pred_fallthru
          _
        %s2742 = smul.u32 4, %s18
        %p2743 = scmp.lt.s32.totalorder %s2742, 15
        %s2744 = scalar_select %p2743, %s2742, 15
        %s2745 = smul.addr %s2744, 4
        %s2746 = scalar_lea.vmem %s3, %s2745
        // Predicated region
        $region64: #{discriminator_forward.5} parent=50 // pred_check
          %p2747 = pneg %p124
        $region65: #{discriminator_forward.5} parent=50 // pred_check_branch
          %2749 = sbr.rel (%p2747) target = $region67
        $region66: #{discriminator_forward.5} parent=50 // pred_region
          %s2750 = smul.u32 4, %s18
        $region67: #{discriminator_forward.5} parent=50 // pred_fallthru
          _
      $region51: #{discriminator_forward.5} parent=5 // pred_fallthru
        _
      %p2751 = scmp.le.s32.totalorder 2, %s9
      // Predicated region
      $region68: #{discriminator_forward.5} parent=5 // pred_check
        %p2752 = pneg %p2751
      $region69: #{discriminator_forward.5} parent=5 // pred_check_branch
        %2754 = sbr.rel (%p2752) target = $region71
      $region70: #{discriminator_forward.5} parent=5 // pred_region
        %s2755 = ssub.s32 %s9, 2
        // Predicated region
        $region72: #{discriminator_forward.5} parent=70 // pred_check
          %p2756 = pneg %p130
        $region73: #{discriminator_forward.5} parent=70 // pred_check_branch
          %2758 = sbr.rel (%p2756) target = $region75
        $region74: #{discriminator_forward.5} parent=70 // pred_region
          %s2759 = smul.u32 4, %s20
          %p2760 = scmp.lt.s32.totalorder %s2759, 15
          %s2761 = scalar_select %p2760, %s2759, 15
          %s2762 = smul.addr %s2761, 4
          %s2763 = scalar_lea.vmem %s3, %s2762
        $region75: #{discriminator_forward.5} parent=70 // pred_fallthru
          _
      $region71: #{discriminator_forward.5} parent=5 // pred_fallthru
        _
    $region6: #{discriminator_forward.5} parent=1 // loop_footer
      %s13 = sadd.s32 1, %s9
    $region7: #{discriminator_forward.5} parent=1 // loop_footer_branch
      %8 = sbr.rel target = $region3
    $region8: #{discriminator_forward.5} parent=1 // loop_exit
      _

// kernel: discriminator_forward.6
$region0: #{discriminator_forward.6}
  #allocation0 [shape = 'u32[]', space=smem, size = 0x4, offset = 0x4, fixed_abs, tag = 'smem constant byte address 0x4 - core index']
  #allocation1 [shape = 'u32[144,128]{1,0:T(1,128)}', space=vmem, size = 0x12000, scoped, tag = 'internal scratch']
  #allocation2 [shape = 'f32[8,512]{1,0:T(8,128)}', space=vmem, size = 0x4000, scoped, tag = 'scratch operand']
  %s0 = inlined_call_operand.vmem [shape: bf16[8,2048], index: 0, kind: input, shape index: {}]
  %s1 = inlined_call_operand.vmem [shape: bf16[2048,1024], index: 1, kind: input, shape index: {}]
  %s2 = inlined_call_operand.vmem [shape: f32[1,1024], index: 2, kind: input, shape index: {}]
  %s3 = inlined_call_operand.vmem [shape: bf16[8,1024], index: 3, kind: output, shape index: {}]
  %s4 = sld [smem:[#allocation0]]
  $region76: #{discriminator_forward.6} parent=0
    _
  %s6 = ssub.s32 1, %s4
  %s7 = scalar_select 0, %s6, %s4
  $region1: #{discriminator_forward.6} parent=0
    #allocation3 [shape = 'u8[2097152]{0}', space=vmem, size = 0x200000, scoped, tag = 'input window, operand 1']
    loop: start=0, step=1, limit=6
    $region2: #{discriminator_forward.6} parent=1 // loop_pre_header
      _
    $region3: #{discriminator_forward.6} parent=1 // loop_header
      %s9 = sphi 0, %s13
      %p10 = scmp.ge.s32.totalorder %s9, 6
      %s16 = sphi 0, %s28
      %s17 = sphi 0, %s24
      %s18 = sphi 0, %s16
      %s19 = sphi 0, %s17
      %s20 = sphi 0, %s18
      %s21 = sphi 0, %s19
      %s31 = sphi 0, %s33
      %s34 = sphi 0, %s31
      %s35 = sphi 0, %s34
      %s51 = sphi 0, %s35
      %s59 = sphi 0, %s61
      %s62 = sphi 0, %s59
      %s63 = sphi 0, %s62
      %s79 = sphi 0, %s63
      %s85 = sphi 0, %s87
      %s88 = sphi 0, %s85
      %s89 = sphi 0, %s88
      %s105 = sphi 0, %s89
      %s111 = sphi 0, %s113
      %s114 = sphi 0, %s111
      %s115 = sphi 0, %s114
      %s131 = sphi 0, %s115
    $region4: #{discriminator_forward.6} parent=1 // loop_header_branch
      %12 = sbr.rel (%p10) target = $region8
    $region5: #{discriminator_forward.6} parent=1 // loop_body
      %s14 = ssub.s32 %s9, 1
      %s15 = ssub.s32 %s9, 2
      %s22 = sadd.s32 1, %s17
      %p23 = scmp.ge.s32.totalorder %s22, 2
      %s24 = scalar_select %p23, 0, %s22
      %s25 = sadd.s32 1, %s16
      %s26 = scalar_select %p23, %s25, %s16
      %p27 = scmp.ge.s32.totalorder %s26, 2
      %s28 = scalar_select %p27, 0, %s26
      %s29 = ssub.s32 %s17, %s24
      %p30 = scmp.eq.s32.totalorder %s29, 0
      %s32 = sadd.s32 %s31, 1
      %s33 = scalar_select %p30, %s31, %s32
      %p36 = pneg %p30
      %p37 = scmp.eq.s32.totalorder %s9, 3
      %p38 = por %p36, %p37
      %p39 = scmp.ne.s32.totalorder %s31, %s34
      %p40 = scmp.eq.s32.totalorder %s9, 0
      %p41 = por %p39, %p40
      %p42 = scmp.ne.s32.totalorder %s31, %s34
      %p43 = scmp.eq.s32.totalorder %s14, 3
      %p44 = por %p42, %p43
      %p45 = scmp.ne.s32.totalorder %s34, %s35
      %p46 = scmp.eq.s32.totalorder %s14, 0
      %p47 = por %p45, %p46
      %p48 = scmp.ne.s32.totalorder %s34, %s35
      %p49 = scmp.eq.s32.totalorder %s15, 3
      %p50 = por %p48, %p49
      %p52 = scmp.ne.s32.totalorder %s35, %s51
      %p53 = scmp.eq.s32.totalorder %s15, 0
      %p54 = por %p52, %p53
      %s55 = ssub.s32 %s17, %s24
      %s56 = ssub.s32 %s16, %s28
      %s57 = sor.u32 %s55, %s56
      %p58 = scmp.eq.s32.totalorder %s57, 0
      %s60 = sadd.s32 %s59, 1
      %s61 = scalar_select %p58, %s59, %s60
      %p64 = pneg %p58
      %p65 = scmp.eq.s32.totalorder %s9, 3
      %p66 = por %p64, %p65
      %p67 = scmp.ne.s32.totalorder %s59, %s62
      %p68 = scmp.eq.s32.totalorder %s9, 0
      %p69 = por %p67, %p68
      %p70 = scmp.ne.s32.totalorder %s59, %s62
      %p71 = scmp.eq.s32.totalorder %s14, 3
      %p72 = por %p70, %p71
      %p73 = scmp.ne.s32.totalorder %s62, %s63
      %p74 = scmp.eq.s32.totalorder %s14, 0
      %p75 = por %p73, %p74
      %p76 = scmp.ne.s32.totalorder %s62, %s63
      %p77 = scmp.eq.s32.totalorder %s15, 3
      %p78 = por %p76, %p77
      %p80 = scmp.ne.s32.totalorder %s63, %s79
      %p81 = scmp.eq.s32.totalorder %s15, 0
      %p82 = por %p80, %p81
      %s83 = ssub.s32 %s16, %s28
      %p84 = scmp.eq.s32.totalorder %s83, 0
      %s86 = sadd.s32 %s85, 1
      %s87 = scalar_select %p84, %s85, %s86
      %p90 = pneg %p84
      %p91 = scmp.eq.s32.totalorder %s9, 3
      %p92 = por %p90, %p91
      %p93 = scmp.ne.s32.totalorder %s85, %s88
      %p94 = scmp.eq.s32.totalorder %s9, 0
      %p95 = por %p93, %p94
      %p96 = scmp.ne.s32.totalorder %s85, %s88
      %p97 = scmp.eq.s32.totalorder %s14, 3
      %p98 = por %p96, %p97
      %p99 = scmp.ne.s32.totalorder %s88, %s89
      %p100 = scmp.eq.s32.totalorder %s14, 0
      %p101 = por %p99, %p100
      %p102 = scmp.ne.s32.totalorder %s88, %s89
      %p103 = scmp.eq.s32.totalorder %s15, 3
      %p104 = por %p102, %p103
      %p106 = scmp.ne.s32.totalorder %s89, %s105
      %p107 = scmp.eq.s32.totalorder %s15, 0
      %p108 = por %p106, %p107
      %s109 = ssub.s32 %s16, %s28
      %p110 = scmp.eq.s32.totalorder %s109, 0
      %s112 = sadd.s32 %s111, 1
      %s113 = scalar_select %p110, %s111, %s112
      %p116 = pneg %p110
      %p117 = scmp.eq.s32.totalorder %s9, 3
      %p118 = por %p116, %p117
      %p119 = scmp.ne.s32.totalorder %s111, %s114
      %p120 = scmp.eq.s32.totalorder %s9, 0
      %p121 = por %p119, %p120
      %p122 = scmp.ne.s32.totalorder %s111, %s114
      %p123 = scmp.eq.s32.totalorder %s14, 3
      %p124 = por %p122, %p123
      %p125 = scmp.ne.s32.totalorder %s114, %s115
      %p126 = scmp.eq.s32.totalorder %s14, 0
      %p127 = por %p125, %p126
      %p128 = scmp.ne.s32.totalorder %s114, %s115
      %p129 = scmp.eq.s32.totalorder %s15, 3
      %p130 = por %p128, %p129
      %p132 = scmp.ne.s32.totalorder %s115, %s131
      %p133 = scmp.eq.s32.totalorder %s15, 0
      %p134 = por %p132, %p133
      %p135 = scmp.le.s32.totalorder 1, %s9
      %p136 = scmp.lt.s32.totalorder %s9, 5
      %p137 = pnand %p135, %p136
      %p138 = pneg %p137
      // Predicated region
      $region9: #{discriminator_forward.6} parent=5 // pred_check
        _
      $region10: #{discriminator_forward.6} parent=5 // pred_check_branch
        %140 = sbr.rel (%p137) target = $region12
      $region11: #{discriminator_forward.6} parent=5 // pred_region
        %s141 = ssub.s32 %s9, 1
      $region12: #{discriminator_forward.6} parent=5 // pred_fallthru
        _
      %p142 = scmp.lt.s32.totalorder %s9, 4
      // Predicated region
      $region13: #{discriminator_forward.6} parent=5 // pred_check
        %p143 = pneg %p142
      $region14: #{discriminator_forward.6} parent=5 // pred_check_branch
        %145 = sbr.rel (%p143) target = $region16
      $region15: #{discriminator_forward.6} parent=5 // pred_region
        // Predicated region
        $region17: #{discriminator_forward.6} parent=15 // pred_check
          %p146 = pneg %p41
        $region18: #{discriminator_forward.6} parent=15 // pred_check_branch
          %148 = sbr.rel (%p146) target = $region20
        $region19: #{discriminator_forward.6} parent=15 // pred_region
          %s149 = smul.u32 8, %s17
          %p150 = scmp.lt.s32.totalorder %s149, 15
          %s151 = scalar_select %p150, %s149, 15
          %s152 = smul.addr %s151, 4
          %s153 = scalar_lea.vmem %s0, %s152
          %s154 = smul.u32 8, %s17
        $region20: #{discriminator_forward.6} parent=15 // pred_fallthru
          _
        // Predicated region
        $region21: #{discriminator_forward.6} parent=15 // pred_check
          %p155 = pneg %p69
        $region22: #{discriminator_forward.6} parent=15 // pred_check_branch
          %157 = sbr.rel (%p155) target = $region24
        $region23: #{discriminator_forward.6} parent=15 // pred_region
          %s158 = sand.u32 %s59, 1
          %s159 = sand.u32 %s59, 1
          %s160 = smul.addr %s159, 2048
          %s161 = scalar_lea.vmem [#allocation3], %s160
          %s162 = smul.u32 128, %s17
          %s163 = smul.u32 4, %s16
          %s164 = smul.addr %s162, 8
          %s165 = sadd.s32 %s163, %s164
          %s166 = smul.addr %s165, 4
          %s167 = scalar_lea.vmem %s1, %s166
          // Predicated region
          $region25: #{discriminator_forward.6} parent=23 // pred_check
            _
          $region26: #{discriminator_forward.6} parent=23 // pred_check_branch
            %169 = sbr.rel (0) target = $region28
          $region27: #{discriminator_forward.6} parent=23 // pred_region
            // Predicated region
            $region29: #{discriminator_forward.6} parent=27 // pred_check
              _
            $region30: #{discriminator_forward.6} parent=27 // pred_check_branch
              %171 = sbr.rel (0) target = $region32
            $region31: #{discriminator_forward.6} parent=27 // pred_region
              loop: start=0, step=1, limit=1
              $region33: #{discriminator_forward.6} parent=31 // loop_pre_header
                _
              $region34: #{discriminator_forward.6} parent=31 // loop_header
                %s173 = sphi 0, %s177
                %p174 = scmp.ge.s32.totalorder %s173, 1
                %s178 = sphi %s167, %s167
                %s179 = sphi %s161, %s161
              $region35: #{discriminator_forward.6} parent=31 // loop_header_branch
                %176 = sbr.rel (%p174) target = $region39
              $region36: #{discriminator_forward.6} parent=31 // loop_body
                %v180 = vld [vmem:[%s178] sm:$0xff]
                %181 = vst [vmem:[%s179] sm:$0xff] %v180
                %v182 = vld [vmem:[%s178 + $0x8] sm:$0xff]
                %183 = vst [vmem:[%s179 + $0x8] sm:$0xff] %v182
                %v184 = vld [vmem:[%s178 + $0x20] sm:$0xff]
                %185 = vst [vmem:[%s179 + $0x10] sm:$0xff] %v184
                %v186 = vld [vmem:[%s178 + $0x28] sm:$0xff]
                %187 = vst [vmem:[%s179 + $0x18] sm:$0xff] %v186
                %v188 = vld [vmem:[%s178 + $0x40] sm:$0xff]
                %189 = vst [vmem:[%s179 + $0x20] sm:$0xff] %v188
                %v190 = vld [vmem:[%s178 + $0x48] sm:$0xff]
                %191 = vst [vmem:[%s179 + $0x28] sm:$0xff] %v190
                %v192 = vld [vmem:[%s178 + $0x60] sm:$0xff]
                %193 = vst [vmem:[%s179 + $0x30] sm:$0xff] %v192
                %v194 = vld [vmem:[%s178 + $0x68] sm:$0xff]
                %195 = vst [vmem:[%s179 + $0x38] sm:$0xff] %v194
                %v196 = vld [vmem:[%s178 + $0x80] sm:$0xff]
                %197 = vst [vmem:[%s179 + $0x40] sm:$0xff] %v196
                %v198 = vld [vmem:[%s178 + $0x88] sm:$0xff]
                %199 = vst [vmem:[%s179 + $0x48] sm:$0xff] %v198
                %v200 = vld [vmem:[%s178 + $0xa0] sm:$0xff]
                %201 = vst [vmem:[%s179 + $0x50] sm:$0xff] %v200
                %v202 = vld [vmem:[%s178 + $0xa8] sm:$0xff]
                %203 = vst [vmem:[%s179 + $0x58] sm:$0xff] %v202
                %v204 = vld [vmem:[%s178 + $0xc0] sm:$0xff]
                %205 = vst [vmem:[%s179 + $0x60] sm:$0xff] %v204
                %v206 = vld [vmem:[%s178 + $0xc8] sm:$0xff]
                %207 = vst [vmem:[%s179 + $0x68] sm:$0xff] %v206
                %v208 = vld [vmem:[%s178 + $0xe0] sm:$0xff]
                %209 = vst [vmem:[%s179 + $0x70] sm:$0xff] %v208
                %v210 = vld [vmem:[%s178 + $0xe8] sm:$0xff]
                %211 = vst [vmem:[%s179 + $0x78] sm:$0xff] %v210
                %v212 = vld [vmem:[%s178 + $0x100] sm:$0xff]
                %213 = vst [vmem:[%s179 + $0x80] sm:$0xff] %v212
                %v214 = vld [vmem:[%s178 + $0x108] sm:$0xff]
                %215 = vst [vmem:[%s179 + $0x88] sm:$0xff] %v214
                %v216 = vld [vmem:[%s178 + $0x120] sm:$0xff]
                %217 = vst [vmem:[%s179 + $0x90] sm:$0xff] %v216
                %v218 = vld [vmem:[%s178 + $0x128] sm:$0xff]
                %219 = vst [vmem:[%s179 + $0x98] sm:$0xff] %v218
                %v220 = vld [vmem:[%s178 + $0x140] sm:$0xff]
                %221 = vst [vmem:[%s179 + $0xa0] sm:$0xff] %v220
                %v222 = vld [vmem:[%s178 + $0x148] sm:$0xff]
                %223 = vst [vmem:[%s179 + $0xa8] sm:$0xff] %v222
                %v224 = vld [vmem:[%s178 + $0x160] sm:$0xff]
                %225 = vst [vmem:[%s179 + $0xb0] sm:$0xff] %v224
                %v226 = vld [vmem:[%s178 + $0x168] sm:$0xff]
                %227 = vst [vmem:[%s179 + $0xb8] sm:$0xff] %v226
                %v228 = vld [vmem:[%s178 + $0x180] sm:$0xff]
                %229 = vst [vmem:[%s179 + $0xc0] sm:$0xff] %v228
                %v230 = vld [vmem:[%s178 + $0x188] sm:$0xff]
                %231 = vst [vmem:[%s179 + $0xc8] sm:$0xff] %v230
                %v232 = vld [vmem:[%s178 + $0x1a0] sm:$0xff]
                %233 = vst [vmem:[%s179 + $0xd0] sm:$0xff] %v232
                %v234 = vld [vmem:[%s178 + $0x1a8] sm:$0xff]
                %235 = vst [vmem:[%s179 + $0xd8] sm:$0xff] %v234
                %v236 = vld [vmem:[%s178 + $0x1c0] sm:$0xff]
                %237 = vst [vmem:[%s179 + $0xe0] sm:$0xff] %v236
                %v238 = vld [vmem:[%s178 + $0x1c8] sm:$0xff]
                %239 = vst [vmem:[%s179 + $0xe8] sm:$0xff] %v238
                %v240 = vld [vmem:[%s178 + $0x1e0] sm:$0xff]
                %241 = vst [vmem:[%s179 + $0xf0] sm:$0xff] %v240
                %v242 = vld [vmem:[%s178 + $0x1e8] sm:$0xff]
                %243 = vst [vmem:[%s179 + $0xf8] sm:$0xff] %v242
                %v244 = vld [vmem:[%s178 + $0x200] sm:$0xff]
                %245 = vst [vmem:[%s179 + $0x100] sm:$0xff] %v244
                %v246 = vld [vmem:[%s178 + $0x208] sm:$0xff]
                %247 = vst [vmem:[%s179 + $0x108] sm:$0xff] %v246
                %v248 = vld [vmem:[%s178 + $0x220] sm:$0xff]
                %249 = vst [vmem:[%s179 + $0x110] sm:$0xff] %v248
                %v250 = vld [vmem:[%s178 + $0x228] sm:$0xff]
                %251 = vst [vmem:[%s179 + $0x118] sm:$0xff] %v250
                %v252 = vld [vmem:[%s178 + $0x240] sm:$0xff]
                %253 = vst [vmem:[%s179 + $0x120] sm:$0xff] %v252
                %v254 = vld [vmem:[%s178 + $0x248] sm:$0xff]
                %255 = vst [vmem:[%s179 + $0x128] sm:$0xff] %v254
                %v256 = vld [vmem:[%s178 + $0x260] sm:$0xff]
                %257 = vst [vmem:[%s179 + $0x130] sm:$0xff] %v256
                %v258 = vld [vmem:[%s178 + $0x268] sm:$0xff]
                %259 = vst [vmem:[%s179 + $0x138] sm:$0xff] %v258
                %v260 = vld [vmem:[%s178 + $0x280] sm:$0xff]
                %261 = vst [vmem:[%s179 + $0x140] sm:$0xff] %v260
                %v262 = vld [vmem:[%s178 + $0x288] sm:$0xff]
                %263 = vst [vmem:[%s179 + $0x148] sm:$0xff] %v262
                %v264 = vld [vmem:[%s178 + $0x2a0] sm:$0xff]
                %265 = vst [vmem:[%s179 + $0x150] sm:$0xff] %v264
                %v266 = vld [vmem:[%s178 + $0x2a8] sm:$0xff]
                %267 = vst [vmem:[%s179 + $0x158] sm:$0xff] %v266
                %v268 = vld [vmem:[%s178 + $0x2c0] sm:$0xff]
                %269 = vst [vmem:[%s179 + $0x160] sm:$0xff] %v268
                %v270 = vld [vmem:[%s178 + $0x2c8] sm:$0xff]
                %271 = vst [vmem:[%s179 + $0x168] sm:$0xff] %v270
                %v272 = vld [vmem:[%s178 + $0x2e0] sm:$0xff]
                %273 = vst [vmem:[%s179 + $0x170] sm:$0xff] %v272
                %v274 = vld [vmem:[%s178 + $0x2e8] sm:$0xff]
                %275 = vst [vmem:[%s179 + $0x178] sm:$0xff] %v274
                %v276 = vld [vmem:[%s178 + $0x300] sm:$0xff]
                %277 = vst [vmem:[%s179 + $0x180] sm:$0xff] %v276
                %v278 = vld [vmem:[%s178 + $0x308] sm:$0xff]
                %279 = vst [vmem:[%s179 + $0x188] sm:$0xff] %v278
                %v280 = vld [vmem:[%s178 + $0x320] sm:$0xff]
                %281 = vst [vmem:[%s179 + $0x190] sm:$0xff] %v280
                %v282 = vld [vmem:[%s178 + $0x328] sm:$0xff]
                %283 = vst [vmem:[%s179 + $0x198] sm:$0xff] %v282
                %v284 = vld [vmem:[%s178 + $0x340] sm:$0xff]
                %285 = vst [vmem:[%s179 + $0x1a0] sm:$0xff] %v284
                %v286 = vld [vmem:[%s178 + $0x348] sm:$0xff]
                %287 = vst [vmem:[%s179 + $0x1a8] sm:$0xff] %v286
                %v288 = vld [vmem:[%s178 + $0x360] sm:$0xff]
                %289 = vst [vmem:[%s179 + $0x1b0] sm:$0xff] %v288
                %v290 = vld [vmem:[%s178 + $0x368] sm:$0xff]
                %291 = vst [vmem:[%s179 + $0x1b8] sm:$0xff] %v290
                %v292 = vld [vmem:[%s178 + $0x380] sm:$0xff]
                %293 = vst [vmem:[%s179 + $0x1c0] sm:$0xff] %v292
                %v294 = vld [vmem:[%s178 + $0x388] sm:$0xff]
                %295 = vst [vmem:[%s179 + $0x1c8] sm:$0xff] %v294
                %v296 = vld [vmem:[%s178 + $0x3a0] sm:$0xff]
                %297 = vst [vmem:[%s179 + $0x1d0] sm:$0xff] %v296
                %v298 = vld [vmem:[%s178 + $0x3a8] sm:$0xff]
                %299 = vst [vmem:[%s179 + $0x1d8] sm:$0xff] %v298
                %v300 = vld [vmem:[%s178 + $0x3c0] sm:$0xff]
                %301 = vst [vmem:[%s179 + $0x1e0] sm:$0xff] %v300
                %v302 = vld [vmem:[%s178 + $0x3c8] sm:$0xff]
                %303 = vst [vmem:[%s179 + $0x1e8] sm:$0xff] %v302
                %v304 = vld [vmem:[%s178 + $0x3e0] sm:$0xff]
                %305 = vst [vmem:[%s179 + $0x1f0] sm:$0xff] %v304
                %v306 = vld [vmem:[%s178 + $0x3e8] sm:$0xff]
                %307 = vst [vmem:[%s179 + $0x1f8] sm:$0xff] %v306
                %v308 = vld [vmem:[%s178 + $0x400] sm:$0xff]
                %309 = vst [vmem:[%s179 + $0x200] sm:$0xff] %v308
                %v310 = vld [vmem:[%s178 + $0x408] sm:$0xff]
                %311 = vst [vmem:[%s179 + $0x208] sm:$0xff] %v310
                %v312 = vld [vmem:[%s178 + $0x420] sm:$0xff]
                %313 = vst [vmem:[%s179 + $0x210] sm:$0xff] %v312
                %v314 = vld [vmem:[%s178 + $0x428] sm:$0xff]
                %315 = vst [vmem:[%s179 + $0x218] sm:$0xff] %v314
                %v316 = vld [vmem:[%s178 + $0x440] sm:$0xff]
                %317 = vst [vmem:[%s179 + $0x220] sm:$0xff] %v316
                %v318 = vld [vmem:[%s178 + $0x448] sm:$0xff]
                %319 = vst [vmem:[%s179 + $0x228] sm:$0xff] %v318
                %v320 = vld [vmem:[%s178 + $0x460] sm:$0xff]
                %321 = vst [vmem:[%s179 + $0x230] sm:$0xff] %v320
                %v322 = vld [vmem:[%s178 + $0x468] sm:$0xff]
                %323 = vst [vmem:[%s179 + $0x238] sm:$0xff] %v322
                %v324 = vld [vmem:[%s178 + $0x480] sm:$0xff]
                %325 = vst [vmem:[%s179 + $0x240] sm:$0xff] %v324
                %v326 = vld [vmem:[%s178 + $0x488] sm:$0xff]
                %327 = vst [vmem:[%s179 + $0x248] sm:$0xff] %v326
                %v328 = vld [vmem:[%s178 + $0x4a0] sm:$0xff]
                %329 = vst [vmem:[%s179 + $0x250] sm:$0xff] %v328
                %v330 = vld [vmem:[%s178 + $0x4a8] sm:$0xff]
                %331 = vst [vmem:[%s179 + $0x258] sm:$0xff] %v330
                %v332 = vld [vmem:[%s178 + $0x4c0] sm:$0xff]
                %333 = vst [vmem:[%s179 + $0x260] sm:$0xff] %v332
                %v334 = vld [vmem:[%s178 + $0x4c8] sm:$0xff]
                %335 = vst [vmem:[%s179 + $0x268] sm:$0xff] %v334
                %v336 = vld [vmem:[%s178 + $0x4e0] sm:$0xff]
                %337 = vst [vmem:[%s179 + $0x270] sm:$0xff] %v336
                %v338 = vld [vmem:[%s178 + $0x4e8] sm:$0xff]
                %339 = vst [vmem:[%s179 + $0x278] sm:$0xff] %v338
                %v340 = vld [vmem:[%s178 + $0x500] sm:$0xff]
                %341 = vst [vmem:[%s179 + $0x280] sm:$0xff] %v340
                %v342 = vld [vmem:[%s178 + $0x508] sm:$0xff]
                %343 = vst [vmem:[%s179 + $0x288] sm:$0xff] %v342
                %v344 = vld [vmem:[%s178 + $0x520] sm:$0xff]
                %345 = vst [vmem:[%s179 + $0x290] sm:$0xff] %v344
                %v346 = vld [vmem:[%s178 + $0x528] sm:$0xff]
                %347 = vst [vmem:[%s179 + $0x298] sm:$0xff] %v346
                %v348 = vld [vmem:[%s178 + $0x540] sm:$0xff]
                %349 = vst [vmem:[%s179 + $0x2a0] sm:$0xff] %v348
                %v350 = vld [vmem:[%s178 + $0x548] sm:$0xff]
                %351 = vst [vmem:[%s179 + $0x2a8] sm:$0xff] %v350
                %v352 = vld [vmem:[%s178 + $0x560] sm:$0xff]
                %353 = vst [vmem:[%s179 + $0x2b0] sm:$0xff] %v352
                %v354 = vld [vmem:[%s178 + $0x568] sm:$0xff]
                %355 = vst [vmem:[%s179 + $0x2b8] sm:$0xff] %v354
                %v356 = vld [vmem:[%s178 + $0x580] sm:$0xff]
                %357 = vst [vmem:[%s179 + $0x2c0] sm:$0xff] %v356
                %v358 = vld [vmem:[%s178 + $0x588] sm:$0xff]
                %359 = vst [vmem:[%s179 + $0x2c8] sm:$0xff] %v358
                %v360 = vld [vmem:[%s178 + $0x5a0] sm:$0xff]
                %361 = vst [vmem:[%s179 + $0x2d0] sm:$0xff] %v360
                %v362 = vld [vmem:[%s178 + $0x5a8] sm:$0xff]
                %363 = vst [vmem:[%s179 + $0x2d8] sm:$0xff] %v362
                %v364 = vld [vmem:[%s178 + $0x5c0] sm:$0xff]
                %365 = vst [vmem:[%s179 + $0x2e0] sm:$0xff] %v364
                %v366 = vld [vmem:[%s178 + $0x5c8] sm:$0xff]
                %367 = vst [vmem:[%s179 + $0x2e8] sm:$0xff] %v366
                %v368 = vld [vmem:[%s178 + $0x5e0] sm:$0xff]
                %369 = vst [vmem:[%s179 + $0x2f0] sm:$0xff] %v368
                %v370 = vld [vmem:[%s178 + $0x5e8] sm:$0xff]
                %371 = vst [vmem:[%s179 + $0x2f8] sm:$0xff] %v370
                %v372 = vld [vmem:[%s178 + $0x600] sm:$0xff]
                %373 = vst [vmem:[%s179 + $0x300] sm:$0xff] %v372
                %v374 = vld [vmem:[%s178 + $0x608] sm:$0xff]
                %375 = vst [vmem:[%s179 + $0x308] sm:$0xff] %v374
                %v376 = vld [vmem:[%s178 + $0x620] sm:$0xff]
                %377 = vst [vmem:[%s179 + $0x310] sm:$0xff] %v376
                %v378 = vld [vmem:[%s178 + $0x628] sm:$0xff]
                %379 = vst [vmem:[%s179 + $0x318] sm:$0xff] %v378
                %v380 = vld [vmem:[%s178 + $0x640] sm:$0xff]
                %381 = vst [vmem:[%s179 + $0x320] sm:$0xff] %v380
                %v382 = vld [vmem:[%s178 + $0x648] sm:$0xff]
                %383 = vst [vmem:[%s179 + $0x328] sm:$0xff] %v382
                %v384 = vld [vmem:[%s178 + $0x660] sm:$0xff]
                %385 = vst [vmem:[%s179 + $0x330] sm:$0xff] %v384
                %v386 = vld [vmem:[%s178 + $0x668] sm:$0xff]
                %387 = vst [vmem:[%s179 + $0x338] sm:$0xff] %v386
                %v388 = vld [vmem:[%s178 + $0x680] sm:$0xff]
                %389 = vst [vmem:[%s179 + $0x340] sm:$0xff] %v388
                %v390 = vld [vmem:[%s178 + $0x688] sm:$0xff]
                %391 = vst [vmem:[%s179 + $0x348] sm:$0xff] %v390
                %v392 = vld [vmem:[%s178 + $0x6a0] sm:$0xff]
                %393 = vst [vmem:[%s179 + $0x350] sm:$0xff] %v392
                %v394 = vld [vmem:[%s178 + $0x6a8] sm:$0xff]
                %395 = vst [vmem:[%s179 + $0x358] sm:$0xff] %v394
                %v396 = vld [vmem:[%s178 + $0x6c0] sm:$0xff]
                %397 = vst [vmem:[%s179 + $0x360] sm:$0xff] %v396
                %v398 = vld [vmem:[%s178 + $0x6c8] sm:$0xff]
                %399 = vst [vmem:[%s179 + $0x368] sm:$0xff] %v398
                %v400 = vld [vmem:[%s178 + $0x6e0] sm:$0xff]
                %401 = vst [vmem:[%s179 + $0x370] sm:$0xff] %v400
                %v402 = vld [vmem:[%s178 + $0x6e8] sm:$0xff]
                %403 = vst [vmem:[%s179 + $0x378] sm:$0xff] %v402
                %v404 = vld [vmem:[%s178 + $0x700] sm:$0xff]
                %405 = vst [vmem:[%s179 + $0x380] sm:$0xff] %v404
                %v406 = vld [vmem:[%s178 + $0x708] sm:$0xff]
                %407 = vst [vmem:[%s179 + $0x388] sm:$0xff] %v406
                %v408 = vld [vmem:[%s178 + $0x720] sm:$0xff]
                %409 = vst [vmem:[%s179 + $0x390] sm:$0xff] %v408
                %v410 = vld [vmem:[%s178 + $0x728] sm:$0xff]
                %411 = vst [vmem:[%s179 + $0x398] sm:$0xff] %v410
                %v412 = vld [vmem:[%s178 + $0x740] sm:$0xff]
                %413 = vst [vmem:[%s179 + $0x3a0] sm:$0xff] %v412
                %v414 = vld [vmem:[%s178 + $0x748] sm:$0xff]
                %415 = vst [vmem:[%s179 + $0x3a8] sm:$0xff] %v414
                %v416 = vld [vmem:[%s178 + $0x760] sm:$0xff]
                %417 = vst [vmem:[%s179 + $0x3b0] sm:$0xff] %v416
                %v418 = vld [vmem:[%s178 + $0x768] sm:$0xff]
                %419 = vst [vmem:[%s179 + $0x3b8] sm:$0xff] %v418
                %v420 = vld [vmem:[%s178 + $0x780] sm:$0xff]
                %421 = vst [vmem:[%s179 + $0x3c0] sm:$0xff] %v420
                %v422 = vld [vmem:[%s178 + $0x788] sm:$0xff]
                %423 = vst [vmem:[%s179 + $0x3c8] sm:$0xff] %v422
                %v424 = vld [vmem:[%s178 + $0x7a0] sm:$0xff]
                %425 = vst [vmem:[%s179 + $0x3d0] sm:$0xff] %v424
                %v426 = vld [vmem:[%s178 + $0x7a8] sm:$0xff]
                %427 = vst [vmem:[%s179 + $0x3d8] sm:$0xff] %v426
                %v428 = vld [vmem:[%s178 + $0x7c0] sm:$0xff]
                %429 = vst [vmem:[%s179 + $0x3e0] sm:$0xff] %v428
                %v430 = vld [vmem:[%s178 + $0x7c8] sm:$0xff]
                %431 = vst [vmem:[%s179 + $0x3e8] sm:$0xff] %v430
                %v432 = vld [vmem:[%s178 + $0x7e0] sm:$0xff]
                %433 = vst [vmem:[%s179 + $0x3f0] sm:$0xff] %v432
                %v434 = vld [vmem:[%s178 + $0x7e8] sm:$0xff]
                %435 = vst [vmem:[%s179 + $0x3f8] sm:$0xff] %v434
                %v436 = vld [vmem:[%s178 + $0x800] sm:$0xff]
                %437 = vst [vmem:[%s179 + $0x400] sm:$0xff] %v436
                %v438 = vld [vmem:[%s178 + $0x808] sm:$0xff]
                %439 = vst [vmem:[%s179 + $0x408] sm:$0xff] %v438
                %v440 = vld [vmem:[%s178 + $0x820] sm:$0xff]
                %441 = vst [vmem:[%s179 + $0x410] sm:$0xff] %v440
                %v442 = vld [vmem:[%s178 + $0x828] sm:$0xff]
                %443 = vst [vmem:[%s179 + $0x418] sm:$0xff] %v442
                %v444 = vld [vmem:[%s178 + $0x840] sm:$0xff]
                %445 = vst [vmem:[%s179 + $0x420] sm:$0xff] %v444
                %v446 = vld [vmem:[%s178 + $0x848] sm:$0xff]
                %447 = vst [vmem:[%s179 + $0x428] sm:$0xff] %v446
                %v448 = vld [vmem:[%s178 + $0x860] sm:$0xff]
                %449 = vst [vmem:[%s179 + $0x430] sm:$0xff] %v448
                %v450 = vld [vmem:[%s178 + $0x868] sm:$0xff]
                %451 = vst [vmem:[%s179 + $0x438] sm:$0xff] %v450
                %v452 = vld [vmem:[%s178 + $0x880] sm:$0xff]
                %453 = vst [vmem:[%s179 + $0x440] sm:$0xff] %v452
                %v454 = vld [vmem:[%s178 + $0x888] sm:$0xff]
                %455 = vst [vmem:[%s179 + $0x448] sm:$0xff] %v454
                %v456 = vld [vmem:[%s178 + $0x8a0] sm:$0xff]
                %457 = vst [vmem:[%s179 + $0x450] sm:$0xff] %v456
                %v458 = vld [vmem:[%s178 + $0x8a8] sm:$0xff]
                %459 = vst [vmem:[%s179 + $0x458] sm:$0xff] %v458
                %v460 = vld [vmem:[%s178 + $0x8c0] sm:$0xff]
                %461 = vst [vmem:[%s179 + $0x460] sm:$0xff] %v460
                %v462 = vld [vmem:[%s178 + $0x8c8] sm:$0xff]
                %463 = vst [vmem:[%s179 + $0x468] sm:$0xff] %v462
                %v464 = vld [vmem:[%s178 + $0x8e0] sm:$0xff]
                %465 = vst [vmem:[%s179 + $0x470] sm:$0xff] %v464
                %v466 = vld [vmem:[%s178 + $0x8e8] sm:$0xff]
                %467 = vst [vmem:[%s179 + $0x478] sm:$0xff] %v466
                %v468 = vld [vmem:[%s178 + $0x900] sm:$0xff]
                %469 = vst [vmem:[%s179 + $0x480] sm:$0xff] %v468
                %v470 = vld [vmem:[%s178 + $0x908] sm:$0xff]
                %471 = vst [vmem:[%s179 + $0x488] sm:$0xff] %v470
                %v472 = vld [vmem:[%s178 + $0x920] sm:$0xff]
                %473 = vst [vmem:[%s179 + $0x490] sm:$0xff] %v472
                %v474 = vld [vmem:[%s178 + $0x928] sm:$0xff]
                %475 = vst [vmem:[%s179 + $0x498] sm:$0xff] %v474
                %v476 = vld [vmem:[%s178 + $0x940] sm:$0xff]
                %477 = vst [vmem:[%s179 + $0x4a0] sm:$0xff] %v476
                %v478 = vld [vmem:[%s178 + $0x948] sm:$0xff]
                %479 = vst [vmem:[%s179 + $0x4a8] sm:$0xff] %v478
                %v480 = vld [vmem:[%s178 + $0x960] sm:$0xff]
                %481 = vst [vmem:[%s179 + $0x4b0] sm:$0xff] %v480
                %v482 = vld [vmem:[%s178 + $0x968] sm:$0xff]
                %483 = vst [vmem:[%s179 + $0x4b8] sm:$0xff] %v482
                %v484 = vld [vmem:[%s178 + $0x980] sm:$0xff]
                %485 = vst [vmem:[%s179 + $0x4c0] sm:$0xff] %v484
                %v486 = vld [vmem:[%s178 + $0x988] sm:$0xff]
                %487 = vst [vmem:[%s179 + $0x4c8] sm:$0xff] %v486
                %v488 = vld [vmem:[%s178 + $0x9a0] sm:$0xff]
                %489 = vst [vmem:[%s179 + $0x4d0] sm:$0xff] %v488
                %v490 = vld [vmem:[%s178 + $0x9a8] sm:$0xff]
                %491 = vst [vmem:[%s179 + $0x4d8] sm:$0xff] %v490
                %v492 = vld [vmem:[%s178 + $0x9c0] sm:$0xff]
                %493 = vst [vmem:[%s179 + $0x4e0] sm:$0xff] %v492
                %v494 = vld [vmem:[%s178 + $0x9c8] sm:$0xff]
                %495 = vst [vmem:[%s179 + $0x4e8] sm:$0xff] %v494
                %v496 = vld [vmem:[%s178 + $0x9e0] sm:$0xff]
                %497 = vst [vmem:[%s179 + $0x4f0] sm:$0xff] %v496
                %v498 = vld [vmem:[%s178 + $0x9e8] sm:$0xff]
                %499 = vst [vmem:[%s179 + $0x4f8] sm:$0xff] %v498
                %v500 = vld [vmem:[%s178 + $0xa00] sm:$0xff]
                %501 = vst [vmem:[%s179 + $0x500] sm:$0xff] %v500
                %v502 = vld [vmem:[%s178 + $0xa08] sm:$0xff]
                %503 = vst [vmem:[%s179 + $0x508] sm:$0xff] %v502
                %v504 = vld [vmem:[%s178 + $0xa20] sm:$0xff]
                %505 = vst [vmem:[%s179 + $0x510] sm:$0xff] %v504
                %v506 = vld [vmem:[%s178 + $0xa28] sm:$0xff]
                %507 = vst [vmem:[%s179 + $0x518] sm:$0xff] %v506
                %v508 = vld [vmem:[%s178 + $0xa40] sm:$0xff]
                %509 = vst [vmem:[%s179 + $0x520] sm:$0xff] %v508
                %v510 = vld [vmem:[%s178 + $0xa48] sm:$0xff]
                %511 = vst [vmem:[%s179 + $0x528] sm:$0xff] %v510
                %v512 = vld [vmem:[%s178 + $0xa60] sm:$0xff]
                %513 = vst [vmem:[%s179 + $0x530] sm:$0xff] %v512
                %v514 = vld [vmem:[%s178 + $0xa68] sm:$0xff]
                %515 = vst [vmem:[%s179 + $0x538] sm:$0xff] %v514
                %v516 = vld [vmem:[%s178 + $0xa80] sm:$0xff]
                %517 = vst [vmem:[%s179 + $0x540] sm:$0xff] %v516
                %v518 = vld [vmem:[%s178 + $0xa88] sm:$0xff]
                %519 = vst [vmem:[%s179 + $0x548] sm:$0xff] %v518
                %v520 = vld [vmem:[%s178 + $0xaa0] sm:$0xff]
                %521 = vst [vmem:[%s179 + $0x550] sm:$0xff] %v520
                %v522 = vld [vmem:[%s178 + $0xaa8] sm:$0xff]
                %523 = vst [vmem:[%s179 + $0x558] sm:$0xff] %v522
                %v524 = vld [vmem:[%s178 + $0xac0] sm:$0xff]
                %525 = vst [vmem:[%s179 + $0x560] sm:$0xff] %v524
                %v526 = vld [vmem:[%s178 + $0xac8] sm:$0xff]
                %527 = vst [vmem:[%s179 + $0x568] sm:$0xff] %v526
                %v528 = vld [vmem:[%s178 + $0xae0] sm:$0xff]
                %529 = vst [vmem:[%s179 + $0x570] sm:$0xff] %v528
                %v530 = vld [vmem:[%s178 + $0xae8] sm:$0xff]
                %531 = vst [vmem:[%s179 + $0x578] sm:$0xff] %v530
                %v532 = vld [vmem:[%s178 + $0xb00] sm:$0xff]
                %533 = vst [vmem:[%s179 + $0x580] sm:$0xff] %v532
                %v534 = vld [vmem:[%s178 + $0xb08] sm:$0xff]
                %535 = vst [vmem:[%s179 + $0x588] sm:$0xff] %v534
                %v536 = vld [vmem:[%s178 + $0xb20] sm:$0xff]
                %537 = vst [vmem:[%s179 + $0x590] sm:$0xff] %v536
                %v538 = vld [vmem:[%s178 + $0xb28] sm:$0xff]
                %539 = vst [vmem:[%s179 + $0x598] sm:$0xff] %v538
                %v540 = vld [vmem:[%s178 + $0xb40] sm:$0xff]
                %541 = vst [vmem:[%s179 + $0x5a0] sm:$0xff] %v540
                %v542 = vld [vmem:[%s178 + $0xb48] sm:$0xff]
                %543 = vst [vmem:[%s179 + $0x5a8] sm:$0xff] %v542
                %v544 = vld [vmem:[%s178 + $0xb60] sm:$0xff]
                %545 = vst [vmem:[%s179 + $0x5b0] sm:$0xff] %v544
                %v546 = vld [vmem:[%s178 + $0xb68] sm:$0xff]
                %547 = vst [vmem:[%s179 + $0x5b8] sm:$0xff] %v546
                %v548 = vld [vmem:[%s178 + $0xb80] sm:$0xff]
                %549 = vst [vmem:[%s179 + $0x5c0] sm:$0xff] %v548
                %v550 = vld [vmem:[%s178 + $0xb88] sm:$0xff]
                %551 = vst [vmem:[%s179 + $0x5c8] sm:$0xff] %v550
                %v552 = vld [vmem:[%s178 + $0xba0] sm:$0xff]
                %553 = vst [vmem:[%s179 + $0x5d0] sm:$0xff] %v552
                %v554 = vld [vmem:[%s178 + $0xba8] sm:$0xff]
                %555 = vst [vmem:[%s179 + $0x5d8] sm:$0xff] %v554
                %v556 = vld [vmem:[%s178 + $0xbc0] sm:$0xff]
                %557 = vst [vmem:[%s179 + $0x5e0] sm:$0xff] %v556
                %v558 = vld [vmem:[%s178 + $0xbc8] sm:$0xff]
                %559 = vst [vmem:[%s179 + $0x5e8] sm:$0xff] %v558
                %v560 = vld [vmem:[%s178 + $0xbe0] sm:$0xff]
                %561 = vst [vmem:[%s179 + $0x5f0] sm:$0xff] %v560
                %v562 = vld [vmem:[%s178 + $0xbe8] sm:$0xff]
                %563 = vst [vmem:[%s179 + $0x5f8] sm:$0xff] %v562
                %v564 = vld [vmem:[%s178 + $0xc00] sm:$0xff]
                %565 = vst [vmem:[%s179 + $0x600] sm:$0xff] %v564
                %v566 = vld [vmem:[%s178 + $0xc08] sm:$0xff]
                %567 = vst [vmem:[%s179 + $0x608] sm:$0xff] %v566
                %v568 = vld [vmem:[%s178 + $0xc20] sm:$0xff]
                %569 = vst [vmem:[%s179 + $0x610] sm:$0xff] %v568
                %v570 = vld [vmem:[%s178 + $0xc28] sm:$0xff]
                %571 = vst [vmem:[%s179 + $0x618] sm:$0xff] %v570
                %v572 = vld [vmem:[%s178 + $0xc40] sm:$0xff]
                %573 = vst [vmem:[%s179 + $0x620] sm:$0xff] %v572
                %v574 = vld [vmem:[%s178 + $0xc48] sm:$0xff]
                %575 = vst [vmem:[%s179 + $0x628] sm:$0xff] %v574
                %v576 = vld [vmem:[%s178 + $0xc60] sm:$0xff]
                %577 = vst [vmem:[%s179 + $0x630] sm:$0xff] %v576
                %v578 = vld [vmem:[%s178 + $0xc68] sm:$0xff]
                %579 = vst [vmem:[%s179 + $0x638] sm:$0xff] %v578
                %v580 = vld [vmem:[%s178 + $0xc80] sm:$0xff]
                %581 = vst [vmem:[%s179 + $0x640] sm:$0xff] %v580
                %v582 = vld [vmem:[%s178 + $0xc88] sm:$0xff]
                %583 = vst [vmem:[%s179 + $0x648] sm:$0xff] %v582
                %v584 = vld [vmem:[%s178 + $0xca0] sm:$0xff]
                %585 = vst [vmem:[%s179 + $0x650] sm:$0xff] %v584
                %v586 = vld [vmem:[%s178 + $0xca8] sm:$0xff]
                %587 = vst [vmem:[%s179 + $0x658] sm:$0xff] %v586
                %v588 = vld [vmem:[%s178 + $0xcc0] sm:$0xff]
                %589 = vst [vmem:[%s179 + $0x660] sm:$0xff] %v588
                %v590 = vld [vmem:[%s178 + $0xcc8] sm:$0xff]
                %591 = vst [vmem:[%s179 + $0x668] sm:$0xff] %v590
                %v592 = vld [vmem:[%s178 + $0xce0] sm:$0xff]
                %593 = vst [vmem:[%s179 + $0x670] sm:$0xff] %v592
                %v594 = vld [vmem:[%s178 + $0xce8] sm:$0xff]
                %595 = vst [vmem:[%s179 + $0x678] sm:$0xff] %v594
                %v596 = vld [vmem:[%s178 + $0xd00] sm:$0xff]
                %597 = vst [vmem:[%s179 + $0x680] sm:$0xff] %v596
                %v598 = vld [vmem:[%s178 + $0xd08] sm:$0xff]
                %599 = vst [vmem:[%s179 + $0x688] sm:$0xff] %v598
                %v600 = vld [vmem:[%s178 + $0xd20] sm:$0xff]
                %601 = vst [vmem:[%s179 + $0x690] sm:$0xff] %v600
                %v602 = vld [vmem:[%s178 + $0xd28] sm:$0xff]
                %603 = vst [vmem:[%s179 + $0x698] sm:$0xff] %v602
                %v604 = vld [vmem:[%s178 + $0xd40] sm:$0xff]
                %605 = vst [vmem:[%s179 + $0x6a0] sm:$0xff] %v604
                %v606 = vld [vmem:[%s178 + $0xd48] sm:$0xff]
                %607 = vst [vmem:[%s179 + $0x6a8] sm:$0xff] %v606
                %v608 = vld [vmem:[%s178 + $0xd60] sm:$0xff]
                %609 = vst [vmem:[%s179 + $0x6b0] sm:$0xff] %v608
                %v610 = vld [vmem:[%s178 + $0xd68] sm:$0xff]
                %611 = vst [vmem:[%s179 + $0x6b8] sm:$0xff] %v610
                %v612 = vld [vmem:[%s178 + $0xd80] sm:$0xff]
                %613 = vst [vmem:[%s179 + $0x6c0] sm:$0xff] %v612
                %v614 = vld [vmem:[%s178 + $0xd88] sm:$0xff]
                %615 = vst [vmem:[%s179 + $0x6c8] sm:$0xff] %v614
                %v616 = vld [vmem:[%s178 + $0xda0] sm:$0xff]
                %617 = vst [vmem:[%s179 + $0x6d0] sm:$0xff] %v616
                %v618 = vld [vmem:[%s178 + $0xda8] sm:$0xff]
                %619 = vst [vmem:[%s179 + $0x6d8] sm:$0xff] %v618
                %v620 = vld [vmem:[%s178 + $0xdc0] sm:$0xff]
                %621 = vst [vmem:[%s179 + $0x6e0] sm:$0xff] %v620
                %v622 = vld [vmem:[%s178 + $0xdc8] sm:$0xff]
                %623 = vst [vmem:[%s179 + $0x6e8] sm:$0xff] %v622
                %v624 = vld [vmem:[%s178 + $0xde0] sm:$0xff]
                %625 = vst [vmem:[%s179 + $0x6f0] sm:$0xff] %v624
                %v626 = vld [vmem:[%s178 + $0xde8] sm:$0xff]
                %627 = vst [vmem:[%s179 + $0x6f8] sm:$0xff] %v626
                %v628 = vld [vmem:[%s178 + $0xe00] sm:$0xff]
                %629 = vst [vmem:[%s179 + $0x700] sm:$0xff] %v628
                %v630 = vld [vmem:[%s178 + $0xe08] sm:$0xff]
                %631 = vst [vmem:[%s179 + $0x708] sm:$0xff] %v630
                %v632 = vld [vmem:[%s178 + $0xe20] sm:$0xff]
                %633 = vst [vmem:[%s179 + $0x710] sm:$0xff] %v632
                %v634 = vld [vmem:[%s178 + $0xe28] sm:$0xff]
                %635 = vst [vmem:[%s179 + $0x718] sm:$0xff] %v634
                %v636 = vld [vmem:[%s178 + $0xe40] sm:$0xff]
                %637 = vst [vmem:[%s179 + $0x720] sm:$0xff] %v636
                %v638 = vld [vmem:[%s178 + $0xe48] sm:$0xff]
                %639 = vst [vmem:[%s179 + $0x728] sm:$0xff] %v638
                %v640 = vld [vmem:[%s178 + $0xe60] sm:$0xff]
                %641 = vst [vmem:[%s179 + $0x730] sm:$0xff] %v640
                %v642 = vld [vmem:[%s178 + $0xe68] sm:$0xff]
                %643 = vst [vmem:[%s179 + $0x738] sm:$0xff] %v642
                %v644 = vld [vmem:[%s178 + $0xe80] sm:$0xff]
                %645 = vst [vmem:[%s179 + $0x740] sm:$0xff] %v644
                %v646 = vld [vmem:[%s178 + $0xe88] sm:$0xff]
                %647 = vst [vmem:[%s179 + $0x748] sm:$0xff] %v646
                %v648 = vld [vmem:[%s178 + $0xea0] sm:$0xff]
                %649 = vst [vmem:[%s179 + $0x750] sm:$0xff] %v648
                %v650 = vld [vmem:[%s178 + $0xea8] sm:$0xff]
                %651 = vst [vmem:[%s179 + $0x758] sm:$0xff] %v650
                %v652 = vld [vmem:[%s178 + $0xec0] sm:$0xff]
                %653 = vst [vmem:[%s179 + $0x760] sm:$0xff] %v652
                %v654 = vld [vmem:[%s178 + $0xec8] sm:$0xff]
                %655 = vst [vmem:[%s179 + $0x768] sm:$0xff] %v654
                %v656 = vld [vmem:[%s178 + $0xee0] sm:$0xff]
                %657 = vst [vmem:[%s179 + $0x770] sm:$0xff] %v656
                %v658 = vld [vmem:[%s178 + $0xee8] sm:$0xff]
                %659 = vst [vmem:[%s179 + $0x778] sm:$0xff] %v658
                %v660 = vld [vmem:[%s178 + $0xf00] sm:$0xff]
                %661 = vst [vmem:[%s179 + $0x780] sm:$0xff] %v660
                %v662 = vld [vmem:[%s178 + $0xf08] sm:$0xff]
                %663 = vst [vmem:[%s179 + $0x788] sm:$0xff] %v662
                %v664 = vld [vmem:[%s178 + $0xf20] sm:$0xff]
                %665 = vst [vmem:[%s179 + $0x790] sm:$0xff] %v664
                %v666 = vld [vmem:[%s178 + $0xf28] sm:$0xff]
                %667 = vst [vmem:[%s179 + $0x798] sm:$0xff] %v666
                %v668 = vld [vmem:[%s178 + $0xf40] sm:$0xff]
                %669 = vst [vmem:[%s179 + $0x7a0] sm:$0xff] %v668
                %v670 = vld [vmem:[%s178 + $0xf48] sm:$0xff]
                %671 = vst [vmem:[%s179 + $0x7a8] sm:$0xff] %v670
                %v672 = vld [vmem:[%s178 + $0xf60] sm:$0xff]
                %673 = vst [vmem:[%s179 + $0x7b0] sm:$0xff] %v672
                %v674 = vld [vmem:[%s178 + $0xf68] sm:$0xff]
                %675 = vst [vmem:[%s179 + $0x7b8] sm:$0xff] %v674
                %v676 = vld [vmem:[%s178 + $0xf80] sm:$0xff]
                %677 = vst [vmem:[%s179 + $0x7c0] sm:$0xff] %v676
                %v678 = vld [vmem:[%s178 + $0xf88] sm:$0xff]
                %679 = vst [vmem:[%s179 + $0x7c8] sm:$0xff] %v678
                %v680 = vld [vmem:[%s178 + $0xfa0] sm:$0xff]
                %681 = vst [vmem:[%s179 + $0x7d0] sm:$0xff] %v680
                %v682 = vld [vmem:[%s178 + $0xfa8] sm:$0xff]
                %683 = vst [vmem:[%s179 + $0x7d8] sm:$0xff] %v682
                %v684 = vld [vmem:[%s178 + $0xfc0] sm:$0xff]
                %685 = vst [vmem:[%s179 + $0x7e0] sm:$0xff] %v684
                %v686 = vld [vmem:[%s178 + $0xfc8] sm:$0xff]
                %687 = vst [vmem:[%s179 + $0x7e8] sm:$0xff] %v686
                %v688 = vld [vmem:[%s178 + $0xfe0] sm:$0xff]
                %689 = vst [vmem:[%s179 + $0x7f0] sm:$0xff] %v688
                %v690 = vld [vmem:[%s178 + $0xfe8] sm:$0xff]
                %691 = vst [vmem:[%s179 + $0x7f8] sm:$0xff] %v690
              $region37: #{discriminator_forward.6} parent=31 // loop_footer
                %s177 = sadd.s32 1, %s173
              $region38: #{discriminator_forward.6} parent=31 // loop_footer_branch
                %172 = sbr.rel target = $region34
              $region39: #{discriminator_forward.6} parent=31 // loop_exit
                _
            $region32: #{discriminator_forward.6} parent=27 // pred_fallthru
              _
            // Predicated region
            $region40: #{discriminator_forward.6} parent=27 // pred_check
              _
            $region41: #{discriminator_forward.6} parent=27 // pred_check_branch
              %693 = sbr.rel target = $region43
            $region42: #{discriminator_forward.6} parent=27 // pred_region
              _
            $region43: #{discriminator_forward.6} parent=27 // pred_fallthru
              _
          $region28: #{discriminator_forward.6} parent=23 // pred_fallthru
            _
          %694 = vnop
        $region24: #{discriminator_forward.6} parent=15 // pred_fallthru
          _
        // Predicated region
        $region44: #{discriminator_forward.6} parent=15 // pred_check
          %p695 = pneg %p95
        $region45: #{discriminator_forward.6} parent=15 // pred_check_branch
          %697 = sbr.rel (%p695) target = $region47
        $region46: #{discriminator_forward.6} parent=15 // pred_region
          %s698 = smul.u32 4, %s16
          %p699 = scmp.lt.s32.totalorder %s698, 7
          %s700 = scalar_select %p699, %s698, 7
          %s701 = scalar_lea.vmem %s2, %s700
          %s702 = smul.u32 4, %s16
        $region47: #{discriminator_forward.6} parent=15 // pred_fallthru
          _
      $region16: #{discriminator_forward.6} parent=5 // pred_fallthru
        _
      %p703 = scmp.le.s32.totalorder 1, %s9
      %p704 = scmp.lt.s32.totalorder %s9, 5
      %p705 = pnand %p703, %p704
      %p706 = pneg %p705
      // Predicated region
      $region48: #{discriminator_forward.6} parent=5 // pred_check
        _
      $region49: #{discriminator_forward.6} parent=5 // pred_check_branch
        %708 = sbr.rel (%p705) target = $region51
      $region50: #{discriminator_forward.6} parent=5 // pred_region
        %s709 = ssub.s32 %s9, 1
        %s710 = sand.u32 %s62, 1
        %s711 = sand.u32 %s62, 1
        %s712 = smul.addr %s711, 2048
        %s713 = scalar_lea.vmem [#allocation3], %s712
        // Predicated region
        $region52: #{discriminator_forward.6} parent=50 // pred_check
          %p714 = pneg %p75
        $region53: #{discriminator_forward.6} parent=50 // pred_check_branch
          %716 = sbr.rel (%p714) target = $region55
        $region54: #{discriminator_forward.6} parent=50 // pred_region
          _
        $region55: #{discriminator_forward.6} parent=50 // pred_fallthru
          _
        %s717 = smul.u32 8, %s19
        %p718 = scmp.lt.s32.totalorder %s717, 15
        %s719 = scalar_select %p718, %s717, 15
        %s720 = smul.addr %s719, 4
        %s721 = scalar_lea.vmem %s0, %s720
        %p722 = pneg %p47
        %p723 = pneg %p44
        %s724 = sand.u32 %s62, 1
        %s725 = sand.u32 %s62, 1
        %s726 = smul.addr %s725, 2048
        %s727 = scalar_lea.vmem [#allocation3], %s726
        %p728 = pneg %p75
        %p729 = pneg %p72
        %s730 = smul.u32 4, %s18
        %p731 = scmp.lt.s32.totalorder %s730, 7
        %s732 = scalar_select %p731, %s730, 7
        %s733 = scalar_lea.vmem %s2, %s732
        %p734 = pneg %p101
        %p735 = pneg %p98
        %p736 = pneg %p127
        %p737 = pneg %p124
        %s738 = smul.u32 4, %s18
        %p739 = scmp.lt.s32.totalorder %s738, 7
        %s740 = scalar_select %p739, %s738, 7
        %s741 = smul.addr %s740, 4
        %s742 = scalar_lea.vmem %s3, %s741
        %s743 = smul.u32 8, %s19
        %p744 = scmp.lt.s32.totalorder %s743, 15
        %s745 = scalar_select %p744, %s743, 15
        %s746 = smul.addr %s745, 4
        %s747 = scalar_lea.vmem %s0, %s746
        %s748 = smul.u32 8, %s19
        %s749 = smul.u32 128, %s19
        %s750 = smul.u32 4, %s18
        %s751 = smul.u32 4, %s18
        %p752 = scmp.lt.s32.totalorder %s751, 7
        %s753 = scalar_select %p752, %s751, 7
        %s754 = scalar_lea.vmem %s2, %s753
        %s755 = smul.u32 4, %s18
        %s756 = smul.u32 4, %s18
        %p757 = scmp.lt.s32.totalorder %s756, 7
        %s758 = scalar_select %p757, %s756, 7
        %s759 = smul.addr %s758, 4
        %s760 = scalar_lea.vmem %s3, %s759
        %s761 = smul.u32 4, %s18
        %p762 = scmp.eq.s32.totalorder %s19, 0
        // Predicated region
        $region56: #{discriminator_forward.6} parent=50 // pred_check
          %p763 = pneg %p762
        $region57: #{discriminator_forward.6} parent=50 // pred_check_branch
          %765 = sbr.rel (%p763) target = $region59
        $region58: #{discriminator_forward.6} parent=50 // pred_region
          %766 = vst [vmem:[#allocation2] sm:$0xff] 0.0
          %767 = vst [vmem:[#allocation2 + $0x8] sm:$0xff] 0.0
          %768 = vst [vmem:[#allocation2 + $0x10] sm:$0xff] 0.0
          %769 = vst [vmem:[#allocation2 + $0x18] sm:$0xff] 0.0
        $region59: #{discriminator_forward.6} parent=50 // pred_fallthru
          _
        %v770 = vld [vmem:[#allocation2] sm:$0xff]
        %v771 = vld [vmem:[#allocation2 + $0x8] sm:$0xff]
        %v772 = vld [vmem:[#allocation2 + $0x10] sm:$0xff]
        %v773 = vld [vmem:[#allocation2 + $0x18] sm:$0xff]
        %v774 = vld [vmem:[%s747] sm:$0xff]
        %v775 = vld [vmem:[%s747 + $0x8] sm:$0xff]
        %v776 = vld [vmem:[%s747 + $0x10] sm:$0xff]
        %v777 = vld [vmem:[%s747 + $0x18] sm:$0xff]
        %v778 = vld [vmem:[%s713] sm:$0xff]
        %v779 = vld [vmem:[%s713 + $0x8] sm:$0xff]
        %v780 = vld [vmem:[%s713 + $0x10] sm:$0xff]
        %v781 = vld [vmem:[%s713 + $0x18] sm:$0xff]
        %v782 = vld [vmem:[%s713 + $0x20] sm:$0xff]
        %v783 = vld [vmem:[%s713 + $0x28] sm:$0xff]
        %v784 = vld [vmem:[%s713 + $0x30] sm:$0xff]
        %v785 = vld [vmem:[%s713 + $0x38] sm:$0xff]
        %v786 = vld [vmem:[%s713 + $0x40] sm:$0xff]
        %v787 = vld [vmem:[%s713 + $0x48] sm:$0xff]
        %v788 = vld [vmem:[%s713 + $0x50] sm:$0xff]
        %v789 = vld [vmem:[%s713 + $0x58] sm:$0xff]
        %v790 = vld [vmem:[%s713 + $0x60] sm:$0xff]
        %v791 = vld [vmem:[%s713 + $0x68] sm:$0xff]
        %v792 = vld [vmem:[%s713 + $0x70] sm:$0xff]
        %v793 = vld [vmem:[%s713 + $0x78] sm:$0xff]
        %v794 = vld [vmem:[%s713 + $0x80] sm:$0xff]
        %v795 = vld [vmem:[%s713 + $0x88] sm:$0xff]
        %v796 = vld [vmem:[%s713 + $0x90] sm:$0xff]
        %v797 = vld [vmem:[%s713 + $0x98] sm:$0xff]
        %v798 = vld [vmem:[%s713 + $0xa0] sm:$0xff]
        %v799 = vld [vmem:[%s713 + $0xa8] sm:$0xff]
        %v800 = vld [vmem:[%s713 + $0xb0] sm:$0xff]
        %v801 = vld [vmem:[%s713 + $0xb8] sm:$0xff]
        %v802 = vld [vmem:[%s713 + $0xc0] sm:$0xff]
        %v803 = vld [vmem:[%s713 + $0xc8] sm:$0xff]
        %v804 = vld [vmem:[%s713 + $0xd0] sm:$0xff]
        %v805 = vld [vmem:[%s713 + $0xd8] sm:$0xff]
        %v806 = vld [vmem:[%s713 + $0xe0] sm:$0xff]
        %v807 = vld [vmem:[%s713 + $0xe8] sm:$0xff]
        %v808 = vld [vmem:[%s713 + $0xf0] sm:$0xff]
        %v809 = vld [vmem:[%s713 + $0xf8] sm:$0xff]
        %v810 = vld [vmem:[%s713 + $0x100] sm:$0xff]
        %v811 = vld [vmem:[%s713 + $0x108] sm:$0xff]
        %v812 = vld [vmem:[%s713 + $0x110] sm:$0xff]
        %v813 = vld [vmem:[%s713 + $0x118] sm:$0xff]
        %v814 = vld [vmem:[%s713 + $0x120] sm:$0xff]
        %v815 = vld [vmem:[%s713 + $0x128] sm:$0xff]
        %v816 = vld [vmem:[%s713 + $0x130] sm:$0xff]
        %v817 = vld [vmem:[%s713 + $0x138] sm:$0xff]
        %v818 = vld [vmem:[%s713 + $0x140] sm:$0xff]
        %v819 = vld [vmem:[%s713 + $0x148] sm:$0xff]
        %v820 = vld [vmem:[%s713 + $0x150] sm:$0xff]
        %v821 = vld [vmem:[%s713 + $0x158] sm:$0xff]
        %v822 = vld [vmem:[%s713 + $0x160] sm:$0xff]
        %v823 = vld [vmem:[%s713 + $0x168] sm:$0xff]
        %v824 = vld [vmem:[%s713 + $0x170] sm:$0xff]
        %v825 = vld [vmem:[%s713 + $0x178] sm:$0xff]
        %v826 = vld [vmem:[%s713 + $0x180] sm:$0xff]
        %v827 = vld [vmem:[%s713 + $0x188] sm:$0xff]
        %v828 = vld [vmem:[%s713 + $0x190] sm:$0xff]
        %v829 = vld [vmem:[%s713 + $0x198] sm:$0xff]
        %v830 = vld [vmem:[%s713 + $0x1a0] sm:$0xff]
        %v831 = vld [vmem:[%s713 + $0x1a8] sm:$0xff]
        %v832 = vld [vmem:[%s713 + $0x1b0] sm:$0xff]
        %v833 = vld [vmem:[%s713 + $0x1b8] sm:$0xff]
        %v834 = vld [vmem:[%s713 + $0x1c0] sm:$0xff]
        %v835 = vld [vmem:[%s713 + $0x1c8] sm:$0xff]
        %v836 = vld [vmem:[%s713 + $0x1d0] sm:$0xff]
        %v837 = vld [vmem:[%s713 + $0x1d8] sm:$0xff]
        %v838 = vld [vmem:[%s713 + $0x1e0] sm:$0xff]
        %v839 = vld [vmem:[%s713 + $0x1e8] sm:$0xff]
        %v840 = vld [vmem:[%s713 + $0x1f0] sm:$0xff]
        %v841 = vld [vmem:[%s713 + $0x1f8] sm:$0xff]
        %v842 = vld [vmem:[%s713 + $0x200] sm:$0xff]
        %v843 = vld [vmem:[%s713 + $0x208] sm:$0xff]
        %v844 = vld [vmem:[%s713 + $0x210] sm:$0xff]
        %v845 = vld [vmem:[%s713 + $0x218] sm:$0xff]
        %v846 = vld [vmem:[%s713 + $0x220] sm:$0xff]
        %v847 = vld [vmem:[%s713 + $0x228] sm:$0xff]
        %v848 = vld [vmem:[%s713 + $0x230] sm:$0xff]
        %v849 = vld [vmem:[%s713 + $0x238] sm:$0xff]
        %v850 = vld [vmem:[%s713 + $0x240] sm:$0xff]
        %v851 = vld [vmem:[%s713 + $0x248] sm:$0xff]
        %v852 = vld [vmem:[%s713 + $0x250] sm:$0xff]
        %v853 = vld [vmem:[%s713 + $0x258] sm:$0xff]
        %v854 = vld [vmem:[%s713 + $0x260] sm:$0xff]
        %v855 = vld [vmem:[%s713 + $0x268] sm:$0xff]
        %v856 = vld [vmem:[%s713 + $0x270] sm:$0xff]
        %v857 = vld [vmem:[%s713 + $0x278] sm:$0xff]
        %v858 = vld [vmem:[%s713 + $0x280] sm:$0xff]
        %v859 = vld [vmem:[%s713 + $0x288] sm:$0xff]
        %v860 = vld [vmem:[%s713 + $0x290] sm:$0xff]
        %v861 = vld [vmem:[%s713 + $0x298] sm:$0xff]
        %v862 = vld [vmem:[%s713 + $0x2a0] sm:$0xff]
        %v863 = vld [vmem:[%s713 + $0x2a8] sm:$0xff]
        %v864 = vld [vmem:[%s713 + $0x2b0] sm:$0xff]
        %v865 = vld [vmem:[%s713 + $0x2b8] sm:$0xff]
        %v866 = vld [vmem:[%s713 + $0x2c0] sm:$0xff]
        %v867 = vld [vmem:[%s713 + $0x2c8] sm:$0xff]
        %v868 = vld [vmem:[%s713 + $0x2d0] sm:$0xff]
        %v869 = vld [vmem:[%s713 + $0x2d8] sm:$0xff]
        %v870 = vld [vmem:[%s713 + $0x2e0] sm:$0xff]
        %v871 = vld [vmem:[%s713 + $0x2e8] sm:$0xff]
        %v872 = vld [vmem:[%s713 + $0x2f0] sm:$0xff]
        %v873 = vld [vmem:[%s713 + $0x2f8] sm:$0xff]
        %v874 = vld [vmem:[%s713 + $0x300] sm:$0xff]
        %v875 = vld [vmem:[%s713 + $0x308] sm:$0xff]
        %v876 = vld [vmem:[%s713 + $0x310] sm:$0xff]
        %v877 = vld [vmem:[%s713 + $0x318] sm:$0xff]
        %v878 = vld [vmem:[%s713 + $0x320] sm:$0xff]
        %v879 = vld [vmem:[%s713 + $0x328] sm:$0xff]
        %v880 = vld [vmem:[%s713 + $0x330] sm:$0xff]
        %v881 = vld [vmem:[%s713 + $0x338] sm:$0xff]
        %v882 = vld [vmem:[%s713 + $0x340] sm:$0xff]
        %v883 = vld [vmem:[%s713 + $0x348] sm:$0xff]
        %v884 = vld [vmem:[%s713 + $0x350] sm:$0xff]
        %v885 = vld [vmem:[%s713 + $0x358] sm:$0xff]
        %v886 = vld [vmem:[%s713 + $0x360] sm:$0xff]
        %v887 = vld [vmem:[%s713 + $0x368] sm:$0xff]
        %v888 = vld [vmem:[%s713 + $0x370] sm:$0xff]
        %v889 = vld [vmem:[%s713 + $0x378] sm:$0xff]
        %v890 = vld [vmem:[%s713 + $0x380] sm:$0xff]
        %v891 = vld [vmem:[%s713 + $0x388] sm:$0xff]
        %v892 = vld [vmem:[%s713 + $0x390] sm:$0xff]
        %v893 = vld [vmem:[%s713 + $0x398] sm:$0xff]
        %v894 = vld [vmem:[%s713 + $0x3a0] sm:$0xff]
        %v895 = vld [vmem:[%s713 + $0x3a8] sm:$0xff]
        %v896 = vld [vmem:[%s713 + $0x3b0] sm:$0xff]
        %v897 = vld [vmem:[%s713 + $0x3b8] sm:$0xff]
        %v898 = vld [vmem:[%s713 + $0x3c0] sm:$0xff]
        %v899 = vld [vmem:[%s713 + $0x3c8] sm:$0xff]
        %v900 = vld [vmem:[%s713 + $0x3d0] sm:$0xff]
        %v901 = vld [vmem:[%s713 + $0x3d8] sm:$0xff]
        %v902 = vld [vmem:[%s713 + $0x3e0] sm:$0xff]
        %v903 = vld [vmem:[%s713 + $0x3e8] sm:$0xff]
        %v904 = vld [vmem:[%s713 + $0x3f0] sm:$0xff]
        %v905 = vld [vmem:[%s713 + $0x3f8] sm:$0xff]
        %v906 = vld [vmem:[%s713 + $0x400] sm:$0xff]
        %v907 = vld [vmem:[%s713 + $0x408] sm:$0xff]
        %v908 = vld [vmem:[%s713 + $0x410] sm:$0xff]
        %v909 = vld [vmem:[%s713 + $0x418] sm:$0xff]
        %v910 = vld [vmem:[%s713 + $0x420] sm:$0xff]
        %v911 = vld [vmem:[%s713 + $0x428] sm:$0xff]
        %v912 = vld [vmem:[%s713 + $0x430] sm:$0xff]
        %v913 = vld [vmem:[%s713 + $0x438] sm:$0xff]
        %v914 = vld [vmem:[%s713 + $0x440] sm:$0xff]
        %v915 = vld [vmem:[%s713 + $0x448] sm:$0xff]
        %v916 = vld [vmem:[%s713 + $0x450] sm:$0xff]
        %v917 = vld [vmem:[%s713 + $0x458] sm:$0xff]
        %v918 = vld [vmem:[%s713 + $0x460] sm:$0xff]
        %v919 = vld [vmem:[%s713 + $0x468] sm:$0xff]
        %v920 = vld [vmem:[%s713 + $0x470] sm:$0xff]
        %v921 = vld [vmem:[%s713 + $0x478] sm:$0xff]
        %v922 = vld [vmem:[%s713 + $0x480] sm:$0xff]
        %v923 = vld [vmem:[%s713 + $0x488] sm:$0xff]
        %v924 = vld [vmem:[%s713 + $0x490] sm:$0xff]
        %v925 = vld [vmem:[%s713 + $0x498] sm:$0xff]
        %v926 = vld [vmem:[%s713 + $0x4a0] sm:$0xff]
        %v927 = vld [vmem:[%s713 + $0x4a8] sm:$0xff]
        %v928 = vld [vmem:[%s713 + $0x4b0] sm:$0xff]
        %v929 = vld [vmem:[%s713 + $0x4b8] sm:$0xff]
        %v930 = vld [vmem:[%s713 + $0x4c0] sm:$0xff]
        %v931 = vld [vmem:[%s713 + $0x4c8] sm:$0xff]
        %v932 = vld [vmem:[%s713 + $0x4d0] sm:$0xff]
        %v933 = vld [vmem:[%s713 + $0x4d8] sm:$0xff]
        %v934 = vld [vmem:[%s713 + $0x4e0] sm:$0xff]
        %v935 = vld [vmem:[%s713 + $0x4e8] sm:$0xff]
        %v936 = vld [vmem:[%s713 + $0x4f0] sm:$0xff]
        %v937 = vld [vmem:[%s713 + $0x4f8] sm:$0xff]
        %v938 = vld [vmem:[%s713 + $0x500] sm:$0xff]
        %v939 = vld [vmem:[%s713 + $0x508] sm:$0xff]
        %v940 = vld [vmem:[%s713 + $0x510] sm:$0xff]
        %v941 = vld [vmem:[%s713 + $0x518] sm:$0xff]
        %v942 = vld [vmem:[%s713 + $0x520] sm:$0xff]
        %v943 = vld [vmem:[%s713 + $0x528] sm:$0xff]
        %v944 = vld [vmem:[%s713 + $0x530] sm:$0xff]
        %v945 = vld [vmem:[%s713 + $0x538] sm:$0xff]
        %v946 = vld [vmem:[%s713 + $0x540] sm:$0xff]
        %v947 = vld [vmem:[%s713 + $0x548] sm:$0xff]
        %v948 = vld [vmem:[%s713 + $0x550] sm:$0xff]
        %v949 = vld [vmem:[%s713 + $0x558] sm:$0xff]
        %v950 = vld [vmem:[%s713 + $0x560] sm:$0xff]
        %v951 = vld [vmem:[%s713 + $0x568] sm:$0xff]
        %v952 = vld [vmem:[%s713 + $0x570] sm:$0xff]
        %v953 = vld [vmem:[%s713 + $0x578] sm:$0xff]
        %v954 = vld [vmem:[%s713 + $0x580] sm:$0xff]
        %v955 = vld [vmem:[%s713 + $0x588] sm:$0xff]
        %v956 = vld [vmem:[%s713 + $0x590] sm:$0xff]
        %v957 = vld [vmem:[%s713 + $0x598] sm:$0xff]
        %v958 = vld [vmem:[%s713 + $0x5a0] sm:$0xff]
        %v959 = vld [vmem:[%s713 + $0x5a8] sm:$0xff]
        %v960 = vld [vmem:[%s713 + $0x5b0] sm:$0xff]
        %v961 = vld [vmem:[%s713 + $0x5b8] sm:$0xff]
        %v962 = vld [vmem:[%s713 + $0x5c0] sm:$0xff]
        %v963 = vld [vmem:[%s713 + $0x5c8] sm:$0xff]
        %v964 = vld [vmem:[%s713 + $0x5d0] sm:$0xff]
        %v965 = vld [vmem:[%s713 + $0x5d8] sm:$0xff]
        %v966 = vld [vmem:[%s713 + $0x5e0] sm:$0xff]
        %v967 = vld [vmem:[%s713 + $0x5e8] sm:$0xff]
        %v968 = vld [vmem:[%s713 + $0x5f0] sm:$0xff]
        %v969 = vld [vmem:[%s713 + $0x5f8] sm:$0xff]
        %v970 = vld [vmem:[%s713 + $0x600] sm:$0xff]
        %v971 = vld [vmem:[%s713 + $0x608] sm:$0xff]
        %v972 = vld [vmem:[%s713 + $0x610] sm:$0xff]
        %v973 = vld [vmem:[%s713 + $0x618] sm:$0xff]
        %v974 = vld [vmem:[%s713 + $0x620] sm:$0xff]
        %v975 = vld [vmem:[%s713 + $0x628] sm:$0xff]
        %v976 = vld [vmem:[%s713 + $0x630] sm:$0xff]
        %v977 = vld [vmem:[%s713 + $0x638] sm:$0xff]
        %v978 = vld [vmem:[%s713 + $0x640] sm:$0xff]
        %v979 = vld [vmem:[%s713 + $0x648] sm:$0xff]
        %v980 = vld [vmem:[%s713 + $0x650] sm:$0xff]
        %v981 = vld [vmem:[%s713 + $0x658] sm:$0xff]
        %v982 = vld [vmem:[%s713 + $0x660] sm:$0xff]
        %v983 = vld [vmem:[%s713 + $0x668] sm:$0xff]
        %v984 = vld [vmem:[%s713 + $0x670] sm:$0xff]
        %v985 = vld [vmem:[%s713 + $0x678] sm:$0xff]
        %v986 = vld [vmem:[%s713 + $0x680] sm:$0xff]
        %v987 = vld [vmem:[%s713 + $0x688] sm:$0xff]
        %v988 = vld [vmem:[%s713 + $0x690] sm:$0xff]
        %v989 = vld [vmem:[%s713 + $0x698] sm:$0xff]
        %v990 = vld [vmem:[%s713 + $0x6a0] sm:$0xff]
        %v991 = vld [vmem:[%s713 + $0x6a8] sm:$0xff]
        %v992 = vld [vmem:[%s713 + $0x6b0] sm:$0xff]
        %v993 = vld [vmem:[%s713 + $0x6b8] sm:$0xff]
        %v994 = vld [vmem:[%s713 + $0x6c0] sm:$0xff]
        %v995 = vld [vmem:[%s713 + $0x6c8] sm:$0xff]
        %v996 = vld [vmem:[%s713 + $0x6d0] sm:$0xff]
        %v997 = vld [vmem:[%s713 + $0x6d8] sm:$0xff]
        %v998 = vld [vmem:[%s713 + $0x6e0] sm:$0xff]
        %v999 = vld [vmem:[%s713 + $0x6e8] sm:$0xff]
        %v1000 = vld [vmem:[%s713 + $0x6f0] sm:$0xff]
        %v1001 = vld [vmem:[%s713 + $0x6f8] sm:$0xff]
        %v1002 = vld [vmem:[%s713 + $0x700] sm:$0xff]
        %v1003 = vld [vmem:[%s713 + $0x708] sm:$0xff]
        %v1004 = vld [vmem:[%s713 + $0x710] sm:$0xff]
        %v1005 = vld [vmem:[%s713 + $0x718] sm:$0xff]
        %v1006 = vld [vmem:[%s713 + $0x720] sm:$0xff]
        %v1007 = vld [vmem:[%s713 + $0x728] sm:$0xff]
        %v1008 = vld [vmem:[%s713 + $0x730] sm:$0xff]
        %v1009 = vld [vmem:[%s713 + $0x738] sm:$0xff]
        %v1010 = vld [vmem:[%s713 + $0x740] sm:$0xff]
        %v1011 = vld [vmem:[%s713 + $0x748] sm:$0xff]
        %v1012 = vld [vmem:[%s713 + $0x750] sm:$0xff]
        %v1013 = vld [vmem:[%s713 + $0x758] sm:$0xff]
        %v1014 = vld [vmem:[%s713 + $0x760] sm:$0xff]
        %v1015 = vld [vmem:[%s713 + $0x768] sm:$0xff]
        %v1016 = vld [vmem:[%s713 + $0x770] sm:$0xff]
        %v1017 = vld [vmem:[%s713 + $0x778] sm:$0xff]
        %v1018 = vld [vmem:[%s713 + $0x780] sm:$0xff]
        %v1019 = vld [vmem:[%s713 + $0x788] sm:$0xff]
        %v1020 = vld [vmem:[%s713 + $0x790] sm:$0xff]
        %v1021 = vld [vmem:[%s713 + $0x798] sm:$0xff]
        %v1022 = vld [vmem:[%s713 + $0x7a0] sm:$0xff]
        %v1023 = vld [vmem:[%s713 + $0x7a8] sm:$0xff]
        %v1024 = vld [vmem:[%s713 + $0x7b0] sm:$0xff]
        %v1025 = vld [vmem:[%s713 + $0x7b8] sm:$0xff]
        %v1026 = vld [vmem:[%s713 + $0x7c0] sm:$0xff]
        %v1027 = vld [vmem:[%s713 + $0x7c8] sm:$0xff]
        %v1028 = vld [vmem:[%s713 + $0x7d0] sm:$0xff]
        %v1029 = vld [vmem:[%s713 + $0x7d8] sm:$0xff]
        %v1030 = vld [vmem:[%s713 + $0x7e0] sm:$0xff]
        %v1031 = vld [vmem:[%s713 + $0x7e8] sm:$0xff]
        %v1032 = vld [vmem:[%s713 + $0x7f0] sm:$0xff]
        %v1033 = vld [vmem:[%s713 + $0x7f8] sm:$0xff]
        %v1038 = vunpack.c.l.b16 %v774
        %v1039 = vunpack.c.h.b16 %v774
        %v1040 = vunpack.c.l.b16 %v775
        %v1041 = vunpack.c.h.b16 %v775
        %v1042 = vunpack.c.l.b16 %v776
        %v1043 = vunpack.c.h.b16 %v776
        %v1044 = vunpack.c.l.b16 %v777
        %v1045 = vunpack.c.h.b16 %v777
        %v1046 = vpack.c.b16 %v1038, %v1038
        %v1047 = vpack.c.b16 %v1039, %v1039
        %v1048 = vpack.c.b16 %v1040, %v1040
        %v1049 = vpack.c.b16 %v1041, %v1041
        %v1050 = vpack.c.b16 %v1042, %v1042
        %v1051 = vpack.c.b16 %v1043, %v1043
        %v1052 = vpack.c.b16 %v1044, %v1044
        %v1053 = vpack.c.b16 %v1045, %v1045
        %v1318 = vunpack.c.l.b16 %v778
        %v1319 = vunpack.c.h.b16 %v778
        %v1320 = vunpack.c.l.b16 %v779
        %v1321 = vunpack.c.h.b16 %v779
        %v1322 = vunpack.c.l.b16 %v780
        %v1323 = vunpack.c.h.b16 %v780
        %v1324 = vunpack.c.l.b16 %v781
        %v1325 = vunpack.c.h.b16 %v781
        %v1326 = vunpack.c.l.b16 %v782
        %v1327 = vunpack.c.h.b16 %v782
        %v1328 = vunpack.c.l.b16 %v783
        %v1329 = vunpack.c.h.b16 %v783
        %v1330 = vunpack.c.l.b16 %v784
        %v1331 = vunpack.c.h.b16 %v784
        %v1332 = vunpack.c.l.b16 %v785
        %v1333 = vunpack.c.h.b16 %v785
        %v1334 = vunpack.c.l.b16 %v786
        %v1335 = vunpack.c.h.b16 %v786
        %v1336 = vunpack.c.l.b16 %v787
        %v1337 = vunpack.c.h.b16 %v787
        %v1338 = vunpack.c.l.b16 %v788
        %v1339 = vunpack.c.h.b16 %v788
        %v1340 = vunpack.c.l.b16 %v789
        %v1341 = vunpack.c.h.b16 %v789
        %v1342 = vunpack.c.l.b16 %v790
        %v1343 = vunpack.c.h.b16 %v790
        %v1344 = vunpack.c.l.b16 %v791
        %v1345 = vunpack.c.h.b16 %v791
        %v1346 = vunpack.c.l.b16 %v792
        %v1347 = vunpack.c.h.b16 %v792
        %v1348 = vunpack.c.l.b16 %v793
        %v1349 = vunpack.c.h.b16 %v793
        %v1350 = vunpack.c.l.b16 %v794
        %v1351 = vunpack.c.h.b16 %v794
        %v1352 = vunpack.c.l.b16 %v795
        %v1353 = vunpack.c.h.b16 %v795
        %v1354 = vunpack.c.l.b16 %v796
        %v1355 = vunpack.c.h.b16 %v796
        %v1356 = vunpack.c.l.b16 %v797
        %v1357 = vunpack.c.h.b16 %v797
        %v1358 = vunpack.c.l.b16 %v798
        %v1359 = vunpack.c.h.b16 %v798
        %v1360 = vunpack.c.l.b16 %v799
        %v1361 = vunpack.c.h.b16 %v799
        %v1362 = vunpack.c.l.b16 %v800
        %v1363 = vunpack.c.h.b16 %v800
        %v1364 = vunpack.c.l.b16 %v801
        %v1365 = vunpack.c.h.b16 %v801
        %v1366 = vunpack.c.l.b16 %v802
        %v1367 = vunpack.c.h.b16 %v802
        %v1368 = vunpack.c.l.b16 %v803
        %v1369 = vunpack.c.h.b16 %v803
        %v1370 = vunpack.c.l.b16 %v804
        %v1371 = vunpack.c.h.b16 %v804
        %v1372 = vunpack.c.l.b16 %v805
        %v1373 = vunpack.c.h.b16 %v805
        %v1374 = vunpack.c.l.b16 %v806
        %v1375 = vunpack.c.h.b16 %v806
        %v1376 = vunpack.c.l.b16 %v807
        %v1377 = vunpack.c.h.b16 %v807
        %v1378 = vunpack.c.l.b16 %v808
        %v1379 = vunpack.c.h.b16 %v808
        %v1380 = vunpack.c.l.b16 %v809
        %v1381 = vunpack.c.h.b16 %v809
        %v1382 = vunpack.c.l.b16 %v810
        %v1383 = vunpack.c.h.b16 %v810
        %v1384 = vunpack.c.l.b16 %v811
        %v1385 = vunpack.c.h.b16 %v811
        %v1386 = vunpack.c.l.b16 %v812
        %v1387 = vunpack.c.h.b16 %v812
        %v1388 = vunpack.c.l.b16 %v813
        %v1389 = vunpack.c.h.b16 %v813
        %v1390 = vunpack.c.l.b16 %v814
        %v1391 = vunpack.c.h.b16 %v814
        %v1392 = vunpack.c.l.b16 %v815
        %v1393 = vunpack.c.h.b16 %v815
        %v1394 = vunpack.c.l.b16 %v816
        %v1395 = vunpack.c.h.b16 %v816
        %v1396 = vunpack.c.l.b16 %v817
        %v1397 = vunpack.c.h.b16 %v817
        %v1398 = vunpack.c.l.b16 %v818
        %v1399 = vunpack.c.h.b16 %v818
        %v1400 = vunpack.c.l.b16 %v819
        %v1401 = vunpack.c.h.b16 %v819
        %v1402 = vunpack.c.l.b16 %v820
        %v1403 = vunpack.c.h.b16 %v820
        %v1404 = vunpack.c.l.b16 %v821
        %v1405 = vunpack.c.h.b16 %v821
        %v1406 = vunpack.c.l.b16 %v822
        %v1407 = vunpack.c.h.b16 %v822
        %v1408 = vunpack.c.l.b16 %v823
        %v1409 = vunpack.c.h.b16 %v823
        %v1410 = vunpack.c.l.b16 %v824
        %v1411 = vunpack.c.h.b16 %v824
        %v1412 = vunpack.c.l.b16 %v825
        %v1413 = vunpack.c.h.b16 %v825
        %v1414 = vunpack.c.l.b16 %v826
        %v1415 = vunpack.c.h.b16 %v826
        %v1416 = vunpack.c.l.b16 %v827
        %v1417 = vunpack.c.h.b16 %v827
        %v1418 = vunpack.c.l.b16 %v828
        %v1419 = vunpack.c.h.b16 %v828
        %v1420 = vunpack.c.l.b16 %v829
        %v1421 = vunpack.c.h.b16 %v829
        %v1422 = vunpack.c.l.b16 %v830
        %v1423 = vunpack.c.h.b16 %v830
        %v1424 = vunpack.c.l.b16 %v831
        %v1425 = vunpack.c.h.b16 %v831
        %v1426 = vunpack.c.l.b16 %v832
        %v1427 = vunpack.c.h.b16 %v832
        %v1428 = vunpack.c.l.b16 %v833
        %v1429 = vunpack.c.h.b16 %v833
        %v1430 = vunpack.c.l.b16 %v834
        %v1431 = vunpack.c.h.b16 %v834
        %v1432 = vunpack.c.l.b16 %v835
        %v1433 = vunpack.c.h.b16 %v835
        %v1434 = vunpack.c.l.b16 %v836
        %v1435 = vunpack.c.h.b16 %v836
        %v1436 = vunpack.c.l.b16 %v837
        %v1437 = vunpack.c.h.b16 %v837
        %v1438 = vunpack.c.l.b16 %v838
        %v1439 = vunpack.c.h.b16 %v838
        %v1440 = vunpack.c.l.b16 %v839
        %v1441 = vunpack.c.h.b16 %v839
        %v1442 = vunpack.c.l.b16 %v840
        %v1443 = vunpack.c.h.b16 %v840
        %v1444 = vunpack.c.l.b16 %v841
        %v1445 = vunpack.c.h.b16 %v841
        %v1446 = vunpack.c.l.b16 %v842
        %v1447 = vunpack.c.h.b16 %v842
        %v1448 = vunpack.c.l.b16 %v843
        %v1449 = vunpack.c.h.b16 %v843
        %v1450 = vunpack.c.l.b16 %v844
        %v1451 = vunpack.c.h.b16 %v844
        %v1452 = vunpack.c.l.b16 %v845
        %v1453 = vunpack.c.h.b16 %v845
        %v1454 = vunpack.c.l.b16 %v846
        %v1455 = vunpack.c.h.b16 %v846
        %v1456 = vunpack.c.l.b16 %v847
        %v1457 = vunpack.c.h.b16 %v847
        %v1458 = vunpack.c.l.b16 %v848
        %v1459 = vunpack.c.h.b16 %v848
        %v1460 = vunpack.c.l.b16 %v849
        %v1461 = vunpack.c.h.b16 %v849
        %v1462 = vunpack.c.l.b16 %v850
        %v1463 = vunpack.c.h.b16 %v850
        %v1464 = vunpack.c.l.b16 %v851
        %v1465 = vunpack.c.h.b16 %v851
        %v1466 = vunpack.c.l.b16 %v852
        %v1467 = vunpack.c.h.b16 %v852
        %v1468 = vunpack.c.l.b16 %v853
        %v1469 = vunpack.c.h.b16 %v853
        %v1470 = vunpack.c.l.b16 %v854
        %v1471 = vunpack.c.h.b16 %v854
        %v1472 = vunpack.c.l.b16 %v855
        %v1473 = vunpack.c.h.b16 %v855
        %v1474 = vunpack.c.l.b16 %v856
        %v1475 = vunpack.c.h.b16 %v856
        %v1476 = vunpack.c.l.b16 %v857
        %v1477 = vunpack.c.h.b16 %v857
        %v1478 = vunpack.c.l.b16 %v858
        %v1479 = vunpack.c.h.b16 %v858
        %v1480 = vunpack.c.l.b16 %v859
        %v1481 = vunpack.c.h.b16 %v859
        %v1482 = vunpack.c.l.b16 %v860
        %v1483 = vunpack.c.h.b16 %v860
        %v1484 = vunpack.c.l.b16 %v861
        %v1485 = vunpack.c.h.b16 %v861
        %v1486 = vunpack.c.l.b16 %v862
        %v1487 = vunpack.c.h.b16 %v862
        %v1488 = vunpack.c.l.b16 %v863
        %v1489 = vunpack.c.h.b16 %v863
        %v1490 = vunpack.c.l.b16 %v864
        %v1491 = vunpack.c.h.b16 %v864
        %v1492 = vunpack.c.l.b16 %v865
        %v1493 = vunpack.c.h.b16 %v865
        %v1494 = vunpack.c.l.b16 %v866
        %v1495 = vunpack.c.h.b16 %v866
        %v1496 = vunpack.c.l.b16 %v867
        %v1497 = vunpack.c.h.b16 %v867
        %v1498 = vunpack.c.l.b16 %v868
        %v1499 = vunpack.c.h.b16 %v868
        %v1500 = vunpack.c.l.b16 %v869
        %v1501 = vunpack.c.h.b16 %v869
        %v1502 = vunpack.c.l.b16 %v870
        %v1503 = vunpack.c.h.b16 %v870
        %v1504 = vunpack.c.l.b16 %v871
        %v1505 = vunpack.c.h.b16 %v871
        %v1506 = vunpack.c.l.b16 %v872
        %v1507 = vunpack.c.h.b16 %v872
        %v1508 = vunpack.c.l.b16 %v873
        %v1509 = vunpack.c.h.b16 %v873
        %v1510 = vunpack.c.l.b16 %v874
        %v1511 = vunpack.c.h.b16 %v874
        %v1512 = vunpack.c.l.b16 %v875
        %v1513 = vunpack.c.h.b16 %v875
        %v1514 = vunpack.c.l.b16 %v876
        %v1515 = vunpack.c.h.b16 %v876
        %v1516 = vunpack.c.l.b16 %v877
        %v1517 = vunpack.c.h.b16 %v877
        %v1518 = vunpack.c.l.b16 %v878
        %v1519 = vunpack.c.h.b16 %v878
        %v1520 = vunpack.c.l.b16 %v879
        %v1521 = vunpack.c.h.b16 %v879
        %v1522 = vunpack.c.l.b16 %v880
        %v1523 = vunpack.c.h.b16 %v880
        %v1524 = vunpack.c.l.b16 %v881
        %v1525 = vunpack.c.h.b16 %v881
        %v1526 = vunpack.c.l.b16 %v882
        %v1527 = vunpack.c.h.b16 %v882
        %v1528 = vunpack.c.l.b16 %v883
        %v1529 = vunpack.c.h.b16 %v883
        %v1530 = vunpack.c.l.b16 %v884
        %v1531 = vunpack.c.h.b16 %v884
        %v1532 = vunpack.c.l.b16 %v885
        %v1533 = vunpack.c.h.b16 %v885
        %v1534 = vunpack.c.l.b16 %v886
        %v1535 = vunpack.c.h.b16 %v886
        %v1536 = vunpack.c.l.b16 %v887
        %v1537 = vunpack.c.h.b16 %v887
        %v1538 = vunpack.c.l.b16 %v888
        %v1539 = vunpack.c.h.b16 %v888
        %v1540 = vunpack.c.l.b16 %v889
        %v1541 = vunpack.c.h.b16 %v889
        %v1542 = vunpack.c.l.b16 %v890
        %v1543 = vunpack.c.h.b16 %v890
        %v1544 = vunpack.c.l.b16 %v891
        %v1545 = vunpack.c.h.b16 %v891
        %v1546 = vunpack.c.l.b16 %v892
        %v1547 = vunpack.c.h.b16 %v892
        %v1548 = vunpack.c.l.b16 %v893
        %v1549 = vunpack.c.h.b16 %v893
        %v1550 = vunpack.c.l.b16 %v894
        %v1551 = vunpack.c.h.b16 %v894
        %v1552 = vunpack.c.l.b16 %v895
        %v1553 = vunpack.c.h.b16 %v895
        %v1554 = vunpack.c.l.b16 %v896
        %v1555 = vunpack.c.h.b16 %v896
        %v1556 = vunpack.c.l.b16 %v897
        %v1557 = vunpack.c.h.b16 %v897
        %v1558 = vunpack.c.l.b16 %v898
        %v1559 = vunpack.c.h.b16 %v898
        %v1560 = vunpack.c.l.b16 %v899
        %v1561 = vunpack.c.h.b16 %v899
        %v1562 = vunpack.c.l.b16 %v900
        %v1563 = vunpack.c.h.b16 %v900
        %v1564 = vunpack.c.l.b16 %v901
        %v1565 = vunpack.c.h.b16 %v901
        %v1566 = vunpack.c.l.b16 %v902
        %v1567 = vunpack.c.h.b16 %v902
        %v1568 = vunpack.c.l.b16 %v903
        %v1569 = vunpack.c.h.b16 %v903
        %v1570 = vunpack.c.l.b16 %v904
        %v1571 = vunpack.c.h.b16 %v904
        %v1572 = vunpack.c.l.b16 %v905
        %v1573 = vunpack.c.h.b16 %v905
        %v1574 = vunpack.c.l.b16 %v906
        %v1575 = vunpack.c.h.b16 %v906
        %v1576 = vunpack.c.l.b16 %v907
        %v1577 = vunpack.c.h.b16 %v907
        %v1578 = vunpack.c.l.b16 %v908
        %v1579 = vunpack.c.h.b16 %v908
        %v1580 = vunpack.c.l.b16 %v909
        %v1581 = vunpack.c.h.b16 %v909
        %v1582 = vunpack.c.l.b16 %v910
        %v1583 = vunpack.c.h.b16 %v910
        %v1584 = vunpack.c.l.b16 %v911
        %v1585 = vunpack.c.h.b16 %v911
        %v1586 = vunpack.c.l.b16 %v912
        %v1587 = vunpack.c.h.b16 %v912
        %v1588 = vunpack.c.l.b16 %v913
        %v1589 = vunpack.c.h.b16 %v913
        %v1590 = vunpack.c.l.b16 %v914
        %v1591 = vunpack.c.h.b16 %v914
        %v1592 = vunpack.c.l.b16 %v915
        %v1593 = vunpack.c.h.b16 %v915
        %v1594 = vunpack.c.l.b16 %v916
        %v1595 = vunpack.c.h.b16 %v916
        %v1596 = vunpack.c.l.b16 %v917
        %v1597 = vunpack.c.h.b16 %v917
        %v1598 = vunpack.c.l.b16 %v918
        %v1599 = vunpack.c.h.b16 %v918
        %v1600 = vunpack.c.l.b16 %v919
        %v1601 = vunpack.c.h.b16 %v919
        %v1602 = vunpack.c.l.b16 %v920
        %v1603 = vunpack.c.h.b16 %v920
        %v1604 = vunpack.c.l.b16 %v921
        %v1605 = vunpack.c.h.b16 %v921
        %v1606 = vunpack.c.l.b16 %v922
        %v1607 = vunpack.c.h.b16 %v922
        %v1608 = vunpack.c.l.b16 %v923
        %v1609 = vunpack.c.h.b16 %v923
        %v1610 = vunpack.c.l.b16 %v924
        %v1611 = vunpack.c.h.b16 %v924
        %v1612 = vunpack.c.l.b16 %v925
        %v1613 = vunpack.c.h.b16 %v925
        %v1614 = vunpack.c.l.b16 %v926
        %v1615 = vunpack.c.h.b16 %v926
        %v1616 = vunpack.c.l.b16 %v927
        %v1617 = vunpack.c.h.b16 %v927
        %v1618 = vunpack.c.l.b16 %v928
        %v1619 = vunpack.c.h.b16 %v928
        %v1620 = vunpack.c.l.b16 %v929
        %v1621 = vunpack.c.h.b16 %v929
        %v1622 = vunpack.c.l.b16 %v930
        %v1623 = vunpack.c.h.b16 %v930
        %v1624 = vunpack.c.l.b16 %v931
        %v1625 = vunpack.c.h.b16 %v931
        %v1626 = vunpack.c.l.b16 %v932
        %v1627 = vunpack.c.h.b16 %v932
        %v1628 = vunpack.c.l.b16 %v933
        %v1629 = vunpack.c.h.b16 %v933
        %v1630 = vunpack.c.l.b16 %v934
        %v1631 = vunpack.c.h.b16 %v934
        %v1632 = vunpack.c.l.b16 %v935
        %v1633 = vunpack.c.h.b16 %v935
        %v1634 = vunpack.c.l.b16 %v936
        %v1635 = vunpack.c.h.b16 %v936
        %v1636 = vunpack.c.l.b16 %v937
        %v1637 = vunpack.c.h.b16 %v937
        %v1638 = vunpack.c.l.b16 %v938
        %v1639 = vunpack.c.h.b16 %v938
        %v1640 = vunpack.c.l.b16 %v939
        %v1641 = vunpack.c.h.b16 %v939
        %v1642 = vunpack.c.l.b16 %v940
        %v1643 = vunpack.c.h.b16 %v940
        %v1644 = vunpack.c.l.b16 %v941
        %v1645 = vunpack.c.h.b16 %v941
        %v1646 = vunpack.c.l.b16 %v942
        %v1647 = vunpack.c.h.b16 %v942
        %v1648 = vunpack.c.l.b16 %v943
        %v1649 = vunpack.c.h.b16 %v943
        %v1650 = vunpack.c.l.b16 %v944
        %v1651 = vunpack.c.h.b16 %v944
        %v1652 = vunpack.c.l.b16 %v945
        %v1653 = vunpack.c.h.b16 %v945
        %v1654 = vunpack.c.l.b16 %v946
        %v1655 = vunpack.c.h.b16 %v946
        %v1656 = vunpack.c.l.b16 %v947
        %v1657 = vunpack.c.h.b16 %v947
        %v1658 = vunpack.c.l.b16 %v948
        %v1659 = vunpack.c.h.b16 %v948
        %v1660 = vunpack.c.l.b16 %v949
        %v1661 = vunpack.c.h.b16 %v949
        %v1662 = vunpack.c.l.b16 %v950
        %v1663 = vunpack.c.h.b16 %v950
        %v1664 = vunpack.c.l.b16 %v951
        %v1665 = vunpack.c.h.b16 %v951
        %v1666 = vunpack.c.l.b16 %v952
        %v1667 = vunpack.c.h.b16 %v952
        %v1668 = vunpack.c.l.b16 %v953
        %v1669 = vunpack.c.h.b16 %v953
        %v1670 = vunpack.c.l.b16 %v954
        %v1671 = vunpack.c.h.b16 %v954
        %v1672 = vunpack.c.l.b16 %v955
        %v1673 = vunpack.c.h.b16 %v955
        %v1674 = vunpack.c.l.b16 %v956
        %v1675 = vunpack.c.h.b16 %v956
        %v1676 = vunpack.c.l.b16 %v957
        %v1677 = vunpack.c.h.b16 %v957
        %v1678 = vunpack.c.l.b16 %v958
        %v1679 = vunpack.c.h.b16 %v958
        %v1680 = vunpack.c.l.b16 %v959
        %v1681 = vunpack.c.h.b16 %v959
        %v1682 = vunpack.c.l.b16 %v960
        %v1683 = vunpack.c.h.b16 %v960
        %v1684 = vunpack.c.l.b16 %v961
        %v1685 = vunpack.c.h.b16 %v961
        %v1686 = vunpack.c.l.b16 %v962
        %v1687 = vunpack.c.h.b16 %v962
        %v1688 = vunpack.c.l.b16 %v963
        %v1689 = vunpack.c.h.b16 %v963
        %v1690 = vunpack.c.l.b16 %v964
        %v1691 = vunpack.c.h.b16 %v964
        %v1692 = vunpack.c.l.b16 %v965
        %v1693 = vunpack.c.h.b16 %v965
        %v1694 = vunpack.c.l.b16 %v966
        %v1695 = vunpack.c.h.b16 %v966
        %v1696 = vunpack.c.l.b16 %v967
        %v1697 = vunpack.c.h.b16 %v967
        %v1698 = vunpack.c.l.b16 %v968
        %v1699 = vunpack.c.h.b16 %v968
        %v1700 = vunpack.c.l.b16 %v969
        %v1701 = vunpack.c.h.b16 %v969
        %v1702 = vunpack.c.l.b16 %v970
        %v1703 = vunpack.c.h.b16 %v970
        %v1704 = vunpack.c.l.b16 %v971
        %v1705 = vunpack.c.h.b16 %v971
        %v1706 = vunpack.c.l.b16 %v972
        %v1707 = vunpack.c.h.b16 %v972
        %v1708 = vunpack.c.l.b16 %v973
        %v1709 = vunpack.c.h.b16 %v973
        %v1710 = vunpack.c.l.b16 %v974
        %v1711 = vunpack.c.h.b16 %v974
        %v1712 = vunpack.c.l.b16 %v975
        %v1713 = vunpack.c.h.b16 %v975
        %v1714 = vunpack.c.l.b16 %v976
        %v1715 = vunpack.c.h.b16 %v976
        %v1716 = vunpack.c.l.b16 %v977
        %v1717 = vunpack.c.h.b16 %v977
        %v1718 = vunpack.c.l.b16 %v978
        %v1719 = vunpack.c.h.b16 %v978
        %v1720 = vunpack.c.l.b16 %v979
        %v1721 = vunpack.c.h.b16 %v979
        %v1722 = vunpack.c.l.b16 %v980
        %v1723 = vunpack.c.h.b16 %v980
        %v1724 = vunpack.c.l.b16 %v981
        %v1725 = vunpack.c.h.b16 %v981
        %v1726 = vunpack.c.l.b16 %v982
        %v1727 = vunpack.c.h.b16 %v982
        %v1728 = vunpack.c.l.b16 %v983
        %v1729 = vunpack.c.h.b16 %v983
        %v1730 = vunpack.c.l.b16 %v984
        %v1731 = vunpack.c.h.b16 %v984
        %v1732 = vunpack.c.l.b16 %v985
        %v1733 = vunpack.c.h.b16 %v985
        %v1734 = vunpack.c.l.b16 %v986
        %v1735 = vunpack.c.h.b16 %v986
        %v1736 = vunpack.c.l.b16 %v987
        %v1737 = vunpack.c.h.b16 %v987
        %v1738 = vunpack.c.l.b16 %v988
        %v1739 = vunpack.c.h.b16 %v988
        %v1740 = vunpack.c.l.b16 %v989
        %v1741 = vunpack.c.h.b16 %v989
        %v1742 = vunpack.c.l.b16 %v990
        %v1743 = vunpack.c.h.b16 %v990
        %v1744 = vunpack.c.l.b16 %v991
        %v1745 = vunpack.c.h.b16 %v991
        %v1746 = vunpack.c.l.b16 %v992
        %v1747 = vunpack.c.h.b16 %v992
        %v1748 = vunpack.c.l.b16 %v993
        %v1749 = vunpack.c.h.b16 %v993
        %v1750 = vunpack.c.l.b16 %v994
        %v1751 = vunpack.c.h.b16 %v994
        %v1752 = vunpack.c.l.b16 %v995
        %v1753 = vunpack.c.h.b16 %v995
        %v1754 = vunpack.c.l.b16 %v996
        %v1755 = vunpack.c.h.b16 %v996
        %v1756 = vunpack.c.l.b16 %v997
        %v1757 = vunpack.c.h.b16 %v997
        %v1758 = vunpack.c.l.b16 %v998
        %v1759 = vunpack.c.h.b16 %v998
        %v1760 = vunpack.c.l.b16 %v999
        %v1761 = vunpack.c.h.b16 %v999
        %v1762 = vunpack.c.l.b16 %v1000
        %v1763 = vunpack.c.h.b16 %v1000
        %v1764 = vunpack.c.l.b16 %v1001
        %v1765 = vunpack.c.h.b16 %v1001
        %v1766 = vunpack.c.l.b16 %v1002
        %v1767 = vunpack.c.h.b16 %v1002
        %v1768 = vunpack.c.l.b16 %v1003
        %v1769 = vunpack.c.h.b16 %v1003
        %v1770 = vunpack.c.l.b16 %v1004
        %v1771 = vunpack.c.h.b16 %v1004
        %v1772 = vunpack.c.l.b16 %v1005
        %v1773 = vunpack.c.h.b16 %v1005
        %v1774 = vunpack.c.l.b16 %v1006
        %v1775 = vunpack.c.h.b16 %v1006
        %v1776 = vunpack.c.l.b16 %v1007
        %v1777 = vunpack.c.h.b16 %v1007
        %v1778 = vunpack.c.l.b16 %v1008
        %v1779 = vunpack.c.h.b16 %v1008
        %v1780 = vunpack.c.l.b16 %v1009
        %v1781 = vunpack.c.h.b16 %v1009
        %v1782 = vunpack.c.l.b16 %v1010
        %v1783 = vunpack.c.h.b16 %v1010
        %v1784 = vunpack.c.l.b16 %v1011
        %v1785 = vunpack.c.h.b16 %v1011
        %v1786 = vunpack.c.l.b16 %v1012
        %v1787 = vunpack.c.h.b16 %v1012
        %v1788 = vunpack.c.l.b16 %v1013
        %v1789 = vunpack.c.h.b16 %v1013
        %v1790 = vunpack.c.l.b16 %v1014
        %v1791 = vunpack.c.h.b16 %v1014
        %v1792 = vunpack.c.l.b16 %v1015
        %v1793 = vunpack.c.h.b16 %v1015
        %v1794 = vunpack.c.l.b16 %v1016
        %v1795 = vunpack.c.h.b16 %v1016
        %v1796 = vunpack.c.l.b16 %v1017
        %v1797 = vunpack.c.h.b16 %v1017
        %v1798 = vunpack.c.l.b16 %v1018
        %v1799 = vunpack.c.h.b16 %v1018
        %v1800 = vunpack.c.l.b16 %v1019
        %v1801 = vunpack.c.h.b16 %v1019
        %v1802 = vunpack.c.l.b16 %v1020
        %v1803 = vunpack.c.h.b16 %v1020
        %v1804 = vunpack.c.l.b16 %v1021
        %v1805 = vunpack.c.h.b16 %v1021
        %v1806 = vunpack.c.l.b16 %v1022
        %v1807 = vunpack.c.h.b16 %v1022
        %v1808 = vunpack.c.l.b16 %v1023
        %v1809 = vunpack.c.h.b16 %v1023
        %v1810 = vunpack.c.l.b16 %v1024
        %v1811 = vunpack.c.h.b16 %v1024
        %v1812 = vunpack.c.l.b16 %v1025
        %v1813 = vunpack.c.h.b16 %v1025
        %v1814 = vunpack.c.l.b16 %v1026
        %v1815 = vunpack.c.h.b16 %v1026
        %v1816 = vunpack.c.l.b16 %v1027
        %v1817 = vunpack.c.h.b16 %v1027
        %v1818 = vunpack.c.l.b16 %v1028
        %v1819 = vunpack.c.h.b16 %v1028
        %v1820 = vunpack.c.l.b16 %v1029
        %v1821 = vunpack.c.h.b16 %v1029
        %v1822 = vunpack.c.l.b16 %v1030
        %v1823 = vunpack.c.h.b16 %v1030
        %v1824 = vunpack.c.l.b16 %v1031
        %v1825 = vunpack.c.h.b16 %v1031
        %v1826 = vunpack.c.l.b16 %v1032
        %v1827 = vunpack.c.h.b16 %v1032
        %v1828 = vunpack.c.l.b16 %v1033
        %v1829 = vunpack.c.h.b16 %v1033
        %v1830 = vpack.c.b16 %v1322, %v1318
        %v1831 = vpack.c.b16 %v1323, %v1319
        %v1832 = vpack.c.b16 %v1324, %v1320
        %v1833 = vpack.c.b16 %v1325, %v1321
        %v1834 = vpack.c.b16 %v1330, %v1326
        %v1835 = vpack.c.b16 %v1331, %v1327
        %v1836 = vpack.c.b16 %v1332, %v1328
        %v1837 = vpack.c.b16 %v1333, %v1329
        %v1838 = vpack.c.b16 %v1338, %v1334
        %v1839 = vpack.c.b16 %v1339, %v1335
        %v1840 = vpack.c.b16 %v1340, %v1336
        %v1841 = vpack.c.b16 %v1341, %v1337
        %v1842 = vpack.c.b16 %v1346, %v1342
        %v1843 = vpack.c.b16 %v1347, %v1343
        %v1844 = vpack.c.b16 %v1348, %v1344
        %v1845 = vpack.c.b16 %v1349, %v1345
        %v1846 = vpack.c.b16 %v1354, %v1350
        %v1847 = vpack.c.b16 %v1355, %v1351
        %v1848 = vpack.c.b16 %v1356, %v1352
        %v1849 = vpack.c.b16 %v1357, %v1353
        %v1850 = vpack.c.b16 %v1362, %v1358
        %v1851 = vpack.c.b16 %v1363, %v1359
        %v1852 = vpack.c.b16 %v1364, %v1360
        %v1853 = vpack.c.b16 %v1365, %v1361
        %v1854 = vpack.c.b16 %v1370, %v1366
        %v1855 = vpack.c.b16 %v1371, %v1367
        %v1856 = vpack.c.b16 %v1372, %v1368
        %v1857 = vpack.c.b16 %v1373, %v1369
        %v1858 = vpack.c.b16 %v1378, %v1374
        %v1859 = vpack.c.b16 %v1379, %v1375
        %v1860 = vpack.c.b16 %v1380, %v1376
        %v1861 = vpack.c.b16 %v1381, %v1377
        %v1862 = vpack.c.b16 %v1386, %v1382
        %v1863 = vpack.c.b16 %v1387, %v1383
        %v1864 = vpack.c.b16 %v1388, %v1384
        %v1865 = vpack.c.b16 %v1389, %v1385
        %v1866 = vpack.c.b16 %v1394, %v1390
        %v1867 = vpack.c.b16 %v1395, %v1391
        %v1868 = vpack.c.b16 %v1396, %v1392
        %v1869 = vpack.c.b16 %v1397, %v1393
        %v1870 = vpack.c.b16 %v1402, %v1398
        %v1871 = vpack.c.b16 %v1403, %v1399
        %v1872 = vpack.c.b16 %v1404, %v1400
        %v1873 = vpack.c.b16 %v1405, %v1401
        %v1874 = vpack.c.b16 %v1410, %v1406
        %v1875 = vpack.c.b16 %v1411, %v1407
        %v1876 = vpack.c.b16 %v1412, %v1408
        %v1877 = vpack.c.b16 %v1413, %v1409
        %v1878 = vpack.c.b16 %v1418, %v1414
        %v1879 = vpack.c.b16 %v1419, %v1415
        %v1880 = vpack.c.b16 %v1420, %v1416
        %v1881 = vpack.c.b16 %v1421, %v1417
        %v1882 = vpack.c.b16 %v1426, %v1422
        %v1883 = vpack.c.b16 %v1427, %v1423
        %v1884 = vpack.c.b16 %v1428, %v1424
        %v1885 = vpack.c.b16 %v1429, %v1425
        %v1886 = vpack.c.b16 %v1434, %v1430
        %v1887 = vpack.c.b16 %v1435, %v1431
        %v1888 = vpack.c.b16 %v1436, %v1432
        %v1889 = vpack.c.b16 %v1437, %v1433
        %v1890 = vpack.c.b16 %v1442, %v1438
        %v1891 = vpack.c.b16 %v1443, %v1439
        %v1892 = vpack.c.b16 %v1444, %v1440
        %v1893 = vpack.c.b16 %v1445, %v1441
        %v1894 = vpack.c.b16 %v1450, %v1446
        %v1895 = vpack.c.b16 %v1451, %v1447
        %v1896 = vpack.c.b16 %v1452, %v1448
        %v1897 = vpack.c.b16 %v1453, %v1449
        %v1898 = vpack.c.b16 %v1458, %v1454
        %v1899 = vpack.c.b16 %v1459, %v1455
        %v1900 = vpack.c.b16 %v1460, %v1456
        %v1901 = vpack.c.b16 %v1461, %v1457
        %v1902 = vpack.c.b16 %v1466, %v1462
        %v1903 = vpack.c.b16 %v1467, %v1463
        %v1904 = vpack.c.b16 %v1468, %v1464
        %v1905 = vpack.c.b16 %v1469, %v1465
        %v1906 = vpack.c.b16 %v1474, %v1470
        %v1907 = vpack.c.b16 %v1475, %v1471
        %v1908 = vpack.c.b16 %v1476, %v1472
        %v1909 = vpack.c.b16 %v1477, %v1473
        %v1910 = vpack.c.b16 %v1482, %v1478
        %v1911 = vpack.c.b16 %v1483, %v1479
        %v1912 = vpack.c.b16 %v1484, %v1480
        %v1913 = vpack.c.b16 %v1485, %v1481
        %v1914 = vpack.c.b16 %v1490, %v1486
        %v1915 = vpack.c.b16 %v1491, %v1487
        %v1916 = vpack.c.b16 %v1492, %v1488
        %v1917 = vpack.c.b16 %v1493, %v1489
        %v1918 = vpack.c.b16 %v1498, %v1494
        %v1919 = vpack.c.b16 %v1499, %v1495
        %v1920 = vpack.c.b16 %v1500, %v1496
        %v1921 = vpack.c.b16 %v1501, %v1497
        %v1922 = vpack.c.b16 %v1506, %v1502
        %v1923 = vpack.c.b16 %v1507, %v1503
        %v1924 = vpack.c.b16 %v1508, %v1504
        %v1925 = vpack.c.b16 %v1509, %v1505
        %v1926 = vpack.c.b16 %v1514, %v1510
        %v1927 = vpack.c.b16 %v1515, %v1511
        %v1928 = vpack.c.b16 %v1516, %v1512
        %v1929 = vpack.c.b16 %v1517, %v1513
        %v1930 = vpack.c.b16 %v1522, %v1518
        %v1931 = vpack.c.b16 %v1523, %v1519
        %v1932 = vpack.c.b16 %v1524, %v1520
        %v1933 = vpack.c.b16 %v1525, %v1521
        %v1934 = vpack.c.b16 %v1530, %v1526
        %v1935 = vpack.c.b16 %v1531, %v1527
        %v1936 = vpack.c.b16 %v1532, %v1528
        %v1937 = vpack.c.b16 %v1533, %v1529
        %v1938 = vpack.c.b16 %v1538, %v1534
        %v1939 = vpack.c.b16 %v1539, %v1535
        %v1940 = vpack.c.b16 %v1540, %v1536
        %v1941 = vpack.c.b16 %v1541, %v1537
        %v1942 = vpack.c.b16 %v1546, %v1542
        %v1943 = vpack.c.b16 %v1547, %v1543
        %v1944 = vpack.c.b16 %v1548, %v1544
        %v1945 = vpack.c.b16 %v1549, %v1545
        %v1946 = vpack.c.b16 %v1554, %v1550
        %v1947 = vpack.c.b16 %v1555, %v1551
        %v1948 = vpack.c.b16 %v1556, %v1552
        %v1949 = vpack.c.b16 %v1557, %v1553
        %v1950 = vpack.c.b16 %v1562, %v1558
        %v1951 = vpack.c.b16 %v1563, %v1559
        %v1952 = vpack.c.b16 %v1564, %v1560
        %v1953 = vpack.c.b16 %v1565, %v1561
        %v1954 = vpack.c.b16 %v1570, %v1566
        %v1955 = vpack.c.b16 %v1571, %v1567
        %v1956 = vpack.c.b16 %v1572, %v1568
        %v1957 = vpack.c.b16 %v1573, %v1569
        %v1958 = vpack.c.b16 %v1578, %v1574
        %v1959 = vpack.c.b16 %v1579, %v1575
        %v1960 = vpack.c.b16 %v1580, %v1576
        %v1961 = vpack.c.b16 %v1581, %v1577
        %v1962 = vpack.c.b16 %v1586, %v1582
        %v1963 = vpack.c.b16 %v1587, %v1583
        %v1964 = vpack.c.b16 %v1588, %v1584
        %v1965 = vpack.c.b16 %v1589, %v1585
        %v1966 = vpack.c.b16 %v1594, %v1590
        %v1967 = vpack.c.b16 %v1595, %v1591
        %v1968 = vpack.c.b16 %v1596, %v1592
        %v1969 = vpack.c.b16 %v1597, %v1593
        %v1970 = vpack.c.b16 %v1602, %v1598
        %v1971 = vpack.c.b16 %v1603, %v1599
        %v1972 = vpack.c.b16 %v1604, %v1600
        %v1973 = vpack.c.b16 %v1605, %v1601
        %v1974 = vpack.c.b16 %v1610, %v1606
        %v1975 = vpack.c.b16 %v1611, %v1607
        %v1976 = vpack.c.b16 %v1612, %v1608
        %v1977 = vpack.c.b16 %v1613, %v1609
        %v1978 = vpack.c.b16 %v1618, %v1614
        %v1979 = vpack.c.b16 %v1619, %v1615
        %v1980 = vpack.c.b16 %v1620, %v1616
        %v1981 = vpack.c.b16 %v1621, %v1617
        %v1982 = vpack.c.b16 %v1626, %v1622
        %v1983 = vpack.c.b16 %v1627, %v1623
        %v1984 = vpack.c.b16 %v1628, %v1624
        %v1985 = vpack.c.b16 %v1629, %v1625
        %v1986 = vpack.c.b16 %v1634, %v1630
        %v1987 = vpack.c.b16 %v1635, %v1631
        %v1988 = vpack.c.b16 %v1636, %v1632
        %v1989 = vpack.c.b16 %v1637, %v1633
        %v1990 = vpack.c.b16 %v1642, %v1638
        %v1991 = vpack.c.b16 %v1643, %v1639
        %v1992 = vpack.c.b16 %v1644, %v1640
        %v1993 = vpack.c.b16 %v1645, %v1641
        %v1994 = vpack.c.b16 %v1650, %v1646
        %v1995 = vpack.c.b16 %v1651, %v1647
        %v1996 = vpack.c.b16 %v1652, %v1648
        %v1997 = vpack.c.b16 %v1653, %v1649
        %v1998 = vpack.c.b16 %v1658, %v1654
        %v1999 = vpack.c.b16 %v1659, %v1655
        %v2000 = vpack.c.b16 %v1660, %v1656
        %v2001 = vpack.c.b16 %v1661, %v1657
        %v2002 = vpack.c.b16 %v1666, %v1662
        %v2003 = vpack.c.b16 %v1667, %v1663
        %v2004 = vpack.c.b16 %v1668, %v1664
        %v2005 = vpack.c.b16 %v1669, %v1665
        %v2006 = vpack.c.b16 %v1674, %v1670
        %v2007 = vpack.c.b16 %v1675, %v1671
        %v2008 = vpack.c.b16 %v1676, %v1672
        %v2009 = vpack.c.b16 %v1677, %v1673
        %v2010 = vpack.c.b16 %v1682, %v1678
        %v2011 = vpack.c.b16 %v1683, %v1679
        %v2012 = vpack.c.b16 %v1684, %v1680
        %v2013 = vpack.c.b16 %v1685, %v1681
        %v2014 = vpack.c.b16 %v1690, %v1686
        %v2015 = vpack.c.b16 %v1691, %v1687
        %v2016 = vpack.c.b16 %v1692, %v1688
        %v2017 = vpack.c.b16 %v1693, %v1689
        %v2018 = vpack.c.b16 %v1698, %v1694
        %v2019 = vpack.c.b16 %v1699, %v1695
        %v2020 = vpack.c.b16 %v1700, %v1696
        %v2021 = vpack.c.b16 %v1701, %v1697
        %v2022 = vpack.c.b16 %v1706, %v1702
        %v2023 = vpack.c.b16 %v1707, %v1703
        %v2024 = vpack.c.b16 %v1708, %v1704
        %v2025 = vpack.c.b16 %v1709, %v1705
        %v2026 = vpack.c.b16 %v1714, %v1710
        %v2027 = vpack.c.b16 %v1715, %v1711
        %v2028 = vpack.c.b16 %v1716, %v1712
        %v2029 = vpack.c.b16 %v1717, %v1713
        %v2030 = vpack.c.b16 %v1722, %v1718
        %v2031 = vpack.c.b16 %v1723, %v1719
        %v2032 = vpack.c.b16 %v1724, %v1720
        %v2033 = vpack.c.b16 %v1725, %v1721
        %v2034 = vpack.c.b16 %v1730, %v1726
        %v2035 = vpack.c.b16 %v1731, %v1727
        %v2036 = vpack.c.b16 %v1732, %v1728
        %v2037 = vpack.c.b16 %v1733, %v1729
        %v2038 = vpack.c.b16 %v1738, %v1734
        %v2039 = vpack.c.b16 %v1739, %v1735
        %v2040 = vpack.c.b16 %v1740, %v1736
        %v2041 = vpack.c.b16 %v1741, %v1737
        %v2042 = vpack.c.b16 %v1746, %v1742
        %v2043 = vpack.c.b16 %v1747, %v1743
        %v2044 = vpack.c.b16 %v1748, %v1744
        %v2045 = vpack.c.b16 %v1749, %v1745
        %v2046 = vpack.c.b16 %v1754, %v1750
        %v2047 = vpack.c.b16 %v1755, %v1751
        %v2048 = vpack.c.b16 %v1756, %v1752
        %v2049 = vpack.c.b16 %v1757, %v1753
        %v2050 = vpack.c.b16 %v1762, %v1758
        %v2051 = vpack.c.b16 %v1763, %v1759
        %v2052 = vpack.c.b16 %v1764, %v1760
        %v2053 = vpack.c.b16 %v1765, %v1761
        %v2054 = vpack.c.b16 %v1770, %v1766
        %v2055 = vpack.c.b16 %v1771, %v1767
        %v2056 = vpack.c.b16 %v1772, %v1768
        %v2057 = vpack.c.b16 %v1773, %v1769
        %v2058 = vpack.c.b16 %v1778, %v1774
        %v2059 = vpack.c.b16 %v1779, %v1775
        %v2060 = vpack.c.b16 %v1780, %v1776
        %v2061 = vpack.c.b16 %v1781, %v1777
        %v2062 = vpack.c.b16 %v1786, %v1782
        %v2063 = vpack.c.b16 %v1787, %v1783
        %v2064 = vpack.c.b16 %v1788, %v1784
        %v2065 = vpack.c.b16 %v1789, %v1785
        %v2066 = vpack.c.b16 %v1794, %v1790
        %v2067 = vpack.c.b16 %v1795, %v1791
        %v2068 = vpack.c.b16 %v1796, %v1792
        %v2069 = vpack.c.b16 %v1797, %v1793
        %v2070 = vpack.c.b16 %v1802, %v1798
        %v2071 = vpack.c.b16 %v1803, %v1799
        %v2072 = vpack.c.b16 %v1804, %v1800
        %v2073 = vpack.c.b16 %v1805, %v1801
        %v2074 = vpack.c.b16 %v1810, %v1806
        %v2075 = vpack.c.b16 %v1811, %v1807
        %v2076 = vpack.c.b16 %v1812, %v1808
        %v2077 = vpack.c.b16 %v1813, %v1809
        %v2078 = vpack.c.b16 %v1818, %v1814
        %v2079 = vpack.c.b16 %v1819, %v1815
        %v2080 = vpack.c.b16 %v1820, %v1816
        %v2081 = vpack.c.b16 %v1821, %v1817
        %v2082 = vpack.c.b16 %v1826, %v1822
        %v2083 = vpack.c.b16 %v1827, %v1823
        %v2084 = vpack.c.b16 %v1828, %v1824
        %v2085 = vpack.c.b16 %v1829, %v1825
        %2342 = vmatprep.subr.bf16.mxu0 %v1859
        %2343 = vmatpush1.bf16.msra.mxu0 %v1858
        %2344 = vmatprep.subr.bf16.mxu0 %v1855
        %2345 = vmatpush1.bf16.msra.mxu0 %v1854
        %2346 = vmatprep.subr.bf16.mxu0 %v1851
        %2347 = vmatpush1.bf16.msra.mxu0 %v1850
        %2348 = vmatprep.subr.bf16.mxu0 %v1847
        %2349 = vmatpush1.bf16.msra.mxu0 %v1846
        %2350 = vmatprep.subr.bf16.mxu0 %v1843
        %2351 = vmatpush1.bf16.msra.mxu0 %v1842
        %2352 = vmatprep.subr.bf16.mxu0 %v1839
        %2353 = vmatpush1.bf16.msra.mxu0 %v1838
        %2354 = vmatprep.subr.bf16.mxu0 %v1835
        %2355 = vmatpush1.bf16.msra.mxu0 %v1834
        %2356 = vmatprep.subr.bf16.mxu0 %v1831
        %2357 = vmatpush1.bf16.msra.mxu0 %v1830
        %2358 = vmatprep.subr.bf16.mxu0 %v1891
        %2359 = vmatpush2.bf16.msra.mxu0 %v1890
        %2360 = vmatprep.subr.bf16.mxu0 %v1887
        %2361 = vmatpush2.bf16.msra.mxu0 %v1886
        %2362 = vmatprep.subr.bf16.mxu0 %v1883
        %2363 = vmatpush2.bf16.msra.mxu0 %v1882
        %2364 = vmatprep.subr.bf16.mxu0 %v1879
        %2365 = vmatpush2.bf16.msra.mxu0 %v1878
        %2366 = vmatprep.subr.bf16.mxu0 %v1875
        %2367 = vmatpush2.bf16.msra.mxu0 %v1874
        %2368 = vmatprep.subr.bf16.mxu0 %v1871
        %2369 = vmatpush2.bf16.msra.mxu0 %v1870
        %2370 = vmatprep.subr.bf16.mxu0 %v1867
        %2371 = vmatpush2.bf16.msra.mxu0 %v1866
        %2372 = vmatprep.subr.bf16.mxu0 %v1863
        %2373 = vmatpush2.bf16.msra.mxu0 %v1862
        %2374 = vmatprep.mubr.bf16.mxu0 %v1047
        %2375 = vmatmul.mubr.bf16.gmra.mxu0 %v1046
        %v2376 = vpop.f32.mrf.mxu0
        %v2377 = vadd.f32 0.0, %v2376
        %v2378 = vpop.f32.mrf.mxu0
        %v2379 = vadd.f32 0.0, %v2378
        %v2380 = vpop.f32.mrf.mxu0
        %v2381 = vpop.f32.mrf.mxu0
        %2382 = vdwg.mxu0
        %2383 = vmatprep.subr.bf16.mxu0 %v1923
        %2384 = vmatpush1.bf16.msra.mxu0 %v1922
        %2385 = vmatprep.subr.bf16.mxu0 %v1919
        %2386 = vmatpush1.bf16.msra.mxu0 %v1918
        %2387 = vmatprep.subr.bf16.mxu0 %v1915
        %2388 = vmatpush1.bf16.msra.mxu0 %v1914
        %2389 = vmatprep.subr.bf16.mxu0 %v1911
        %2390 = vmatpush1.bf16.msra.mxu0 %v1910
        %2391 = vmatprep.subr.bf16.mxu0 %v1907
        %2392 = vmatpush1.bf16.msra.mxu0 %v1906
        %2393 = vmatprep.subr.bf16.mxu0 %v1903
        %2394 = vmatpush1.bf16.msra.mxu0 %v1902
        %2395 = vmatprep.subr.bf16.mxu0 %v1899
        %2396 = vmatpush1.bf16.msra.mxu0 %v1898
        %2397 = vmatprep.subr.bf16.mxu0 %v1895
        %2398 = vmatpush1.bf16.msra.mxu0 %v1894
        %2399 = vmatprep.subr.bf16.mxu0 %v1955
        %2400 = vmatpush2.bf16.msra.mxu0 %v1954
        %2401 = vmatprep.subr.bf16.mxu0 %v1951
        %2402 = vmatpush2.bf16.msra.mxu0 %v1950
        %2403 = vmatprep.subr.bf16.mxu0 %v1947
        %2404 = vmatpush2.bf16.msra.mxu0 %v1946
        %2405 = vmatprep.subr.bf16.mxu0 %v1943
        %2406 = vmatpush2.bf16.msra.mxu0 %v1942
        %2407 = vmatprep.subr.bf16.mxu0 %v1939
        %2408 = vmatpush2.bf16.msra.mxu0 %v1938
        %2409 = vmatprep.subr.bf16.mxu0 %v1935
        %2410 = vmatpush2.bf16.msra.mxu0 %v1934
        %2411 = vmatprep.subr.bf16.mxu0 %v1931
        %2412 = vmatpush2.bf16.msra.mxu0 %v1930
        %2413 = vmatprep.subr.bf16.mxu0 %v1927
        %2414 = vmatpush2.bf16.msra.mxu0 %v1926
        %2415 = vmatprep.mubr.bf16.mxu0 %v1049
        %2416 = vmatmul.mubr.bf16.gmra.mxu0 %v1048
        %v2417 = vpop.f32.mrf.mxu0
        %v2418 = vadd.f32 %v2377, %v2417
        %v2419 = vpop.f32.mrf.mxu0
        %v2420 = vadd.f32 %v2379, %v2419
        %v2421 = vpop.f32.mrf.mxu0
        %v2422 = vpop.f32.mrf.mxu0
        %2423 = vdwg.mxu0
        %2424 = vmatprep.subr.bf16.mxu0 %v1987
        %2425 = vmatpush1.bf16.msra.mxu0 %v1986
        %2426 = vmatprep.subr.bf16.mxu0 %v1983
        %2427 = vmatpush1.bf16.msra.mxu0 %v1982
        %2428 = vmatprep.subr.bf16.mxu0 %v1979
        %2429 = vmatpush1.bf16.msra.mxu0 %v1978
        %2430 = vmatprep.subr.bf16.mxu0 %v1975
        %2431 = vmatpush1.bf16.msra.mxu0 %v1974
        %2432 = vmatprep.subr.bf16.mxu0 %v1971
        %2433 = vmatpush1.bf16.msra.mxu0 %v1970
        %2434 = vmatprep.subr.bf16.mxu0 %v1967
        %2435 = vmatpush1.bf16.msra.mxu0 %v1966
        %2436 = vmatprep.subr.bf16.mxu0 %v1963
        %2437 = vmatpush1.bf16.msra.mxu0 %v1962
        %2438 = vmatprep.subr.bf16.mxu0 %v1959
        %2439 = vmatpush1.bf16.msra.mxu0 %v1958
        %2440 = vmatprep.subr.bf16.mxu0 %v2019
        %2441 = vmatpush2.bf16.msra.mxu0 %v2018
        %2442 = vmatprep.subr.bf16.mxu0 %v2015
        %2443 = vmatpush2.bf16.msra.mxu0 %v2014
        %2444 = vmatprep.subr.bf16.mxu0 %v2011
        %2445 = vmatpush2.bf16.msra.mxu0 %v2010
        %2446 = vmatprep.subr.bf16.mxu0 %v2007
        %2447 = vmatpush2.bf16.msra.mxu0 %v2006
        %2448 = vmatprep.subr.bf16.mxu0 %v2003
        %2449 = vmatpush2.bf16.msra.mxu0 %v2002
        %2450 = vmatprep.subr.bf16.mxu0 %v1999
        %2451 = vmatpush2.bf16.msra.mxu0 %v1998
        %2452 = vmatprep.subr.bf16.mxu0 %v1995
        %2453 = vmatpush2.bf16.msra.mxu0 %v1994
        %2454 = vmatprep.subr.bf16.mxu0 %v1991
        %2455 = vmatpush2.bf16.msra.mxu0 %v1990
        %2456 = vmatprep.mubr.bf16.mxu0 %v1051
        %2457 = vmatmul.mubr.bf16.gmra.mxu0 %v1050
        %v2458 = vpop.f32.mrf.mxu0
        %v2459 = vadd.f32 %v2418, %v2458
        %v2460 = vpop.f32.mrf.mxu0
        %v2461 = vadd.f32 %v2420, %v2460
        %v2462 = vpop.f32.mrf.mxu0
        %v2463 = vpop.f32.mrf.mxu0
        %2464 = vdwg.mxu0
        %2465 = vmatprep.subr.bf16.mxu0 %v2051
        %2466 = vmatpush1.bf16.msra.mxu0 %v2050
        %2467 = vmatprep.subr.bf16.mxu0 %v2047
        %2468 = vmatpush1.bf16.msra.mxu0 %v2046
        %2469 = vmatprep.subr.bf16.mxu0 %v2043
        %2470 = vmatpush1.bf16.msra.mxu0 %v2042
        %2471 = vmatprep.subr.bf16.mxu0 %v2039
        %2472 = vmatpush1.bf16.msra.mxu0 %v2038
        %2473 = vmatprep.subr.bf16.mxu0 %v2035
        %2474 = vmatpush1.bf16.msra.mxu0 %v2034
        %2475 = vmatprep.subr.bf16.mxu0 %v2031
        %2476 = vmatpush1.bf16.msra.mxu0 %v2030
        %2477 = vmatprep.subr.bf16.mxu0 %v2027
        %2478 = vmatpush1.bf16.msra.mxu0 %v2026
        %2479 = vmatprep.subr.bf16.mxu0 %v2023
        %2480 = vmatpush1.bf16.msra.mxu0 %v2022
        %2481 = vmatprep.subr.bf16.mxu0 %v2083
        %2482 = vmatpush2.bf16.msra.mxu0 %v2082
        %2483 = vmatprep.subr.bf16.mxu0 %v2079
        %2484 = vmatpush2.bf16.msra.mxu0 %v2078
        %2485 = vmatprep.subr.bf16.mxu0 %v2075
        %2486 = vmatpush2.bf16.msra.mxu0 %v2074
        %2487 = vmatprep.subr.bf16.mxu0 %v2071
        %2488 = vmatpush2.bf16.msra.mxu0 %v2070
        %2489 = vmatprep.subr.bf16.mxu0 %v2067
        %2490 = vmatpush2.bf16.msra.mxu0 %v2066
        %2491 = vmatprep.subr.bf16.mxu0 %v2063
        %2492 = vmatpush2.bf16.msra.mxu0 %v2062
        %2493 = vmatprep.subr.bf16.mxu0 %v2059
        %2494 = vmatpush2.bf16.msra.mxu0 %v2058
        %2495 = vmatprep.subr.bf16.mxu0 %v2055
        %2496 = vmatpush2.bf16.msra.mxu0 %v2054
        %2497 = vmatprep.mubr.bf16.mxu0 %v1053
        %2498 = vmatmul.mubr.bf16.gmra.mxu0 %v1052
        %v2499 = vpop.f32.mrf.mxu0
        %v2500 = vadd.f32 %v2459, %v2499
        %v2501 = vpop.f32.mrf.mxu0
        %v2502 = vadd.f32 %v2461, %v2501
        %v2503 = vpop.f32.mrf.mxu0
        %v2504 = vpop.f32.mrf.mxu0
        %2505 = vdwg.mxu0
        %2506 = vmatprep.subr.bf16.mxu0 %v1861
        %2507 = vmatpush1.bf16.msra.mxu0 %v1860
        %2508 = vmatprep.subr.bf16.mxu0 %v1857
        %2509 = vmatpush1.bf16.msra.mxu0 %v1856
        %2510 = vmatprep.subr.bf16.mxu0 %v1853
        %2511 = vmatpush1.bf16.msra.mxu0 %v1852
        %2512 = vmatprep.subr.bf16.mxu0 %v1849
        %2513 = vmatpush1.bf16.msra.mxu0 %v1848
        %2514 = vmatprep.subr.bf16.mxu0 %v1845
        %2515 = vmatpush1.bf16.msra.mxu0 %v1844
        %2516 = vmatprep.subr.bf16.mxu0 %v1841
        %2517 = vmatpush1.bf16.msra.mxu0 %v1840
        %2518 = vmatprep.subr.bf16.mxu0 %v1837
        %2519 = vmatpush1.bf16.msra.mxu0 %v1836
        %2520 = vmatprep.subr.bf16.mxu0 %v1833
        %2521 = vmatpush1.bf16.msra.mxu0 %v1832
        %2522 = vmatprep.subr.bf16.mxu0 %v1893
        %2523 = vmatpush2.bf16.msra.mxu0 %v1892
        %2524 = vmatprep.subr.bf16.mxu0 %v1889
        %2525 = vmatpush2.bf16.msra.mxu0 %v1888
        %2526 = vmatprep.subr.bf16.mxu0 %v1885
        %2527 = vmatpush2.bf16.msra.mxu0 %v1884
        %2528 = vmatprep.subr.bf16.mxu0 %v1881
        %2529 = vmatpush2.bf16.msra.mxu0 %v1880
        %2530 = vmatprep.subr.bf16.mxu0 %v1877
        %2531 = vmatpush2.bf16.msra.mxu0 %v1876
        %2532 = vmatprep.subr.bf16.mxu0 %v1873
        %2533 = vmatpush2.bf16.msra.mxu0 %v1872
        %2534 = vmatprep.subr.bf16.mxu0 %v1869
        %2535 = vmatpush2.bf16.msra.mxu0 %v1868
        %2536 = vmatprep.subr.bf16.mxu0 %v1865
        %2537 = vmatpush2.bf16.msra.mxu0 %v1864
        %2538 = vmatprep.mubr.bf16.mxu0 %v1047
        %2539 = vmatmul.mubr.bf16.gmra.mxu0 %v1046
        %v2540 = vpop.f32.mrf.mxu0
        %v2541 = vadd.f32 0.0, %v2540
        %v2542 = vpop.f32.mrf.mxu0
        %v2543 = vadd.f32 0.0, %v2542
        %v2544 = vpop.f32.mrf.mxu0
        %v2545 = vpop.f32.mrf.mxu0
        %2546 = vdwg.mxu0
        %2547 = vmatprep.subr.bf16.mxu0 %v1925
        %2548 = vmatpush1.bf16.msra.mxu0 %v1924
        %2549 = vmatprep.subr.bf16.mxu0 %v1921
        %2550 = vmatpush1.bf16.msra.mxu0 %v1920
        %2551 = vmatprep.subr.bf16.mxu0 %v1917
        %2552 = vmatpush1.bf16.msra.mxu0 %v1916
        %2553 = vmatprep.subr.bf16.mxu0 %v1913
        %2554 = vmatpush1.bf16.msra.mxu0 %v1912
        %2555 = vmatprep.subr.bf16.mxu0 %v1909
        %2556 = vmatpush1.bf16.msra.mxu0 %v1908
        %2557 = vmatprep.subr.bf16.mxu0 %v1905
        %2558 = vmatpush1.bf16.msra.mxu0 %v1904
        %2559 = vmatprep.subr.bf16.mxu0 %v1901
        %2560 = vmatpush1.bf16.msra.mxu0 %v1900
        %2561 = vmatprep.subr.bf16.mxu0 %v1897
        %2562 = vmatpush1.bf16.msra.mxu0 %v1896
        %2563 = vmatprep.subr.bf16.mxu0 %v1957
        %2564 = vmatpush2.bf16.msra.mxu0 %v1956
        %2565 = vmatprep.subr.bf16.mxu0 %v1953
        %2566 = vmatpush2.bf16.msra.mxu0 %v1952
        %2567 = vmatprep.subr.bf16.mxu0 %v1949
        %2568 = vmatpush2.bf16.msra.mxu0 %v1948
        %2569 = vmatprep.subr.bf16.mxu0 %v1945
        %2570 = vmatpush2.bf16.msra.mxu0 %v1944
        %2571 = vmatprep.subr.bf16.mxu0 %v1941
        %2572 = vmatpush2.bf16.msra.mxu0 %v1940
        %2573 = vmatprep.subr.bf16.mxu0 %v1937
        %2574 = vmatpush2.bf16.msra.mxu0 %v1936
        %2575 = vmatprep.subr.bf16.mxu0 %v1933
        %2576 = vmatpush2.bf16.msra.mxu0 %v1932
        %2577 = vmatprep.subr.bf16.mxu0 %v1929
        %2578 = vmatpush2.bf16.msra.mxu0 %v1928
        %2579 = vmatprep.mubr.bf16.mxu0 %v1049
        %2580 = vmatmul.mubr.bf16.gmra.mxu0 %v1048
        %v2581 = vpop.f32.mrf.mxu0
        %v2582 = vadd.f32 %v2541, %v2581
        %v2583 = vpop.f32.mrf.mxu0
        %v2584 = vadd.f32 %v2543, %v2583
        %v2585 = vpop.f32.mrf.mxu0
        %v2586 = vpop.f32.mrf.mxu0
        %2587 = vdwg.mxu0
        %2588 = vmatprep.subr.bf16.mxu0 %v1989
        %2589 = vmatpush1.bf16.msra.mxu0 %v1988
        %2590 = vmatprep.subr.bf16.mxu0 %v1985
        %2591 = vmatpush1.bf16.msra.mxu0 %v1984
        %2592 = vmatprep.subr.bf16.mxu0 %v1981
        %2593 = vmatpush1.bf16.msra.mxu0 %v1980
        %2594 = vmatprep.subr.bf16.mxu0 %v1977
        %2595 = vmatpush1.bf16.msra.mxu0 %v1976
        %2596 = vmatprep.subr.bf16.mxu0 %v1973
        %2597 = vmatpush1.bf16.msra.mxu0 %v1972
        %2598 = vmatprep.subr.bf16.mxu0 %v1969
        %2599 = vmatpush1.bf16.msra.mxu0 %v1968
        %2600 = vmatprep.subr.bf16.mxu0 %v1965
        %2601 = vmatpush1.bf16.msra.mxu0 %v1964
        %2602 = vmatprep.subr.bf16.mxu0 %v1961
        %2603 = vmatpush1.bf16.msra.mxu0 %v1960
        %2604 = vmatprep.subr.bf16.mxu0 %v2021
        %2605 = vmatpush2.bf16.msra.mxu0 %v2020
        %2606 = vmatprep.subr.bf16.mxu0 %v2017
        %2607 = vmatpush2.bf16.msra.mxu0 %v2016
        %2608 = vmatprep.subr.bf16.mxu0 %v2013
        %2609 = vmatpush2.bf16.msra.mxu0 %v2012
        %2610 = vmatprep.subr.bf16.mxu0 %v2009
        %2611 = vmatpush2.bf16.msra.mxu0 %v2008
        %2612 = vmatprep.subr.bf16.mxu0 %v2005
        %2613 = vmatpush2.bf16.msra.mxu0 %v2004
        %2614 = vmatprep.subr.bf16.mxu0 %v2001
        %2615 = vmatpush2.bf16.msra.mxu0 %v2000
        %2616 = vmatprep.subr.bf16.mxu0 %v1997
        %2617 = vmatpush2.bf16.msra.mxu0 %v1996
        %2618 = vmatprep.subr.bf16.mxu0 %v1993
        %2619 = vmatpush2.bf16.msra.mxu0 %v1992
        %2620 = vmatprep.mubr.bf16.mxu0 %v1051
        %2621 = vmatmul.mubr.bf16.gmra.mxu0 %v1050
        %v2622 = vpop.f32.mrf.mxu0
        %v2623 = vadd.f32 %v2582, %v2622
        %v2624 = vpop.f32.mrf.mxu0
        %v2625 = vadd.f32 %v2584, %v2624
        %v2626 = vpop.f32.mrf.mxu0
        %v2627 = vpop.f32.mrf.mxu0
        %2628 = vdwg.mxu0
        %2629 = vmatprep.subr.bf16.mxu0 %v2053
        %2630 = vmatpush1.bf16.msra.mxu0 %v2052
        %2631 = vmatprep.subr.bf16.mxu0 %v2049
        %2632 = vmatpush1.bf16.msra.mxu0 %v2048
        %2633 = vmatprep.subr.bf16.mxu0 %v2045
        %2634 = vmatpush1.bf16.msra.mxu0 %v2044
        %2635 = vmatprep.subr.bf16.mxu0 %v2041
        %2636 = vmatpush1.bf16.msra.mxu0 %v2040
        %2637 = vmatprep.subr.bf16.mxu0 %v2037
        %2638 = vmatpush1.bf16.msra.mxu0 %v2036
        %2639 = vmatprep.subr.bf16.mxu0 %v2033
        %2640 = vmatpush1.bf16.msra.mxu0 %v2032
        %2641 = vmatprep.subr.bf16.mxu0 %v2029
        %2642 = vmatpush1.bf16.msra.mxu0 %v2028
        %2643 = vmatprep.subr.bf16.mxu0 %v2025
        %2644 = vmatpush1.bf16.msra.mxu0 %v2024
        %2645 = vmatprep.subr.bf16.mxu0 %v2085
        %2646 = vmatpush2.bf16.msra.mxu0 %v2084
        %2647 = vmatprep.subr.bf16.mxu0 %v2081
        %2648 = vmatpush2.bf16.msra.mxu0 %v2080
        %2649 = vmatprep.subr.bf16.mxu0 %v2077
        %2650 = vmatpush2.bf16.msra.mxu0 %v2076
        %2651 = vmatprep.subr.bf16.mxu0 %v2073
        %2652 = vmatpush2.bf16.msra.mxu0 %v2072
        %2653 = vmatprep.subr.bf16.mxu0 %v2069
        %2654 = vmatpush2.bf16.msra.mxu0 %v2068
        %2655 = vmatprep.subr.bf16.mxu0 %v2065
        %2656 = vmatpush2.bf16.msra.mxu0 %v2064
        %2657 = vmatprep.subr.bf16.mxu0 %v2061
        %2658 = vmatpush2.bf16.msra.mxu0 %v2060
        %2659 = vmatprep.subr.bf16.mxu0 %v2057
        %2660 = vmatpush2.bf16.msra.mxu0 %v2056
        %2661 = vmatprep.mubr.bf16.mxu0 %v1053
        %2662 = vmatmul.mubr.bf16.gmra.mxu0 %v1052
        %v2663 = vpop.f32.mrf.mxu0
        %v2664 = vadd.f32 %v2623, %v2663
        %v2665 = vpop.f32.mrf.mxu0
        %v2666 = vadd.f32 %v2625, %v2665
        %v2667 = vpop.f32.mrf.mxu0
        %v2668 = vpop.f32.mrf.mxu0
        %2669 = vdwg.mxu0
        %v2670 = vadd.f32 %v770, %v2500
        %v2671 = vadd.f32 %v771, %v2502
        %v2672 = vadd.f32 %v772, %v2664
        %v2673 = vadd.f32 %v773, %v2666
        %2674 = vst [vmem:[#allocation2] sm:$0xff] %v2670
        %2675 = vst [vmem:[#allocation2 + $0x8] sm:$0xff] %v2671
        %2676 = vst [vmem:[#allocation2 + $0x10] sm:$0xff] %v2672
        %2677 = vst [vmem:[#allocation2 + $0x18] sm:$0xff] %v2673
        %p2678 = scmp.eq.s32.totalorder %s19, 1
        // Predicated region
        $region60: #{discriminator_forward.6} parent=50 // pred_check
          %p2679 = pneg %p2678
        $region61: #{discriminator_forward.6} parent=50 // pred_check_branch
          %2681 = sbr.rel (%p2679) target = $region63
        $region62: #{discriminator_forward.6} parent=50 // pred_region
          %v2682 = vld [vmem:[#allocation2] sm:$0xff]
          %v2683 = vld [vmem:[#allocation2 + $0x8] sm:$0xff]
          %v2684 = vld [vmem:[#allocation2 + $0x10] sm:$0xff]
          %v2685 = vld [vmem:[#allocation2 + $0x18] sm:$0xff]
          %v2686 = vld [vmem:[%s754] sm:$0xf]
          %v2688 = vlaneseq
          %v2689 = vshrl.u32 %v2688, 7
          %v2690 = vsub.s32 0, %v2689
          %v2691 = vrot.slane %v2686, %v2690
          %v2692 = vlaneseq
          %v2693 = vshrl.u32 %v2692, 7
          %v2694 = vsub.s32 1, %v2693
          %v2695 = vrot.slane %v2686, %v2694
          %v2696 = vlaneseq
          %v2697 = vshrl.u32 %v2696, 7
          %v2698 = vsub.s32 2, %v2697
          %v2699 = vrot.slane %v2686, %v2698
          %v2700 = vlaneseq
          %v2701 = vshrl.u32 %v2700, 7
          %v2702 = vsub.s32 3, %v2701
          %v2703 = vrot.slane %v2686, %v2702
          %v2708 = vadd.f32 %v2682, %v2691
          %v2709 = vadd.f32 %v2683, %v2695
          %v2710 = vadd.f32 %v2684, %v2699
          %v2711 = vadd.f32 %v2685, %v2703
          %vm2712 = vcmp.ge.f32.partialorder %v2708, 0.0
          %vm2713 = vcmp.ge.f32.partialorder %v2709, 0.0
          %vm2714 = vcmp.ge.f32.partialorder %v2710, 0.0
          %vm2715 = vcmp.ge.f32.partialorder %v2711, 0.0
          %v2716 = vmul.f32 %v2708, 0.2
          %v2717 = vmul.f32 %v2709, 0.2
          %v2718 = vmul.f32 %v2710, 0.2
          %v2719 = vmul.f32 %v2711, 0.2
          %v2720 = vsel %vm2712, %v2708, %v2716
          %v2721 = vsel %vm2713, %v2709, %v2717
          %v2722 = vsel %vm2714, %v2710, %v2718
          %v2723 = vsel %vm2715, %v2711, %v2719
          %v2724 = vpack.c.bf16 %v2720, %v2720
          %v2725 = vpack.c.bf16 %v2721, %v2721
          %v2726 = vpack.c.bf16 %v2722, %v2722
          %v2727 = vpack.c.bf16 %v2723, %v2723
          %v2732 = vunpack.c.l.b16 %v2724
          %v2733 = vunpack.c.l.b16 %v2725
          %v2734 = vunpack.c.l.b16 %v2726
          %v2735 = vunpack.c.l.b16 %v2727
          %v2736 = vpack.c.b16 %v2733, %v2732
          %v2737 = vpack.c.b16 %v2735, %v2734
          %2740 = vst [vmem:[%s760] sm:$0xff] %v2736
          %2741 = vst [vmem:[%s760 + $0x8] sm:$0xff] %v2737
        $region63: #{discriminator_forward.6} parent=50 // pred_fallthru
          _
        %s2742 = smul.u32 4, %s18
        %p2743 = scmp.lt.s32.totalorder %s2742, 7
        %s2744 = scalar_select %p2743, %s2742, 7
        %s2745 = smul.addr %s2744, 4
        %s2746 = scalar_lea.vmem %s3, %s2745
        // Predicated region
        $region64: #{discriminator_forward.6} parent=50 // pred_check
          %p2747 = pneg %p124
        $region65: #{discriminator_forward.6} parent=50 // pred_check_branch
          %2749 = sbr.rel (%p2747) target = $region67
        $region66: #{discriminator_forward.6} parent=50 // pred_region
          %s2750 = smul.u32 4, %s18
        $region67: #{discriminator_forward.6} parent=50 // pred_fallthru
          _
      $region51: #{discriminator_forward.6} parent=5 // pred_fallthru
        _
      %p2751 = scmp.le.s32.totalorder 2, %s9
      // Predicated region
      $region68: #{discriminator_forward.6} parent=5 // pred_check
        %p2752 = pneg %p2751
      $region69: #{discriminator_forward.6} parent=5 // pred_check_branch
        %2754 = sbr.rel (%p2752) target = $region71
      $region70: #{discriminator_forward.6} parent=5 // pred_region
        %s2755 = ssub.s32 %s9, 2
        // Predicated region
        $region72: #{discriminator_forward.6} parent=70 // pred_check
          %p2756 = pneg %p130
        $region73: #{discriminator_forward.6} parent=70 // pred_check_branch
          %2758 = sbr.rel (%p2756) target = $region75
        $region74: #{discriminator_forward.6} parent=70 // pred_region
          %s2759 = smul.u32 4, %s20
          %p2760 = scmp.lt.s32.totalorder %s2759, 7
          %s2761 = scalar_select %p2760, %s2759, 7
          %s2762 = smul.addr %s2761, 4
          %s2763 = scalar_lea.vmem %s3, %s2762
        $region75: #{discriminator_forward.6} parent=70 // pred_fallthru
          _
      $region71: #{discriminator_forward.6} parent=5 // pred_fallthru
        _
    $region6: #{discriminator_forward.6} parent=1 // loop_footer
      %s13 = sadd.s32 1, %s9
    $region7: #{discriminator_forward.6} parent=1 // loop_footer_branch
      %8 = sbr.rel target = $region3
    $region8: #{discriminator_forward.6} parent=1 // loop_exit
      _

</llo_original>
